<compile_context>
chip_gen: v7x
topology: tpu7x:2x2x1
jax: 0.10.0
libtpu: 0.0.40
codegen_flags: <defaults>
</compile_context>

<pallas_src>
import math

import numpy as np
import jax
import jax.numpy as jnp
from jax import lax
from jax.experimental import pallas as pl
from jax.experimental.pallas import tpu as pltpu

LANE = 128


def _pad_cols(m):
    """Pad the flattened-spatial width up to a multiple of the 128-lane axis."""
    return max(LANE, ((m + LANE - 1) // LANE) * LANE)


def _is_pow2(v):
    return v > 0 and (v & (v - 1)) == 0


# ----------------------------------------------------------------------------
# Host-side packing helpers (run once, outside the hot path)
# ----------------------------------------------------------------------------
def _pack_conv(w):
    """[3,3,Cin,Cout] f32 -> [9, Cout, Cin] bf16 (tap index k = kh*3 + kw)."""
    kh, kw, cin, cout = w.shape
    return jnp.transpose(w, (0, 1, 3, 2)).reshape(kh * kw, cout, cin).astype(jnp.bfloat16)


def _make_sel(batch, h, w, stride, m_in_pad, m_out_pad):
    """0/1 column-selection matrix implementing spatial stride-`stride` subsampling
    (== AvgPool2d(kernel_size=1, stride)) in the [C, N*H*W] layout."""
    ho, wo = (h - 1) // stride + 1, (w - 1) // stride + 1
    sel = np.zeros((m_in_pad, m_out_pad), np.float32)
    for n in range(batch):
        for yo in range(ho):
            for xo in range(wo):
                src = n * h * w + (yo * stride) * w + (xo * stride)
                dst = n * ho * wo + yo * wo + xo
                sel[src, dst] = 1.0
    return jnp.asarray(sel)


def _make_pool(batch, h, w, m_pad):
    """Per-image global average pooling matrix: [M_pad, batch] with 1/(H*W) entries."""
    pool = np.zeros((m_pad, batch), np.float32)
    inv = 1.0 / float(h * w)
    for n in range(batch):
        pool[n * h * w:(n + 1) * h * w, n] = inv
    return jnp.asarray(pool)


# ----------------------------------------------------------------------------
# In-kernel 3x3 convolution (stride 1, padding 1) on a [C, N*H*W] activation.
# The 9 taps are realised as lane-rolls of the activation, masked at the image
# borders, and accumulated with 9 small MXU matmuls (bf16 in, f32 accumulate).
# ----------------------------------------------------------------------------
def _conv3x3(act, w_ref, hh, ww, m_pad, cout):
    cin = act.shape[0]
    shift_w = int(math.log2(ww))          # hh, ww are powers of two by construction
    j = lax.broadcasted_iota(jnp.int32, (1, m_pad), 1)
    xcol = j & (ww - 1)
    yrow = (j >> shift_w) & (hh - 1)
    acc = jnp.zeros((cout, m_pad), jnp.float32)
    for dy in (-1, 0, 1):
        for dx in (-1, 0, 1):
            s = dy * ww + dx
            rolled = act if s == 0 else pltpu.roll(act, (-s) % m_pad, axis=1)
            valid = ((xcol + dx >= 0) & (xcol + dx < ww) &
                     (yrow + dy >= 0) & (yrow + dy < hh))
            patch = jnp.where(valid, rolled, 0.0).astype(jnp.bfloat16)
            wk = w_ref[3 * (dy + 1) + (dx + 1)]        # [cout, cin] bf16
            acc = acc + jnp.dot(wk, patch, preferred_element_type=jnp.float32)
    return acc


# ----------------------------------------------------------------------------
# Build the fused forward pass (one pallas_call for the whole network)
# ----------------------------------------------------------------------------
def make_forward(params, batch, height, width):
    in_channels = params['conv1_w'].shape[2]
    in_planes = params['conv1_w'].shape[3]
    num_classes = params['fc_w'].shape[0]
    assert _is_pow2(height) and _is_pow2(width)

    m0 = batch * height * width
    m0_pad = _pad_cols(m0)

    # ---- static per-block config + packed kernel operands -------------------
    cfgs = []
    blk_w_arrays = []
    sel_arrays = []
    proj_arrays = []
    scal_list = [params['bias1']]
    hh, ww = height, width
    for lname in ('layer1', 'layer2', 'layer3'):
        for bp in params[lname]:
            stride = int(bp['stride'])
            cin = bp['conv1_w'].shape[2]
            cout = bp['conv1_w'].shape[3]
            ho = (hh - 1) // stride + 1
            wo = (ww - 1) // stride + 1
            assert _is_pow2(ho) and _is_pow2(wo)
            m_in_pad = _pad_cols(batch * hh * ww)
            m_out_pad = _pad_cols(batch * ho * wo)
            sel_idx = None
            if stride != 1:
                sel_idx = len(sel_arrays)
                sel_arrays.append(_make_sel(batch, hh, ww, stride, m_in_pad, m_out_pad))
                # channel-injection matrix == cat(identity, zeros) on the channel axis
                proj_arrays.append(jnp.asarray(np.eye(cout, cin, dtype=np.float32)))
            cfgs.append(dict(stride=stride, downsample=bool(bp['downsample']),
                             cout=cout, h_in=hh, w_in=ww, m_in_pad=m_in_pad,
                             h_out=ho, w_out=wo, m_out_pad=m_out_pad,
                             sel_idx=sel_idx))
            blk_w_arrays.append(_pack_conv(bp['conv1_w']))
            blk_w_arrays.append(_pack_conv(bp['conv2_w']))
            scal_list += [bp['bias1a'], bp['bias1b'], bp['bias2a'],
                          bp['bias2b'], bp['scale']]
            hh, ww = ho, wo
    scal_list.append(params['bias2'])

    nblocks = len(cfgs)
    n_sel = len(sel_arrays)
    m_last_pad = _pad_cols(batch * hh * ww)
    pool = _make_pool(batch, hh, ww, m_last_pad)
    wstem = _pack_conv(params['conv1_w'])
    wfc = params['fc_w'].astype(jnp.float32)                  # [num_classes, C]
    bfc = params['fc_b'].reshape(num_classes, 1).astype(jnp.float32)
    scalars = jnp.array([float(v) for v in scal_list], dtype=jnp.float32)

    fixed_inputs = ([wstem] + blk_w_arrays + sel_arrays + proj_arrays
                    + [pool, wfc, bfc, scalars])

    # ---- the single fused kernel --------------------------------------------
    def kernel(*refs):
        x_ref = refs[0]
        wstem_ref = refs[1]
        pos = 2
        blk_w_refs = refs[pos:pos + 2 * nblocks]
        pos += 2 * nblocks
        sel_refs = refs[pos:pos + n_sel]
        pos += n_sel
        proj_refs = refs[pos:pos + n_sel]
        pos += n_sel
        pool_ref, wfc_ref, bfc_ref, scal_ref, o_ref = refs[pos:pos + 5]

        # stem: relu(conv1(x) + bias1)
        act = _conv3x3(x_ref[...], wstem_ref, height, width, m0_pad, in_planes)
        act = jnp.maximum(act + scal_ref[0], 0.0)

        # Fixup basic blocks; every intermediate stays on-chip.
        for bi, cfg in enumerate(cfgs):
            w1_ref = blk_w_refs[2 * bi]
            w2_ref = blk_w_refs[2 * bi + 1]
            so = 1 + 5 * bi
            b1a = scal_ref[so + 0]
            b1b = scal_ref[so + 1]
            b2a = scal_ref[so + 2]
            b2b = scal_ref[so + 3]
            scl = scal_ref[so + 4]

            identity = act
            bx = act + b1a                                       # bias1a (in-register)
            out = _conv3x3(bx, w1_ref, cfg['h_in'], cfg['w_in'],
                           cfg['m_in_pad'], cfg['cout'])
            if cfg['stride'] != 1:
                # strided conv == full-res conv followed by 0/1 column selection
                out = jnp.dot(out, sel_refs[cfg['sel_idx']][...],
                              preferred_element_type=jnp.float32)
            out = jnp.maximum(out + b1b, 0.0)                    # bias1b + ReLU
            out = _conv3x3(out + b2a, w2_ref, cfg['h_out'], cfg['w_out'],
                           cfg['m_out_pad'], cfg['cout'])
            out = out * scl + b2b                                # Scale() + bias2b
            if cfg['downsample']:
                # AvgPool2d(1, stride) on biased_x, then zero channel pad (via the
                # injection matmul) -- no zero-padded tensor is materialized.
                ident = jnp.dot(bx, sel_refs[cfg['sel_idx']][...],
                                preferred_element_type=jnp.float32)
                ident = jnp.dot(proj_refs[cfg['sel_idx']][...], ident,
                                preferred_element_type=jnp.float32)
            else:
                ident = identity
            act = jnp.maximum(out + ident, 0.0)                  # fused residual + ReLU

        # head: global average pool (matmul with 1/(H*W) matrix) + bias2 + fc
        pooled = jnp.dot(act, pool_ref[...], preferred_element_type=jnp.float32)
        pooled = pooled + scal_ref[1 + 5 * nblocks]              # Bias() before fc
        logits = jnp.dot(wfc_ref[...], pooled,
                         preferred_element_type=jnp.float32) + bfc_ref[...]
        o_ref[...] = logits                                      # [num_classes, batch]

    vmem_spec = pl.BlockSpec(memory_space=pltpu.MemorySpace.VMEM)
    smem_spec = pl.BlockSpec(memory_space=pltpu.MemorySpace.SMEM)
    n_inputs = 1 + len(fixed_inputs)
    call = pl.pallas_call(
        kernel,
        out_shape=jax.ShapeDtypeStruct((num_classes, batch), jnp.float32),
        in_specs=[vmem_spec] * (n_inputs - 1) + [smem_spec],   # scalars last, in SMEM
        out_specs=vmem_spec,
    )

    def forward(x_nchw):
        x = x_nchw.astype(jnp.float32)
        x_cm = jnp.transpose(x, (1, 0, 2, 3)).reshape(in_channels, m0)  # [C, N*H*W]
        if m0_pad > m0:
            x_cm = jnp.pad(x_cm, ((0, 0), (0, m0_pad - m0)))
        logits_t = call(x_cm, *fixed_inputs)
        return logits_t.T                                        # [batch, num_classes]

    return jax.jit(forward)


# ----------------------------------------------------------------------------
# Deterministic parameter construction (synthetic, not a checkpoint load)
# ----------------------------------------------------------------------------
def init_params(key, in_planes=4, in_channels=3, layers=(1, 1, 1), num_classes=10):
    keys = list(jax.random.split(key, 64))
    kit = iter(keys)

    def nk():
        return next(kit)

    params = {}
    params['conv1_w'] = 0.1 * jax.random.normal(
        nk(), (3, 3, in_channels, in_planes), jnp.float32)
    params['bias1'] = jnp.float32(0.01)

    inplanes = in_planes

    def make_layer(planes, blocks, stride):
        nonlocal inplanes
        blks = []
        for bi in range(blocks):
            s = stride if bi == 0 else 1
            cin = inplanes if bi == 0 else planes
            blks.append({
                'stride': s,
                'downsample': (bi == 0 and s != 1),
                'bias1a': jnp.float32(0.01),
                'bias1b': jnp.float32(-0.01),
                'bias2a': jnp.float32(0.02),
                'bias2b': jnp.float32(-0.02),
                'scale': jnp.float32(1.0),
                'conv1_w': 0.1 * jax.random.normal(nk(), (3, 3, cin, planes), jnp.float32),
                'conv2_w': 0.1 * jax.random.normal(nk(), (3, 3, planes, planes), jnp.float32),
            })
        inplanes = planes
        return blks

    params['layer1'] = make_layer(in_planes, layers[0], 1)
    params['layer2'] = make_layer(in_planes * 2, layers[1], 2)
    params['layer3'] = make_layer(in_planes * 4, layers[2], 2)
    params['bias2'] = jnp.float32(0.03)
    params['fc_w'] = 0.1 * jax.random.normal(nk(), (num_classes, in_planes * 4), jnp.float32)
    params['fc_b'] = 0.01 * jnp.arange(num_classes, dtype=jnp.float32)
    return params


# ----------------------------------------------------------------------------
if __name__ == "__main__":
    key = jax.random.PRNGKey(0)
    pkey, xkey = jax.random.split(key)

    in_planes = 4        # small FixupResNet(block, layers=[1,1,1], in_planes=4)
    params = init_params(pkey, in_planes=in_planes, in_channels=3,
                         layers=(1, 1, 1), num_classes=10)

    x = jax.random.normal(xkey, (2, 3, 16, 16), jnp.float32)  # NCHW like PyTorch
    forward = make_forward(params, batch=2, height=16, width=16)
    out = forward(x)
    out = jax.block_until_ready(out)

    assert out.shape == (2, 10), out.shape
    assert out.dtype == jnp.float32
    print("KERNEL_OK")
</pallas_src>

<mosaic_0001>
module attributes {stable_mosaic.version = 11 : i64} {
  func.func @kernel(%arg0: memref<3x512xf32, #tpu.memory_space<vmem>>, %arg1: memref<9x4x3xbf16, #tpu.memory_space<vmem>>, %arg2: memref<9x4x4xbf16, #tpu.memory_space<vmem>>, %arg3: memref<9x4x4xbf16, #tpu.memory_space<vmem>>, %arg4: memref<9x8x4xbf16, #tpu.memory_space<vmem>>, %arg5: memref<9x8x8xbf16, #tpu.memory_space<vmem>>, %arg6: memref<9x16x8xbf16, #tpu.memory_space<vmem>>, %arg7: memref<9x16x16xbf16, #tpu.memory_space<vmem>>, %arg8: memref<512x128xf32, #tpu.memory_space<vmem>>, %arg9: memref<128x128xf32, #tpu.memory_space<vmem>>, %arg10: memref<8x4xf32, #tpu.memory_space<vmem>>, %arg11: memref<16x8xf32, #tpu.memory_space<vmem>>, %arg12: memref<128x2xf32, #tpu.memory_space<vmem>>, %arg13: memref<10x16xf32, #tpu.memory_space<vmem>>, %arg14: memref<10x1xf32, #tpu.memory_space<vmem>>, %arg15: memref<17xf32, #tpu.memory_space<smem>>, %arg16: memref<10x2xf32, #tpu.memory_space<vmem>>) attributes {dimension_semantics = [], scalar_prefetch = 0 : i64, scratch_operands = 0 : i64, tpu.core_type = #tpu.core_type<tc>} {
    %c0 = arith.constant 0 : index
    %c0_0 = arith.constant 0 : index
    %0 = vector.load %arg0[%c0, %c0_0] : memref<3x512xf32, #tpu.memory_space<vmem>>, vector<3x512xf32>
    %1 = tpu.iota {dimensions = array<i32: 1>} : vector<1x512xi32>
    %c15_i32 = arith.constant 15 : i32
    %2 = vector.broadcast %c15_i32 : i32 to vector<1x512xi32>
    %3 = arith.andi %1, %2 : vector<1x512xi32>
    %c4_i32 = arith.constant 4 : i32
    %4 = vector.broadcast %c4_i32 : i32 to vector<1x512xi32>
    %5 = arith.shrsi %1, %4 : vector<1x512xi32>
    %c15_i32_1 = arith.constant 15 : i32
    %6 = vector.broadcast %c15_i32_1 : i32 to vector<1x512xi32>
    %7 = arith.andi %5, %6 : vector<1x512xi32>
    %cst = arith.constant 0.000000e+00 : f32
    %8 = vector.broadcast %cst : f32 to vector<4x512xf32>
    %c17_i32 = arith.constant 17 : i32
    %9 = tpu.dynamic_rotate %0 by %c17_i32 dim 1 : vector<3x512xf32>, i32 -> vector<3x512xf32>
    %c-1_i32 = arith.constant -1 : i32
    %10 = vector.broadcast %c-1_i32 : i32 to vector<1x512xi32>
    %11 = arith.addi %3, %10 : vector<1x512xi32>
    %c0_i32 = arith.constant 0 : i32
    %12 = vector.broadcast %c0_i32 : i32 to vector<1x512xi32>
    %13 = arith.cmpi sge, %11, %12 : vector<1x512xi32>
    %c-1_i32_2 = arith.constant -1 : i32
    %14 = vector.broadcast %c-1_i32_2 : i32 to vector<1x512xi32>
    %15 = arith.addi %3, %14 : vector<1x512xi32>
    %c16_i32 = arith.constant 16 : i32
    %16 = vector.broadcast %c16_i32 : i32 to vector<1x512xi32>
    %17 = arith.cmpi slt, %15, %16 : vector<1x512xi32>
    %18 = arith.andi %13, %17 : vector<1x512xi1>
    %c-1_i32_3 = arith.constant -1 : i32
    %19 = vector.broadcast %c-1_i32_3 : i32 to vector<1x512xi32>
    %20 = arith.addi %7, %19 : vector<1x512xi32>
    %c0_i32_4 = arith.constant 0 : i32
    %21 = vector.broadcast %c0_i32_4 : i32 to vector<1x512xi32>
    %22 = arith.cmpi sge, %20, %21 : vector<1x512xi32>
    %23 = arith.andi %18, %22 : vector<1x512xi1>
    %c-1_i32_5 = arith.constant -1 : i32
    %24 = vector.broadcast %c-1_i32_5 : i32 to vector<1x512xi32>
    %25 = arith.addi %7, %24 : vector<1x512xi32>
    %c16_i32_6 = arith.constant 16 : i32
    %26 = vector.broadcast %c16_i32_6 : i32 to vector<1x512xi32>
    %27 = arith.cmpi slt, %25, %26 : vector<1x512xi32>
    %28 = arith.andi %23, %27 : vector<1x512xi1>
    %cst_7 = arith.constant 0.000000e+00 : f32
    %29 = vector.shape_cast %28 : vector<1x512xi1> to vector<1x512xi1>
    %30 = vector.broadcast %29 : vector<1x512xi1> to vector<3x512xi1>
    %31 = vector.broadcast %cst_7 : f32 to vector<3x512xf32>
    %32 = arith.select %30, %9, %31 : vector<3x512xi1>, vector<3x512xf32>
    %33 = arith.truncf %32 : vector<3x512xf32> to vector<3x512xbf16>
    %c0_8 = arith.constant 0 : index
    %c0_9 = arith.constant 0 : index
    %c0_10 = arith.constant 0 : index
    %34 = vector.load %arg1[%c0_8, %c0_9, %c0_10] : memref<9x4x3xbf16, #tpu.memory_space<vmem>>, vector<1x4x3xbf16>
    %35 = vector.shape_cast %34 : vector<1x4x3xbf16> to vector<4x3xbf16>
    %cst_11 = arith.constant dense<0.000000e+00> : vector<4x512xf32>
    %36 = tpu.matmul %35, %33, %cst_11 {dimension_numbers = #tpu.dot_dimension_numbers<[1], [0], [0], [1], [0, 0, 1, 1], [], []>} : vector<4x3xbf16>, vector<3x512xbf16>, vector<4x512xf32> -> vector<4x512xf32>
    %37 = arith.addf %8, %36 : vector<4x512xf32>
    %c16_i32_12 = arith.constant 16 : i32
    %38 = tpu.dynamic_rotate %0 by %c16_i32_12 dim 1 : vector<3x512xf32>, i32 -> vector<3x512xf32>
    %c0_i32_13 = arith.constant 0 : i32
    %39 = vector.broadcast %c0_i32_13 : i32 to vector<1x512xi32>
    %40 = arith.addi %3, %39 : vector<1x512xi32>
    %c0_i32_14 = arith.constant 0 : i32
    %41 = vector.broadcast %c0_i32_14 : i32 to vector<1x512xi32>
    %42 = arith.cmpi sge, %40, %41 : vector<1x512xi32>
    %c0_i32_15 = arith.constant 0 : i32
    %43 = vector.broadcast %c0_i32_15 : i32 to vector<1x512xi32>
    %44 = arith.addi %3, %43 : vector<1x512xi32>
    %c16_i32_16 = arith.constant 16 : i32
    %45 = vector.broadcast %c16_i32_16 : i32 to vector<1x512xi32>
    %46 = arith.cmpi slt, %44, %45 : vector<1x512xi32>
    %47 = arith.andi %42, %46 : vector<1x512xi1>
    %c-1_i32_17 = arith.constant -1 : i32
    %48 = vector.broadcast %c-1_i32_17 : i32 to vector<1x512xi32>
    %49 = arith.addi %7, %48 : vector<1x512xi32>
    %c0_i32_18 = arith.constant 0 : i32
    %50 = vector.broadcast %c0_i32_18 : i32 to vector<1x512xi32>
    %51 = arith.cmpi sge, %49, %50 : vector<1x512xi32>
    %52 = arith.andi %47, %51 : vector<1x512xi1>
    %c-1_i32_19 = arith.constant -1 : i32
    %53 = vector.broadcast %c-1_i32_19 : i32 to vector<1x512xi32>
    %54 = arith.addi %7, %53 : vector<1x512xi32>
    %c16_i32_20 = arith.constant 16 : i32
    %55 = vector.broadcast %c16_i32_20 : i32 to vector<1x512xi32>
    %56 = arith.cmpi slt, %54, %55 : vector<1x512xi32>
    %57 = arith.andi %52, %56 : vector<1x512xi1>
    %cst_21 = arith.constant 0.000000e+00 : f32
    %58 = vector.shape_cast %57 : vector<1x512xi1> to vector<1x512xi1>
    %59 = vector.broadcast %58 : vector<1x512xi1> to vector<3x512xi1>
    %60 = vector.broadcast %cst_21 : f32 to vector<3x512xf32>
    %61 = arith.select %59, %38, %60 : vector<3x512xi1>, vector<3x512xf32>
    %62 = arith.truncf %61 : vector<3x512xf32> to vector<3x512xbf16>
    %c1 = arith.constant 1 : index
    %c0_22 = arith.constant 0 : index
    %c0_23 = arith.constant 0 : index
    %63 = vector.load %arg1[%c1, %c0_22, %c0_23] : memref<9x4x3xbf16, #tpu.memory_space<vmem>>, vector<1x4x3xbf16>
    %64 = vector.shape_cast %63 : vector<1x4x3xbf16> to vector<4x3xbf16>
    %cst_24 = arith.constant dense<0.000000e+00> : vector<4x512xf32>
    %65 = tpu.matmul %64, %62, %cst_24 {dimension_numbers = #tpu.dot_dimension_numbers<[1], [0], [0], [1], [0, 0, 1, 1], [], []>} : vector<4x3xbf16>, vector<3x512xbf16>, vector<4x512xf32> -> vector<4x512xf32>
    %66 = arith.addf %37, %65 : vector<4x512xf32>
    %c15_i32_25 = arith.constant 15 : i32
    %67 = tpu.dynamic_rotate %0 by %c15_i32_25 dim 1 : vector<3x512xf32>, i32 -> vector<3x512xf32>
    %c1_i32 = arith.constant 1 : i32
    %68 = vector.broadcast %c1_i32 : i32 to vector<1x512xi32>
    %69 = arith.addi %3, %68 : vector<1x512xi32>
    %c0_i32_26 = arith.constant 0 : i32
    %70 = vector.broadcast %c0_i32_26 : i32 to vector<1x512xi32>
    %71 = arith.cmpi sge, %69, %70 : vector<1x512xi32>
    %c1_i32_27 = arith.constant 1 : i32
    %72 = vector.broadcast %c1_i32_27 : i32 to vector<1x512xi32>
    %73 = arith.addi %3, %72 : vector<1x512xi32>
    %c16_i32_28 = arith.constant 16 : i32
    %74 = vector.broadcast %c16_i32_28 : i32 to vector<1x512xi32>
    %75 = arith.cmpi slt, %73, %74 : vector<1x512xi32>
    %76 = arith.andi %71, %75 : vector<1x512xi1>
    %c-1_i32_29 = arith.constant -1 : i32
    %77 = vector.broadcast %c-1_i32_29 : i32 to vector<1x512xi32>
    %78 = arith.addi %7, %77 : vector<1x512xi32>
    %c0_i32_30 = arith.constant 0 : i32
    %79 = vector.broadcast %c0_i32_30 : i32 to vector<1x512xi32>
    %80 = arith.cmpi sge, %78, %79 : vector<1x512xi32>
    %81 = arith.andi %76, %80 : vector<1x512xi1>
    %c-1_i32_31 = arith.constant -1 : i32
    %82 = vector.broadcast %c-1_i32_31 : i32 to vector<1x512xi32>
    %83 = arith.addi %7, %82 : vector<1x512xi32>
    %c16_i32_32 = arith.constant 16 : i32
    %84 = vector.broadcast %c16_i32_32 : i32 to vector<1x512xi32>
    %85 = arith.cmpi slt, %83, %84 : vector<1x512xi32>
    %86 = arith.andi %81, %85 : vector<1x512xi1>
    %cst_33 = arith.constant 0.000000e+00 : f32
    %87 = vector.shape_cast %86 : vector<1x512xi1> to vector<1x512xi1>
    %88 = vector.broadcast %87 : vector<1x512xi1> to vector<3x512xi1>
    %89 = vector.broadcast %cst_33 : f32 to vector<3x512xf32>
    %90 = arith.select %88, %67, %89 : vector<3x512xi1>, vector<3x512xf32>
    %91 = arith.truncf %90 : vector<3x512xf32> to vector<3x512xbf16>
    %c2 = arith.constant 2 : index
    %c0_34 = arith.constant 0 : index
    %c0_35 = arith.constant 0 : index
    %92 = vector.load %arg1[%c2, %c0_34, %c0_35] : memref<9x4x3xbf16, #tpu.memory_space<vmem>>, vector<1x4x3xbf16>
    %93 = vector.shape_cast %92 : vector<1x4x3xbf16> to vector<4x3xbf16>
    %cst_36 = arith.constant dense<0.000000e+00> : vector<4x512xf32>
    %94 = tpu.matmul %93, %91, %cst_36 {dimension_numbers = #tpu.dot_dimension_numbers<[1], [0], [0], [1], [0, 0, 1, 1], [], []>} : vector<4x3xbf16>, vector<3x512xbf16>, vector<4x512xf32> -> vector<4x512xf32>
    %95 = arith.addf %66, %94 : vector<4x512xf32>
    %c1_i32_37 = arith.constant 1 : i32
    %96 = tpu.dynamic_rotate %0 by %c1_i32_37 dim 1 : vector<3x512xf32>, i32 -> vector<3x512xf32>
    %c-1_i32_38 = arith.constant -1 : i32
    %97 = vector.broadcast %c-1_i32_38 : i32 to vector<1x512xi32>
    %98 = arith.addi %3, %97 : vector<1x512xi32>
    %c0_i32_39 = arith.constant 0 : i32
    %99 = vector.broadcast %c0_i32_39 : i32 to vector<1x512xi32>
    %100 = arith.cmpi sge, %98, %99 : vector<1x512xi32>
    %c-1_i32_40 = arith.constant -1 : i32
    %101 = vector.broadcast %c-1_i32_40 : i32 to vector<1x512xi32>
    %102 = arith.addi %3, %101 : vector<1x512xi32>
    %c16_i32_41 = arith.constant 16 : i32
    %103 = vector.broadcast %c16_i32_41 : i32 to vector<1x512xi32>
    %104 = arith.cmpi slt, %102, %103 : vector<1x512xi32>
    %105 = arith.andi %100, %104 : vector<1x512xi1>
    %c0_i32_42 = arith.constant 0 : i32
    %106 = vector.broadcast %c0_i32_42 : i32 to vector<1x512xi32>
    %107 = arith.addi %7, %106 : vector<1x512xi32>
    %c0_i32_43 = arith.constant 0 : i32
    %108 = vector.broadcast %c0_i32_43 : i32 to vector<1x512xi32>
    %109 = arith.cmpi sge, %107, %108 : vector<1x512xi32>
    %110 = arith.andi %105, %109 : vector<1x512xi1>
    %c0_i32_44 = arith.constant 0 : i32
    %111 = vector.broadcast %c0_i32_44 : i32 to vector<1x512xi32>
    %112 = arith.addi %7, %111 : vector<1x512xi32>
    %c16_i32_45 = arith.constant 16 : i32
    %113 = vector.broadcast %c16_i32_45 : i32 to vector<1x512xi32>
    %114 = arith.cmpi slt, %112, %113 : vector<1x512xi32>
    %115 = arith.andi %110, %114 : vector<1x512xi1>
    %cst_46 = arith.constant 0.000000e+00 : f32
    %116 = vector.shape_cast %115 : vector<1x512xi1> to vector<1x512xi1>
    %117 = vector.broadcast %116 : vector<1x512xi1> to vector<3x512xi1>
    %118 = vector.broadcast %cst_46 : f32 to vector<3x512xf32>
    %119 = arith.select %117, %96, %118 : vector<3x512xi1>, vector<3x512xf32>
    %120 = arith.truncf %119 : vector<3x512xf32> to vector<3x512xbf16>
    %c3 = arith.constant 3 : index
    %c0_47 = arith.constant 0 : index
    %c0_48 = arith.constant 0 : index
    %121 = vector.load %arg1[%c3, %c0_47, %c0_48] : memref<9x4x3xbf16, #tpu.memory_space<vmem>>, vector<1x4x3xbf16>
    %122 = vector.shape_cast %121 : vector<1x4x3xbf16> to vector<4x3xbf16>
    %cst_49 = arith.constant dense<0.000000e+00> : vector<4x512xf32>
    %123 = tpu.matmul %122, %120, %cst_49 {dimension_numbers = #tpu.dot_dimension_numbers<[1], [0], [0], [1], [0, 0, 1, 1], [], []>} : vector<4x3xbf16>, vector<3x512xbf16>, vector<4x512xf32> -> vector<4x512xf32>
    %124 = arith.addf %95, %123 : vector<4x512xf32>
    %c0_i32_50 = arith.constant 0 : i32
    %125 = vector.broadcast %c0_i32_50 : i32 to vector<1x512xi32>
    %126 = arith.addi %3, %125 : vector<1x512xi32>
    %c0_i32_51 = arith.constant 0 : i32
    %127 = vector.broadcast %c0_i32_51 : i32 to vector<1x512xi32>
    %128 = arith.cmpi sge, %126, %127 : vector<1x512xi32>
    %c0_i32_52 = arith.constant 0 : i32
    %129 = vector.broadcast %c0_i32_52 : i32 to vector<1x512xi32>
    %130 = arith.addi %3, %129 : vector<1x512xi32>
    %c16_i32_53 = arith.constant 16 : i32
    %131 = vector.broadcast %c16_i32_53 : i32 to vector<1x512xi32>
    %132 = arith.cmpi slt, %130, %131 : vector<1x512xi32>
    %133 = arith.andi %128, %132 : vector<1x512xi1>
    %c0_i32_54 = arith.constant 0 : i32
    %134 = vector.broadcast %c0_i32_54 : i32 to vector<1x512xi32>
    %135 = arith.addi %7, %134 : vector<1x512xi32>
    %c0_i32_55 = arith.constant 0 : i32
    %136 = vector.broadcast %c0_i32_55 : i32 to vector<1x512xi32>
    %137 = arith.cmpi sge, %135, %136 : vector<1x512xi32>
    %138 = arith.andi %133, %137 : vector<1x512xi1>
    %c0_i32_56 = arith.constant 0 : i32
    %139 = vector.broadcast %c0_i32_56 : i32 to vector<1x512xi32>
    %140 = arith.addi %7, %139 : vector<1x512xi32>
    %c16_i32_57 = arith.constant 16 : i32
    %141 = vector.broadcast %c16_i32_57 : i32 to vector<1x512xi32>
    %142 = arith.cmpi slt, %140, %141 : vector<1x512xi32>
    %143 = arith.andi %138, %142 : vector<1x512xi1>
    %cst_58 = arith.constant 0.000000e+00 : f32
    %144 = vector.shape_cast %143 : vector<1x512xi1> to vector<1x512xi1>
    %145 = vector.broadcast %144 : vector<1x512xi1> to vector<3x512xi1>
    %146 = vector.broadcast %cst_58 : f32 to vector<3x512xf32>
    %147 = arith.select %145, %0, %146 : vector<3x512xi1>, vector<3x512xf32>
    %148 = arith.truncf %147 : vector<3x512xf32> to vector<3x512xbf16>
    %c4 = arith.constant 4 : index
    %c0_59 = arith.constant 0 : index
    %c0_60 = arith.constant 0 : index
    %149 = vector.load %arg1[%c4, %c0_59, %c0_60] : memref<9x4x3xbf16, #tpu.memory_space<vmem>>, vector<1x4x3xbf16>
    %150 = vector.shape_cast %149 : vector<1x4x3xbf16> to vector<4x3xbf16>
    %cst_61 = arith.constant dense<0.000000e+00> : vector<4x512xf32>
    %151 = tpu.matmul %150, %148, %cst_61 {dimension_numbers = #tpu.dot_dimension_numbers<[1], [0], [0], [1], [0, 0, 1, 1], [], []>} : vector<4x3xbf16>, vector<3x512xbf16>, vector<4x512xf32> -> vector<4x512xf32>
    %152 = arith.addf %124, %151 : vector<4x512xf32>
    %c511_i32 = arith.constant 511 : i32
    %153 = tpu.dynamic_rotate %0 by %c511_i32 dim 1 : vector<3x512xf32>, i32 -> vector<3x512xf32>
    %c1_i32_62 = arith.constant 1 : i32
    %154 = vector.broadcast %c1_i32_62 : i32 to vector<1x512xi32>
    %155 = arith.addi %3, %154 : vector<1x512xi32>
    %c0_i32_63 = arith.constant 0 : i32
    %156 = vector.broadcast %c0_i32_63 : i32 to vector<1x512xi32>
    %157 = arith.cmpi sge, %155, %156 : vector<1x512xi32>
    %c1_i32_64 = arith.constant 1 : i32
    %158 = vector.broadcast %c1_i32_64 : i32 to vector<1x512xi32>
    %159 = arith.addi %3, %158 : vector<1x512xi32>
    %c16_i32_65 = arith.constant 16 : i32
    %160 = vector.broadcast %c16_i32_65 : i32 to vector<1x512xi32>
    %161 = arith.cmpi slt, %159, %160 : vector<1x512xi32>
    %162 = arith.andi %157, %161 : vector<1x512xi1>
    %c0_i32_66 = arith.constant 0 : i32
    %163 = vector.broadcast %c0_i32_66 : i32 to vector<1x512xi32>
    %164 = arith.addi %7, %163 : vector<1x512xi32>
    %c0_i32_67 = arith.constant 0 : i32
    %165 = vector.broadcast %c0_i32_67 : i32 to vector<1x512xi32>
    %166 = arith.cmpi sge, %164, %165 : vector<1x512xi32>
    %167 = arith.andi %162, %166 : vector<1x512xi1>
    %c0_i32_68 = arith.constant 0 : i32
    %168 = vector.broadcast %c0_i32_68 : i32 to vector<1x512xi32>
    %169 = arith.addi %7, %168 : vector<1x512xi32>
    %c16_i32_69 = arith.constant 16 : i32
    %170 = vector.broadcast %c16_i32_69 : i32 to vector<1x512xi32>
    %171 = arith.cmpi slt, %169, %170 : vector<1x512xi32>
    %172 = arith.andi %167, %171 : vector<1x512xi1>
    %cst_70 = arith.constant 0.000000e+00 : f32
    %173 = vector.shape_cast %172 : vector<1x512xi1> to vector<1x512xi1>
    %174 = vector.broadcast %173 : vector<1x512xi1> to vector<3x512xi1>
    %175 = vector.broadcast %cst_70 : f32 to vector<3x512xf32>
    %176 = arith.select %174, %153, %175 : vector<3x512xi1>, vector<3x512xf32>
    %177 = arith.truncf %176 : vector<3x512xf32> to vector<3x512xbf16>
    %c5 = arith.constant 5 : index
    %c0_71 = arith.constant 0 : index
    %c0_72 = arith.constant 0 : index
    %178 = vector.load %arg1[%c5, %c0_71, %c0_72] : memref<9x4x3xbf16, #tpu.memory_space<vmem>>, vector<1x4x3xbf16>
    %179 = vector.shape_cast %178 : vector<1x4x3xbf16> to vector<4x3xbf16>
    %cst_73 = arith.constant dense<0.000000e+00> : vector<4x512xf32>
    %180 = tpu.matmul %179, %177, %cst_73 {dimension_numbers = #tpu.dot_dimension_numbers<[1], [0], [0], [1], [0, 0, 1, 1], [], []>} : vector<4x3xbf16>, vector<3x512xbf16>, vector<4x512xf32> -> vector<4x512xf32>
    %181 = arith.addf %152, %180 : vector<4x512xf32>
    %c497_i32 = arith.constant 497 : i32
    %182 = tpu.dynamic_rotate %0 by %c497_i32 dim 1 : vector<3x512xf32>, i32 -> vector<3x512xf32>
    %c-1_i32_74 = arith.constant -1 : i32
    %183 = vector.broadcast %c-1_i32_74 : i32 to vector<1x512xi32>
    %184 = arith.addi %3, %183 : vector<1x512xi32>
    %c0_i32_75 = arith.constant 0 : i32
    %185 = vector.broadcast %c0_i32_75 : i32 to vector<1x512xi32>
    %186 = arith.cmpi sge, %184, %185 : vector<1x512xi32>
    %c-1_i32_76 = arith.constant -1 : i32
    %187 = vector.broadcast %c-1_i32_76 : i32 to vector<1x512xi32>
    %188 = arith.addi %3, %187 : vector<1x512xi32>
    %c16_i32_77 = arith.constant 16 : i32
    %189 = vector.broadcast %c16_i32_77 : i32 to vector<1x512xi32>
    %190 = arith.cmpi slt, %188, %189 : vector<1x512xi32>
    %191 = arith.andi %186, %190 : vector<1x512xi1>
    %c1_i32_78 = arith.constant 1 : i32
    %192 = vector.broadcast %c1_i32_78 : i32 to vector<1x512xi32>
    %193 = arith.addi %7, %192 : vector<1x512xi32>
    %c0_i32_79 = arith.constant 0 : i32
    %194 = vector.broadcast %c0_i32_79 : i32 to vector<1x512xi32>
    %195 = arith.cmpi sge, %193, %194 : vector<1x512xi32>
    %196 = arith.andi %191, %195 : vector<1x512xi1>
    %c1_i32_80 = arith.constant 1 : i32
    %197 = vector.broadcast %c1_i32_80 : i32 to vector<1x512xi32>
    %198 = arith.addi %7, %197 : vector<1x512xi32>
    %c16_i32_81 = arith.constant 16 : i32
    %199 = vector.broadcast %c16_i32_81 : i32 to vector<1x512xi32>
    %200 = arith.cmpi slt, %198, %199 : vector<1x512xi32>
    %201 = arith.andi %196, %200 : vector<1x512xi1>
    %cst_82 = arith.constant 0.000000e+00 : f32
    %202 = vector.shape_cast %201 : vector<1x512xi1> to vector<1x512xi1>
    %203 = vector.broadcast %202 : vector<1x512xi1> to vector<3x512xi1>
    %204 = vector.broadcast %cst_82 : f32 to vector<3x512xf32>
    %205 = arith.select %203, %182, %204 : vector<3x512xi1>, vector<3x512xf32>
    %206 = arith.truncf %205 : vector<3x512xf32> to vector<3x512xbf16>
    %c6 = arith.constant 6 : index
    %c0_83 = arith.constant 0 : index
    %c0_84 = arith.constant 0 : index
    %207 = vector.load %arg1[%c6, %c0_83, %c0_84] : memref<9x4x3xbf16, #tpu.memory_space<vmem>>, vector<1x4x3xbf16>
    %208 = vector.shape_cast %207 : vector<1x4x3xbf16> to vector<4x3xbf16>
    %cst_85 = arith.constant dense<0.000000e+00> : vector<4x512xf32>
    %209 = tpu.matmul %208, %206, %cst_85 {dimension_numbers = #tpu.dot_dimension_numbers<[1], [0], [0], [1], [0, 0, 1, 1], [], []>} : vector<4x3xbf16>, vector<3x512xbf16>, vector<4x512xf32> -> vector<4x512xf32>
    %210 = arith.addf %181, %209 : vector<4x512xf32>
    %c496_i32 = arith.constant 496 : i32
    %211 = tpu.dynamic_rotate %0 by %c496_i32 dim 1 : vector<3x512xf32>, i32 -> vector<3x512xf32>
    %c0_i32_86 = arith.constant 0 : i32
    %212 = vector.broadcast %c0_i32_86 : i32 to vector<1x512xi32>
    %213 = arith.addi %3, %212 : vector<1x512xi32>
    %c0_i32_87 = arith.constant 0 : i32
    %214 = vector.broadcast %c0_i32_87 : i32 to vector<1x512xi32>
    %215 = arith.cmpi sge, %213, %214 : vector<1x512xi32>
    %c0_i32_88 = arith.constant 0 : i32
    %216 = vector.broadcast %c0_i32_88 : i32 to vector<1x512xi32>
    %217 = arith.addi %3, %216 : vector<1x512xi32>
    %c16_i32_89 = arith.constant 16 : i32
    %218 = vector.broadcast %c16_i32_89 : i32 to vector<1x512xi32>
    %219 = arith.cmpi slt, %217, %218 : vector<1x512xi32>
    %220 = arith.andi %215, %219 : vector<1x512xi1>
    %c1_i32_90 = arith.constant 1 : i32
    %221 = vector.broadcast %c1_i32_90 : i32 to vector<1x512xi32>
    %222 = arith.addi %7, %221 : vector<1x512xi32>
    %c0_i32_91 = arith.constant 0 : i32
    %223 = vector.broadcast %c0_i32_91 : i32 to vector<1x512xi32>
    %224 = arith.cmpi sge, %222, %223 : vector<1x512xi32>
    %225 = arith.andi %220, %224 : vector<1x512xi1>
    %c1_i32_92 = arith.constant 1 : i32
    %226 = vector.broadcast %c1_i32_92 : i32 to vector<1x512xi32>
    %227 = arith.addi %7, %226 : vector<1x512xi32>
    %c16_i32_93 = arith.constant 16 : i32
    %228 = vector.broadcast %c16_i32_93 : i32 to vector<1x512xi32>
    %229 = arith.cmpi slt, %227, %228 : vector<1x512xi32>
    %230 = arith.andi %225, %229 : vector<1x512xi1>
    %cst_94 = arith.constant 0.000000e+00 : f32
    %231 = vector.shape_cast %230 : vector<1x512xi1> to vector<1x512xi1>
    %232 = vector.broadcast %231 : vector<1x512xi1> to vector<3x512xi1>
    %233 = vector.broadcast %cst_94 : f32 to vector<3x512xf32>
    %234 = arith.select %232, %211, %233 : vector<3x512xi1>, vector<3x512xf32>
    %235 = arith.truncf %234 : vector<3x512xf32> to vector<3x512xbf16>
    %c7 = arith.constant 7 : index
    %c0_95 = arith.constant 0 : index
    %c0_96 = arith.constant 0 : index
    %236 = vector.load %arg1[%c7, %c0_95, %c0_96] : memref<9x4x3xbf16, #tpu.memory_space<vmem>>, vector<1x4x3xbf16>
    %237 = vector.shape_cast %236 : vector<1x4x3xbf16> to vector<4x3xbf16>
    %cst_97 = arith.constant dense<0.000000e+00> : vector<4x512xf32>
    %238 = tpu.matmul %237, %235, %cst_97 {dimension_numbers = #tpu.dot_dimension_numbers<[1], [0], [0], [1], [0, 0, 1, 1], [], []>} : vector<4x3xbf16>, vector<3x512xbf16>, vector<4x512xf32> -> vector<4x512xf32>
    %239 = arith.addf %210, %238 : vector<4x512xf32>
    %c495_i32 = arith.constant 495 : i32
    %240 = tpu.dynamic_rotate %0 by %c495_i32 dim 1 : vector<3x512xf32>, i32 -> vector<3x512xf32>
    %c1_i32_98 = arith.constant 1 : i32
    %241 = vector.broadcast %c1_i32_98 : i32 to vector<1x512xi32>
    %242 = arith.addi %3, %241 : vector<1x512xi32>
    %c0_i32_99 = arith.constant 0 : i32
    %243 = vector.broadcast %c0_i32_99 : i32 to vector<1x512xi32>
    %244 = arith.cmpi sge, %242, %243 : vector<1x512xi32>
    %c1_i32_100 = arith.constant 1 : i32
    %245 = vector.broadcast %c1_i32_100 : i32 to vector<1x512xi32>
    %246 = arith.addi %3, %245 : vector<1x512xi32>
    %c16_i32_101 = arith.constant 16 : i32
    %247 = vector.broadcast %c16_i32_101 : i32 to vector<1x512xi32>
    %248 = arith.cmpi slt, %246, %247 : vector<1x512xi32>
    %249 = arith.andi %244, %248 : vector<1x512xi1>
    %c1_i32_102 = arith.constant 1 : i32
    %250 = vector.broadcast %c1_i32_102 : i32 to vector<1x512xi32>
    %251 = arith.addi %7, %250 : vector<1x512xi32>
    %c0_i32_103 = arith.constant 0 : i32
    %252 = vector.broadcast %c0_i32_103 : i32 to vector<1x512xi32>
    %253 = arith.cmpi sge, %251, %252 : vector<1x512xi32>
    %254 = arith.andi %249, %253 : vector<1x512xi1>
    %c1_i32_104 = arith.constant 1 : i32
    %255 = vector.broadcast %c1_i32_104 : i32 to vector<1x512xi32>
    %256 = arith.addi %7, %255 : vector<1x512xi32>
    %c16_i32_105 = arith.constant 16 : i32
    %257 = vector.broadcast %c16_i32_105 : i32 to vector<1x512xi32>
    %258 = arith.cmpi slt, %256, %257 : vector<1x512xi32>
    %259 = arith.andi %254, %258 : vector<1x512xi1>
    %cst_106 = arith.constant 0.000000e+00 : f32
    %260 = vector.shape_cast %259 : vector<1x512xi1> to vector<1x512xi1>
    %261 = vector.broadcast %260 : vector<1x512xi1> to vector<3x512xi1>
    %262 = vector.broadcast %cst_106 : f32 to vector<3x512xf32>
    %263 = arith.select %261, %240, %262 : vector<3x512xi1>, vector<3x512xf32>
    %264 = arith.truncf %263 : vector<3x512xf32> to vector<3x512xbf16>
    %c8 = arith.constant 8 : index
    %c0_107 = arith.constant 0 : index
    %c0_108 = arith.constant 0 : index
    %265 = vector.load %arg1[%c8, %c0_107, %c0_108] : memref<9x4x3xbf16, #tpu.memory_space<vmem>>, vector<1x4x3xbf16>
    %266 = vector.shape_cast %265 : vector<1x4x3xbf16> to vector<4x3xbf16>
    %cst_109 = arith.constant dense<0.000000e+00> : vector<4x512xf32>
    %267 = tpu.matmul %266, %264, %cst_109 {dimension_numbers = #tpu.dot_dimension_numbers<[1], [0], [0], [1], [0, 0, 1, 1], [], []>} : vector<4x3xbf16>, vector<3x512xbf16>, vector<4x512xf32> -> vector<4x512xf32>
    %268 = arith.addf %239, %267 : vector<4x512xf32>
    %c0_110 = arith.constant 0 : index
    %269 = memref.load %arg15[%c0_110] : memref<17xf32, #tpu.memory_space<smem>>
    %270 = vector.broadcast %269 : f32 to vector<4x512xf32>
    %271 = arith.addf %268, %270 : vector<4x512xf32>
    %cst_111 = arith.constant 0.000000e+00 : f32
    %272 = vector.broadcast %cst_111 : f32 to vector<4x512xf32>
    %273 = arith.maximumf %271, %272 : vector<4x512xf32>
    %c1_112 = arith.constant 1 : index
    %274 = memref.load %arg15[%c1_112] : memref<17xf32, #tpu.memory_space<smem>>
    %c2_113 = arith.constant 2 : index
    %275 = memref.load %arg15[%c2_113] : memref<17xf32, #tpu.memory_space<smem>>
    %c3_114 = arith.constant 3 : index
    %276 = memref.load %arg15[%c3_114] : memref<17xf32, #tpu.memory_space<smem>>
    %c4_115 = arith.constant 4 : index
    %277 = memref.load %arg15[%c4_115] : memref<17xf32, #tpu.memory_space<smem>>
    %c5_116 = arith.constant 5 : index
    %278 = memref.load %arg15[%c5_116] : memref<17xf32, #tpu.memory_space<smem>>
    %279 = vector.broadcast %274 : f32 to vector<4x512xf32>
    %280 = arith.addf %273, %279 : vector<4x512xf32>
    %281 = tpu.iota {dimensions = array<i32: 1>} : vector<1x512xi32>
    %c15_i32_117 = arith.constant 15 : i32
    %282 = vector.broadcast %c15_i32_117 : i32 to vector<1x512xi32>
    %283 = arith.andi %281, %282 : vector<1x512xi32>
    %c4_i32_118 = arith.constant 4 : i32
    %284 = vector.broadcast %c4_i32_118 : i32 to vector<1x512xi32>
    %285 = arith.shrsi %281, %284 : vector<1x512xi32>
    %c15_i32_119 = arith.constant 15 : i32
    %286 = vector.broadcast %c15_i32_119 : i32 to vector<1x512xi32>
    %287 = arith.andi %285, %286 : vector<1x512xi32>
    %cst_120 = arith.constant 0.000000e+00 : f32
    %288 = vector.broadcast %cst_120 : f32 to vector<4x512xf32>
    %c17_i32_121 = arith.constant 17 : i32
    %289 = tpu.dynamic_rotate %280 by %c17_i32_121 dim 1 : vector<4x512xf32>, i32 -> vector<4x512xf32>
    %c-1_i32_122 = arith.constant -1 : i32
    %290 = vector.broadcast %c-1_i32_122 : i32 to vector<1x512xi32>
    %291 = arith.addi %283, %290 : vector<1x512xi32>
    %c0_i32_123 = arith.constant 0 : i32
    %292 = vector.broadcast %c0_i32_123 : i32 to vector<1x512xi32>
    %293 = arith.cmpi sge, %291, %292 : vector<1x512xi32>
    %c-1_i32_124 = arith.constant -1 : i32
    %294 = vector.broadcast %c-1_i32_124 : i32 to vector<1x512xi32>
    %295 = arith.addi %283, %294 : vector<1x512xi32>
    %c16_i32_125 = arith.constant 16 : i32
    %296 = vector.broadcast %c16_i32_125 : i32 to vector<1x512xi32>
    %297 = arith.cmpi slt, %295, %296 : vector<1x512xi32>
    %298 = arith.andi %293, %297 : vector<1x512xi1>
    %c-1_i32_126 = arith.constant -1 : i32
    %299 = vector.broadcast %c-1_i32_126 : i32 to vector<1x512xi32>
    %300 = arith.addi %287, %299 : vector<1x512xi32>
    %c0_i32_127 = arith.constant 0 : i32
    %301 = vector.broadcast %c0_i32_127 : i32 to vector<1x512xi32>
    %302 = arith.cmpi sge, %300, %301 : vector<1x512xi32>
    %303 = arith.andi %298, %302 : vector<1x512xi1>
    %c-1_i32_128 = arith.constant -1 : i32
    %304 = vector.broadcast %c-1_i32_128 : i32 to vector<1x512xi32>
    %305 = arith.addi %287, %304 : vector<1x512xi32>
    %c16_i32_129 = arith.constant 16 : i32
    %306 = vector.broadcast %c16_i32_129 : i32 to vector<1x512xi32>
    %307 = arith.cmpi slt, %305, %306 : vector<1x512xi32>
    %308 = arith.andi %303, %307 : vector<1x512xi1>
    %cst_130 = arith.constant 0.000000e+00 : f32
    %309 = vector.shape_cast %308 : vector<1x512xi1> to vector<1x512xi1>
    %310 = vector.broadcast %309 : vector<1x512xi1> to vector<4x512xi1>
    %311 = vector.broadcast %cst_130 : f32 to vector<4x512xf32>
    %312 = arith.select %310, %289, %311 : vector<4x512xi1>, vector<4x512xf32>
    %313 = arith.truncf %312 : vector<4x512xf32> to vector<4x512xbf16>
    %c0_131 = arith.constant 0 : index
    %c0_132 = arith.constant 0 : index
    %c0_133 = arith.constant 0 : index
    %314 = vector.load %arg2[%c0_131, %c0_132, %c0_133] : memref<9x4x4xbf16, #tpu.memory_space<vmem>>, vector<1x4x4xbf16>
    %315 = vector.shape_cast %314 : vector<1x4x4xbf16> to vector<4x4xbf16>
    %cst_134 = arith.constant dense<0.000000e+00> : vector<4x512xf32>
    %316 = tpu.matmul %315, %313, %cst_134 {dimension_numbers = #tpu.dot_dimension_numbers<[1], [0], [0], [1], [0, 0, 1, 1], [], []>} : vector<4x4xbf16>, vector<4x512xbf16>, vector<4x512xf32> -> vector<4x512xf32>
    %317 = arith.addf %288, %316 : vector<4x512xf32>
    %c16_i32_135 = arith.constant 16 : i32
    %318 = tpu.dynamic_rotate %280 by %c16_i32_135 dim 1 : vector<4x512xf32>, i32 -> vector<4x512xf32>
    %c0_i32_136 = arith.constant 0 : i32
    %319 = vector.broadcast %c0_i32_136 : i32 to vector<1x512xi32>
    %320 = arith.addi %283, %319 : vector<1x512xi32>
    %c0_i32_137 = arith.constant 0 : i32
    %321 = vector.broadcast %c0_i32_137 : i32 to vector<1x512xi32>
    %322 = arith.cmpi sge, %320, %321 : vector<1x512xi32>
    %c0_i32_138 = arith.constant 0 : i32
    %323 = vector.broadcast %c0_i32_138 : i32 to vector<1x512xi32>
    %324 = arith.addi %283, %323 : vector<1x512xi32>
    %c16_i32_139 = arith.constant 16 : i32
    %325 = vector.broadcast %c16_i32_139 : i32 to vector<1x512xi32>
    %326 = arith.cmpi slt, %324, %325 : vector<1x512xi32>
    %327 = arith.andi %322, %326 : vector<1x512xi1>
    %c-1_i32_140 = arith.constant -1 : i32
    %328 = vector.broadcast %c-1_i32_140 : i32 to vector<1x512xi32>
    %329 = arith.addi %287, %328 : vector<1x512xi32>
    %c0_i32_141 = arith.constant 0 : i32
    %330 = vector.broadcast %c0_i32_141 : i32 to vector<1x512xi32>
    %331 = arith.cmpi sge, %329, %330 : vector<1x512xi32>
    %332 = arith.andi %327, %331 : vector<1x512xi1>
    %c-1_i32_142 = arith.constant -1 : i32
    %333 = vector.broadcast %c-1_i32_142 : i32 to vector<1x512xi32>
    %334 = arith.addi %287, %333 : vector<1x512xi32>
    %c16_i32_143 = arith.constant 16 : i32
    %335 = vector.broadcast %c16_i32_143 : i32 to vector<1x512xi32>
    %336 = arith.cmpi slt, %334, %335 : vector<1x512xi32>
    %337 = arith.andi %332, %336 : vector<1x512xi1>
    %cst_144 = arith.constant 0.000000e+00 : f32
    %338 = vector.shape_cast %337 : vector<1x512xi1> to vector<1x512xi1>
    %339 = vector.broadcast %338 : vector<1x512xi1> to vector<4x512xi1>
    %340 = vector.broadcast %cst_144 : f32 to vector<4x512xf32>
    %341 = arith.select %339, %318, %340 : vector<4x512xi1>, vector<4x512xf32>
    %342 = arith.truncf %341 : vector<4x512xf32> to vector<4x512xbf16>
    %c1_145 = arith.constant 1 : index
    %c0_146 = arith.constant 0 : index
    %c0_147 = arith.constant 0 : index
    %343 = vector.load %arg2[%c1_145, %c0_146, %c0_147] : memref<9x4x4xbf16, #tpu.memory_space<vmem>>, vector<1x4x4xbf16>
    %344 = vector.shape_cast %343 : vector<1x4x4xbf16> to vector<4x4xbf16>
    %cst_148 = arith.constant dense<0.000000e+00> : vector<4x512xf32>
    %345 = tpu.matmul %344, %342, %cst_148 {dimension_numbers = #tpu.dot_dimension_numbers<[1], [0], [0], [1], [0, 0, 1, 1], [], []>} : vector<4x4xbf16>, vector<4x512xbf16>, vector<4x512xf32> -> vector<4x512xf32>
    %346 = arith.addf %317, %345 : vector<4x512xf32>
    %c15_i32_149 = arith.constant 15 : i32
    %347 = tpu.dynamic_rotate %280 by %c15_i32_149 dim 1 : vector<4x512xf32>, i32 -> vector<4x512xf32>
    %c1_i32_150 = arith.constant 1 : i32
    %348 = vector.broadcast %c1_i32_150 : i32 to vector<1x512xi32>
    %349 = arith.addi %283, %348 : vector<1x512xi32>
    %c0_i32_151 = arith.constant 0 : i32
    %350 = vector.broadcast %c0_i32_151 : i32 to vector<1x512xi32>
    %351 = arith.cmpi sge, %349, %350 : vector<1x512xi32>
    %c1_i32_152 = arith.constant 1 : i32
    %352 = vector.broadcast %c1_i32_152 : i32 to vector<1x512xi32>
    %353 = arith.addi %283, %352 : vector<1x512xi32>
    %c16_i32_153 = arith.constant 16 : i32
    %354 = vector.broadcast %c16_i32_153 : i32 to vector<1x512xi32>
    %355 = arith.cmpi slt, %353, %354 : vector<1x512xi32>
    %356 = arith.andi %351, %355 : vector<1x512xi1>
    %c-1_i32_154 = arith.constant -1 : i32
    %357 = vector.broadcast %c-1_i32_154 : i32 to vector<1x512xi32>
    %358 = arith.addi %287, %357 : vector<1x512xi32>
    %c0_i32_155 = arith.constant 0 : i32
    %359 = vector.broadcast %c0_i32_155 : i32 to vector<1x512xi32>
    %360 = arith.cmpi sge, %358, %359 : vector<1x512xi32>
    %361 = arith.andi %356, %360 : vector<1x512xi1>
    %c-1_i32_156 = arith.constant -1 : i32
    %362 = vector.broadcast %c-1_i32_156 : i32 to vector<1x512xi32>
    %363 = arith.addi %287, %362 : vector<1x512xi32>
    %c16_i32_157 = arith.constant 16 : i32
    %364 = vector.broadcast %c16_i32_157 : i32 to vector<1x512xi32>
    %365 = arith.cmpi slt, %363, %364 : vector<1x512xi32>
    %366 = arith.andi %361, %365 : vector<1x512xi1>
    %cst_158 = arith.constant 0.000000e+00 : f32
    %367 = vector.shape_cast %366 : vector<1x512xi1> to vector<1x512xi1>
    %368 = vector.broadcast %367 : vector<1x512xi1> to vector<4x512xi1>
    %369 = vector.broadcast %cst_158 : f32 to vector<4x512xf32>
    %370 = arith.select %368, %347, %369 : vector<4x512xi1>, vector<4x512xf32>
    %371 = arith.truncf %370 : vector<4x512xf32> to vector<4x512xbf16>
    %c2_159 = arith.constant 2 : index
    %c0_160 = arith.constant 0 : index
    %c0_161 = arith.constant 0 : index
    %372 = vector.load %arg2[%c2_159, %c0_160, %c0_161] : memref<9x4x4xbf16, #tpu.memory_space<vmem>>, vector<1x4x4xbf16>
    %373 = vector.shape_cast %372 : vector<1x4x4xbf16> to vector<4x4xbf16>
    %cst_162 = arith.constant dense<0.000000e+00> : vector<4x512xf32>
    %374 = tpu.matmul %373, %371, %cst_162 {dimension_numbers = #tpu.dot_dimension_numbers<[1], [0], [0], [1], [0, 0, 1, 1], [], []>} : vector<4x4xbf16>, vector<4x512xbf16>, vector<4x512xf32> -> vector<4x512xf32>
    %375 = arith.addf %346, %374 : vector<4x512xf32>
    %c1_i32_163 = arith.constant 1 : i32
    %376 = tpu.dynamic_rotate %280 by %c1_i32_163 dim 1 : vector<4x512xf32>, i32 -> vector<4x512xf32>
    %c-1_i32_164 = arith.constant -1 : i32
    %377 = vector.broadcast %c-1_i32_164 : i32 to vector<1x512xi32>
    %378 = arith.addi %283, %377 : vector<1x512xi32>
    %c0_i32_165 = arith.constant 0 : i32
    %379 = vector.broadcast %c0_i32_165 : i32 to vector<1x512xi32>
    %380 = arith.cmpi sge, %378, %379 : vector<1x512xi32>
    %c-1_i32_166 = arith.constant -1 : i32
    %381 = vector.broadcast %c-1_i32_166 : i32 to vector<1x512xi32>
    %382 = arith.addi %283, %381 : vector<1x512xi32>
    %c16_i32_167 = arith.constant 16 : i32
    %383 = vector.broadcast %c16_i32_167 : i32 to vector<1x512xi32>
    %384 = arith.cmpi slt, %382, %383 : vector<1x512xi32>
    %385 = arith.andi %380, %384 : vector<1x512xi1>
    %c0_i32_168 = arith.constant 0 : i32
    %386 = vector.broadcast %c0_i32_168 : i32 to vector<1x512xi32>
    %387 = arith.addi %287, %386 : vector<1x512xi32>
    %c0_i32_169 = arith.constant 0 : i32
    %388 = vector.broadcast %c0_i32_169 : i32 to vector<1x512xi32>
    %389 = arith.cmpi sge, %387, %388 : vector<1x512xi32>
    %390 = arith.andi %385, %389 : vector<1x512xi1>
    %c0_i32_170 = arith.constant 0 : i32
    %391 = vector.broadcast %c0_i32_170 : i32 to vector<1x512xi32>
    %392 = arith.addi %287, %391 : vector<1x512xi32>
    %c16_i32_171 = arith.constant 16 : i32
    %393 = vector.broadcast %c16_i32_171 : i32 to vector<1x512xi32>
    %394 = arith.cmpi slt, %392, %393 : vector<1x512xi32>
    %395 = arith.andi %390, %394 : vector<1x512xi1>
    %cst_172 = arith.constant 0.000000e+00 : f32
    %396 = vector.shape_cast %395 : vector<1x512xi1> to vector<1x512xi1>
    %397 = vector.broadcast %396 : vector<1x512xi1> to vector<4x512xi1>
    %398 = vector.broadcast %cst_172 : f32 to vector<4x512xf32>
    %399 = arith.select %397, %376, %398 : vector<4x512xi1>, vector<4x512xf32>
    %400 = arith.truncf %399 : vector<4x512xf32> to vector<4x512xbf16>
    %c3_173 = arith.constant 3 : index
    %c0_174 = arith.constant 0 : index
    %c0_175 = arith.constant 0 : index
    %401 = vector.load %arg2[%c3_173, %c0_174, %c0_175] : memref<9x4x4xbf16, #tpu.memory_space<vmem>>, vector<1x4x4xbf16>
    %402 = vector.shape_cast %401 : vector<1x4x4xbf16> to vector<4x4xbf16>
    %cst_176 = arith.constant dense<0.000000e+00> : vector<4x512xf32>
    %403 = tpu.matmul %402, %400, %cst_176 {dimension_numbers = #tpu.dot_dimension_numbers<[1], [0], [0], [1], [0, 0, 1, 1], [], []>} : vector<4x4xbf16>, vector<4x512xbf16>, vector<4x512xf32> -> vector<4x512xf32>
    %404 = arith.addf %375, %403 : vector<4x512xf32>
    %c0_i32_177 = arith.constant 0 : i32
    %405 = vector.broadcast %c0_i32_177 : i32 to vector<1x512xi32>
    %406 = arith.addi %283, %405 : vector<1x512xi32>
    %c0_i32_178 = arith.constant 0 : i32
    %407 = vector.broadcast %c0_i32_178 : i32 to vector<1x512xi32>
    %408 = arith.cmpi sge, %406, %407 : vector<1x512xi32>
    %c0_i32_179 = arith.constant 0 : i32
    %409 = vector.broadcast %c0_i32_179 : i32 to vector<1x512xi32>
    %410 = arith.addi %283, %409 : vector<1x512xi32>
    %c16_i32_180 = arith.constant 16 : i32
    %411 = vector.broadcast %c16_i32_180 : i32 to vector<1x512xi32>
    %412 = arith.cmpi slt, %410, %411 : vector<1x512xi32>
    %413 = arith.andi %408, %412 : vector<1x512xi1>
    %c0_i32_181 = arith.constant 0 : i32
    %414 = vector.broadcast %c0_i32_181 : i32 to vector<1x512xi32>
    %415 = arith.addi %287, %414 : vector<1x512xi32>
    %c0_i32_182 = arith.constant 0 : i32
    %416 = vector.broadcast %c0_i32_182 : i32 to vector<1x512xi32>
    %417 = arith.cmpi sge, %415, %416 : vector<1x512xi32>
    %418 = arith.andi %413, %417 : vector<1x512xi1>
    %c0_i32_183 = arith.constant 0 : i32
    %419 = vector.broadcast %c0_i32_183 : i32 to vector<1x512xi32>
    %420 = arith.addi %287, %419 : vector<1x512xi32>
    %c16_i32_184 = arith.constant 16 : i32
    %421 = vector.broadcast %c16_i32_184 : i32 to vector<1x512xi32>
    %422 = arith.cmpi slt, %420, %421 : vector<1x512xi32>
    %423 = arith.andi %418, %422 : vector<1x512xi1>
    %cst_185 = arith.constant 0.000000e+00 : f32
    %424 = vector.shape_cast %423 : vector<1x512xi1> to vector<1x512xi1>
    %425 = vector.broadcast %424 : vector<1x512xi1> to vector<4x512xi1>
    %426 = vector.broadcast %cst_185 : f32 to vector<4x512xf32>
    %427 = arith.select %425, %280, %426 : vector<4x512xi1>, vector<4x512xf32>
    %428 = arith.truncf %427 : vector<4x512xf32> to vector<4x512xbf16>
    %c4_186 = arith.constant 4 : index
    %c0_187 = arith.constant 0 : index
    %c0_188 = arith.constant 0 : index
    %429 = vector.load %arg2[%c4_186, %c0_187, %c0_188] : memref<9x4x4xbf16, #tpu.memory_space<vmem>>, vector<1x4x4xbf16>
    %430 = vector.shape_cast %429 : vector<1x4x4xbf16> to vector<4x4xbf16>
    %cst_189 = arith.constant dense<0.000000e+00> : vector<4x512xf32>
    %431 = tpu.matmul %430, %428, %cst_189 {dimension_numbers = #tpu.dot_dimension_numbers<[1], [0], [0], [1], [0, 0, 1, 1], [], []>} : vector<4x4xbf16>, vector<4x512xbf16>, vector<4x512xf32> -> vector<4x512xf32>
    %432 = arith.addf %404, %431 : vector<4x512xf32>
    %c511_i32_190 = arith.constant 511 : i32
    %433 = tpu.dynamic_rotate %280 by %c511_i32_190 dim 1 : vector<4x512xf32>, i32 -> vector<4x512xf32>
    %c1_i32_191 = arith.constant 1 : i32
    %434 = vector.broadcast %c1_i32_191 : i32 to vector<1x512xi32>
    %435 = arith.addi %283, %434 : vector<1x512xi32>
    %c0_i32_192 = arith.constant 0 : i32
    %436 = vector.broadcast %c0_i32_192 : i32 to vector<1x512xi32>
    %437 = arith.cmpi sge, %435, %436 : vector<1x512xi32>
    %c1_i32_193 = arith.constant 1 : i32
    %438 = vector.broadcast %c1_i32_193 : i32 to vector<1x512xi32>
    %439 = arith.addi %283, %438 : vector<1x512xi32>
    %c16_i32_194 = arith.constant 16 : i32
    %440 = vector.broadcast %c16_i32_194 : i32 to vector<1x512xi32>
    %441 = arith.cmpi slt, %439, %440 : vector<1x512xi32>
    %442 = arith.andi %437, %441 : vector<1x512xi1>
    %c0_i32_195 = arith.constant 0 : i32
    %443 = vector.broadcast %c0_i32_195 : i32 to vector<1x512xi32>
    %444 = arith.addi %287, %443 : vector<1x512xi32>
    %c0_i32_196 = arith.constant 0 : i32
    %445 = vector.broadcast %c0_i32_196 : i32 to vector<1x512xi32>
    %446 = arith.cmpi sge, %444, %445 : vector<1x512xi32>
    %447 = arith.andi %442, %446 : vector<1x512xi1>
    %c0_i32_197 = arith.constant 0 : i32
    %448 = vector.broadcast %c0_i32_197 : i32 to vector<1x512xi32>
    %449 = arith.addi %287, %448 : vector<1x512xi32>
    %c16_i32_198 = arith.constant 16 : i32
    %450 = vector.broadcast %c16_i32_198 : i32 to vector<1x512xi32>
    %451 = arith.cmpi slt, %449, %450 : vector<1x512xi32>
    %452 = arith.andi %447, %451 : vector<1x512xi1>
    %cst_199 = arith.constant 0.000000e+00 : f32
    %453 = vector.shape_cast %452 : vector<1x512xi1> to vector<1x512xi1>
    %454 = vector.broadcast %453 : vector<1x512xi1> to vector<4x512xi1>
    %455 = vector.broadcast %cst_199 : f32 to vector<4x512xf32>
    %456 = arith.select %454, %433, %455 : vector<4x512xi1>, vector<4x512xf32>
    %457 = arith.truncf %456 : vector<4x512xf32> to vector<4x512xbf16>
    %c5_200 = arith.constant 5 : index
    %c0_201 = arith.constant 0 : index
    %c0_202 = arith.constant 0 : index
    %458 = vector.load %arg2[%c5_200, %c0_201, %c0_202] : memref<9x4x4xbf16, #tpu.memory_space<vmem>>, vector<1x4x4xbf16>
    %459 = vector.shape_cast %458 : vector<1x4x4xbf16> to vector<4x4xbf16>
    %cst_203 = arith.constant dense<0.000000e+00> : vector<4x512xf32>
    %460 = tpu.matmul %459, %457, %cst_203 {dimension_numbers = #tpu.dot_dimension_numbers<[1], [0], [0], [1], [0, 0, 1, 1], [], []>} : vector<4x4xbf16>, vector<4x512xbf16>, vector<4x512xf32> -> vector<4x512xf32>
    %461 = arith.addf %432, %460 : vector<4x512xf32>
    %c497_i32_204 = arith.constant 497 : i32
    %462 = tpu.dynamic_rotate %280 by %c497_i32_204 dim 1 : vector<4x512xf32>, i32 -> vector<4x512xf32>
    %c-1_i32_205 = arith.constant -1 : i32
    %463 = vector.broadcast %c-1_i32_205 : i32 to vector<1x512xi32>
    %464 = arith.addi %283, %463 : vector<1x512xi32>
    %c0_i32_206 = arith.constant 0 : i32
    %465 = vector.broadcast %c0_i32_206 : i32 to vector<1x512xi32>
    %466 = arith.cmpi sge, %464, %465 : vector<1x512xi32>
    %c-1_i32_207 = arith.constant -1 : i32
    %467 = vector.broadcast %c-1_i32_207 : i32 to vector<1x512xi32>
    %468 = arith.addi %283, %467 : vector<1x512xi32>
    %c16_i32_208 = arith.constant 16 : i32
    %469 = vector.broadcast %c16_i32_208 : i32 to vector<1x512xi32>
    %470 = arith.cmpi slt, %468, %469 : vector<1x512xi32>
    %471 = arith.andi %466, %470 : vector<1x512xi1>
    %c1_i32_209 = arith.constant 1 : i32
    %472 = vector.broadcast %c1_i32_209 : i32 to vector<1x512xi32>
    %473 = arith.addi %287, %472 : vector<1x512xi32>
    %c0_i32_210 = arith.constant 0 : i32
    %474 = vector.broadcast %c0_i32_210 : i32 to vector<1x512xi32>
    %475 = arith.cmpi sge, %473, %474 : vector<1x512xi32>
    %476 = arith.andi %471, %475 : vector<1x512xi1>
    %c1_i32_211 = arith.constant 1 : i32
    %477 = vector.broadcast %c1_i32_211 : i32 to vector<1x512xi32>
    %478 = arith.addi %287, %477 : vector<1x512xi32>
    %c16_i32_212 = arith.constant 16 : i32
    %479 = vector.broadcast %c16_i32_212 : i32 to vector<1x512xi32>
    %480 = arith.cmpi slt, %478, %479 : vector<1x512xi32>
    %481 = arith.andi %476, %480 : vector<1x512xi1>
    %cst_213 = arith.constant 0.000000e+00 : f32
    %482 = vector.shape_cast %481 : vector<1x512xi1> to vector<1x512xi1>
    %483 = vector.broadcast %482 : vector<1x512xi1> to vector<4x512xi1>
    %484 = vector.broadcast %cst_213 : f32 to vector<4x512xf32>
    %485 = arith.select %483, %462, %484 : vector<4x512xi1>, vector<4x512xf32>
    %486 = arith.truncf %485 : vector<4x512xf32> to vector<4x512xbf16>
    %c6_214 = arith.constant 6 : index
    %c0_215 = arith.constant 0 : index
    %c0_216 = arith.constant 0 : index
    %487 = vector.load %arg2[%c6_214, %c0_215, %c0_216] : memref<9x4x4xbf16, #tpu.memory_space<vmem>>, vector<1x4x4xbf16>
    %488 = vector.shape_cast %487 : vector<1x4x4xbf16> to vector<4x4xbf16>
    %cst_217 = arith.constant dense<0.000000e+00> : vector<4x512xf32>
    %489 = tpu.matmul %488, %486, %cst_217 {dimension_numbers = #tpu.dot_dimension_numbers<[1], [0], [0], [1], [0, 0, 1, 1], [], []>} : vector<4x4xbf16>, vector<4x512xbf16>, vector<4x512xf32> -> vector<4x512xf32>
    %490 = arith.addf %461, %489 : vector<4x512xf32>
    %c496_i32_218 = arith.constant 496 : i32
    %491 = tpu.dynamic_rotate %280 by %c496_i32_218 dim 1 : vector<4x512xf32>, i32 -> vector<4x512xf32>
    %c0_i32_219 = arith.constant 0 : i32
    %492 = vector.broadcast %c0_i32_219 : i32 to vector<1x512xi32>
    %493 = arith.addi %283, %492 : vector<1x512xi32>
    %c0_i32_220 = arith.constant 0 : i32
    %494 = vector.broadcast %c0_i32_220 : i32 to vector<1x512xi32>
    %495 = arith.cmpi sge, %493, %494 : vector<1x512xi32>
    %c0_i32_221 = arith.constant 0 : i32
    %496 = vector.broadcast %c0_i32_221 : i32 to vector<1x512xi32>
    %497 = arith.addi %283, %496 : vector<1x512xi32>
    %c16_i32_222 = arith.constant 16 : i32
    %498 = vector.broadcast %c16_i32_222 : i32 to vector<1x512xi32>
    %499 = arith.cmpi slt, %497, %498 : vector<1x512xi32>
    %500 = arith.andi %495, %499 : vector<1x512xi1>
    %c1_i32_223 = arith.constant 1 : i32
    %501 = vector.broadcast %c1_i32_223 : i32 to vector<1x512xi32>
    %502 = arith.addi %287, %501 : vector<1x512xi32>
    %c0_i32_224 = arith.constant 0 : i32
    %503 = vector.broadcast %c0_i32_224 : i32 to vector<1x512xi32>
    %504 = arith.cmpi sge, %502, %503 : vector<1x512xi32>
    %505 = arith.andi %500, %504 : vector<1x512xi1>
    %c1_i32_225 = arith.constant 1 : i32
    %506 = vector.broadcast %c1_i32_225 : i32 to vector<1x512xi32>
    %507 = arith.addi %287, %506 : vector<1x512xi32>
    %c16_i32_226 = arith.constant 16 : i32
    %508 = vector.broadcast %c16_i32_226 : i32 to vector<1x512xi32>
    %509 = arith.cmpi slt, %507, %508 : vector<1x512xi32>
    %510 = arith.andi %505, %509 : vector<1x512xi1>
    %cst_227 = arith.constant 0.000000e+00 : f32
    %511 = vector.shape_cast %510 : vector<1x512xi1> to vector<1x512xi1>
    %512 = vector.broadcast %511 : vector<1x512xi1> to vector<4x512xi1>
    %513 = vector.broadcast %cst_227 : f32 to vector<4x512xf32>
    %514 = arith.select %512, %491, %513 : vector<4x512xi1>, vector<4x512xf32>
    %515 = arith.truncf %514 : vector<4x512xf32> to vector<4x512xbf16>
    %c7_228 = arith.constant 7 : index
    %c0_229 = arith.constant 0 : index
    %c0_230 = arith.constant 0 : index
    %516 = vector.load %arg2[%c7_228, %c0_229, %c0_230] : memref<9x4x4xbf16, #tpu.memory_space<vmem>>, vector<1x4x4xbf16>
    %517 = vector.shape_cast %516 : vector<1x4x4xbf16> to vector<4x4xbf16>
    %cst_231 = arith.constant dense<0.000000e+00> : vector<4x512xf32>
    %518 = tpu.matmul %517, %515, %cst_231 {dimension_numbers = #tpu.dot_dimension_numbers<[1], [0], [0], [1], [0, 0, 1, 1], [], []>} : vector<4x4xbf16>, vector<4x512xbf16>, vector<4x512xf32> -> vector<4x512xf32>
    %519 = arith.addf %490, %518 : vector<4x512xf32>
    %c495_i32_232 = arith.constant 495 : i32
    %520 = tpu.dynamic_rotate %280 by %c495_i32_232 dim 1 : vector<4x512xf32>, i32 -> vector<4x512xf32>
    %c1_i32_233 = arith.constant 1 : i32
    %521 = vector.broadcast %c1_i32_233 : i32 to vector<1x512xi32>
    %522 = arith.addi %283, %521 : vector<1x512xi32>
    %c0_i32_234 = arith.constant 0 : i32
    %523 = vector.broadcast %c0_i32_234 : i32 to vector<1x512xi32>
    %524 = arith.cmpi sge, %522, %523 : vector<1x512xi32>
    %c1_i32_235 = arith.constant 1 : i32
    %525 = vector.broadcast %c1_i32_235 : i32 to vector<1x512xi32>
    %526 = arith.addi %283, %525 : vector<1x512xi32>
    %c16_i32_236 = arith.constant 16 : i32
    %527 = vector.broadcast %c16_i32_236 : i32 to vector<1x512xi32>
    %528 = arith.cmpi slt, %526, %527 : vector<1x512xi32>
    %529 = arith.andi %524, %528 : vector<1x512xi1>
    %c1_i32_237 = arith.constant 1 : i32
    %530 = vector.broadcast %c1_i32_237 : i32 to vector<1x512xi32>
    %531 = arith.addi %287, %530 : vector<1x512xi32>
    %c0_i32_238 = arith.constant 0 : i32
    %532 = vector.broadcast %c0_i32_238 : i32 to vector<1x512xi32>
    %533 = arith.cmpi sge, %531, %532 : vector<1x512xi32>
    %534 = arith.andi %529, %533 : vector<1x512xi1>
    %c1_i32_239 = arith.constant 1 : i32
    %535 = vector.broadcast %c1_i32_239 : i32 to vector<1x512xi32>
    %536 = arith.addi %287, %535 : vector<1x512xi32>
    %c16_i32_240 = arith.constant 16 : i32
    %537 = vector.broadcast %c16_i32_240 : i32 to vector<1x512xi32>
    %538 = arith.cmpi slt, %536, %537 : vector<1x512xi32>
    %539 = arith.andi %534, %538 : vector<1x512xi1>
    %cst_241 = arith.constant 0.000000e+00 : f32
    %540 = vector.shape_cast %539 : vector<1x512xi1> to vector<1x512xi1>
    %541 = vector.broadcast %540 : vector<1x512xi1> to vector<4x512xi1>
    %542 = vector.broadcast %cst_241 : f32 to vector<4x512xf32>
    %543 = arith.select %541, %520, %542 : vector<4x512xi1>, vector<4x512xf32>
    %544 = arith.truncf %543 : vector<4x512xf32> to vector<4x512xbf16>
    %c8_242 = arith.constant 8 : index
    %c0_243 = arith.constant 0 : index
    %c0_244 = arith.constant 0 : index
    %545 = vector.load %arg2[%c8_242, %c0_243, %c0_244] : memref<9x4x4xbf16, #tpu.memory_space<vmem>>, vector<1x4x4xbf16>
    %546 = vector.shape_cast %545 : vector<1x4x4xbf16> to vector<4x4xbf16>
    %cst_245 = arith.constant dense<0.000000e+00> : vector<4x512xf32>
    %547 = tpu.matmul %546, %544, %cst_245 {dimension_numbers = #tpu.dot_dimension_numbers<[1], [0], [0], [1], [0, 0, 1, 1], [], []>} : vector<4x4xbf16>, vector<4x512xbf16>, vector<4x512xf32> -> vector<4x512xf32>
    %548 = arith.addf %519, %547 : vector<4x512xf32>
    %549 = vector.broadcast %275 : f32 to vector<4x512xf32>
    %550 = arith.addf %548, %549 : vector<4x512xf32>
    %cst_246 = arith.constant 0.000000e+00 : f32
    %551 = vector.broadcast %cst_246 : f32 to vector<4x512xf32>
    %552 = arith.maximumf %550, %551 : vector<4x512xf32>
    %553 = vector.broadcast %276 : f32 to vector<4x512xf32>
    %554 = arith.addf %552, %553 : vector<4x512xf32>
    %555 = tpu.iota {dimensions = array<i32: 1>} : vector<1x512xi32>
    %c15_i32_247 = arith.constant 15 : i32
    %556 = vector.broadcast %c15_i32_247 : i32 to vector<1x512xi32>
    %557 = arith.andi %555, %556 : vector<1x512xi32>
    %c4_i32_248 = arith.constant 4 : i32
    %558 = vector.broadcast %c4_i32_248 : i32 to vector<1x512xi32>
    %559 = arith.shrsi %555, %558 : vector<1x512xi32>
    %c15_i32_249 = arith.constant 15 : i32
    %560 = vector.broadcast %c15_i32_249 : i32 to vector<1x512xi32>
    %561 = arith.andi %559, %560 : vector<1x512xi32>
    %cst_250 = arith.constant 0.000000e+00 : f32
    %562 = vector.broadcast %cst_250 : f32 to vector<4x512xf32>
    %c17_i32_251 = arith.constant 17 : i32
    %563 = tpu.dynamic_rotate %554 by %c17_i32_251 dim 1 : vector<4x512xf32>, i32 -> vector<4x512xf32>
    %c-1_i32_252 = arith.constant -1 : i32
    %564 = vector.broadcast %c-1_i32_252 : i32 to vector<1x512xi32>
    %565 = arith.addi %557, %564 : vector<1x512xi32>
    %c0_i32_253 = arith.constant 0 : i32
    %566 = vector.broadcast %c0_i32_253 : i32 to vector<1x512xi32>
    %567 = arith.cmpi sge, %565, %566 : vector<1x512xi32>
    %c-1_i32_254 = arith.constant -1 : i32
    %568 = vector.broadcast %c-1_i32_254 : i32 to vector<1x512xi32>
    %569 = arith.addi %557, %568 : vector<1x512xi32>
    %c16_i32_255 = arith.constant 16 : i32
    %570 = vector.broadcast %c16_i32_255 : i32 to vector<1x512xi32>
    %571 = arith.cmpi slt, %569, %570 : vector<1x512xi32>
    %572 = arith.andi %567, %571 : vector<1x512xi1>
    %c-1_i32_256 = arith.constant -1 : i32
    %573 = vector.broadcast %c-1_i32_256 : i32 to vector<1x512xi32>
    %574 = arith.addi %561, %573 : vector<1x512xi32>
    %c0_i32_257 = arith.constant 0 : i32
    %575 = vector.broadcast %c0_i32_257 : i32 to vector<1x512xi32>
    %576 = arith.cmpi sge, %574, %575 : vector<1x512xi32>
    %577 = arith.andi %572, %576 : vector<1x512xi1>
    %c-1_i32_258 = arith.constant -1 : i32
    %578 = vector.broadcast %c-1_i32_258 : i32 to vector<1x512xi32>
    %579 = arith.addi %561, %578 : vector<1x512xi32>
    %c16_i32_259 = arith.constant 16 : i32
    %580 = vector.broadcast %c16_i32_259 : i32 to vector<1x512xi32>
    %581 = arith.cmpi slt, %579, %580 : vector<1x512xi32>
    %582 = arith.andi %577, %581 : vector<1x512xi1>
    %cst_260 = arith.constant 0.000000e+00 : f32
    %583 = vector.shape_cast %582 : vector<1x512xi1> to vector<1x512xi1>
    %584 = vector.broadcast %583 : vector<1x512xi1> to vector<4x512xi1>
    %585 = vector.broadcast %cst_260 : f32 to vector<4x512xf32>
    %586 = arith.select %584, %563, %585 : vector<4x512xi1>, vector<4x512xf32>
    %587 = arith.truncf %586 : vector<4x512xf32> to vector<4x512xbf16>
    %c0_261 = arith.constant 0 : index
    %c0_262 = arith.constant 0 : index
    %c0_263 = arith.constant 0 : index
    %588 = vector.load %arg3[%c0_261, %c0_262, %c0_263] : memref<9x4x4xbf16, #tpu.memory_space<vmem>>, vector<1x4x4xbf16>
    %589 = vector.shape_cast %588 : vector<1x4x4xbf16> to vector<4x4xbf16>
    %cst_264 = arith.constant dense<0.000000e+00> : vector<4x512xf32>
    %590 = tpu.matmul %589, %587, %cst_264 {dimension_numbers = #tpu.dot_dimension_numbers<[1], [0], [0], [1], [0, 0, 1, 1], [], []>} : vector<4x4xbf16>, vector<4x512xbf16>, vector<4x512xf32> -> vector<4x512xf32>
    %591 = arith.addf %562, %590 : vector<4x512xf32>
    %c16_i32_265 = arith.constant 16 : i32
    %592 = tpu.dynamic_rotate %554 by %c16_i32_265 dim 1 : vector<4x512xf32>, i32 -> vector<4x512xf32>
    %c0_i32_266 = arith.constant 0 : i32
    %593 = vector.broadcast %c0_i32_266 : i32 to vector<1x512xi32>
    %594 = arith.addi %557, %593 : vector<1x512xi32>
    %c0_i32_267 = arith.constant 0 : i32
    %595 = vector.broadcast %c0_i32_267 : i32 to vector<1x512xi32>
    %596 = arith.cmpi sge, %594, %595 : vector<1x512xi32>
    %c0_i32_268 = arith.constant 0 : i32
    %597 = vector.broadcast %c0_i32_268 : i32 to vector<1x512xi32>
    %598 = arith.addi %557, %597 : vector<1x512xi32>
    %c16_i32_269 = arith.constant 16 : i32
    %599 = vector.broadcast %c16_i32_269 : i32 to vector<1x512xi32>
    %600 = arith.cmpi slt, %598, %599 : vector<1x512xi32>
    %601 = arith.andi %596, %600 : vector<1x512xi1>
    %c-1_i32_270 = arith.constant -1 : i32
    %602 = vector.broadcast %c-1_i32_270 : i32 to vector<1x512xi32>
    %603 = arith.addi %561, %602 : vector<1x512xi32>
    %c0_i32_271 = arith.constant 0 : i32
    %604 = vector.broadcast %c0_i32_271 : i32 to vector<1x512xi32>
    %605 = arith.cmpi sge, %603, %604 : vector<1x512xi32>
    %606 = arith.andi %601, %605 : vector<1x512xi1>
    %c-1_i32_272 = arith.constant -1 : i32
    %607 = vector.broadcast %c-1_i32_272 : i32 to vector<1x512xi32>
    %608 = arith.addi %561, %607 : vector<1x512xi32>
    %c16_i32_273 = arith.constant 16 : i32
    %609 = vector.broadcast %c16_i32_273 : i32 to vector<1x512xi32>
    %610 = arith.cmpi slt, %608, %609 : vector<1x512xi32>
    %611 = arith.andi %606, %610 : vector<1x512xi1>
    %cst_274 = arith.constant 0.000000e+00 : f32
    %612 = vector.shape_cast %611 : vector<1x512xi1> to vector<1x512xi1>
    %613 = vector.broadcast %612 : vector<1x512xi1> to vector<4x512xi1>
    %614 = vector.broadcast %cst_274 : f32 to vector<4x512xf32>
    %615 = arith.select %613, %592, %614 : vector<4x512xi1>, vector<4x512xf32>
    %616 = arith.truncf %615 : vector<4x512xf32> to vector<4x512xbf16>
    %c1_275 = arith.constant 1 : index
    %c0_276 = arith.constant 0 : index
    %c0_277 = arith.constant 0 : index
    %617 = vector.load %arg3[%c1_275, %c0_276, %c0_277] : memref<9x4x4xbf16, #tpu.memory_space<vmem>>, vector<1x4x4xbf16>
    %618 = vector.shape_cast %617 : vector<1x4x4xbf16> to vector<4x4xbf16>
    %cst_278 = arith.constant dense<0.000000e+00> : vector<4x512xf32>
    %619 = tpu.matmul %618, %616, %cst_278 {dimension_numbers = #tpu.dot_dimension_numbers<[1], [0], [0], [1], [0, 0, 1, 1], [], []>} : vector<4x4xbf16>, vector<4x512xbf16>, vector<4x512xf32> -> vector<4x512xf32>
    %620 = arith.addf %591, %619 : vector<4x512xf32>
    %c15_i32_279 = arith.constant 15 : i32
    %621 = tpu.dynamic_rotate %554 by %c15_i32_279 dim 1 : vector<4x512xf32>, i32 -> vector<4x512xf32>
    %c1_i32_280 = arith.constant 1 : i32
    %622 = vector.broadcast %c1_i32_280 : i32 to vector<1x512xi32>
    %623 = arith.addi %557, %622 : vector<1x512xi32>
    %c0_i32_281 = arith.constant 0 : i32
    %624 = vector.broadcast %c0_i32_281 : i32 to vector<1x512xi32>
    %625 = arith.cmpi sge, %623, %624 : vector<1x512xi32>
    %c1_i32_282 = arith.constant 1 : i32
    %626 = vector.broadcast %c1_i32_282 : i32 to vector<1x512xi32>
    %627 = arith.addi %557, %626 : vector<1x512xi32>
    %c16_i32_283 = arith.constant 16 : i32
    %628 = vector.broadcast %c16_i32_283 : i32 to vector<1x512xi32>
    %629 = arith.cmpi slt, %627, %628 : vector<1x512xi32>
    %630 = arith.andi %625, %629 : vector<1x512xi1>
    %c-1_i32_284 = arith.constant -1 : i32
    %631 = vector.broadcast %c-1_i32_284 : i32 to vector<1x512xi32>
    %632 = arith.addi %561, %631 : vector<1x512xi32>
    %c0_i32_285 = arith.constant 0 : i32
    %633 = vector.broadcast %c0_i32_285 : i32 to vector<1x512xi32>
    %634 = arith.cmpi sge, %632, %633 : vector<1x512xi32>
    %635 = arith.andi %630, %634 : vector<1x512xi1>
    %c-1_i32_286 = arith.constant -1 : i32
    %636 = vector.broadcast %c-1_i32_286 : i32 to vector<1x512xi32>
    %637 = arith.addi %561, %636 : vector<1x512xi32>
    %c16_i32_287 = arith.constant 16 : i32
    %638 = vector.broadcast %c16_i32_287 : i32 to vector<1x512xi32>
    %639 = arith.cmpi slt, %637, %638 : vector<1x512xi32>
    %640 = arith.andi %635, %639 : vector<1x512xi1>
    %cst_288 = arith.constant 0.000000e+00 : f32
    %641 = vector.shape_cast %640 : vector<1x512xi1> to vector<1x512xi1>
    %642 = vector.broadcast %641 : vector<1x512xi1> to vector<4x512xi1>
    %643 = vector.broadcast %cst_288 : f32 to vector<4x512xf32>
    %644 = arith.select %642, %621, %643 : vector<4x512xi1>, vector<4x512xf32>
    %645 = arith.truncf %644 : vector<4x512xf32> to vector<4x512xbf16>
    %c2_289 = arith.constant 2 : index
    %c0_290 = arith.constant 0 : index
    %c0_291 = arith.constant 0 : index
    %646 = vector.load %arg3[%c2_289, %c0_290, %c0_291] : memref<9x4x4xbf16, #tpu.memory_space<vmem>>, vector<1x4x4xbf16>
    %647 = vector.shape_cast %646 : vector<1x4x4xbf16> to vector<4x4xbf16>
    %cst_292 = arith.constant dense<0.000000e+00> : vector<4x512xf32>
    %648 = tpu.matmul %647, %645, %cst_292 {dimension_numbers = #tpu.dot_dimension_numbers<[1], [0], [0], [1], [0, 0, 1, 1], [], []>} : vector<4x4xbf16>, vector<4x512xbf16>, vector<4x512xf32> -> vector<4x512xf32>
    %649 = arith.addf %620, %648 : vector<4x512xf32>
    %c1_i32_293 = arith.constant 1 : i32
    %650 = tpu.dynamic_rotate %554 by %c1_i32_293 dim 1 : vector<4x512xf32>, i32 -> vector<4x512xf32>
    %c-1_i32_294 = arith.constant -1 : i32
    %651 = vector.broadcast %c-1_i32_294 : i32 to vector<1x512xi32>
    %652 = arith.addi %557, %651 : vector<1x512xi32>
    %c0_i32_295 = arith.constant 0 : i32
    %653 = vector.broadcast %c0_i32_295 : i32 to vector<1x512xi32>
    %654 = arith.cmpi sge, %652, %653 : vector<1x512xi32>
    %c-1_i32_296 = arith.constant -1 : i32
    %655 = vector.broadcast %c-1_i32_296 : i32 to vector<1x512xi32>
    %656 = arith.addi %557, %655 : vector<1x512xi32>
    %c16_i32_297 = arith.constant 16 : i32
    %657 = vector.broadcast %c16_i32_297 : i32 to vector<1x512xi32>
    %658 = arith.cmpi slt, %656, %657 : vector<1x512xi32>
    %659 = arith.andi %654, %658 : vector<1x512xi1>
    %c0_i32_298 = arith.constant 0 : i32
    %660 = vector.broadcast %c0_i32_298 : i32 to vector<1x512xi32>
    %661 = arith.addi %561, %660 : vector<1x512xi32>
    %c0_i32_299 = arith.constant 0 : i32
    %662 = vector.broadcast %c0_i32_299 : i32 to vector<1x512xi32>
    %663 = arith.cmpi sge, %661, %662 : vector<1x512xi32>
    %664 = arith.andi %659, %663 : vector<1x512xi1>
    %c0_i32_300 = arith.constant 0 : i32
    %665 = vector.broadcast %c0_i32_300 : i32 to vector<1x512xi32>
    %666 = arith.addi %561, %665 : vector<1x512xi32>
    %c16_i32_301 = arith.constant 16 : i32
    %667 = vector.broadcast %c16_i32_301 : i32 to vector<1x512xi32>
    %668 = arith.cmpi slt, %666, %667 : vector<1x512xi32>
    %669 = arith.andi %664, %668 : vector<1x512xi1>
    %cst_302 = arith.constant 0.000000e+00 : f32
    %670 = vector.shape_cast %669 : vector<1x512xi1> to vector<1x512xi1>
    %671 = vector.broadcast %670 : vector<1x512xi1> to vector<4x512xi1>
    %672 = vector.broadcast %cst_302 : f32 to vector<4x512xf32>
    %673 = arith.select %671, %650, %672 : vector<4x512xi1>, vector<4x512xf32>
    %674 = arith.truncf %673 : vector<4x512xf32> to vector<4x512xbf16>
    %c3_303 = arith.constant 3 : index
    %c0_304 = arith.constant 0 : index
    %c0_305 = arith.constant 0 : index
    %675 = vector.load %arg3[%c3_303, %c0_304, %c0_305] : memref<9x4x4xbf16, #tpu.memory_space<vmem>>, vector<1x4x4xbf16>
    %676 = vector.shape_cast %675 : vector<1x4x4xbf16> to vector<4x4xbf16>
    %cst_306 = arith.constant dense<0.000000e+00> : vector<4x512xf32>
    %677 = tpu.matmul %676, %674, %cst_306 {dimension_numbers = #tpu.dot_dimension_numbers<[1], [0], [0], [1], [0, 0, 1, 1], [], []>} : vector<4x4xbf16>, vector<4x512xbf16>, vector<4x512xf32> -> vector<4x512xf32>
    %678 = arith.addf %649, %677 : vector<4x512xf32>
    %c0_i32_307 = arith.constant 0 : i32
    %679 = vector.broadcast %c0_i32_307 : i32 to vector<1x512xi32>
    %680 = arith.addi %557, %679 : vector<1x512xi32>
    %c0_i32_308 = arith.constant 0 : i32
    %681 = vector.broadcast %c0_i32_308 : i32 to vector<1x512xi32>
    %682 = arith.cmpi sge, %680, %681 : vector<1x512xi32>
    %c0_i32_309 = arith.constant 0 : i32
    %683 = vector.broadcast %c0_i32_309 : i32 to vector<1x512xi32>
    %684 = arith.addi %557, %683 : vector<1x512xi32>
    %c16_i32_310 = arith.constant 16 : i32
    %685 = vector.broadcast %c16_i32_310 : i32 to vector<1x512xi32>
    %686 = arith.cmpi slt, %684, %685 : vector<1x512xi32>
    %687 = arith.andi %682, %686 : vector<1x512xi1>
    %c0_i32_311 = arith.constant 0 : i32
    %688 = vector.broadcast %c0_i32_311 : i32 to vector<1x512xi32>
    %689 = arith.addi %561, %688 : vector<1x512xi32>
    %c0_i32_312 = arith.constant 0 : i32
    %690 = vector.broadcast %c0_i32_312 : i32 to vector<1x512xi32>
    %691 = arith.cmpi sge, %689, %690 : vector<1x512xi32>
    %692 = arith.andi %687, %691 : vector<1x512xi1>
    %c0_i32_313 = arith.constant 0 : i32
    %693 = vector.broadcast %c0_i32_313 : i32 to vector<1x512xi32>
    %694 = arith.addi %561, %693 : vector<1x512xi32>
    %c16_i32_314 = arith.constant 16 : i32
    %695 = vector.broadcast %c16_i32_314 : i32 to vector<1x512xi32>
    %696 = arith.cmpi slt, %694, %695 : vector<1x512xi32>
    %697 = arith.andi %692, %696 : vector<1x512xi1>
    %cst_315 = arith.constant 0.000000e+00 : f32
    %698 = vector.shape_cast %697 : vector<1x512xi1> to vector<1x512xi1>
    %699 = vector.broadcast %698 : vector<1x512xi1> to vector<4x512xi1>
    %700 = vector.broadcast %cst_315 : f32 to vector<4x512xf32>
    %701 = arith.select %699, %554, %700 : vector<4x512xi1>, vector<4x512xf32>
    %702 = arith.truncf %701 : vector<4x512xf32> to vector<4x512xbf16>
    %c4_316 = arith.constant 4 : index
    %c0_317 = arith.constant 0 : index
    %c0_318 = arith.constant 0 : index
    %703 = vector.load %arg3[%c4_316, %c0_317, %c0_318] : memref<9x4x4xbf16, #tpu.memory_space<vmem>>, vector<1x4x4xbf16>
    %704 = vector.shape_cast %703 : vector<1x4x4xbf16> to vector<4x4xbf16>
    %cst_319 = arith.constant dense<0.000000e+00> : vector<4x512xf32>
    %705 = tpu.matmul %704, %702, %cst_319 {dimension_numbers = #tpu.dot_dimension_numbers<[1], [0], [0], [1], [0, 0, 1, 1], [], []>} : vector<4x4xbf16>, vector<4x512xbf16>, vector<4x512xf32> -> vector<4x512xf32>
    %706 = arith.addf %678, %705 : vector<4x512xf32>
    %c511_i32_320 = arith.constant 511 : i32
    %707 = tpu.dynamic_rotate %554 by %c511_i32_320 dim 1 : vector<4x512xf32>, i32 -> vector<4x512xf32>
    %c1_i32_321 = arith.constant 1 : i32
    %708 = vector.broadcast %c1_i32_321 : i32 to vector<1x512xi32>
    %709 = arith.addi %557, %708 : vector<1x512xi32>
    %c0_i32_322 = arith.constant 0 : i32
    %710 = vector.broadcast %c0_i32_322 : i32 to vector<1x512xi32>
    %711 = arith.cmpi sge, %709, %710 : vector<1x512xi32>
    %c1_i32_323 = arith.constant 1 : i32
    %712 = vector.broadcast %c1_i32_323 : i32 to vector<1x512xi32>
    %713 = arith.addi %557, %712 : vector<1x512xi32>
    %c16_i32_324 = arith.constant 16 : i32
    %714 = vector.broadcast %c16_i32_324 : i32 to vector<1x512xi32>
    %715 = arith.cmpi slt, %713, %714 : vector<1x512xi32>
    %716 = arith.andi %711, %715 : vector<1x512xi1>
    %c0_i32_325 = arith.constant 0 : i32
    %717 = vector.broadcast %c0_i32_325 : i32 to vector<1x512xi32>
    %718 = arith.addi %561, %717 : vector<1x512xi32>
    %c0_i32_326 = arith.constant 0 : i32
    %719 = vector.broadcast %c0_i32_326 : i32 to vector<1x512xi32>
    %720 = arith.cmpi sge, %718, %719 : vector<1x512xi32>
    %721 = arith.andi %716, %720 : vector<1x512xi1>
    %c0_i32_327 = arith.constant 0 : i32
    %722 = vector.broadcast %c0_i32_327 : i32 to vector<1x512xi32>
    %723 = arith.addi %561, %722 : vector<1x512xi32>
    %c16_i32_328 = arith.constant 16 : i32
    %724 = vector.broadcast %c16_i32_328 : i32 to vector<1x512xi32>
    %725 = arith.cmpi slt, %723, %724 : vector<1x512xi32>
    %726 = arith.andi %721, %725 : vector<1x512xi1>
    %cst_329 = arith.constant 0.000000e+00 : f32
    %727 = vector.shape_cast %726 : vector<1x512xi1> to vector<1x512xi1>
    %728 = vector.broadcast %727 : vector<1x512xi1> to vector<4x512xi1>
    %729 = vector.broadcast %cst_329 : f32 to vector<4x512xf32>
    %730 = arith.select %728, %707, %729 : vector<4x512xi1>, vector<4x512xf32>
    %731 = arith.truncf %730 : vector<4x512xf32> to vector<4x512xbf16>
    %c5_330 = arith.constant 5 : index
    %c0_331 = arith.constant 0 : index
    %c0_332 = arith.constant 0 : index
    %732 = vector.load %arg3[%c5_330, %c0_331, %c0_332] : memref<9x4x4xbf16, #tpu.memory_space<vmem>>, vector<1x4x4xbf16>
    %733 = vector.shape_cast %732 : vector<1x4x4xbf16> to vector<4x4xbf16>
    %cst_333 = arith.constant dense<0.000000e+00> : vector<4x512xf32>
    %734 = tpu.matmul %733, %731, %cst_333 {dimension_numbers = #tpu.dot_dimension_numbers<[1], [0], [0], [1], [0, 0, 1, 1], [], []>} : vector<4x4xbf16>, vector<4x512xbf16>, vector<4x512xf32> -> vector<4x512xf32>
    %735 = arith.addf %706, %734 : vector<4x512xf32>
    %c497_i32_334 = arith.constant 497 : i32
    %736 = tpu.dynamic_rotate %554 by %c497_i32_334 dim 1 : vector<4x512xf32>, i32 -> vector<4x512xf32>
    %c-1_i32_335 = arith.constant -1 : i32
    %737 = vector.broadcast %c-1_i32_335 : i32 to vector<1x512xi32>
    %738 = arith.addi %557, %737 : vector<1x512xi32>
    %c0_i32_336 = arith.constant 0 : i32
    %739 = vector.broadcast %c0_i32_336 : i32 to vector<1x512xi32>
    %740 = arith.cmpi sge, %738, %739 : vector<1x512xi32>
    %c-1_i32_337 = arith.constant -1 : i32
    %741 = vector.broadcast %c-1_i32_337 : i32 to vector<1x512xi32>
    %742 = arith.addi %557, %741 : vector<1x512xi32>
    %c16_i32_338 = arith.constant 16 : i32
    %743 = vector.broadcast %c16_i32_338 : i32 to vector<1x512xi32>
    %744 = arith.cmpi slt, %742, %743 : vector<1x512xi32>
    %745 = arith.andi %740, %744 : vector<1x512xi1>
    %c1_i32_339 = arith.constant 1 : i32
    %746 = vector.broadcast %c1_i32_339 : i32 to vector<1x512xi32>
    %747 = arith.addi %561, %746 : vector<1x512xi32>
    %c0_i32_340 = arith.constant 0 : i32
    %748 = vector.broadcast %c0_i32_340 : i32 to vector<1x512xi32>
    %749 = arith.cmpi sge, %747, %748 : vector<1x512xi32>
    %750 = arith.andi %745, %749 : vector<1x512xi1>
    %c1_i32_341 = arith.constant 1 : i32
    %751 = vector.broadcast %c1_i32_341 : i32 to vector<1x512xi32>
    %752 = arith.addi %561, %751 : vector<1x512xi32>
    %c16_i32_342 = arith.constant 16 : i32
    %753 = vector.broadcast %c16_i32_342 : i32 to vector<1x512xi32>
    %754 = arith.cmpi slt, %752, %753 : vector<1x512xi32>
    %755 = arith.andi %750, %754 : vector<1x512xi1>
    %cst_343 = arith.constant 0.000000e+00 : f32
    %756 = vector.shape_cast %755 : vector<1x512xi1> to vector<1x512xi1>
    %757 = vector.broadcast %756 : vector<1x512xi1> to vector<4x512xi1>
    %758 = vector.broadcast %cst_343 : f32 to vector<4x512xf32>
    %759 = arith.select %757, %736, %758 : vector<4x512xi1>, vector<4x512xf32>
    %760 = arith.truncf %759 : vector<4x512xf32> to vector<4x512xbf16>
    %c6_344 = arith.constant 6 : index
    %c0_345 = arith.constant 0 : index
    %c0_346 = arith.constant 0 : index
    %761 = vector.load %arg3[%c6_344, %c0_345, %c0_346] : memref<9x4x4xbf16, #tpu.memory_space<vmem>>, vector<1x4x4xbf16>
    %762 = vector.shape_cast %761 : vector<1x4x4xbf16> to vector<4x4xbf16>
    %cst_347 = arith.constant dense<0.000000e+00> : vector<4x512xf32>
    %763 = tpu.matmul %762, %760, %cst_347 {dimension_numbers = #tpu.dot_dimension_numbers<[1], [0], [0], [1], [0, 0, 1, 1], [], []>} : vector<4x4xbf16>, vector<4x512xbf16>, vector<4x512xf32> -> vector<4x512xf32>
    %764 = arith.addf %735, %763 : vector<4x512xf32>
    %c496_i32_348 = arith.constant 496 : i32
    %765 = tpu.dynamic_rotate %554 by %c496_i32_348 dim 1 : vector<4x512xf32>, i32 -> vector<4x512xf32>
    %c0_i32_349 = arith.constant 0 : i32
    %766 = vector.broadcast %c0_i32_349 : i32 to vector<1x512xi32>
    %767 = arith.addi %557, %766 : vector<1x512xi32>
    %c0_i32_350 = arith.constant 0 : i32
    %768 = vector.broadcast %c0_i32_350 : i32 to vector<1x512xi32>
    %769 = arith.cmpi sge, %767, %768 : vector<1x512xi32>
    %c0_i32_351 = arith.constant 0 : i32
    %770 = vector.broadcast %c0_i32_351 : i32 to vector<1x512xi32>
    %771 = arith.addi %557, %770 : vector<1x512xi32>
    %c16_i32_352 = arith.constant 16 : i32
    %772 = vector.broadcast %c16_i32_352 : i32 to vector<1x512xi32>
    %773 = arith.cmpi slt, %771, %772 : vector<1x512xi32>
    %774 = arith.andi %769, %773 : vector<1x512xi1>
    %c1_i32_353 = arith.constant 1 : i32
    %775 = vector.broadcast %c1_i32_353 : i32 to vector<1x512xi32>
    %776 = arith.addi %561, %775 : vector<1x512xi32>
    %c0_i32_354 = arith.constant 0 : i32
    %777 = vector.broadcast %c0_i32_354 : i32 to vector<1x512xi32>
    %778 = arith.cmpi sge, %776, %777 : vector<1x512xi32>
    %779 = arith.andi %774, %778 : vector<1x512xi1>
    %c1_i32_355 = arith.constant 1 : i32
    %780 = vector.broadcast %c1_i32_355 : i32 to vector<1x512xi32>
    %781 = arith.addi %561, %780 : vector<1x512xi32>
    %c16_i32_356 = arith.constant 16 : i32
    %782 = vector.broadcast %c16_i32_356 : i32 to vector<1x512xi32>
    %783 = arith.cmpi slt, %781, %782 : vector<1x512xi32>
    %784 = arith.andi %779, %783 : vector<1x512xi1>
    %cst_357 = arith.constant 0.000000e+00 : f32
    %785 = vector.shape_cast %784 : vector<1x512xi1> to vector<1x512xi1>
    %786 = vector.broadcast %785 : vector<1x512xi1> to vector<4x512xi1>
    %787 = vector.broadcast %cst_357 : f32 to vector<4x512xf32>
    %788 = arith.select %786, %765, %787 : vector<4x512xi1>, vector<4x512xf32>
    %789 = arith.truncf %788 : vector<4x512xf32> to vector<4x512xbf16>
    %c7_358 = arith.constant 7 : index
    %c0_359 = arith.constant 0 : index
    %c0_360 = arith.constant 0 : index
    %790 = vector.load %arg3[%c7_358, %c0_359, %c0_360] : memref<9x4x4xbf16, #tpu.memory_space<vmem>>, vector<1x4x4xbf16>
    %791 = vector.shape_cast %790 : vector<1x4x4xbf16> to vector<4x4xbf16>
    %cst_361 = arith.constant dense<0.000000e+00> : vector<4x512xf32>
    %792 = tpu.matmul %791, %789, %cst_361 {dimension_numbers = #tpu.dot_dimension_numbers<[1], [0], [0], [1], [0, 0, 1, 1], [], []>} : vector<4x4xbf16>, vector<4x512xbf16>, vector<4x512xf32> -> vector<4x512xf32>
    %793 = arith.addf %764, %792 : vector<4x512xf32>
    %c495_i32_362 = arith.constant 495 : i32
    %794 = tpu.dynamic_rotate %554 by %c495_i32_362 dim 1 : vector<4x512xf32>, i32 -> vector<4x512xf32>
    %c1_i32_363 = arith.constant 1 : i32
    %795 = vector.broadcast %c1_i32_363 : i32 to vector<1x512xi32>
    %796 = arith.addi %557, %795 : vector<1x512xi32>
    %c0_i32_364 = arith.constant 0 : i32
    %797 = vector.broadcast %c0_i32_364 : i32 to vector<1x512xi32>
    %798 = arith.cmpi sge, %796, %797 : vector<1x512xi32>
    %c1_i32_365 = arith.constant 1 : i32
    %799 = vector.broadcast %c1_i32_365 : i32 to vector<1x512xi32>
    %800 = arith.addi %557, %799 : vector<1x512xi32>
    %c16_i32_366 = arith.constant 16 : i32
    %801 = vector.broadcast %c16_i32_366 : i32 to vector<1x512xi32>
    %802 = arith.cmpi slt, %800, %801 : vector<1x512xi32>
    %803 = arith.andi %798, %802 : vector<1x512xi1>
    %c1_i32_367 = arith.constant 1 : i32
    %804 = vector.broadcast %c1_i32_367 : i32 to vector<1x512xi32>
    %805 = arith.addi %561, %804 : vector<1x512xi32>
    %c0_i32_368 = arith.constant 0 : i32
    %806 = vector.broadcast %c0_i32_368 : i32 to vector<1x512xi32>
    %807 = arith.cmpi sge, %805, %806 : vector<1x512xi32>
    %808 = arith.andi %803, %807 : vector<1x512xi1>
    %c1_i32_369 = arith.constant 1 : i32
    %809 = vector.broadcast %c1_i32_369 : i32 to vector<1x512xi32>
    %810 = arith.addi %561, %809 : vector<1x512xi32>
    %c16_i32_370 = arith.constant 16 : i32
    %811 = vector.broadcast %c16_i32_370 : i32 to vector<1x512xi32>
    %812 = arith.cmpi slt, %810, %811 : vector<1x512xi32>
    %813 = arith.andi %808, %812 : vector<1x512xi1>
    %cst_371 = arith.constant 0.000000e+00 : f32
    %814 = vector.shape_cast %813 : vector<1x512xi1> to vector<1x512xi1>
    %815 = vector.broadcast %814 : vector<1x512xi1> to vector<4x512xi1>
    %816 = vector.broadcast %cst_371 : f32 to vector<4x512xf32>
    %817 = arith.select %815, %794, %816 : vector<4x512xi1>, vector<4x512xf32>
    %818 = arith.truncf %817 : vector<4x512xf32> to vector<4x512xbf16>
    %c8_372 = arith.constant 8 : index
    %c0_373 = arith.constant 0 : index
    %c0_374 = arith.constant 0 : index
    %819 = vector.load %arg3[%c8_372, %c0_373, %c0_374] : memref<9x4x4xbf16, #tpu.memory_space<vmem>>, vector<1x4x4xbf16>
    %820 = vector.shape_cast %819 : vector<1x4x4xbf16> to vector<4x4xbf16>
    %cst_375 = arith.constant dense<0.000000e+00> : vector<4x512xf32>
    %821 = tpu.matmul %820, %818, %cst_375 {dimension_numbers = #tpu.dot_dimension_numbers<[1], [0], [0], [1], [0, 0, 1, 1], [], []>} : vector<4x4xbf16>, vector<4x512xbf16>, vector<4x512xf32> -> vector<4x512xf32>
    %822 = arith.addf %793, %821 : vector<4x512xf32>
    %823 = vector.broadcast %278 : f32 to vector<4x512xf32>
    %824 = arith.mulf %822, %823 : vector<4x512xf32>
    %825 = vector.broadcast %277 : f32 to vector<4x512xf32>
    %826 = arith.addf %824, %825 : vector<4x512xf32>
    %827 = arith.addf %826, %273 : vector<4x512xf32>
    %cst_376 = arith.constant 0.000000e+00 : f32
    %828 = vector.broadcast %cst_376 : f32 to vector<4x512xf32>
    %829 = arith.maximumf %827, %828 : vector<4x512xf32>
    %c6_377 = arith.constant 6 : index
    %830 = memref.load %arg15[%c6_377] : memref<17xf32, #tpu.memory_space<smem>>
    %c7_378 = arith.constant 7 : index
    %831 = memref.load %arg15[%c7_378] : memref<17xf32, #tpu.memory_space<smem>>
    %c8_379 = arith.constant 8 : index
    %832 = memref.load %arg15[%c8_379] : memref<17xf32, #tpu.memory_space<smem>>
    %c9 = arith.constant 9 : index
    %833 = memref.load %arg15[%c9] : memref<17xf32, #tpu.memory_space<smem>>
    %c10 = arith.constant 10 : index
    %834 = memref.load %arg15[%c10] : memref<17xf32, #tpu.memory_space<smem>>
    %835 = vector.broadcast %830 : f32 to vector<4x512xf32>
    %836 = arith.addf %829, %835 : vector<4x512xf32>
    %837 = tpu.iota {dimensions = array<i32: 1>} : vector<1x512xi32>
    %c15_i32_380 = arith.constant 15 : i32
    %838 = vector.broadcast %c15_i32_380 : i32 to vector<1x512xi32>
    %839 = arith.andi %837, %838 : vector<1x512xi32>
    %c4_i32_381 = arith.constant 4 : i32
    %840 = vector.broadcast %c4_i32_381 : i32 to vector<1x512xi32>
    %841 = arith.shrsi %837, %840 : vector<1x512xi32>
    %c15_i32_382 = arith.constant 15 : i32
    %842 = vector.broadcast %c15_i32_382 : i32 to vector<1x512xi32>
    %843 = arith.andi %841, %842 : vector<1x512xi32>
    %cst_383 = arith.constant 0.000000e+00 : f32
    %844 = vector.broadcast %cst_383 : f32 to vector<8x512xf32>
    %c17_i32_384 = arith.constant 17 : i32
    %845 = tpu.dynamic_rotate %836 by %c17_i32_384 dim 1 : vector<4x512xf32>, i32 -> vector<4x512xf32>
    %c-1_i32_385 = arith.constant -1 : i32
    %846 = vector.broadcast %c-1_i32_385 : i32 to vector<1x512xi32>
    %847 = arith.addi %839, %846 : vector<1x512xi32>
    %c0_i32_386 = arith.constant 0 : i32
    %848 = vector.broadcast %c0_i32_386 : i32 to vector<1x512xi32>
    %849 = arith.cmpi sge, %847, %848 : vector<1x512xi32>
    %c-1_i32_387 = arith.constant -1 : i32
    %850 = vector.broadcast %c-1_i32_387 : i32 to vector<1x512xi32>
    %851 = arith.addi %839, %850 : vector<1x512xi32>
    %c16_i32_388 = arith.constant 16 : i32
    %852 = vector.broadcast %c16_i32_388 : i32 to vector<1x512xi32>
    %853 = arith.cmpi slt, %851, %852 : vector<1x512xi32>
    %854 = arith.andi %849, %853 : vector<1x512xi1>
    %c-1_i32_389 = arith.constant -1 : i32
    %855 = vector.broadcast %c-1_i32_389 : i32 to vector<1x512xi32>
    %856 = arith.addi %843, %855 : vector<1x512xi32>
    %c0_i32_390 = arith.constant 0 : i32
    %857 = vector.broadcast %c0_i32_390 : i32 to vector<1x512xi32>
    %858 = arith.cmpi sge, %856, %857 : vector<1x512xi32>
    %859 = arith.andi %854, %858 : vector<1x512xi1>
    %c-1_i32_391 = arith.constant -1 : i32
    %860 = vector.broadcast %c-1_i32_391 : i32 to vector<1x512xi32>
    %861 = arith.addi %843, %860 : vector<1x512xi32>
    %c16_i32_392 = arith.constant 16 : i32
    %862 = vector.broadcast %c16_i32_392 : i32 to vector<1x512xi32>
    %863 = arith.cmpi slt, %861, %862 : vector<1x512xi32>
    %864 = arith.andi %859, %863 : vector<1x512xi1>
    %cst_393 = arith.constant 0.000000e+00 : f32
    %865 = vector.shape_cast %864 : vector<1x512xi1> to vector<1x512xi1>
    %866 = vector.broadcast %865 : vector<1x512xi1> to vector<4x512xi1>
    %867 = vector.broadcast %cst_393 : f32 to vector<4x512xf32>
    %868 = arith.select %866, %845, %867 : vector<4x512xi1>, vector<4x512xf32>
    %869 = arith.truncf %868 : vector<4x512xf32> to vector<4x512xbf16>
    %c0_394 = arith.constant 0 : index
    %c0_395 = arith.constant 0 : index
    %c0_396 = arith.constant 0 : index
    %870 = vector.load %arg4[%c0_394, %c0_395, %c0_396] : memref<9x8x4xbf16, #tpu.memory_space<vmem>>, vector<1x8x4xbf16>
    %871 = vector.shape_cast %870 : vector<1x8x4xbf16> to vector<8x4xbf16>
    %cst_397 = arith.constant dense<0.000000e+00> : vector<8x512xf32>
    %872 = tpu.matmul %871, %869, %cst_397 {dimension_numbers = #tpu.dot_dimension_numbers<[1], [0], [0], [1], [0, 0, 1, 1], [], []>} : vector<8x4xbf16>, vector<4x512xbf16>, vector<8x512xf32> -> vector<8x512xf32>
    %873 = arith.addf %844, %872 : vector<8x512xf32>
    %c16_i32_398 = arith.constant 16 : i32
    %874 = tpu.dynamic_rotate %836 by %c16_i32_398 dim 1 : vector<4x512xf32>, i32 -> vector<4x512xf32>
    %c0_i32_399 = arith.constant 0 : i32
    %875 = vector.broadcast %c0_i32_399 : i32 to vector<1x512xi32>
    %876 = arith.addi %839, %875 : vector<1x512xi32>
    %c0_i32_400 = arith.constant 0 : i32
    %877 = vector.broadcast %c0_i32_400 : i32 to vector<1x512xi32>
    %878 = arith.cmpi sge, %876, %877 : vector<1x512xi32>
    %c0_i32_401 = arith.constant 0 : i32
    %879 = vector.broadcast %c0_i32_401 : i32 to vector<1x512xi32>
    %880 = arith.addi %839, %879 : vector<1x512xi32>
    %c16_i32_402 = arith.constant 16 : i32
    %881 = vector.broadcast %c16_i32_402 : i32 to vector<1x512xi32>
    %882 = arith.cmpi slt, %880, %881 : vector<1x512xi32>
    %883 = arith.andi %878, %882 : vector<1x512xi1>
    %c-1_i32_403 = arith.constant -1 : i32
    %884 = vector.broadcast %c-1_i32_403 : i32 to vector<1x512xi32>
    %885 = arith.addi %843, %884 : vector<1x512xi32>
    %c0_i32_404 = arith.constant 0 : i32
    %886 = vector.broadcast %c0_i32_404 : i32 to vector<1x512xi32>
    %887 = arith.cmpi sge, %885, %886 : vector<1x512xi32>
    %888 = arith.andi %883, %887 : vector<1x512xi1>
    %c-1_i32_405 = arith.constant -1 : i32
    %889 = vector.broadcast %c-1_i32_405 : i32 to vector<1x512xi32>
    %890 = arith.addi %843, %889 : vector<1x512xi32>
    %c16_i32_406 = arith.constant 16 : i32
    %891 = vector.broadcast %c16_i32_406 : i32 to vector<1x512xi32>
    %892 = arith.cmpi slt, %890, %891 : vector<1x512xi32>
    %893 = arith.andi %888, %892 : vector<1x512xi1>
    %cst_407 = arith.constant 0.000000e+00 : f32
    %894 = vector.shape_cast %893 : vector<1x512xi1> to vector<1x512xi1>
    %895 = vector.broadcast %894 : vector<1x512xi1> to vector<4x512xi1>
    %896 = vector.broadcast %cst_407 : f32 to vector<4x512xf32>
    %897 = arith.select %895, %874, %896 : vector<4x512xi1>, vector<4x512xf32>
    %898 = arith.truncf %897 : vector<4x512xf32> to vector<4x512xbf16>
    %c1_408 = arith.constant 1 : index
    %c0_409 = arith.constant 0 : index
    %c0_410 = arith.constant 0 : index
    %899 = vector.load %arg4[%c1_408, %c0_409, %c0_410] : memref<9x8x4xbf16, #tpu.memory_space<vmem>>, vector<1x8x4xbf16>
    %900 = vector.shape_cast %899 : vector<1x8x4xbf16> to vector<8x4xbf16>
    %cst_411 = arith.constant dense<0.000000e+00> : vector<8x512xf32>
    %901 = tpu.matmul %900, %898, %cst_411 {dimension_numbers = #tpu.dot_dimension_numbers<[1], [0], [0], [1], [0, 0, 1, 1], [], []>} : vector<8x4xbf16>, vector<4x512xbf16>, vector<8x512xf32> -> vector<8x512xf32>
    %902 = arith.addf %873, %901 : vector<8x512xf32>
    %c15_i32_412 = arith.constant 15 : i32
    %903 = tpu.dynamic_rotate %836 by %c15_i32_412 dim 1 : vector<4x512xf32>, i32 -> vector<4x512xf32>
    %c1_i32_413 = arith.constant 1 : i32
    %904 = vector.broadcast %c1_i32_413 : i32 to vector<1x512xi32>
    %905 = arith.addi %839, %904 : vector<1x512xi32>
    %c0_i32_414 = arith.constant 0 : i32
    %906 = vector.broadcast %c0_i32_414 : i32 to vector<1x512xi32>
    %907 = arith.cmpi sge, %905, %906 : vector<1x512xi32>
    %c1_i32_415 = arith.constant 1 : i32
    %908 = vector.broadcast %c1_i32_415 : i32 to vector<1x512xi32>
    %909 = arith.addi %839, %908 : vector<1x512xi32>
    %c16_i32_416 = arith.constant 16 : i32
    %910 = vector.broadcast %c16_i32_416 : i32 to vector<1x512xi32>
    %911 = arith.cmpi slt, %909, %910 : vector<1x512xi32>
    %912 = arith.andi %907, %911 : vector<1x512xi1>
    %c-1_i32_417 = arith.constant -1 : i32
    %913 = vector.broadcast %c-1_i32_417 : i32 to vector<1x512xi32>
    %914 = arith.addi %843, %913 : vector<1x512xi32>
    %c0_i32_418 = arith.constant 0 : i32
    %915 = vector.broadcast %c0_i32_418 : i32 to vector<1x512xi32>
    %916 = arith.cmpi sge, %914, %915 : vector<1x512xi32>
    %917 = arith.andi %912, %916 : vector<1x512xi1>
    %c-1_i32_419 = arith.constant -1 : i32
    %918 = vector.broadcast %c-1_i32_419 : i32 to vector<1x512xi32>
    %919 = arith.addi %843, %918 : vector<1x512xi32>
    %c16_i32_420 = arith.constant 16 : i32
    %920 = vector.broadcast %c16_i32_420 : i32 to vector<1x512xi32>
    %921 = arith.cmpi slt, %919, %920 : vector<1x512xi32>
    %922 = arith.andi %917, %921 : vector<1x512xi1>
    %cst_421 = arith.constant 0.000000e+00 : f32
    %923 = vector.shape_cast %922 : vector<1x512xi1> to vector<1x512xi1>
    %924 = vector.broadcast %923 : vector<1x512xi1> to vector<4x512xi1>
    %925 = vector.broadcast %cst_421 : f32 to vector<4x512xf32>
    %926 = arith.select %924, %903, %925 : vector<4x512xi1>, vector<4x512xf32>
    %927 = arith.truncf %926 : vector<4x512xf32> to vector<4x512xbf16>
    %c2_422 = arith.constant 2 : index
    %c0_423 = arith.constant 0 : index
    %c0_424 = arith.constant 0 : index
    %928 = vector.load %arg4[%c2_422, %c0_423, %c0_424] : memref<9x8x4xbf16, #tpu.memory_space<vmem>>, vector<1x8x4xbf16>
    %929 = vector.shape_cast %928 : vector<1x8x4xbf16> to vector<8x4xbf16>
    %cst_425 = arith.constant dense<0.000000e+00> : vector<8x512xf32>
    %930 = tpu.matmul %929, %927, %cst_425 {dimension_numbers = #tpu.dot_dimension_numbers<[1], [0], [0], [1], [0, 0, 1, 1], [], []>} : vector<8x4xbf16>, vector<4x512xbf16>, vector<8x512xf32> -> vector<8x512xf32>
    %931 = arith.addf %902, %930 : vector<8x512xf32>
    %c1_i32_426 = arith.constant 1 : i32
    %932 = tpu.dynamic_rotate %836 by %c1_i32_426 dim 1 : vector<4x512xf32>, i32 -> vector<4x512xf32>
    %c-1_i32_427 = arith.constant -1 : i32
    %933 = vector.broadcast %c-1_i32_427 : i32 to vector<1x512xi32>
    %934 = arith.addi %839, %933 : vector<1x512xi32>
    %c0_i32_428 = arith.constant 0 : i32
    %935 = vector.broadcast %c0_i32_428 : i32 to vector<1x512xi32>
    %936 = arith.cmpi sge, %934, %935 : vector<1x512xi32>
    %c-1_i32_429 = arith.constant -1 : i32
    %937 = vector.broadcast %c-1_i32_429 : i32 to vector<1x512xi32>
    %938 = arith.addi %839, %937 : vector<1x512xi32>
    %c16_i32_430 = arith.constant 16 : i32
    %939 = vector.broadcast %c16_i32_430 : i32 to vector<1x512xi32>
    %940 = arith.cmpi slt, %938, %939 : vector<1x512xi32>
    %941 = arith.andi %936, %940 : vector<1x512xi1>
    %c0_i32_431 = arith.constant 0 : i32
    %942 = vector.broadcast %c0_i32_431 : i32 to vector<1x512xi32>
    %943 = arith.addi %843, %942 : vector<1x512xi32>
    %c0_i32_432 = arith.constant 0 : i32
    %944 = vector.broadcast %c0_i32_432 : i32 to vector<1x512xi32>
    %945 = arith.cmpi sge, %943, %944 : vector<1x512xi32>
    %946 = arith.andi %941, %945 : vector<1x512xi1>
    %c0_i32_433 = arith.constant 0 : i32
    %947 = vector.broadcast %c0_i32_433 : i32 to vector<1x512xi32>
    %948 = arith.addi %843, %947 : vector<1x512xi32>
    %c16_i32_434 = arith.constant 16 : i32
    %949 = vector.broadcast %c16_i32_434 : i32 to vector<1x512xi32>
    %950 = arith.cmpi slt, %948, %949 : vector<1x512xi32>
    %951 = arith.andi %946, %950 : vector<1x512xi1>
    %cst_435 = arith.constant 0.000000e+00 : f32
    %952 = vector.shape_cast %951 : vector<1x512xi1> to vector<1x512xi1>
    %953 = vector.broadcast %952 : vector<1x512xi1> to vector<4x512xi1>
    %954 = vector.broadcast %cst_435 : f32 to vector<4x512xf32>
    %955 = arith.select %953, %932, %954 : vector<4x512xi1>, vector<4x512xf32>
    %956 = arith.truncf %955 : vector<4x512xf32> to vector<4x512xbf16>
    %c3_436 = arith.constant 3 : index
    %c0_437 = arith.constant 0 : index
    %c0_438 = arith.constant 0 : index
    %957 = vector.load %arg4[%c3_436, %c0_437, %c0_438] : memref<9x8x4xbf16, #tpu.memory_space<vmem>>, vector<1x8x4xbf16>
    %958 = vector.shape_cast %957 : vector<1x8x4xbf16> to vector<8x4xbf16>
    %cst_439 = arith.constant dense<0.000000e+00> : vector<8x512xf32>
    %959 = tpu.matmul %958, %956, %cst_439 {dimension_numbers = #tpu.dot_dimension_numbers<[1], [0], [0], [1], [0, 0, 1, 1], [], []>} : vector<8x4xbf16>, vector<4x512xbf16>, vector<8x512xf32> -> vector<8x512xf32>
    %960 = arith.addf %931, %959 : vector<8x512xf32>
    %c0_i32_440 = arith.constant 0 : i32
    %961 = vector.broadcast %c0_i32_440 : i32 to vector<1x512xi32>
    %962 = arith.addi %839, %961 : vector<1x512xi32>
    %c0_i32_441 = arith.constant 0 : i32
    %963 = vector.broadcast %c0_i32_441 : i32 to vector<1x512xi32>
    %964 = arith.cmpi sge, %962, %963 : vector<1x512xi32>
    %c0_i32_442 = arith.constant 0 : i32
    %965 = vector.broadcast %c0_i32_442 : i32 to vector<1x512xi32>
    %966 = arith.addi %839, %965 : vector<1x512xi32>
    %c16_i32_443 = arith.constant 16 : i32
    %967 = vector.broadcast %c16_i32_443 : i32 to vector<1x512xi32>
    %968 = arith.cmpi slt, %966, %967 : vector<1x512xi32>
    %969 = arith.andi %964, %968 : vector<1x512xi1>
    %c0_i32_444 = arith.constant 0 : i32
    %970 = vector.broadcast %c0_i32_444 : i32 to vector<1x512xi32>
    %971 = arith.addi %843, %970 : vector<1x512xi32>
    %c0_i32_445 = arith.constant 0 : i32
    %972 = vector.broadcast %c0_i32_445 : i32 to vector<1x512xi32>
    %973 = arith.cmpi sge, %971, %972 : vector<1x512xi32>
    %974 = arith.andi %969, %973 : vector<1x512xi1>
    %c0_i32_446 = arith.constant 0 : i32
    %975 = vector.broadcast %c0_i32_446 : i32 to vector<1x512xi32>
    %976 = arith.addi %843, %975 : vector<1x512xi32>
    %c16_i32_447 = arith.constant 16 : i32
    %977 = vector.broadcast %c16_i32_447 : i32 to vector<1x512xi32>
    %978 = arith.cmpi slt, %976, %977 : vector<1x512xi32>
    %979 = arith.andi %974, %978 : vector<1x512xi1>
    %cst_448 = arith.constant 0.000000e+00 : f32
    %980 = vector.shape_cast %979 : vector<1x512xi1> to vector<1x512xi1>
    %981 = vector.broadcast %980 : vector<1x512xi1> to vector<4x512xi1>
    %982 = vector.broadcast %cst_448 : f32 to vector<4x512xf32>
    %983 = arith.select %981, %836, %982 : vector<4x512xi1>, vector<4x512xf32>
    %984 = arith.truncf %983 : vector<4x512xf32> to vector<4x512xbf16>
    %c4_449 = arith.constant 4 : index
    %c0_450 = arith.constant 0 : index
    %c0_451 = arith.constant 0 : index
    %985 = vector.load %arg4[%c4_449, %c0_450, %c0_451] : memref<9x8x4xbf16, #tpu.memory_space<vmem>>, vector<1x8x4xbf16>
    %986 = vector.shape_cast %985 : vector<1x8x4xbf16> to vector<8x4xbf16>
    %cst_452 = arith.constant dense<0.000000e+00> : vector<8x512xf32>
    %987 = tpu.matmul %986, %984, %cst_452 {dimension_numbers = #tpu.dot_dimension_numbers<[1], [0], [0], [1], [0, 0, 1, 1], [], []>} : vector<8x4xbf16>, vector<4x512xbf16>, vector<8x512xf32> -> vector<8x512xf32>
    %988 = arith.addf %960, %987 : vector<8x512xf32>
    %c511_i32_453 = arith.constant 511 : i32
    %989 = tpu.dynamic_rotate %836 by %c511_i32_453 dim 1 : vector<4x512xf32>, i32 -> vector<4x512xf32>
    %c1_i32_454 = arith.constant 1 : i32
    %990 = vector.broadcast %c1_i32_454 : i32 to vector<1x512xi32>
    %991 = arith.addi %839, %990 : vector<1x512xi32>
    %c0_i32_455 = arith.constant 0 : i32
    %992 = vector.broadcast %c0_i32_455 : i32 to vector<1x512xi32>
    %993 = arith.cmpi sge, %991, %992 : vector<1x512xi32>
    %c1_i32_456 = arith.constant 1 : i32
    %994 = vector.broadcast %c1_i32_456 : i32 to vector<1x512xi32>
    %995 = arith.addi %839, %994 : vector<1x512xi32>
    %c16_i32_457 = arith.constant 16 : i32
    %996 = vector.broadcast %c16_i32_457 : i32 to vector<1x512xi32>
    %997 = arith.cmpi slt, %995, %996 : vector<1x512xi32>
    %998 = arith.andi %993, %997 : vector<1x512xi1>
    %c0_i32_458 = arith.constant 0 : i32
    %999 = vector.broadcast %c0_i32_458 : i32 to vector<1x512xi32>
    %1000 = arith.addi %843, %999 : vector<1x512xi32>
    %c0_i32_459 = arith.constant 0 : i32
    %1001 = vector.broadcast %c0_i32_459 : i32 to vector<1x512xi32>
    %1002 = arith.cmpi sge, %1000, %1001 : vector<1x512xi32>
    %1003 = arith.andi %998, %1002 : vector<1x512xi1>
    %c0_i32_460 = arith.constant 0 : i32
    %1004 = vector.broadcast %c0_i32_460 : i32 to vector<1x512xi32>
    %1005 = arith.addi %843, %1004 : vector<1x512xi32>
    %c16_i32_461 = arith.constant 16 : i32
    %1006 = vector.broadcast %c16_i32_461 : i32 to vector<1x512xi32>
    %1007 = arith.cmpi slt, %1005, %1006 : vector<1x512xi32>
    %1008 = arith.andi %1003, %1007 : vector<1x512xi1>
    %cst_462 = arith.constant 0.000000e+00 : f32
    %1009 = vector.shape_cast %1008 : vector<1x512xi1> to vector<1x512xi1>
    %1010 = vector.broadcast %1009 : vector<1x512xi1> to vector<4x512xi1>
    %1011 = vector.broadcast %cst_462 : f32 to vector<4x512xf32>
    %1012 = arith.select %1010, %989, %1011 : vector<4x512xi1>, vector<4x512xf32>
    %1013 = arith.truncf %1012 : vector<4x512xf32> to vector<4x512xbf16>
    %c5_463 = arith.constant 5 : index
    %c0_464 = arith.constant 0 : index
    %c0_465 = arith.constant 0 : index
    %1014 = vector.load %arg4[%c5_463, %c0_464, %c0_465] : memref<9x8x4xbf16, #tpu.memory_space<vmem>>, vector<1x8x4xbf16>
    %1015 = vector.shape_cast %1014 : vector<1x8x4xbf16> to vector<8x4xbf16>
    %cst_466 = arith.constant dense<0.000000e+00> : vector<8x512xf32>
    %1016 = tpu.matmul %1015, %1013, %cst_466 {dimension_numbers = #tpu.dot_dimension_numbers<[1], [0], [0], [1], [0, 0, 1, 1], [], []>} : vector<8x4xbf16>, vector<4x512xbf16>, vector<8x512xf32> -> vector<8x512xf32>
    %1017 = arith.addf %988, %1016 : vector<8x512xf32>
    %c497_i32_467 = arith.constant 497 : i32
    %1018 = tpu.dynamic_rotate %836 by %c497_i32_467 dim 1 : vector<4x512xf32>, i32 -> vector<4x512xf32>
    %c-1_i32_468 = arith.constant -1 : i32
    %1019 = vector.broadcast %c-1_i32_468 : i32 to vector<1x512xi32>
    %1020 = arith.addi %839, %1019 : vector<1x512xi32>
    %c0_i32_469 = arith.constant 0 : i32
    %1021 = vector.broadcast %c0_i32_469 : i32 to vector<1x512xi32>
    %1022 = arith.cmpi sge, %1020, %1021 : vector<1x512xi32>
    %c-1_i32_470 = arith.constant -1 : i32
    %1023 = vector.broadcast %c-1_i32_470 : i32 to vector<1x512xi32>
    %1024 = arith.addi %839, %1023 : vector<1x512xi32>
    %c16_i32_471 = arith.constant 16 : i32
    %1025 = vector.broadcast %c16_i32_471 : i32 to vector<1x512xi32>
    %1026 = arith.cmpi slt, %1024, %1025 : vector<1x512xi32>
    %1027 = arith.andi %1022, %1026 : vector<1x512xi1>
    %c1_i32_472 = arith.constant 1 : i32
    %1028 = vector.broadcast %c1_i32_472 : i32 to vector<1x512xi32>
    %1029 = arith.addi %843, %1028 : vector<1x512xi32>
    %c0_i32_473 = arith.constant 0 : i32
    %1030 = vector.broadcast %c0_i32_473 : i32 to vector<1x512xi32>
    %1031 = arith.cmpi sge, %1029, %1030 : vector<1x512xi32>
    %1032 = arith.andi %1027, %1031 : vector<1x512xi1>
    %c1_i32_474 = arith.constant 1 : i32
    %1033 = vector.broadcast %c1_i32_474 : i32 to vector<1x512xi32>
    %1034 = arith.addi %843, %1033 : vector<1x512xi32>
    %c16_i32_475 = arith.constant 16 : i32
    %1035 = vector.broadcast %c16_i32_475 : i32 to vector<1x512xi32>
    %1036 = arith.cmpi slt, %1034, %1035 : vector<1x512xi32>
    %1037 = arith.andi %1032, %1036 : vector<1x512xi1>
    %cst_476 = arith.constant 0.000000e+00 : f32
    %1038 = vector.shape_cast %1037 : vector<1x512xi1> to vector<1x512xi1>
    %1039 = vector.broadcast %1038 : vector<1x512xi1> to vector<4x512xi1>
    %1040 = vector.broadcast %cst_476 : f32 to vector<4x512xf32>
    %1041 = arith.select %1039, %1018, %1040 : vector<4x512xi1>, vector<4x512xf32>
    %1042 = arith.truncf %1041 : vector<4x512xf32> to vector<4x512xbf16>
    %c6_477 = arith.constant 6 : index
    %c0_478 = arith.constant 0 : index
    %c0_479 = arith.constant 0 : index
    %1043 = vector.load %arg4[%c6_477, %c0_478, %c0_479] : memref<9x8x4xbf16, #tpu.memory_space<vmem>>, vector<1x8x4xbf16>
    %1044 = vector.shape_cast %1043 : vector<1x8x4xbf16> to vector<8x4xbf16>
    %cst_480 = arith.constant dense<0.000000e+00> : vector<8x512xf32>
    %1045 = tpu.matmul %1044, %1042, %cst_480 {dimension_numbers = #tpu.dot_dimension_numbers<[1], [0], [0], [1], [0, 0, 1, 1], [], []>} : vector<8x4xbf16>, vector<4x512xbf16>, vector<8x512xf32> -> vector<8x512xf32>
    %1046 = arith.addf %1017, %1045 : vector<8x512xf32>
    %c496_i32_481 = arith.constant 496 : i32
    %1047 = tpu.dynamic_rotate %836 by %c496_i32_481 dim 1 : vector<4x512xf32>, i32 -> vector<4x512xf32>
    %c0_i32_482 = arith.constant 0 : i32
    %1048 = vector.broadcast %c0_i32_482 : i32 to vector<1x512xi32>
    %1049 = arith.addi %839, %1048 : vector<1x512xi32>
    %c0_i32_483 = arith.constant 0 : i32
    %1050 = vector.broadcast %c0_i32_483 : i32 to vector<1x512xi32>
    %1051 = arith.cmpi sge, %1049, %1050 : vector<1x512xi32>
    %c0_i32_484 = arith.constant 0 : i32
    %1052 = vector.broadcast %c0_i32_484 : i32 to vector<1x512xi32>
    %1053 = arith.addi %839, %1052 : vector<1x512xi32>
    %c16_i32_485 = arith.constant 16 : i32
    %1054 = vector.broadcast %c16_i32_485 : i32 to vector<1x512xi32>
    %1055 = arith.cmpi slt, %1053, %1054 : vector<1x512xi32>
    %1056 = arith.andi %1051, %1055 : vector<1x512xi1>
    %c1_i32_486 = arith.constant 1 : i32
    %1057 = vector.broadcast %c1_i32_486 : i32 to vector<1x512xi32>
    %1058 = arith.addi %843, %1057 : vector<1x512xi32>
    %c0_i32_487 = arith.constant 0 : i32
    %1059 = vector.broadcast %c0_i32_487 : i32 to vector<1x512xi32>
    %1060 = arith.cmpi sge, %1058, %1059 : vector<1x512xi32>
    %1061 = arith.andi %1056, %1060 : vector<1x512xi1>
    %c1_i32_488 = arith.constant 1 : i32
    %1062 = vector.broadcast %c1_i32_488 : i32 to vector<1x512xi32>
    %1063 = arith.addi %843, %1062 : vector<1x512xi32>
    %c16_i32_489 = arith.constant 16 : i32
    %1064 = vector.broadcast %c16_i32_489 : i32 to vector<1x512xi32>
    %1065 = arith.cmpi slt, %1063, %1064 : vector<1x512xi32>
    %1066 = arith.andi %1061, %1065 : vector<1x512xi1>
    %cst_490 = arith.constant 0.000000e+00 : f32
    %1067 = vector.shape_cast %1066 : vector<1x512xi1> to vector<1x512xi1>
    %1068 = vector.broadcast %1067 : vector<1x512xi1> to vector<4x512xi1>
    %1069 = vector.broadcast %cst_490 : f32 to vector<4x512xf32>
    %1070 = arith.select %1068, %1047, %1069 : vector<4x512xi1>, vector<4x512xf32>
    %1071 = arith.truncf %1070 : vector<4x512xf32> to vector<4x512xbf16>
    %c7_491 = arith.constant 7 : index
    %c0_492 = arith.constant 0 : index
    %c0_493 = arith.constant 0 : index
    %1072 = vector.load %arg4[%c7_491, %c0_492, %c0_493] : memref<9x8x4xbf16, #tpu.memory_space<vmem>>, vector<1x8x4xbf16>
    %1073 = vector.shape_cast %1072 : vector<1x8x4xbf16> to vector<8x4xbf16>
    %cst_494 = arith.constant dense<0.000000e+00> : vector<8x512xf32>
    %1074 = tpu.matmul %1073, %1071, %cst_494 {dimension_numbers = #tpu.dot_dimension_numbers<[1], [0], [0], [1], [0, 0, 1, 1], [], []>} : vector<8x4xbf16>, vector<4x512xbf16>, vector<8x512xf32> -> vector<8x512xf32>
    %1075 = arith.addf %1046, %1074 : vector<8x512xf32>
    %c495_i32_495 = arith.constant 495 : i32
    %1076 = tpu.dynamic_rotate %836 by %c495_i32_495 dim 1 : vector<4x512xf32>, i32 -> vector<4x512xf32>
    %c1_i32_496 = arith.constant 1 : i32
    %1077 = vector.broadcast %c1_i32_496 : i32 to vector<1x512xi32>
    %1078 = arith.addi %839, %1077 : vector<1x512xi32>
    %c0_i32_497 = arith.constant 0 : i32
    %1079 = vector.broadcast %c0_i32_497 : i32 to vector<1x512xi32>
    %1080 = arith.cmpi sge, %1078, %1079 : vector<1x512xi32>
    %c1_i32_498 = arith.constant 1 : i32
    %1081 = vector.broadcast %c1_i32_498 : i32 to vector<1x512xi32>
    %1082 = arith.addi %839, %1081 : vector<1x512xi32>
    %c16_i32_499 = arith.constant 16 : i32
    %1083 = vector.broadcast %c16_i32_499 : i32 to vector<1x512xi32>
    %1084 = arith.cmpi slt, %1082, %1083 : vector<1x512xi32>
    %1085 = arith.andi %1080, %1084 : vector<1x512xi1>
    %c1_i32_500 = arith.constant 1 : i32
    %1086 = vector.broadcast %c1_i32_500 : i32 to vector<1x512xi32>
    %1087 = arith.addi %843, %1086 : vector<1x512xi32>
    %c0_i32_501 = arith.constant 0 : i32
    %1088 = vector.broadcast %c0_i32_501 : i32 to vector<1x512xi32>
    %1089 = arith.cmpi sge, %1087, %1088 : vector<1x512xi32>
    %1090 = arith.andi %1085, %1089 : vector<1x512xi1>
    %c1_i32_502 = arith.constant 1 : i32
    %1091 = vector.broadcast %c1_i32_502 : i32 to vector<1x512xi32>
    %1092 = arith.addi %843, %1091 : vector<1x512xi32>
    %c16_i32_503 = arith.constant 16 : i32
    %1093 = vector.broadcast %c16_i32_503 : i32 to vector<1x512xi32>
    %1094 = arith.cmpi slt, %1092, %1093 : vector<1x512xi32>
    %1095 = arith.andi %1090, %1094 : vector<1x512xi1>
    %cst_504 = arith.constant 0.000000e+00 : f32
    %1096 = vector.shape_cast %1095 : vector<1x512xi1> to vector<1x512xi1>
    %1097 = vector.broadcast %1096 : vector<1x512xi1> to vector<4x512xi1>
    %1098 = vector.broadcast %cst_504 : f32 to vector<4x512xf32>
    %1099 = arith.select %1097, %1076, %1098 : vector<4x512xi1>, vector<4x512xf32>
    %1100 = arith.truncf %1099 : vector<4x512xf32> to vector<4x512xbf16>
    %c8_505 = arith.constant 8 : index
    %c0_506 = arith.constant 0 : index
    %c0_507 = arith.constant 0 : index
    %1101 = vector.load %arg4[%c8_505, %c0_506, %c0_507] : memref<9x8x4xbf16, #tpu.memory_space<vmem>>, vector<1x8x4xbf16>
    %1102 = vector.shape_cast %1101 : vector<1x8x4xbf16> to vector<8x4xbf16>
    %cst_508 = arith.constant dense<0.000000e+00> : vector<8x512xf32>
    %1103 = tpu.matmul %1102, %1100, %cst_508 {dimension_numbers = #tpu.dot_dimension_numbers<[1], [0], [0], [1], [0, 0, 1, 1], [], []>} : vector<8x4xbf16>, vector<4x512xbf16>, vector<8x512xf32> -> vector<8x512xf32>
    %1104 = arith.addf %1075, %1103 : vector<8x512xf32>
    %c0_509 = arith.constant 0 : index
    %c0_510 = arith.constant 0 : index
    %1105 = vector.load %arg8[%c0_509, %c0_510] : memref<512x128xf32, #tpu.memory_space<vmem>>, vector<512x128xf32>
    %cst_511 = arith.constant dense<0.000000e+00> : vector<8x128xf32>
    %1106 = tpu.matmul %1104, %1105, %cst_511 {dimension_numbers = #tpu.dot_dimension_numbers<[1], [0], [0], [1], [0, 0, 1, 1], [], []>} : vector<8x512xf32>, vector<512x128xf32>, vector<8x128xf32> -> vector<8x128xf32>
    %1107 = vector.broadcast %831 : f32 to vector<8x128xf32>
    %1108 = arith.addf %1106, %1107 : vector<8x128xf32>
    %cst_512 = arith.constant 0.000000e+00 : f32
    %1109 = vector.broadcast %cst_512 : f32 to vector<8x128xf32>
    %1110 = arith.maximumf %1108, %1109 : vector<8x128xf32>
    %1111 = vector.broadcast %832 : f32 to vector<8x128xf32>
    %1112 = arith.addf %1110, %1111 : vector<8x128xf32>
    %1113 = tpu.iota {dimensions = array<i32: 1>} : vector<1x128xi32>
    %c7_i32 = arith.constant 7 : i32
    %1114 = vector.broadcast %c7_i32 : i32 to vector<1x128xi32>
    %1115 = arith.andi %1113, %1114 : vector<1x128xi32>
    %c3_i32 = arith.constant 3 : i32
    %1116 = vector.broadcast %c3_i32 : i32 to vector<1x128xi32>
    %1117 = arith.shrsi %1113, %1116 : vector<1x128xi32>
    %c7_i32_513 = arith.constant 7 : i32
    %1118 = vector.broadcast %c7_i32_513 : i32 to vector<1x128xi32>
    %1119 = arith.andi %1117, %1118 : vector<1x128xi32>
    %cst_514 = arith.constant 0.000000e+00 : f32
    %1120 = vector.broadcast %cst_514 : f32 to vector<8x128xf32>
    %c9_i32 = arith.constant 9 : i32
    %1121 = tpu.dynamic_rotate %1112 by %c9_i32 dim 1 : vector<8x128xf32>, i32 -> vector<8x128xf32>
    %c-1_i32_515 = arith.constant -1 : i32
    %1122 = vector.broadcast %c-1_i32_515 : i32 to vector<1x128xi32>
    %1123 = arith.addi %1115, %1122 : vector<1x128xi32>
    %c0_i32_516 = arith.constant 0 : i32
    %1124 = vector.broadcast %c0_i32_516 : i32 to vector<1x128xi32>
    %1125 = arith.cmpi sge, %1123, %1124 : vector<1x128xi32>
    %c-1_i32_517 = arith.constant -1 : i32
    %1126 = vector.broadcast %c-1_i32_517 : i32 to vector<1x128xi32>
    %1127 = arith.addi %1115, %1126 : vector<1x128xi32>
    %c8_i32 = arith.constant 8 : i32
    %1128 = vector.broadcast %c8_i32 : i32 to vector<1x128xi32>
    %1129 = arith.cmpi slt, %1127, %1128 : vector<1x128xi32>
    %1130 = arith.andi %1125, %1129 : vector<1x128xi1>
    %c-1_i32_518 = arith.constant -1 : i32
    %1131 = vector.broadcast %c-1_i32_518 : i32 to vector<1x128xi32>
    %1132 = arith.addi %1119, %1131 : vector<1x128xi32>
    %c0_i32_519 = arith.constant 0 : i32
    %1133 = vector.broadcast %c0_i32_519 : i32 to vector<1x128xi32>
    %1134 = arith.cmpi sge, %1132, %1133 : vector<1x128xi32>
    %1135 = arith.andi %1130, %1134 : vector<1x128xi1>
    %c-1_i32_520 = arith.constant -1 : i32
    %1136 = vector.broadcast %c-1_i32_520 : i32 to vector<1x128xi32>
    %1137 = arith.addi %1119, %1136 : vector<1x128xi32>
    %c8_i32_521 = arith.constant 8 : i32
    %1138 = vector.broadcast %c8_i32_521 : i32 to vector<1x128xi32>
    %1139 = arith.cmpi slt, %1137, %1138 : vector<1x128xi32>
    %1140 = arith.andi %1135, %1139 : vector<1x128xi1>
    %cst_522 = arith.constant 0.000000e+00 : f32
    %1141 = vector.shape_cast %1140 : vector<1x128xi1> to vector<1x128xi1>
    %1142 = vector.broadcast %1141 : vector<1x128xi1> to vector<8x128xi1>
    %1143 = vector.broadcast %cst_522 : f32 to vector<8x128xf32>
    %1144 = arith.select %1142, %1121, %1143 : vector<8x128xi1>, vector<8x128xf32>
    %1145 = arith.truncf %1144 : vector<8x128xf32> to vector<8x128xbf16>
    %c0_523 = arith.constant 0 : index
    %c0_524 = arith.constant 0 : index
    %c0_525 = arith.constant 0 : index
    %1146 = vector.load %arg5[%c0_523, %c0_524, %c0_525] : memref<9x8x8xbf16, #tpu.memory_space<vmem>>, vector<1x8x8xbf16>
    %1147 = vector.shape_cast %1146 : vector<1x8x8xbf16> to vector<8x8xbf16>
    %cst_526 = arith.constant dense<0.000000e+00> : vector<8x128xf32>
    %1148 = tpu.matmul %1147, %1145, %cst_526 {dimension_numbers = #tpu.dot_dimension_numbers<[1], [0], [0], [1], [0, 0, 1, 1], [], []>} : vector<8x8xbf16>, vector<8x128xbf16>, vector<8x128xf32> -> vector<8x128xf32>
    %1149 = arith.addf %1120, %1148 : vector<8x128xf32>
    %c8_i32_527 = arith.constant 8 : i32
    %1150 = tpu.dynamic_rotate %1112 by %c8_i32_527 dim 1 : vector<8x128xf32>, i32 -> vector<8x128xf32>
    %c0_i32_528 = arith.constant 0 : i32
    %1151 = vector.broadcast %c0_i32_528 : i32 to vector<1x128xi32>
    %1152 = arith.addi %1115, %1151 : vector<1x128xi32>
    %c0_i32_529 = arith.constant 0 : i32
    %1153 = vector.broadcast %c0_i32_529 : i32 to vector<1x128xi32>
    %1154 = arith.cmpi sge, %1152, %1153 : vector<1x128xi32>
    %c0_i32_530 = arith.constant 0 : i32
    %1155 = vector.broadcast %c0_i32_530 : i32 to vector<1x128xi32>
    %1156 = arith.addi %1115, %1155 : vector<1x128xi32>
    %c8_i32_531 = arith.constant 8 : i32
    %1157 = vector.broadcast %c8_i32_531 : i32 to vector<1x128xi32>
    %1158 = arith.cmpi slt, %1156, %1157 : vector<1x128xi32>
    %1159 = arith.andi %1154, %1158 : vector<1x128xi1>
    %c-1_i32_532 = arith.constant -1 : i32
    %1160 = vector.broadcast %c-1_i32_532 : i32 to vector<1x128xi32>
    %1161 = arith.addi %1119, %1160 : vector<1x128xi32>
    %c0_i32_533 = arith.constant 0 : i32
    %1162 = vector.broadcast %c0_i32_533 : i32 to vector<1x128xi32>
    %1163 = arith.cmpi sge, %1161, %1162 : vector<1x128xi32>
    %1164 = arith.andi %1159, %1163 : vector<1x128xi1>
    %c-1_i32_534 = arith.constant -1 : i32
    %1165 = vector.broadcast %c-1_i32_534 : i32 to vector<1x128xi32>
    %1166 = arith.addi %1119, %1165 : vector<1x128xi32>
    %c8_i32_535 = arith.constant 8 : i32
    %1167 = vector.broadcast %c8_i32_535 : i32 to vector<1x128xi32>
    %1168 = arith.cmpi slt, %1166, %1167 : vector<1x128xi32>
    %1169 = arith.andi %1164, %1168 : vector<1x128xi1>
    %cst_536 = arith.constant 0.000000e+00 : f32
    %1170 = vector.shape_cast %1169 : vector<1x128xi1> to vector<1x128xi1>
    %1171 = vector.broadcast %1170 : vector<1x128xi1> to vector<8x128xi1>
    %1172 = vector.broadcast %cst_536 : f32 to vector<8x128xf32>
    %1173 = arith.select %1171, %1150, %1172 : vector<8x128xi1>, vector<8x128xf32>
    %1174 = arith.truncf %1173 : vector<8x128xf32> to vector<8x128xbf16>
    %c1_537 = arith.constant 1 : index
    %c0_538 = arith.constant 0 : index
    %c0_539 = arith.constant 0 : index
    %1175 = vector.load %arg5[%c1_537, %c0_538, %c0_539] : memref<9x8x8xbf16, #tpu.memory_space<vmem>>, vector<1x8x8xbf16>
    %1176 = vector.shape_cast %1175 : vector<1x8x8xbf16> to vector<8x8xbf16>
    %cst_540 = arith.constant dense<0.000000e+00> : vector<8x128xf32>
    %1177 = tpu.matmul %1176, %1174, %cst_540 {dimension_numbers = #tpu.dot_dimension_numbers<[1], [0], [0], [1], [0, 0, 1, 1], [], []>} : vector<8x8xbf16>, vector<8x128xbf16>, vector<8x128xf32> -> vector<8x128xf32>
    %1178 = arith.addf %1149, %1177 : vector<8x128xf32>
    %c7_i32_541 = arith.constant 7 : i32
    %1179 = tpu.dynamic_rotate %1112 by %c7_i32_541 dim 1 : vector<8x128xf32>, i32 -> vector<8x128xf32>
    %c1_i32_542 = arith.constant 1 : i32
    %1180 = vector.broadcast %c1_i32_542 : i32 to vector<1x128xi32>
    %1181 = arith.addi %1115, %1180 : vector<1x128xi32>
    %c0_i32_543 = arith.constant 0 : i32
    %1182 = vector.broadcast %c0_i32_543 : i32 to vector<1x128xi32>
    %1183 = arith.cmpi sge, %1181, %1182 : vector<1x128xi32>
    %c1_i32_544 = arith.constant 1 : i32
    %1184 = vector.broadcast %c1_i32_544 : i32 to vector<1x128xi32>
    %1185 = arith.addi %1115, %1184 : vector<1x128xi32>
    %c8_i32_545 = arith.constant 8 : i32
    %1186 = vector.broadcast %c8_i32_545 : i32 to vector<1x128xi32>
    %1187 = arith.cmpi slt, %1185, %1186 : vector<1x128xi32>
    %1188 = arith.andi %1183, %1187 : vector<1x128xi1>
    %c-1_i32_546 = arith.constant -1 : i32
    %1189 = vector.broadcast %c-1_i32_546 : i32 to vector<1x128xi32>
    %1190 = arith.addi %1119, %1189 : vector<1x128xi32>
    %c0_i32_547 = arith.constant 0 : i32
    %1191 = vector.broadcast %c0_i32_547 : i32 to vector<1x128xi32>
    %1192 = arith.cmpi sge, %1190, %1191 : vector<1x128xi32>
    %1193 = arith.andi %1188, %1192 : vector<1x128xi1>
    %c-1_i32_548 = arith.constant -1 : i32
    %1194 = vector.broadcast %c-1_i32_548 : i32 to vector<1x128xi32>
    %1195 = arith.addi %1119, %1194 : vector<1x128xi32>
    %c8_i32_549 = arith.constant 8 : i32
    %1196 = vector.broadcast %c8_i32_549 : i32 to vector<1x128xi32>
    %1197 = arith.cmpi slt, %1195, %1196 : vector<1x128xi32>
    %1198 = arith.andi %1193, %1197 : vector<1x128xi1>
    %cst_550 = arith.constant 0.000000e+00 : f32
    %1199 = vector.shape_cast %1198 : vector<1x128xi1> to vector<1x128xi1>
    %1200 = vector.broadcast %1199 : vector<1x128xi1> to vector<8x128xi1>
    %1201 = vector.broadcast %cst_550 : f32 to vector<8x128xf32>
    %1202 = arith.select %1200, %1179, %1201 : vector<8x128xi1>, vector<8x128xf32>
    %1203 = arith.truncf %1202 : vector<8x128xf32> to vector<8x128xbf16>
    %c2_551 = arith.constant 2 : index
    %c0_552 = arith.constant 0 : index
    %c0_553 = arith.constant 0 : index
    %1204 = vector.load %arg5[%c2_551, %c0_552, %c0_553] : memref<9x8x8xbf16, #tpu.memory_space<vmem>>, vector<1x8x8xbf16>
    %1205 = vector.shape_cast %1204 : vector<1x8x8xbf16> to vector<8x8xbf16>
    %cst_554 = arith.constant dense<0.000000e+00> : vector<8x128xf32>
    %1206 = tpu.matmul %1205, %1203, %cst_554 {dimension_numbers = #tpu.dot_dimension_numbers<[1], [0], [0], [1], [0, 0, 1, 1], [], []>} : vector<8x8xbf16>, vector<8x128xbf16>, vector<8x128xf32> -> vector<8x128xf32>
    %1207 = arith.addf %1178, %1206 : vector<8x128xf32>
    %c1_i32_555 = arith.constant 1 : i32
    %1208 = tpu.dynamic_rotate %1112 by %c1_i32_555 dim 1 : vector<8x128xf32>, i32 -> vector<8x128xf32>
    %c-1_i32_556 = arith.constant -1 : i32
    %1209 = vector.broadcast %c-1_i32_556 : i32 to vector<1x128xi32>
    %1210 = arith.addi %1115, %1209 : vector<1x128xi32>
    %c0_i32_557 = arith.constant 0 : i32
    %1211 = vector.broadcast %c0_i32_557 : i32 to vector<1x128xi32>
    %1212 = arith.cmpi sge, %1210, %1211 : vector<1x128xi32>
    %c-1_i32_558 = arith.constant -1 : i32
    %1213 = vector.broadcast %c-1_i32_558 : i32 to vector<1x128xi32>
    %1214 = arith.addi %1115, %1213 : vector<1x128xi32>
    %c8_i32_559 = arith.constant 8 : i32
    %1215 = vector.broadcast %c8_i32_559 : i32 to vector<1x128xi32>
    %1216 = arith.cmpi slt, %1214, %1215 : vector<1x128xi32>
    %1217 = arith.andi %1212, %1216 : vector<1x128xi1>
    %c0_i32_560 = arith.constant 0 : i32
    %1218 = vector.broadcast %c0_i32_560 : i32 to vector<1x128xi32>
    %1219 = arith.addi %1119, %1218 : vector<1x128xi32>
    %c0_i32_561 = arith.constant 0 : i32
    %1220 = vector.broadcast %c0_i32_561 : i32 to vector<1x128xi32>
    %1221 = arith.cmpi sge, %1219, %1220 : vector<1x128xi32>
    %1222 = arith.andi %1217, %1221 : vector<1x128xi1>
    %c0_i32_562 = arith.constant 0 : i32
    %1223 = vector.broadcast %c0_i32_562 : i32 to vector<1x128xi32>
    %1224 = arith.addi %1119, %1223 : vector<1x128xi32>
    %c8_i32_563 = arith.constant 8 : i32
    %1225 = vector.broadcast %c8_i32_563 : i32 to vector<1x128xi32>
    %1226 = arith.cmpi slt, %1224, %1225 : vector<1x128xi32>
    %1227 = arith.andi %1222, %1226 : vector<1x128xi1>
    %cst_564 = arith.constant 0.000000e+00 : f32
    %1228 = vector.shape_cast %1227 : vector<1x128xi1> to vector<1x128xi1>
    %1229 = vector.broadcast %1228 : vector<1x128xi1> to vector<8x128xi1>
    %1230 = vector.broadcast %cst_564 : f32 to vector<8x128xf32>
    %1231 = arith.select %1229, %1208, %1230 : vector<8x128xi1>, vector<8x128xf32>
    %1232 = arith.truncf %1231 : vector<8x128xf32> to vector<8x128xbf16>
    %c3_565 = arith.constant 3 : index
    %c0_566 = arith.constant 0 : index
    %c0_567 = arith.constant 0 : index
    %1233 = vector.load %arg5[%c3_565, %c0_566, %c0_567] : memref<9x8x8xbf16, #tpu.memory_space<vmem>>, vector<1x8x8xbf16>
    %1234 = vector.shape_cast %1233 : vector<1x8x8xbf16> to vector<8x8xbf16>
    %cst_568 = arith.constant dense<0.000000e+00> : vector<8x128xf32>
    %1235 = tpu.matmul %1234, %1232, %cst_568 {dimension_numbers = #tpu.dot_dimension_numbers<[1], [0], [0], [1], [0, 0, 1, 1], [], []>} : vector<8x8xbf16>, vector<8x128xbf16>, vector<8x128xf32> -> vector<8x128xf32>
    %1236 = arith.addf %1207, %1235 : vector<8x128xf32>
    %c0_i32_569 = arith.constant 0 : i32
    %1237 = vector.broadcast %c0_i32_569 : i32 to vector<1x128xi32>
    %1238 = arith.addi %1115, %1237 : vector<1x128xi32>
    %c0_i32_570 = arith.constant 0 : i32
    %1239 = vector.broadcast %c0_i32_570 : i32 to vector<1x128xi32>
    %1240 = arith.cmpi sge, %1238, %1239 : vector<1x128xi32>
    %c0_i32_571 = arith.constant 0 : i32
    %1241 = vector.broadcast %c0_i32_571 : i32 to vector<1x128xi32>
    %1242 = arith.addi %1115, %1241 : vector<1x128xi32>
    %c8_i32_572 = arith.constant 8 : i32
    %1243 = vector.broadcast %c8_i32_572 : i32 to vector<1x128xi32>
    %1244 = arith.cmpi slt, %1242, %1243 : vector<1x128xi32>
    %1245 = arith.andi %1240, %1244 : vector<1x128xi1>
    %c0_i32_573 = arith.constant 0 : i32
    %1246 = vector.broadcast %c0_i32_573 : i32 to vector<1x128xi32>
    %1247 = arith.addi %1119, %1246 : vector<1x128xi32>
    %c0_i32_574 = arith.constant 0 : i32
    %1248 = vector.broadcast %c0_i32_574 : i32 to vector<1x128xi32>
    %1249 = arith.cmpi sge, %1247, %1248 : vector<1x128xi32>
    %1250 = arith.andi %1245, %1249 : vector<1x128xi1>
    %c0_i32_575 = arith.constant 0 : i32
    %1251 = vector.broadcast %c0_i32_575 : i32 to vector<1x128xi32>
    %1252 = arith.addi %1119, %1251 : vector<1x128xi32>
    %c8_i32_576 = arith.constant 8 : i32
    %1253 = vector.broadcast %c8_i32_576 : i32 to vector<1x128xi32>
    %1254 = arith.cmpi slt, %1252, %1253 : vector<1x128xi32>
    %1255 = arith.andi %1250, %1254 : vector<1x128xi1>
    %cst_577 = arith.constant 0.000000e+00 : f32
    %1256 = vector.shape_cast %1255 : vector<1x128xi1> to vector<1x128xi1>
    %1257 = vector.broadcast %1256 : vector<1x128xi1> to vector<8x128xi1>
    %1258 = vector.broadcast %cst_577 : f32 to vector<8x128xf32>
    %1259 = arith.select %1257, %1112, %1258 : vector<8x128xi1>, vector<8x128xf32>
    %1260 = arith.truncf %1259 : vector<8x128xf32> to vector<8x128xbf16>
    %c4_578 = arith.constant 4 : index
    %c0_579 = arith.constant 0 : index
    %c0_580 = arith.constant 0 : index
    %1261 = vector.load %arg5[%c4_578, %c0_579, %c0_580] : memref<9x8x8xbf16, #tpu.memory_space<vmem>>, vector<1x8x8xbf16>
    %1262 = vector.shape_cast %1261 : vector<1x8x8xbf16> to vector<8x8xbf16>
    %cst_581 = arith.constant dense<0.000000e+00> : vector<8x128xf32>
    %1263 = tpu.matmul %1262, %1260, %cst_581 {dimension_numbers = #tpu.dot_dimension_numbers<[1], [0], [0], [1], [0, 0, 1, 1], [], []>} : vector<8x8xbf16>, vector<8x128xbf16>, vector<8x128xf32> -> vector<8x128xf32>
    %1264 = arith.addf %1236, %1263 : vector<8x128xf32>
    %c127_i32 = arith.constant 127 : i32
    %1265 = tpu.dynamic_rotate %1112 by %c127_i32 dim 1 : vector<8x128xf32>, i32 -> vector<8x128xf32>
    %c1_i32_582 = arith.constant 1 : i32
    %1266 = vector.broadcast %c1_i32_582 : i32 to vector<1x128xi32>
    %1267 = arith.addi %1115, %1266 : vector<1x128xi32>
    %c0_i32_583 = arith.constant 0 : i32
    %1268 = vector.broadcast %c0_i32_583 : i32 to vector<1x128xi32>
    %1269 = arith.cmpi sge, %1267, %1268 : vector<1x128xi32>
    %c1_i32_584 = arith.constant 1 : i32
    %1270 = vector.broadcast %c1_i32_584 : i32 to vector<1x128xi32>
    %1271 = arith.addi %1115, %1270 : vector<1x128xi32>
    %c8_i32_585 = arith.constant 8 : i32
    %1272 = vector.broadcast %c8_i32_585 : i32 to vector<1x128xi32>
    %1273 = arith.cmpi slt, %1271, %1272 : vector<1x128xi32>
    %1274 = arith.andi %1269, %1273 : vector<1x128xi1>
    %c0_i32_586 = arith.constant 0 : i32
    %1275 = vector.broadcast %c0_i32_586 : i32 to vector<1x128xi32>
    %1276 = arith.addi %1119, %1275 : vector<1x128xi32>
    %c0_i32_587 = arith.constant 0 : i32
    %1277 = vector.broadcast %c0_i32_587 : i32 to vector<1x128xi32>
    %1278 = arith.cmpi sge, %1276, %1277 : vector<1x128xi32>
    %1279 = arith.andi %1274, %1278 : vector<1x128xi1>
    %c0_i32_588 = arith.constant 0 : i32
    %1280 = vector.broadcast %c0_i32_588 : i32 to vector<1x128xi32>
    %1281 = arith.addi %1119, %1280 : vector<1x128xi32>
    %c8_i32_589 = arith.constant 8 : i32
    %1282 = vector.broadcast %c8_i32_589 : i32 to vector<1x128xi32>
    %1283 = arith.cmpi slt, %1281, %1282 : vector<1x128xi32>
    %1284 = arith.andi %1279, %1283 : vector<1x128xi1>
    %cst_590 = arith.constant 0.000000e+00 : f32
    %1285 = vector.shape_cast %1284 : vector<1x128xi1> to vector<1x128xi1>
    %1286 = vector.broadcast %1285 : vector<1x128xi1> to vector<8x128xi1>
    %1287 = vector.broadcast %cst_590 : f32 to vector<8x128xf32>
    %1288 = arith.select %1286, %1265, %1287 : vector<8x128xi1>, vector<8x128xf32>
    %1289 = arith.truncf %1288 : vector<8x128xf32> to vector<8x128xbf16>
    %c5_591 = arith.constant 5 : index
    %c0_592 = arith.constant 0 : index
    %c0_593 = arith.constant 0 : index
    %1290 = vector.load %arg5[%c5_591, %c0_592, %c0_593] : memref<9x8x8xbf16, #tpu.memory_space<vmem>>, vector<1x8x8xbf16>
    %1291 = vector.shape_cast %1290 : vector<1x8x8xbf16> to vector<8x8xbf16>
    %cst_594 = arith.constant dense<0.000000e+00> : vector<8x128xf32>
    %1292 = tpu.matmul %1291, %1289, %cst_594 {dimension_numbers = #tpu.dot_dimension_numbers<[1], [0], [0], [1], [0, 0, 1, 1], [], []>} : vector<8x8xbf16>, vector<8x128xbf16>, vector<8x128xf32> -> vector<8x128xf32>
    %1293 = arith.addf %1264, %1292 : vector<8x128xf32>
    %c121_i32 = arith.constant 121 : i32
    %1294 = tpu.dynamic_rotate %1112 by %c121_i32 dim 1 : vector<8x128xf32>, i32 -> vector<8x128xf32>
    %c-1_i32_595 = arith.constant -1 : i32
    %1295 = vector.broadcast %c-1_i32_595 : i32 to vector<1x128xi32>
    %1296 = arith.addi %1115, %1295 : vector<1x128xi32>
    %c0_i32_596 = arith.constant 0 : i32
    %1297 = vector.broadcast %c0_i32_596 : i32 to vector<1x128xi32>
    %1298 = arith.cmpi sge, %1296, %1297 : vector<1x128xi32>
    %c-1_i32_597 = arith.constant -1 : i32
    %1299 = vector.broadcast %c-1_i32_597 : i32 to vector<1x128xi32>
    %1300 = arith.addi %1115, %1299 : vector<1x128xi32>
    %c8_i32_598 = arith.constant 8 : i32
    %1301 = vector.broadcast %c8_i32_598 : i32 to vector<1x128xi32>
    %1302 = arith.cmpi slt, %1300, %1301 : vector<1x128xi32>
    %1303 = arith.andi %1298, %1302 : vector<1x128xi1>
    %c1_i32_599 = arith.constant 1 : i32
    %1304 = vector.broadcast %c1_i32_599 : i32 to vector<1x128xi32>
    %1305 = arith.addi %1119, %1304 : vector<1x128xi32>
    %c0_i32_600 = arith.constant 0 : i32
    %1306 = vector.broadcast %c0_i32_600 : i32 to vector<1x128xi32>
    %1307 = arith.cmpi sge, %1305, %1306 : vector<1x128xi32>
    %1308 = arith.andi %1303, %1307 : vector<1x128xi1>
    %c1_i32_601 = arith.constant 1 : i32
    %1309 = vector.broadcast %c1_i32_601 : i32 to vector<1x128xi32>
    %1310 = arith.addi %1119, %1309 : vector<1x128xi32>
    %c8_i32_602 = arith.constant 8 : i32
    %1311 = vector.broadcast %c8_i32_602 : i32 to vector<1x128xi32>
    %1312 = arith.cmpi slt, %1310, %1311 : vector<1x128xi32>
    %1313 = arith.andi %1308, %1312 : vector<1x128xi1>
    %cst_603 = arith.constant 0.000000e+00 : f32
    %1314 = vector.shape_cast %1313 : vector<1x128xi1> to vector<1x128xi1>
    %1315 = vector.broadcast %1314 : vector<1x128xi1> to vector<8x128xi1>
    %1316 = vector.broadcast %cst_603 : f32 to vector<8x128xf32>
    %1317 = arith.select %1315, %1294, %1316 : vector<8x128xi1>, vector<8x128xf32>
    %1318 = arith.truncf %1317 : vector<8x128xf32> to vector<8x128xbf16>
    %c6_604 = arith.constant 6 : index
    %c0_605 = arith.constant 0 : index
    %c0_606 = arith.constant 0 : index
    %1319 = vector.load %arg5[%c6_604, %c0_605, %c0_606] : memref<9x8x8xbf16, #tpu.memory_space<vmem>>, vector<1x8x8xbf16>
    %1320 = vector.shape_cast %1319 : vector<1x8x8xbf16> to vector<8x8xbf16>
    %cst_607 = arith.constant dense<0.000000e+00> : vector<8x128xf32>
    %1321 = tpu.matmul %1320, %1318, %cst_607 {dimension_numbers = #tpu.dot_dimension_numbers<[1], [0], [0], [1], [0, 0, 1, 1], [], []>} : vector<8x8xbf16>, vector<8x128xbf16>, vector<8x128xf32> -> vector<8x128xf32>
    %1322 = arith.addf %1293, %1321 : vector<8x128xf32>
    %c120_i32 = arith.constant 120 : i32
    %1323 = tpu.dynamic_rotate %1112 by %c120_i32 dim 1 : vector<8x128xf32>, i32 -> vector<8x128xf32>
    %c0_i32_608 = arith.constant 0 : i32
    %1324 = vector.broadcast %c0_i32_608 : i32 to vector<1x128xi32>
    %1325 = arith.addi %1115, %1324 : vector<1x128xi32>
    %c0_i32_609 = arith.constant 0 : i32
    %1326 = vector.broadcast %c0_i32_609 : i32 to vector<1x128xi32>
    %1327 = arith.cmpi sge, %1325, %1326 : vector<1x128xi32>
    %c0_i32_610 = arith.constant 0 : i32
    %1328 = vector.broadcast %c0_i32_610 : i32 to vector<1x128xi32>
    %1329 = arith.addi %1115, %1328 : vector<1x128xi32>
    %c8_i32_611 = arith.constant 8 : i32
    %1330 = vector.broadcast %c8_i32_611 : i32 to vector<1x128xi32>
    %1331 = arith.cmpi slt, %1329, %1330 : vector<1x128xi32>
    %1332 = arith.andi %1327, %1331 : vector<1x128xi1>
    %c1_i32_612 = arith.constant 1 : i32
    %1333 = vector.broadcast %c1_i32_612 : i32 to vector<1x128xi32>
    %1334 = arith.addi %1119, %1333 : vector<1x128xi32>
    %c0_i32_613 = arith.constant 0 : i32
    %1335 = vector.broadcast %c0_i32_613 : i32 to vector<1x128xi32>
    %1336 = arith.cmpi sge, %1334, %1335 : vector<1x128xi32>
    %1337 = arith.andi %1332, %1336 : vector<1x128xi1>
    %c1_i32_614 = arith.constant 1 : i32
    %1338 = vector.broadcast %c1_i32_614 : i32 to vector<1x128xi32>
    %1339 = arith.addi %1119, %1338 : vector<1x128xi32>
    %c8_i32_615 = arith.constant 8 : i32
    %1340 = vector.broadcast %c8_i32_615 : i32 to vector<1x128xi32>
    %1341 = arith.cmpi slt, %1339, %1340 : vector<1x128xi32>
    %1342 = arith.andi %1337, %1341 : vector<1x128xi1>
    %cst_616 = arith.constant 0.000000e+00 : f32
    %1343 = vector.shape_cast %1342 : vector<1x128xi1> to vector<1x128xi1>
    %1344 = vector.broadcast %1343 : vector<1x128xi1> to vector<8x128xi1>
    %1345 = vector.broadcast %cst_616 : f32 to vector<8x128xf32>
    %1346 = arith.select %1344, %1323, %1345 : vector<8x128xi1>, vector<8x128xf32>
    %1347 = arith.truncf %1346 : vector<8x128xf32> to vector<8x128xbf16>
    %c7_617 = arith.constant 7 : index
    %c0_618 = arith.constant 0 : index
    %c0_619 = arith.constant 0 : index
    %1348 = vector.load %arg5[%c7_617, %c0_618, %c0_619] : memref<9x8x8xbf16, #tpu.memory_space<vmem>>, vector<1x8x8xbf16>
    %1349 = vector.shape_cast %1348 : vector<1x8x8xbf16> to vector<8x8xbf16>
    %cst_620 = arith.constant dense<0.000000e+00> : vector<8x128xf32>
    %1350 = tpu.matmul %1349, %1347, %cst_620 {dimension_numbers = #tpu.dot_dimension_numbers<[1], [0], [0], [1], [0, 0, 1, 1], [], []>} : vector<8x8xbf16>, vector<8x128xbf16>, vector<8x128xf32> -> vector<8x128xf32>
    %1351 = arith.addf %1322, %1350 : vector<8x128xf32>
    %c119_i32 = arith.constant 119 : i32
    %1352 = tpu.dynamic_rotate %1112 by %c119_i32 dim 1 : vector<8x128xf32>, i32 -> vector<8x128xf32>
    %c1_i32_621 = arith.constant 1 : i32
    %1353 = vector.broadcast %c1_i32_621 : i32 to vector<1x128xi32>
    %1354 = arith.addi %1115, %1353 : vector<1x128xi32>
    %c0_i32_622 = arith.constant 0 : i32
    %1355 = vector.broadcast %c0_i32_622 : i32 to vector<1x128xi32>
    %1356 = arith.cmpi sge, %1354, %1355 : vector<1x128xi32>
    %c1_i32_623 = arith.constant 1 : i32
    %1357 = vector.broadcast %c1_i32_623 : i32 to vector<1x128xi32>
    %1358 = arith.addi %1115, %1357 : vector<1x128xi32>
    %c8_i32_624 = arith.constant 8 : i32
    %1359 = vector.broadcast %c8_i32_624 : i32 to vector<1x128xi32>
    %1360 = arith.cmpi slt, %1358, %1359 : vector<1x128xi32>
    %1361 = arith.andi %1356, %1360 : vector<1x128xi1>
    %c1_i32_625 = arith.constant 1 : i32
    %1362 = vector.broadcast %c1_i32_625 : i32 to vector<1x128xi32>
    %1363 = arith.addi %1119, %1362 : vector<1x128xi32>
    %c0_i32_626 = arith.constant 0 : i32
    %1364 = vector.broadcast %c0_i32_626 : i32 to vector<1x128xi32>
    %1365 = arith.cmpi sge, %1363, %1364 : vector<1x128xi32>
    %1366 = arith.andi %1361, %1365 : vector<1x128xi1>
    %c1_i32_627 = arith.constant 1 : i32
    %1367 = vector.broadcast %c1_i32_627 : i32 to vector<1x128xi32>
    %1368 = arith.addi %1119, %1367 : vector<1x128xi32>
    %c8_i32_628 = arith.constant 8 : i32
    %1369 = vector.broadcast %c8_i32_628 : i32 to vector<1x128xi32>
    %1370 = arith.cmpi slt, %1368, %1369 : vector<1x128xi32>
    %1371 = arith.andi %1366, %1370 : vector<1x128xi1>
    %cst_629 = arith.constant 0.000000e+00 : f32
    %1372 = vector.shape_cast %1371 : vector<1x128xi1> to vector<1x128xi1>
    %1373 = vector.broadcast %1372 : vector<1x128xi1> to vector<8x128xi1>
    %1374 = vector.broadcast %cst_629 : f32 to vector<8x128xf32>
    %1375 = arith.select %1373, %1352, %1374 : vector<8x128xi1>, vector<8x128xf32>
    %1376 = arith.truncf %1375 : vector<8x128xf32> to vector<8x128xbf16>
    %c8_630 = arith.constant 8 : index
    %c0_631 = arith.constant 0 : index
    %c0_632 = arith.constant 0 : index
    %1377 = vector.load %arg5[%c8_630, %c0_631, %c0_632] : memref<9x8x8xbf16, #tpu.memory_space<vmem>>, vector<1x8x8xbf16>
    %1378 = vector.shape_cast %1377 : vector<1x8x8xbf16> to vector<8x8xbf16>
    %cst_633 = arith.constant dense<0.000000e+00> : vector<8x128xf32>
    %1379 = tpu.matmul %1378, %1376, %cst_633 {dimension_numbers = #tpu.dot_dimension_numbers<[1], [0], [0], [1], [0, 0, 1, 1], [], []>} : vector<8x8xbf16>, vector<8x128xbf16>, vector<8x128xf32> -> vector<8x128xf32>
    %1380 = arith.addf %1351, %1379 : vector<8x128xf32>
    %1381 = vector.broadcast %834 : f32 to vector<8x128xf32>
    %1382 = arith.mulf %1380, %1381 : vector<8x128xf32>
    %1383 = vector.broadcast %833 : f32 to vector<8x128xf32>
    %1384 = arith.addf %1382, %1383 : vector<8x128xf32>
    %c0_634 = arith.constant 0 : index
    %c0_635 = arith.constant 0 : index
    %1385 = vector.load %arg8[%c0_634, %c0_635] : memref<512x128xf32, #tpu.memory_space<vmem>>, vector<512x128xf32>
    %cst_636 = arith.constant dense<0.000000e+00> : vector<4x128xf32>
    %1386 = tpu.matmul %836, %1385, %cst_636 {dimension_numbers = #tpu.dot_dimension_numbers<[1], [0], [0], [1], [0, 0, 1, 1], [], []>} : vector<4x512xf32>, vector<512x128xf32>, vector<4x128xf32> -> vector<4x128xf32>
    %c0_637 = arith.constant 0 : index
    %c0_638 = arith.constant 0 : index
    %1387 = vector.load %arg10[%c0_637, %c0_638] : memref<8x4xf32, #tpu.memory_space<vmem>>, vector<8x4xf32>
    %cst_639 = arith.constant dense<0.000000e+00> : vector<8x128xf32>
    %1388 = tpu.matmul %1387, %1386, %cst_639 {dimension_numbers = #tpu.dot_dimension_numbers<[1], [0], [0], [1], [0, 0, 1, 1], [], []>} : vector<8x4xf32>, vector<4x128xf32>, vector<8x128xf32> -> vector<8x128xf32>
    %1389 = arith.addf %1384, %1388 : vector<8x128xf32>
    %cst_640 = arith.constant 0.000000e+00 : f32
    %1390 = vector.broadcast %cst_640 : f32 to vector<8x128xf32>
    %1391 = arith.maximumf %1389, %1390 : vector<8x128xf32>
    %c11 = arith.constant 11 : index
    %1392 = memref.load %arg15[%c11] : memref<17xf32, #tpu.memory_space<smem>>
    %c12 = arith.constant 12 : index
    %1393 = memref.load %arg15[%c12] : memref<17xf32, #tpu.memory_space<smem>>
    %c13 = arith.constant 13 : index
    %1394 = memref.load %arg15[%c13] : memref<17xf32, #tpu.memory_space<smem>>
    %c14 = arith.constant 14 : index
    %1395 = memref.load %arg15[%c14] : memref<17xf32, #tpu.memory_space<smem>>
    %c15 = arith.constant 15 : index
    %1396 = memref.load %arg15[%c15] : memref<17xf32, #tpu.memory_space<smem>>
    %1397 = vector.broadcast %1392 : f32 to vector<8x128xf32>
    %1398 = arith.addf %1391, %1397 : vector<8x128xf32>
    %1399 = tpu.iota {dimensions = array<i32: 1>} : vector<1x128xi32>
    %c7_i32_641 = arith.constant 7 : i32
    %1400 = vector.broadcast %c7_i32_641 : i32 to vector<1x128xi32>
    %1401 = arith.andi %1399, %1400 : vector<1x128xi32>
    %c3_i32_642 = arith.constant 3 : i32
    %1402 = vector.broadcast %c3_i32_642 : i32 to vector<1x128xi32>
    %1403 = arith.shrsi %1399, %1402 : vector<1x128xi32>
    %c7_i32_643 = arith.constant 7 : i32
    %1404 = vector.broadcast %c7_i32_643 : i32 to vector<1x128xi32>
    %1405 = arith.andi %1403, %1404 : vector<1x128xi32>
    %cst_644 = arith.constant 0.000000e+00 : f32
    %1406 = vector.broadcast %cst_644 : f32 to vector<16x128xf32>
    %c9_i32_645 = arith.constant 9 : i32
    %1407 = tpu.dynamic_rotate %1398 by %c9_i32_645 dim 1 : vector<8x128xf32>, i32 -> vector<8x128xf32>
    %c-1_i32_646 = arith.constant -1 : i32
    %1408 = vector.broadcast %c-1_i32_646 : i32 to vector<1x128xi32>
    %1409 = arith.addi %1401, %1408 : vector<1x128xi32>
    %c0_i32_647 = arith.constant 0 : i32
    %1410 = vector.broadcast %c0_i32_647 : i32 to vector<1x128xi32>
    %1411 = arith.cmpi sge, %1409, %1410 : vector<1x128xi32>
    %c-1_i32_648 = arith.constant -1 : i32
    %1412 = vector.broadcast %c-1_i32_648 : i32 to vector<1x128xi32>
    %1413 = arith.addi %1401, %1412 : vector<1x128xi32>
    %c8_i32_649 = arith.constant 8 : i32
    %1414 = vector.broadcast %c8_i32_649 : i32 to vector<1x128xi32>
    %1415 = arith.cmpi slt, %1413, %1414 : vector<1x128xi32>
    %1416 = arith.andi %1411, %1415 : vector<1x128xi1>
    %c-1_i32_650 = arith.constant -1 : i32
    %1417 = vector.broadcast %c-1_i32_650 : i32 to vector<1x128xi32>
    %1418 = arith.addi %1405, %1417 : vector<1x128xi32>
    %c0_i32_651 = arith.constant 0 : i32
    %1419 = vector.broadcast %c0_i32_651 : i32 to vector<1x128xi32>
    %1420 = arith.cmpi sge, %1418, %1419 : vector<1x128xi32>
    %1421 = arith.andi %1416, %1420 : vector<1x128xi1>
    %c-1_i32_652 = arith.constant -1 : i32
    %1422 = vector.broadcast %c-1_i32_652 : i32 to vector<1x128xi32>
    %1423 = arith.addi %1405, %1422 : vector<1x128xi32>
    %c8_i32_653 = arith.constant 8 : i32
    %1424 = vector.broadcast %c8_i32_653 : i32 to vector<1x128xi32>
    %1425 = arith.cmpi slt, %1423, %1424 : vector<1x128xi32>
    %1426 = arith.andi %1421, %1425 : vector<1x128xi1>
    %cst_654 = arith.constant 0.000000e+00 : f32
    %1427 = vector.shape_cast %1426 : vector<1x128xi1> to vector<1x128xi1>
    %1428 = vector.broadcast %1427 : vector<1x128xi1> to vector<8x128xi1>
    %1429 = vector.broadcast %cst_654 : f32 to vector<8x128xf32>
    %1430 = arith.select %1428, %1407, %1429 : vector<8x128xi1>, vector<8x128xf32>
    %1431 = arith.truncf %1430 : vector<8x128xf32> to vector<8x128xbf16>
    %c0_655 = arith.constant 0 : index
    %c0_656 = arith.constant 0 : index
    %c0_657 = arith.constant 0 : index
    %1432 = vector.load %arg6[%c0_655, %c0_656, %c0_657] : memref<9x16x8xbf16, #tpu.memory_space<vmem>>, vector<1x16x8xbf16>
    %1433 = vector.shape_cast %1432 : vector<1x16x8xbf16> to vector<16x8xbf16>
    %cst_658 = arith.constant dense<0.000000e+00> : vector<16x128xf32>
    %1434 = tpu.matmul %1433, %1431, %cst_658 {dimension_numbers = #tpu.dot_dimension_numbers<[1], [0], [0], [1], [0, 0, 1, 1], [], []>} : vector<16x8xbf16>, vector<8x128xbf16>, vector<16x128xf32> -> vector<16x128xf32>
    %1435 = arith.addf %1406, %1434 : vector<16x128xf32>
    %c8_i32_659 = arith.constant 8 : i32
    %1436 = tpu.dynamic_rotate %1398 by %c8_i32_659 dim 1 : vector<8x128xf32>, i32 -> vector<8x128xf32>
    %c0_i32_660 = arith.constant 0 : i32
    %1437 = vector.broadcast %c0_i32_660 : i32 to vector<1x128xi32>
    %1438 = arith.addi %1401, %1437 : vector<1x128xi32>
    %c0_i32_661 = arith.constant 0 : i32
    %1439 = vector.broadcast %c0_i32_661 : i32 to vector<1x128xi32>
    %1440 = arith.cmpi sge, %1438, %1439 : vector<1x128xi32>
    %c0_i32_662 = arith.constant 0 : i32
    %1441 = vector.broadcast %c0_i32_662 : i32 to vector<1x128xi32>
    %1442 = arith.addi %1401, %1441 : vector<1x128xi32>
    %c8_i32_663 = arith.constant 8 : i32
    %1443 = vector.broadcast %c8_i32_663 : i32 to vector<1x128xi32>
    %1444 = arith.cmpi slt, %1442, %1443 : vector<1x128xi32>
    %1445 = arith.andi %1440, %1444 : vector<1x128xi1>
    %c-1_i32_664 = arith.constant -1 : i32
    %1446 = vector.broadcast %c-1_i32_664 : i32 to vector<1x128xi32>
    %1447 = arith.addi %1405, %1446 : vector<1x128xi32>
    %c0_i32_665 = arith.constant 0 : i32
    %1448 = vector.broadcast %c0_i32_665 : i32 to vector<1x128xi32>
    %1449 = arith.cmpi sge, %1447, %1448 : vector<1x128xi32>
    %1450 = arith.andi %1445, %1449 : vector<1x128xi1>
    %c-1_i32_666 = arith.constant -1 : i32
    %1451 = vector.broadcast %c-1_i32_666 : i32 to vector<1x128xi32>
    %1452 = arith.addi %1405, %1451 : vector<1x128xi32>
    %c8_i32_667 = arith.constant 8 : i32
    %1453 = vector.broadcast %c8_i32_667 : i32 to vector<1x128xi32>
    %1454 = arith.cmpi slt, %1452, %1453 : vector<1x128xi32>
    %1455 = arith.andi %1450, %1454 : vector<1x128xi1>
    %cst_668 = arith.constant 0.000000e+00 : f32
    %1456 = vector.shape_cast %1455 : vector<1x128xi1> to vector<1x128xi1>
    %1457 = vector.broadcast %1456 : vector<1x128xi1> to vector<8x128xi1>
    %1458 = vector.broadcast %cst_668 : f32 to vector<8x128xf32>
    %1459 = arith.select %1457, %1436, %1458 : vector<8x128xi1>, vector<8x128xf32>
    %1460 = arith.truncf %1459 : vector<8x128xf32> to vector<8x128xbf16>
    %c1_669 = arith.constant 1 : index
    %c0_670 = arith.constant 0 : index
    %c0_671 = arith.constant 0 : index
    %1461 = vector.load %arg6[%c1_669, %c0_670, %c0_671] : memref<9x16x8xbf16, #tpu.memory_space<vmem>>, vector<1x16x8xbf16>
    %1462 = vector.shape_cast %1461 : vector<1x16x8xbf16> to vector<16x8xbf16>
    %cst_672 = arith.constant dense<0.000000e+00> : vector<16x128xf32>
    %1463 = tpu.matmul %1462, %1460, %cst_672 {dimension_numbers = #tpu.dot_dimension_numbers<[1], [0], [0], [1], [0, 0, 1, 1], [], []>} : vector<16x8xbf16>, vector<8x128xbf16>, vector<16x128xf32> -> vector<16x128xf32>
    %1464 = arith.addf %1435, %1463 : vector<16x128xf32>
    %c7_i32_673 = arith.constant 7 : i32
    %1465 = tpu.dynamic_rotate %1398 by %c7_i32_673 dim 1 : vector<8x128xf32>, i32 -> vector<8x128xf32>
    %c1_i32_674 = arith.constant 1 : i32
    %1466 = vector.broadcast %c1_i32_674 : i32 to vector<1x128xi32>
    %1467 = arith.addi %1401, %1466 : vector<1x128xi32>
    %c0_i32_675 = arith.constant 0 : i32
    %1468 = vector.broadcast %c0_i32_675 : i32 to vector<1x128xi32>
    %1469 = arith.cmpi sge, %1467, %1468 : vector<1x128xi32>
    %c1_i32_676 = arith.constant 1 : i32
    %1470 = vector.broadcast %c1_i32_676 : i32 to vector<1x128xi32>
    %1471 = arith.addi %1401, %1470 : vector<1x128xi32>
    %c8_i32_677 = arith.constant 8 : i32
    %1472 = vector.broadcast %c8_i32_677 : i32 to vector<1x128xi32>
    %1473 = arith.cmpi slt, %1471, %1472 : vector<1x128xi32>
    %1474 = arith.andi %1469, %1473 : vector<1x128xi1>
    %c-1_i32_678 = arith.constant -1 : i32
    %1475 = vector.broadcast %c-1_i32_678 : i32 to vector<1x128xi32>
    %1476 = arith.addi %1405, %1475 : vector<1x128xi32>
    %c0_i32_679 = arith.constant 0 : i32
    %1477 = vector.broadcast %c0_i32_679 : i32 to vector<1x128xi32>
    %1478 = arith.cmpi sge, %1476, %1477 : vector<1x128xi32>
    %1479 = arith.andi %1474, %1478 : vector<1x128xi1>
    %c-1_i32_680 = arith.constant -1 : i32
    %1480 = vector.broadcast %c-1_i32_680 : i32 to vector<1x128xi32>
    %1481 = arith.addi %1405, %1480 : vector<1x128xi32>
    %c8_i32_681 = arith.constant 8 : i32
    %1482 = vector.broadcast %c8_i32_681 : i32 to vector<1x128xi32>
    %1483 = arith.cmpi slt, %1481, %1482 : vector<1x128xi32>
    %1484 = arith.andi %1479, %1483 : vector<1x128xi1>
    %cst_682 = arith.constant 0.000000e+00 : f32
    %1485 = vector.shape_cast %1484 : vector<1x128xi1> to vector<1x128xi1>
    %1486 = vector.broadcast %1485 : vector<1x128xi1> to vector<8x128xi1>
    %1487 = vector.broadcast %cst_682 : f32 to vector<8x128xf32>
    %1488 = arith.select %1486, %1465, %1487 : vector<8x128xi1>, vector<8x128xf32>
    %1489 = arith.truncf %1488 : vector<8x128xf32> to vector<8x128xbf16>
    %c2_683 = arith.constant 2 : index
    %c0_684 = arith.constant 0 : index
    %c0_685 = arith.constant 0 : index
    %1490 = vector.load %arg6[%c2_683, %c0_684, %c0_685] : memref<9x16x8xbf16, #tpu.memory_space<vmem>>, vector<1x16x8xbf16>
    %1491 = vector.shape_cast %1490 : vector<1x16x8xbf16> to vector<16x8xbf16>
    %cst_686 = arith.constant dense<0.000000e+00> : vector<16x128xf32>
    %1492 = tpu.matmul %1491, %1489, %cst_686 {dimension_numbers = #tpu.dot_dimension_numbers<[1], [0], [0], [1], [0, 0, 1, 1], [], []>} : vector<16x8xbf16>, vector<8x128xbf16>, vector<16x128xf32> -> vector<16x128xf32>
    %1493 = arith.addf %1464, %1492 : vector<16x128xf32>
    %c1_i32_687 = arith.constant 1 : i32
    %1494 = tpu.dynamic_rotate %1398 by %c1_i32_687 dim 1 : vector<8x128xf32>, i32 -> vector<8x128xf32>
    %c-1_i32_688 = arith.constant -1 : i32
    %1495 = vector.broadcast %c-1_i32_688 : i32 to vector<1x128xi32>
    %1496 = arith.addi %1401, %1495 : vector<1x128xi32>
    %c0_i32_689 = arith.constant 0 : i32
    %1497 = vector.broadcast %c0_i32_689 : i32 to vector<1x128xi32>
    %1498 = arith.cmpi sge, %1496, %1497 : vector<1x128xi32>
    %c-1_i32_690 = arith.constant -1 : i32
    %1499 = vector.broadcast %c-1_i32_690 : i32 to vector<1x128xi32>
    %1500 = arith.addi %1401, %1499 : vector<1x128xi32>
    %c8_i32_691 = arith.constant 8 : i32
    %1501 = vector.broadcast %c8_i32_691 : i32 to vector<1x128xi32>
    %1502 = arith.cmpi slt, %1500, %1501 : vector<1x128xi32>
    %1503 = arith.andi %1498, %1502 : vector<1x128xi1>
    %c0_i32_692 = arith.constant 0 : i32
    %1504 = vector.broadcast %c0_i32_692 : i32 to vector<1x128xi32>
    %1505 = arith.addi %1405, %1504 : vector<1x128xi32>
    %c0_i32_693 = arith.constant 0 : i32
    %1506 = vector.broadcast %c0_i32_693 : i32 to vector<1x128xi32>
    %1507 = arith.cmpi sge, %1505, %1506 : vector<1x128xi32>
    %1508 = arith.andi %1503, %1507 : vector<1x128xi1>
    %c0_i32_694 = arith.constant 0 : i32
    %1509 = vector.broadcast %c0_i32_694 : i32 to vector<1x128xi32>
    %1510 = arith.addi %1405, %1509 : vector<1x128xi32>
    %c8_i32_695 = arith.constant 8 : i32
    %1511 = vector.broadcast %c8_i32_695 : i32 to vector<1x128xi32>
    %1512 = arith.cmpi slt, %1510, %1511 : vector<1x128xi32>
    %1513 = arith.andi %1508, %1512 : vector<1x128xi1>
    %cst_696 = arith.constant 0.000000e+00 : f32
    %1514 = vector.shape_cast %1513 : vector<1x128xi1> to vector<1x128xi1>
    %1515 = vector.broadcast %1514 : vector<1x128xi1> to vector<8x128xi1>
    %1516 = vector.broadcast %cst_696 : f32 to vector<8x128xf32>
    %1517 = arith.select %1515, %1494, %1516 : vector<8x128xi1>, vector<8x128xf32>
    %1518 = arith.truncf %1517 : vector<8x128xf32> to vector<8x128xbf16>
    %c3_697 = arith.constant 3 : index
    %c0_698 = arith.constant 0 : index
    %c0_699 = arith.constant 0 : index
    %1519 = vector.load %arg6[%c3_697, %c0_698, %c0_699] : memref<9x16x8xbf16, #tpu.memory_space<vmem>>, vector<1x16x8xbf16>
    %1520 = vector.shape_cast %1519 : vector<1x16x8xbf16> to vector<16x8xbf16>
    %cst_700 = arith.constant dense<0.000000e+00> : vector<16x128xf32>
    %1521 = tpu.matmul %1520, %1518, %cst_700 {dimension_numbers = #tpu.dot_dimension_numbers<[1], [0], [0], [1], [0, 0, 1, 1], [], []>} : vector<16x8xbf16>, vector<8x128xbf16>, vector<16x128xf32> -> vector<16x128xf32>
    %1522 = arith.addf %1493, %1521 : vector<16x128xf32>
    %c0_i32_701 = arith.constant 0 : i32
    %1523 = vector.broadcast %c0_i32_701 : i32 to vector<1x128xi32>
    %1524 = arith.addi %1401, %1523 : vector<1x128xi32>
    %c0_i32_702 = arith.constant 0 : i32
    %1525 = vector.broadcast %c0_i32_702 : i32 to vector<1x128xi32>
    %1526 = arith.cmpi sge, %1524, %1525 : vector<1x128xi32>
    %c0_i32_703 = arith.constant 0 : i32
    %1527 = vector.broadcast %c0_i32_703 : i32 to vector<1x128xi32>
    %1528 = arith.addi %1401, %1527 : vector<1x128xi32>
    %c8_i32_704 = arith.constant 8 : i32
    %1529 = vector.broadcast %c8_i32_704 : i32 to vector<1x128xi32>
    %1530 = arith.cmpi slt, %1528, %1529 : vector<1x128xi32>
    %1531 = arith.andi %1526, %1530 : vector<1x128xi1>
    %c0_i32_705 = arith.constant 0 : i32
    %1532 = vector.broadcast %c0_i32_705 : i32 to vector<1x128xi32>
    %1533 = arith.addi %1405, %1532 : vector<1x128xi32>
    %c0_i32_706 = arith.constant 0 : i32
    %1534 = vector.broadcast %c0_i32_706 : i32 to vector<1x128xi32>
    %1535 = arith.cmpi sge, %1533, %1534 : vector<1x128xi32>
    %1536 = arith.andi %1531, %1535 : vector<1x128xi1>
    %c0_i32_707 = arith.constant 0 : i32
    %1537 = vector.broadcast %c0_i32_707 : i32 to vector<1x128xi32>
    %1538 = arith.addi %1405, %1537 : vector<1x128xi32>
    %c8_i32_708 = arith.constant 8 : i32
    %1539 = vector.broadcast %c8_i32_708 : i32 to vector<1x128xi32>
    %1540 = arith.cmpi slt, %1538, %1539 : vector<1x128xi32>
    %1541 = arith.andi %1536, %1540 : vector<1x128xi1>
    %cst_709 = arith.constant 0.000000e+00 : f32
    %1542 = vector.shape_cast %1541 : vector<1x128xi1> to vector<1x128xi1>
    %1543 = vector.broadcast %1542 : vector<1x128xi1> to vector<8x128xi1>
    %1544 = vector.broadcast %cst_709 : f32 to vector<8x128xf32>
    %1545 = arith.select %1543, %1398, %1544 : vector<8x128xi1>, vector<8x128xf32>
    %1546 = arith.truncf %1545 : vector<8x128xf32> to vector<8x128xbf16>
    %c4_710 = arith.constant 4 : index
    %c0_711 = arith.constant 0 : index
    %c0_712 = arith.constant 0 : index
    %1547 = vector.load %arg6[%c4_710, %c0_711, %c0_712] : memref<9x16x8xbf16, #tpu.memory_space<vmem>>, vector<1x16x8xbf16>
    %1548 = vector.shape_cast %1547 : vector<1x16x8xbf16> to vector<16x8xbf16>
    %cst_713 = arith.constant dense<0.000000e+00> : vector<16x128xf32>
    %1549 = tpu.matmul %1548, %1546, %cst_713 {dimension_numbers = #tpu.dot_dimension_numbers<[1], [0], [0], [1], [0, 0, 1, 1], [], []>} : vector<16x8xbf16>, vector<8x128xbf16>, vector<16x128xf32> -> vector<16x128xf32>
    %1550 = arith.addf %1522, %1549 : vector<16x128xf32>
    %c127_i32_714 = arith.constant 127 : i32
    %1551 = tpu.dynamic_rotate %1398 by %c127_i32_714 dim 1 : vector<8x128xf32>, i32 -> vector<8x128xf32>
    %c1_i32_715 = arith.constant 1 : i32
    %1552 = vector.broadcast %c1_i32_715 : i32 to vector<1x128xi32>
    %1553 = arith.addi %1401, %1552 : vector<1x128xi32>
    %c0_i32_716 = arith.constant 0 : i32
    %1554 = vector.broadcast %c0_i32_716 : i32 to vector<1x128xi32>
    %1555 = arith.cmpi sge, %1553, %1554 : vector<1x128xi32>
    %c1_i32_717 = arith.constant 1 : i32
    %1556 = vector.broadcast %c1_i32_717 : i32 to vector<1x128xi32>
    %1557 = arith.addi %1401, %1556 : vector<1x128xi32>
    %c8_i32_718 = arith.constant 8 : i32
    %1558 = vector.broadcast %c8_i32_718 : i32 to vector<1x128xi32>
    %1559 = arith.cmpi slt, %1557, %1558 : vector<1x128xi32>
    %1560 = arith.andi %1555, %1559 : vector<1x128xi1>
    %c0_i32_719 = arith.constant 0 : i32
    %1561 = vector.broadcast %c0_i32_719 : i32 to vector<1x128xi32>
    %1562 = arith.addi %1405, %1561 : vector<1x128xi32>
    %c0_i32_720 = arith.constant 0 : i32
    %1563 = vector.broadcast %c0_i32_720 : i32 to vector<1x128xi32>
    %1564 = arith.cmpi sge, %1562, %1563 : vector<1x128xi32>
    %1565 = arith.andi %1560, %1564 : vector<1x128xi1>
    %c0_i32_721 = arith.constant 0 : i32
    %1566 = vector.broadcast %c0_i32_721 : i32 to vector<1x128xi32>
    %1567 = arith.addi %1405, %1566 : vector<1x128xi32>
    %c8_i32_722 = arith.constant 8 : i32
    %1568 = vector.broadcast %c8_i32_722 : i32 to vector<1x128xi32>
    %1569 = arith.cmpi slt, %1567, %1568 : vector<1x128xi32>
    %1570 = arith.andi %1565, %1569 : vector<1x128xi1>
    %cst_723 = arith.constant 0.000000e+00 : f32
    %1571 = vector.shape_cast %1570 : vector<1x128xi1> to vector<1x128xi1>
    %1572 = vector.broadcast %1571 : vector<1x128xi1> to vector<8x128xi1>
    %1573 = vector.broadcast %cst_723 : f32 to vector<8x128xf32>
    %1574 = arith.select %1572, %1551, %1573 : vector<8x128xi1>, vector<8x128xf32>
    %1575 = arith.truncf %1574 : vector<8x128xf32> to vector<8x128xbf16>
    %c5_724 = arith.constant 5 : index
    %c0_725 = arith.constant 0 : index
    %c0_726 = arith.constant 0 : index
    %1576 = vector.load %arg6[%c5_724, %c0_725, %c0_726] : memref<9x16x8xbf16, #tpu.memory_space<vmem>>, vector<1x16x8xbf16>
    %1577 = vector.shape_cast %1576 : vector<1x16x8xbf16> to vector<16x8xbf16>
    %cst_727 = arith.constant dense<0.000000e+00> : vector<16x128xf32>
    %1578 = tpu.matmul %1577, %1575, %cst_727 {dimension_numbers = #tpu.dot_dimension_numbers<[1], [0], [0], [1], [0, 0, 1, 1], [], []>} : vector<16x8xbf16>, vector<8x128xbf16>, vector<16x128xf32> -> vector<16x128xf32>
    %1579 = arith.addf %1550, %1578 : vector<16x128xf32>
    %c121_i32_728 = arith.constant 121 : i32
    %1580 = tpu.dynamic_rotate %1398 by %c121_i32_728 dim 1 : vector<8x128xf32>, i32 -> vector<8x128xf32>
    %c-1_i32_729 = arith.constant -1 : i32
    %1581 = vector.broadcast %c-1_i32_729 : i32 to vector<1x128xi32>
    %1582 = arith.addi %1401, %1581 : vector<1x128xi32>
    %c0_i32_730 = arith.constant 0 : i32
    %1583 = vector.broadcast %c0_i32_730 : i32 to vector<1x128xi32>
    %1584 = arith.cmpi sge, %1582, %1583 : vector<1x128xi32>
    %c-1_i32_731 = arith.constant -1 : i32
    %1585 = vector.broadcast %c-1_i32_731 : i32 to vector<1x128xi32>
    %1586 = arith.addi %1401, %1585 : vector<1x128xi32>
    %c8_i32_732 = arith.constant 8 : i32
    %1587 = vector.broadcast %c8_i32_732 : i32 to vector<1x128xi32>
    %1588 = arith.cmpi slt, %1586, %1587 : vector<1x128xi32>
    %1589 = arith.andi %1584, %1588 : vector<1x128xi1>
    %c1_i32_733 = arith.constant 1 : i32
    %1590 = vector.broadcast %c1_i32_733 : i32 to vector<1x128xi32>
    %1591 = arith.addi %1405, %1590 : vector<1x128xi32>
    %c0_i32_734 = arith.constant 0 : i32
    %1592 = vector.broadcast %c0_i32_734 : i32 to vector<1x128xi32>
    %1593 = arith.cmpi sge, %1591, %1592 : vector<1x128xi32>
    %1594 = arith.andi %1589, %1593 : vector<1x128xi1>
    %c1_i32_735 = arith.constant 1 : i32
    %1595 = vector.broadcast %c1_i32_735 : i32 to vector<1x128xi32>
    %1596 = arith.addi %1405, %1595 : vector<1x128xi32>
    %c8_i32_736 = arith.constant 8 : i32
    %1597 = vector.broadcast %c8_i32_736 : i32 to vector<1x128xi32>
    %1598 = arith.cmpi slt, %1596, %1597 : vector<1x128xi32>
    %1599 = arith.andi %1594, %1598 : vector<1x128xi1>
    %cst_737 = arith.constant 0.000000e+00 : f32
    %1600 = vector.shape_cast %1599 : vector<1x128xi1> to vector<1x128xi1>
    %1601 = vector.broadcast %1600 : vector<1x128xi1> to vector<8x128xi1>
    %1602 = vector.broadcast %cst_737 : f32 to vector<8x128xf32>
    %1603 = arith.select %1601, %1580, %1602 : vector<8x128xi1>, vector<8x128xf32>
    %1604 = arith.truncf %1603 : vector<8x128xf32> to vector<8x128xbf16>
    %c6_738 = arith.constant 6 : index
    %c0_739 = arith.constant 0 : index
    %c0_740 = arith.constant 0 : index
    %1605 = vector.load %arg6[%c6_738, %c0_739, %c0_740] : memref<9x16x8xbf16, #tpu.memory_space<vmem>>, vector<1x16x8xbf16>
    %1606 = vector.shape_cast %1605 : vector<1x16x8xbf16> to vector<16x8xbf16>
    %cst_741 = arith.constant dense<0.000000e+00> : vector<16x128xf32>
    %1607 = tpu.matmul %1606, %1604, %cst_741 {dimension_numbers = #tpu.dot_dimension_numbers<[1], [0], [0], [1], [0, 0, 1, 1], [], []>} : vector<16x8xbf16>, vector<8x128xbf16>, vector<16x128xf32> -> vector<16x128xf32>
    %1608 = arith.addf %1579, %1607 : vector<16x128xf32>
    %c120_i32_742 = arith.constant 120 : i32
    %1609 = tpu.dynamic_rotate %1398 by %c120_i32_742 dim 1 : vector<8x128xf32>, i32 -> vector<8x128xf32>
    %c0_i32_743 = arith.constant 0 : i32
    %1610 = vector.broadcast %c0_i32_743 : i32 to vector<1x128xi32>
    %1611 = arith.addi %1401, %1610 : vector<1x128xi32>
    %c0_i32_744 = arith.constant 0 : i32
    %1612 = vector.broadcast %c0_i32_744 : i32 to vector<1x128xi32>
    %1613 = arith.cmpi sge, %1611, %1612 : vector<1x128xi32>
    %c0_i32_745 = arith.constant 0 : i32
    %1614 = vector.broadcast %c0_i32_745 : i32 to vector<1x128xi32>
    %1615 = arith.addi %1401, %1614 : vector<1x128xi32>
    %c8_i32_746 = arith.constant 8 : i32
    %1616 = vector.broadcast %c8_i32_746 : i32 to vector<1x128xi32>
    %1617 = arith.cmpi slt, %1615, %1616 : vector<1x128xi32>
    %1618 = arith.andi %1613, %1617 : vector<1x128xi1>
    %c1_i32_747 = arith.constant 1 : i32
    %1619 = vector.broadcast %c1_i32_747 : i32 to vector<1x128xi32>
    %1620 = arith.addi %1405, %1619 : vector<1x128xi32>
    %c0_i32_748 = arith.constant 0 : i32
    %1621 = vector.broadcast %c0_i32_748 : i32 to vector<1x128xi32>
    %1622 = arith.cmpi sge, %1620, %1621 : vector<1x128xi32>
    %1623 = arith.andi %1618, %1622 : vector<1x128xi1>
    %c1_i32_749 = arith.constant 1 : i32
    %1624 = vector.broadcast %c1_i32_749 : i32 to vector<1x128xi32>
    %1625 = arith.addi %1405, %1624 : vector<1x128xi32>
    %c8_i32_750 = arith.constant 8 : i32
    %1626 = vector.broadcast %c8_i32_750 : i32 to vector<1x128xi32>
    %1627 = arith.cmpi slt, %1625, %1626 : vector<1x128xi32>
    %1628 = arith.andi %1623, %1627 : vector<1x128xi1>
    %cst_751 = arith.constant 0.000000e+00 : f32
    %1629 = vector.shape_cast %1628 : vector<1x128xi1> to vector<1x128xi1>
    %1630 = vector.broadcast %1629 : vector<1x128xi1> to vector<8x128xi1>
    %1631 = vector.broadcast %cst_751 : f32 to vector<8x128xf32>
    %1632 = arith.select %1630, %1609, %1631 : vector<8x128xi1>, vector<8x128xf32>
    %1633 = arith.truncf %1632 : vector<8x128xf32> to vector<8x128xbf16>
    %c7_752 = arith.constant 7 : index
    %c0_753 = arith.constant 0 : index
    %c0_754 = arith.constant 0 : index
    %1634 = vector.load %arg6[%c7_752, %c0_753, %c0_754] : memref<9x16x8xbf16, #tpu.memory_space<vmem>>, vector<1x16x8xbf16>
    %1635 = vector.shape_cast %1634 : vector<1x16x8xbf16> to vector<16x8xbf16>
    %cst_755 = arith.constant dense<0.000000e+00> : vector<16x128xf32>
    %1636 = tpu.matmul %1635, %1633, %cst_755 {dimension_numbers = #tpu.dot_dimension_numbers<[1], [0], [0], [1], [0, 0, 1, 1], [], []>} : vector<16x8xbf16>, vector<8x128xbf16>, vector<16x128xf32> -> vector<16x128xf32>
    %1637 = arith.addf %1608, %1636 : vector<16x128xf32>
    %c119_i32_756 = arith.constant 119 : i32
    %1638 = tpu.dynamic_rotate %1398 by %c119_i32_756 dim 1 : vector<8x128xf32>, i32 -> vector<8x128xf32>
    %c1_i32_757 = arith.constant 1 : i32
    %1639 = vector.broadcast %c1_i32_757 : i32 to vector<1x128xi32>
    %1640 = arith.addi %1401, %1639 : vector<1x128xi32>
    %c0_i32_758 = arith.constant 0 : i32
    %1641 = vector.broadcast %c0_i32_758 : i32 to vector<1x128xi32>
    %1642 = arith.cmpi sge, %1640, %1641 : vector<1x128xi32>
    %c1_i32_759 = arith.constant 1 : i32
    %1643 = vector.broadcast %c1_i32_759 : i32 to vector<1x128xi32>
    %1644 = arith.addi %1401, %1643 : vector<1x128xi32>
    %c8_i32_760 = arith.constant 8 : i32
    %1645 = vector.broadcast %c8_i32_760 : i32 to vector<1x128xi32>
    %1646 = arith.cmpi slt, %1644, %1645 : vector<1x128xi32>
    %1647 = arith.andi %1642, %1646 : vector<1x128xi1>
    %c1_i32_761 = arith.constant 1 : i32
    %1648 = vector.broadcast %c1_i32_761 : i32 to vector<1x128xi32>
    %1649 = arith.addi %1405, %1648 : vector<1x128xi32>
    %c0_i32_762 = arith.constant 0 : i32
    %1650 = vector.broadcast %c0_i32_762 : i32 to vector<1x128xi32>
    %1651 = arith.cmpi sge, %1649, %1650 : vector<1x128xi32>
    %1652 = arith.andi %1647, %1651 : vector<1x128xi1>
    %c1_i32_763 = arith.constant 1 : i32
    %1653 = vector.broadcast %c1_i32_763 : i32 to vector<1x128xi32>
    %1654 = arith.addi %1405, %1653 : vector<1x128xi32>
    %c8_i32_764 = arith.constant 8 : i32
    %1655 = vector.broadcast %c8_i32_764 : i32 to vector<1x128xi32>
    %1656 = arith.cmpi slt, %1654, %1655 : vector<1x128xi32>
    %1657 = arith.andi %1652, %1656 : vector<1x128xi1>
    %cst_765 = arith.constant 0.000000e+00 : f32
    %1658 = vector.shape_cast %1657 : vector<1x128xi1> to vector<1x128xi1>
    %1659 = vector.broadcast %1658 : vector<1x128xi1> to vector<8x128xi1>
    %1660 = vector.broadcast %cst_765 : f32 to vector<8x128xf32>
    %1661 = arith.select %1659, %1638, %1660 : vector<8x128xi1>, vector<8x128xf32>
    %1662 = arith.truncf %1661 : vector<8x128xf32> to vector<8x128xbf16>
    %c8_766 = arith.constant 8 : index
    %c0_767 = arith.constant 0 : index
    %c0_768 = arith.constant 0 : index
    %1663 = vector.load %arg6[%c8_766, %c0_767, %c0_768] : memref<9x16x8xbf16, #tpu.memory_space<vmem>>, vector<1x16x8xbf16>
    %1664 = vector.shape_cast %1663 : vector<1x16x8xbf16> to vector<16x8xbf16>
    %cst_769 = arith.constant dense<0.000000e+00> : vector<16x128xf32>
    %1665 = tpu.matmul %1664, %1662, %cst_769 {dimension_numbers = #tpu.dot_dimension_numbers<[1], [0], [0], [1], [0, 0, 1, 1], [], []>} : vector<16x8xbf16>, vector<8x128xbf16>, vector<16x128xf32> -> vector<16x128xf32>
    %1666 = arith.addf %1637, %1665 : vector<16x128xf32>
    %c0_770 = arith.constant 0 : index
    %c0_771 = arith.constant 0 : index
    %1667 = vector.load %arg9[%c0_770, %c0_771] : memref<128x128xf32, #tpu.memory_space<vmem>>, vector<128x128xf32>
    %cst_772 = arith.constant dense<0.000000e+00> : vector<16x128xf32>
    %1668 = tpu.matmul %1666, %1667, %cst_772 {dimension_numbers = #tpu.dot_dimension_numbers<[1], [0], [0], [1], [0, 0, 1, 1], [], []>} : vector<16x128xf32>, vector<128x128xf32>, vector<16x128xf32> -> vector<16x128xf32>
    %1669 = vector.broadcast %1393 : f32 to vector<16x128xf32>
    %1670 = arith.addf %1668, %1669 : vector<16x128xf32>
    %cst_773 = arith.constant 0.000000e+00 : f32
    %1671 = vector.broadcast %cst_773 : f32 to vector<16x128xf32>
    %1672 = arith.maximumf %1670, %1671 : vector<16x128xf32>
    %1673 = vector.broadcast %1394 : f32 to vector<16x128xf32>
    %1674 = arith.addf %1672, %1673 : vector<16x128xf32>
    %1675 = tpu.iota {dimensions = array<i32: 1>} : vector<1x128xi32>
    %c3_i32_774 = arith.constant 3 : i32
    %1676 = vector.broadcast %c3_i32_774 : i32 to vector<1x128xi32>
    %1677 = arith.andi %1675, %1676 : vector<1x128xi32>
    %c2_i32 = arith.constant 2 : i32
    %1678 = vector.broadcast %c2_i32 : i32 to vector<1x128xi32>
    %1679 = arith.shrsi %1675, %1678 : vector<1x128xi32>
    %c3_i32_775 = arith.constant 3 : i32
    %1680 = vector.broadcast %c3_i32_775 : i32 to vector<1x128xi32>
    %1681 = arith.andi %1679, %1680 : vector<1x128xi32>
    %cst_776 = arith.constant 0.000000e+00 : f32
    %1682 = vector.broadcast %cst_776 : f32 to vector<16x128xf32>
    %c5_i32 = arith.constant 5 : i32
    %1683 = tpu.dynamic_rotate %1674 by %c5_i32 dim 1 : vector<16x128xf32>, i32 -> vector<16x128xf32>
    %c-1_i32_777 = arith.constant -1 : i32
    %1684 = vector.broadcast %c-1_i32_777 : i32 to vector<1x128xi32>
    %1685 = arith.addi %1677, %1684 : vector<1x128xi32>
    %c0_i32_778 = arith.constant 0 : i32
    %1686 = vector.broadcast %c0_i32_778 : i32 to vector<1x128xi32>
    %1687 = arith.cmpi sge, %1685, %1686 : vector<1x128xi32>
    %c-1_i32_779 = arith.constant -1 : i32
    %1688 = vector.broadcast %c-1_i32_779 : i32 to vector<1x128xi32>
    %1689 = arith.addi %1677, %1688 : vector<1x128xi32>
    %c4_i32_780 = arith.constant 4 : i32
    %1690 = vector.broadcast %c4_i32_780 : i32 to vector<1x128xi32>
    %1691 = arith.cmpi slt, %1689, %1690 : vector<1x128xi32>
    %1692 = arith.andi %1687, %1691 : vector<1x128xi1>
    %c-1_i32_781 = arith.constant -1 : i32
    %1693 = vector.broadcast %c-1_i32_781 : i32 to vector<1x128xi32>
    %1694 = arith.addi %1681, %1693 : vector<1x128xi32>
    %c0_i32_782 = arith.constant 0 : i32
    %1695 = vector.broadcast %c0_i32_782 : i32 to vector<1x128xi32>
    %1696 = arith.cmpi sge, %1694, %1695 : vector<1x128xi32>
    %1697 = arith.andi %1692, %1696 : vector<1x128xi1>
    %c-1_i32_783 = arith.constant -1 : i32
    %1698 = vector.broadcast %c-1_i32_783 : i32 to vector<1x128xi32>
    %1699 = arith.addi %1681, %1698 : vector<1x128xi32>
    %c4_i32_784 = arith.constant 4 : i32
    %1700 = vector.broadcast %c4_i32_784 : i32 to vector<1x128xi32>
    %1701 = arith.cmpi slt, %1699, %1700 : vector<1x128xi32>
    %1702 = arith.andi %1697, %1701 : vector<1x128xi1>
    %cst_785 = arith.constant 0.000000e+00 : f32
    %1703 = vector.shape_cast %1702 : vector<1x128xi1> to vector<1x128xi1>
    %1704 = vector.broadcast %1703 : vector<1x128xi1> to vector<16x128xi1>
    %1705 = vector.broadcast %cst_785 : f32 to vector<16x128xf32>
    %1706 = arith.select %1704, %1683, %1705 : vector<16x128xi1>, vector<16x128xf32>
    %1707 = arith.truncf %1706 : vector<16x128xf32> to vector<16x128xbf16>
    %c0_786 = arith.constant 0 : index
    %c0_787 = arith.constant 0 : index
    %c0_788 = arith.constant 0 : index
    %1708 = vector.load %arg7[%c0_786, %c0_787, %c0_788] : memref<9x16x16xbf16, #tpu.memory_space<vmem>>, vector<1x16x16xbf16>
    %1709 = vector.shape_cast %1708 : vector<1x16x16xbf16> to vector<16x16xbf16>
    %cst_789 = arith.constant dense<0.000000e+00> : vector<16x128xf32>
    %1710 = tpu.matmul %1709, %1707, %cst_789 {dimension_numbers = #tpu.dot_dimension_numbers<[1], [0], [0], [1], [0, 0, 1, 1], [], []>} : vector<16x16xbf16>, vector<16x128xbf16>, vector<16x128xf32> -> vector<16x128xf32>
    %1711 = arith.addf %1682, %1710 : vector<16x128xf32>
    %c4_i32_790 = arith.constant 4 : i32
    %1712 = tpu.dynamic_rotate %1674 by %c4_i32_790 dim 1 : vector<16x128xf32>, i32 -> vector<16x128xf32>
    %c0_i32_791 = arith.constant 0 : i32
    %1713 = vector.broadcast %c0_i32_791 : i32 to vector<1x128xi32>
    %1714 = arith.addi %1677, %1713 : vector<1x128xi32>
    %c0_i32_792 = arith.constant 0 : i32
    %1715 = vector.broadcast %c0_i32_792 : i32 to vector<1x128xi32>
    %1716 = arith.cmpi sge, %1714, %1715 : vector<1x128xi32>
    %c0_i32_793 = arith.constant 0 : i32
    %1717 = vector.broadcast %c0_i32_793 : i32 to vector<1x128xi32>
    %1718 = arith.addi %1677, %1717 : vector<1x128xi32>
    %c4_i32_794 = arith.constant 4 : i32
    %1719 = vector.broadcast %c4_i32_794 : i32 to vector<1x128xi32>
    %1720 = arith.cmpi slt, %1718, %1719 : vector<1x128xi32>
    %1721 = arith.andi %1716, %1720 : vector<1x128xi1>
    %c-1_i32_795 = arith.constant -1 : i32
    %1722 = vector.broadcast %c-1_i32_795 : i32 to vector<1x128xi32>
    %1723 = arith.addi %1681, %1722 : vector<1x128xi32>
    %c0_i32_796 = arith.constant 0 : i32
    %1724 = vector.broadcast %c0_i32_796 : i32 to vector<1x128xi32>
    %1725 = arith.cmpi sge, %1723, %1724 : vector<1x128xi32>
    %1726 = arith.andi %1721, %1725 : vector<1x128xi1>
    %c-1_i32_797 = arith.constant -1 : i32
    %1727 = vector.broadcast %c-1_i32_797 : i32 to vector<1x128xi32>
    %1728 = arith.addi %1681, %1727 : vector<1x128xi32>
    %c4_i32_798 = arith.constant 4 : i32
    %1729 = vector.broadcast %c4_i32_798 : i32 to vector<1x128xi32>
    %1730 = arith.cmpi slt, %1728, %1729 : vector<1x128xi32>
    %1731 = arith.andi %1726, %1730 : vector<1x128xi1>
    %cst_799 = arith.constant 0.000000e+00 : f32
    %1732 = vector.shape_cast %1731 : vector<1x128xi1> to vector<1x128xi1>
    %1733 = vector.broadcast %1732 : vector<1x128xi1> to vector<16x128xi1>
    %1734 = vector.broadcast %cst_799 : f32 to vector<16x128xf32>
    %1735 = arith.select %1733, %1712, %1734 : vector<16x128xi1>, vector<16x128xf32>
    %1736 = arith.truncf %1735 : vector<16x128xf32> to vector<16x128xbf16>
    %c1_800 = arith.constant 1 : index
    %c0_801 = arith.constant 0 : index
    %c0_802 = arith.constant 0 : index
    %1737 = vector.load %arg7[%c1_800, %c0_801, %c0_802] : memref<9x16x16xbf16, #tpu.memory_space<vmem>>, vector<1x16x16xbf16>
    %1738 = vector.shape_cast %1737 : vector<1x16x16xbf16> to vector<16x16xbf16>
    %cst_803 = arith.constant dense<0.000000e+00> : vector<16x128xf32>
    %1739 = tpu.matmul %1738, %1736, %cst_803 {dimension_numbers = #tpu.dot_dimension_numbers<[1], [0], [0], [1], [0, 0, 1, 1], [], []>} : vector<16x16xbf16>, vector<16x128xbf16>, vector<16x128xf32> -> vector<16x128xf32>
    %1740 = arith.addf %1711, %1739 : vector<16x128xf32>
    %c3_i32_804 = arith.constant 3 : i32
    %1741 = tpu.dynamic_rotate %1674 by %c3_i32_804 dim 1 : vector<16x128xf32>, i32 -> vector<16x128xf32>
    %c1_i32_805 = arith.constant 1 : i32
    %1742 = vector.broadcast %c1_i32_805 : i32 to vector<1x128xi32>
    %1743 = arith.addi %1677, %1742 : vector<1x128xi32>
    %c0_i32_806 = arith.constant 0 : i32
    %1744 = vector.broadcast %c0_i32_806 : i32 to vector<1x128xi32>
    %1745 = arith.cmpi sge, %1743, %1744 : vector<1x128xi32>
    %c1_i32_807 = arith.constant 1 : i32
    %1746 = vector.broadcast %c1_i32_807 : i32 to vector<1x128xi32>
    %1747 = arith.addi %1677, %1746 : vector<1x128xi32>
    %c4_i32_808 = arith.constant 4 : i32
    %1748 = vector.broadcast %c4_i32_808 : i32 to vector<1x128xi32>
    %1749 = arith.cmpi slt, %1747, %1748 : vector<1x128xi32>
    %1750 = arith.andi %1745, %1749 : vector<1x128xi1>
    %c-1_i32_809 = arith.constant -1 : i32
    %1751 = vector.broadcast %c-1_i32_809 : i32 to vector<1x128xi32>
    %1752 = arith.addi %1681, %1751 : vector<1x128xi32>
    %c0_i32_810 = arith.constant 0 : i32
    %1753 = vector.broadcast %c0_i32_810 : i32 to vector<1x128xi32>
    %1754 = arith.cmpi sge, %1752, %1753 : vector<1x128xi32>
    %1755 = arith.andi %1750, %1754 : vector<1x128xi1>
    %c-1_i32_811 = arith.constant -1 : i32
    %1756 = vector.broadcast %c-1_i32_811 : i32 to vector<1x128xi32>
    %1757 = arith.addi %1681, %1756 : vector<1x128xi32>
    %c4_i32_812 = arith.constant 4 : i32
    %1758 = vector.broadcast %c4_i32_812 : i32 to vector<1x128xi32>
    %1759 = arith.cmpi slt, %1757, %1758 : vector<1x128xi32>
    %1760 = arith.andi %1755, %1759 : vector<1x128xi1>
    %cst_813 = arith.constant 0.000000e+00 : f32
    %1761 = vector.shape_cast %1760 : vector<1x128xi1> to vector<1x128xi1>
    %1762 = vector.broadcast %1761 : vector<1x128xi1> to vector<16x128xi1>
    %1763 = vector.broadcast %cst_813 : f32 to vector<16x128xf32>
    %1764 = arith.select %1762, %1741, %1763 : vector<16x128xi1>, vector<16x128xf32>
    %1765 = arith.truncf %1764 : vector<16x128xf32> to vector<16x128xbf16>
    %c2_814 = arith.constant 2 : index
    %c0_815 = arith.constant 0 : index
    %c0_816 = arith.constant 0 : index
    %1766 = vector.load %arg7[%c2_814, %c0_815, %c0_816] : memref<9x16x16xbf16, #tpu.memory_space<vmem>>, vector<1x16x16xbf16>
    %1767 = vector.shape_cast %1766 : vector<1x16x16xbf16> to vector<16x16xbf16>
    %cst_817 = arith.constant dense<0.000000e+00> : vector<16x128xf32>
    %1768 = tpu.matmul %1767, %1765, %cst_817 {dimension_numbers = #tpu.dot_dimension_numbers<[1], [0], [0], [1], [0, 0, 1, 1], [], []>} : vector<16x16xbf16>, vector<16x128xbf16>, vector<16x128xf32> -> vector<16x128xf32>
    %1769 = arith.addf %1740, %1768 : vector<16x128xf32>
    %c1_i32_818 = arith.constant 1 : i32
    %1770 = tpu.dynamic_rotate %1674 by %c1_i32_818 dim 1 : vector<16x128xf32>, i32 -> vector<16x128xf32>
    %c-1_i32_819 = arith.constant -1 : i32
    %1771 = vector.broadcast %c-1_i32_819 : i32 to vector<1x128xi32>
    %1772 = arith.addi %1677, %1771 : vector<1x128xi32>
    %c0_i32_820 = arith.constant 0 : i32
    %1773 = vector.broadcast %c0_i32_820 : i32 to vector<1x128xi32>
    %1774 = arith.cmpi sge, %1772, %1773 : vector<1x128xi32>
    %c-1_i32_821 = arith.constant -1 : i32
    %1775 = vector.broadcast %c-1_i32_821 : i32 to vector<1x128xi32>
    %1776 = arith.addi %1677, %1775 : vector<1x128xi32>
    %c4_i32_822 = arith.constant 4 : i32
    %1777 = vector.broadcast %c4_i32_822 : i32 to vector<1x128xi32>
    %1778 = arith.cmpi slt, %1776, %1777 : vector<1x128xi32>
    %1779 = arith.andi %1774, %1778 : vector<1x128xi1>
    %c0_i32_823 = arith.constant 0 : i32
    %1780 = vector.broadcast %c0_i32_823 : i32 to vector<1x128xi32>
    %1781 = arith.addi %1681, %1780 : vector<1x128xi32>
    %c0_i32_824 = arith.constant 0 : i32
    %1782 = vector.broadcast %c0_i32_824 : i32 to vector<1x128xi32>
    %1783 = arith.cmpi sge, %1781, %1782 : vector<1x128xi32>
    %1784 = arith.andi %1779, %1783 : vector<1x128xi1>
    %c0_i32_825 = arith.constant 0 : i32
    %1785 = vector.broadcast %c0_i32_825 : i32 to vector<1x128xi32>
    %1786 = arith.addi %1681, %1785 : vector<1x128xi32>
    %c4_i32_826 = arith.constant 4 : i32
    %1787 = vector.broadcast %c4_i32_826 : i32 to vector<1x128xi32>
    %1788 = arith.cmpi slt, %1786, %1787 : vector<1x128xi32>
    %1789 = arith.andi %1784, %1788 : vector<1x128xi1>
    %cst_827 = arith.constant 0.000000e+00 : f32
    %1790 = vector.shape_cast %1789 : vector<1x128xi1> to vector<1x128xi1>
    %1791 = vector.broadcast %1790 : vector<1x128xi1> to vector<16x128xi1>
    %1792 = vector.broadcast %cst_827 : f32 to vector<16x128xf32>
    %1793 = arith.select %1791, %1770, %1792 : vector<16x128xi1>, vector<16x128xf32>
    %1794 = arith.truncf %1793 : vector<16x128xf32> to vector<16x128xbf16>
    %c3_828 = arith.constant 3 : index
    %c0_829 = arith.constant 0 : index
    %c0_830 = arith.constant 0 : index
    %1795 = vector.load %arg7[%c3_828, %c0_829, %c0_830] : memref<9x16x16xbf16, #tpu.memory_space<vmem>>, vector<1x16x16xbf16>
    %1796 = vector.shape_cast %1795 : vector<1x16x16xbf16> to vector<16x16xbf16>
    %cst_831 = arith.constant dense<0.000000e+00> : vector<16x128xf32>
    %1797 = tpu.matmul %1796, %1794, %cst_831 {dimension_numbers = #tpu.dot_dimension_numbers<[1], [0], [0], [1], [0, 0, 1, 1], [], []>} : vector<16x16xbf16>, vector<16x128xbf16>, vector<16x128xf32> -> vector<16x128xf32>
    %1798 = arith.addf %1769, %1797 : vector<16x128xf32>
    %c0_i32_832 = arith.constant 0 : i32
    %1799 = vector.broadcast %c0_i32_832 : i32 to vector<1x128xi32>
    %1800 = arith.addi %1677, %1799 : vector<1x128xi32>
    %c0_i32_833 = arith.constant 0 : i32
    %1801 = vector.broadcast %c0_i32_833 : i32 to vector<1x128xi32>
    %1802 = arith.cmpi sge, %1800, %1801 : vector<1x128xi32>
    %c0_i32_834 = arith.constant 0 : i32
    %1803 = vector.broadcast %c0_i32_834 : i32 to vector<1x128xi32>
    %1804 = arith.addi %1677, %1803 : vector<1x128xi32>
    %c4_i32_835 = arith.constant 4 : i32
    %1805 = vector.broadcast %c4_i32_835 : i32 to vector<1x128xi32>
    %1806 = arith.cmpi slt, %1804, %1805 : vector<1x128xi32>
    %1807 = arith.andi %1802, %1806 : vector<1x128xi1>
    %c0_i32_836 = arith.constant 0 : i32
    %1808 = vector.broadcast %c0_i32_836 : i32 to vector<1x128xi32>
    %1809 = arith.addi %1681, %1808 : vector<1x128xi32>
    %c0_i32_837 = arith.constant 0 : i32
    %1810 = vector.broadcast %c0_i32_837 : i32 to vector<1x128xi32>
    %1811 = arith.cmpi sge, %1809, %1810 : vector<1x128xi32>
    %1812 = arith.andi %1807, %1811 : vector<1x128xi1>
    %c0_i32_838 = arith.constant 0 : i32
    %1813 = vector.broadcast %c0_i32_838 : i32 to vector<1x128xi32>
    %1814 = arith.addi %1681, %1813 : vector<1x128xi32>
    %c4_i32_839 = arith.constant 4 : i32
    %1815 = vector.broadcast %c4_i32_839 : i32 to vector<1x128xi32>
    %1816 = arith.cmpi slt, %1814, %1815 : vector<1x128xi32>
    %1817 = arith.andi %1812, %1816 : vector<1x128xi1>
    %cst_840 = arith.constant 0.000000e+00 : f32
    %1818 = vector.shape_cast %1817 : vector<1x128xi1> to vector<1x128xi1>
    %1819 = vector.broadcast %1818 : vector<1x128xi1> to vector<16x128xi1>
    %1820 = vector.broadcast %cst_840 : f32 to vector<16x128xf32>
    %1821 = arith.select %1819, %1674, %1820 : vector<16x128xi1>, vector<16x128xf32>
    %1822 = arith.truncf %1821 : vector<16x128xf32> to vector<16x128xbf16>
    %c4_841 = arith.constant 4 : index
    %c0_842 = arith.constant 0 : index
    %c0_843 = arith.constant 0 : index
    %1823 = vector.load %arg7[%c4_841, %c0_842, %c0_843] : memref<9x16x16xbf16, #tpu.memory_space<vmem>>, vector<1x16x16xbf16>
    %1824 = vector.shape_cast %1823 : vector<1x16x16xbf16> to vector<16x16xbf16>
    %cst_844 = arith.constant dense<0.000000e+00> : vector<16x128xf32>
    %1825 = tpu.matmul %1824, %1822, %cst_844 {dimension_numbers = #tpu.dot_dimension_numbers<[1], [0], [0], [1], [0, 0, 1, 1], [], []>} : vector<16x16xbf16>, vector<16x128xbf16>, vector<16x128xf32> -> vector<16x128xf32>
    %1826 = arith.addf %1798, %1825 : vector<16x128xf32>
    %c127_i32_845 = arith.constant 127 : i32
    %1827 = tpu.dynamic_rotate %1674 by %c127_i32_845 dim 1 : vector<16x128xf32>, i32 -> vector<16x128xf32>
    %c1_i32_846 = arith.constant 1 : i32
    %1828 = vector.broadcast %c1_i32_846 : i32 to vector<1x128xi32>
    %1829 = arith.addi %1677, %1828 : vector<1x128xi32>
    %c0_i32_847 = arith.constant 0 : i32
    %1830 = vector.broadcast %c0_i32_847 : i32 to vector<1x128xi32>
    %1831 = arith.cmpi sge, %1829, %1830 : vector<1x128xi32>
    %c1_i32_848 = arith.constant 1 : i32
    %1832 = vector.broadcast %c1_i32_848 : i32 to vector<1x128xi32>
    %1833 = arith.addi %1677, %1832 : vector<1x128xi32>
    %c4_i32_849 = arith.constant 4 : i32
    %1834 = vector.broadcast %c4_i32_849 : i32 to vector<1x128xi32>
    %1835 = arith.cmpi slt, %1833, %1834 : vector<1x128xi32>
    %1836 = arith.andi %1831, %1835 : vector<1x128xi1>
    %c0_i32_850 = arith.constant 0 : i32
    %1837 = vector.broadcast %c0_i32_850 : i32 to vector<1x128xi32>
    %1838 = arith.addi %1681, %1837 : vector<1x128xi32>
    %c0_i32_851 = arith.constant 0 : i32
    %1839 = vector.broadcast %c0_i32_851 : i32 to vector<1x128xi32>
    %1840 = arith.cmpi sge, %1838, %1839 : vector<1x128xi32>
    %1841 = arith.andi %1836, %1840 : vector<1x128xi1>
    %c0_i32_852 = arith.constant 0 : i32
    %1842 = vector.broadcast %c0_i32_852 : i32 to vector<1x128xi32>
    %1843 = arith.addi %1681, %1842 : vector<1x128xi32>
    %c4_i32_853 = arith.constant 4 : i32
    %1844 = vector.broadcast %c4_i32_853 : i32 to vector<1x128xi32>
    %1845 = arith.cmpi slt, %1843, %1844 : vector<1x128xi32>
    %1846 = arith.andi %1841, %1845 : vector<1x128xi1>
    %cst_854 = arith.constant 0.000000e+00 : f32
    %1847 = vector.shape_cast %1846 : vector<1x128xi1> to vector<1x128xi1>
    %1848 = vector.broadcast %1847 : vector<1x128xi1> to vector<16x128xi1>
    %1849 = vector.broadcast %cst_854 : f32 to vector<16x128xf32>
    %1850 = arith.select %1848, %1827, %1849 : vector<16x128xi1>, vector<16x128xf32>
    %1851 = arith.truncf %1850 : vector<16x128xf32> to vector<16x128xbf16>
    %c5_855 = arith.constant 5 : index
    %c0_856 = arith.constant 0 : index
    %c0_857 = arith.constant 0 : index
    %1852 = vector.load %arg7[%c5_855, %c0_856, %c0_857] : memref<9x16x16xbf16, #tpu.memory_space<vmem>>, vector<1x16x16xbf16>
    %1853 = vector.shape_cast %1852 : vector<1x16x16xbf16> to vector<16x16xbf16>
    %cst_858 = arith.constant dense<0.000000e+00> : vector<16x128xf32>
    %1854 = tpu.matmul %1853, %1851, %cst_858 {dimension_numbers = #tpu.dot_dimension_numbers<[1], [0], [0], [1], [0, 0, 1, 1], [], []>} : vector<16x16xbf16>, vector<16x128xbf16>, vector<16x128xf32> -> vector<16x128xf32>
    %1855 = arith.addf %1826, %1854 : vector<16x128xf32>
    %c125_i32 = arith.constant 125 : i32
    %1856 = tpu.dynamic_rotate %1674 by %c125_i32 dim 1 : vector<16x128xf32>, i32 -> vector<16x128xf32>
    %c-1_i32_859 = arith.constant -1 : i32
    %1857 = vector.broadcast %c-1_i32_859 : i32 to vector<1x128xi32>
    %1858 = arith.addi %1677, %1857 : vector<1x128xi32>
    %c0_i32_860 = arith.constant 0 : i32
    %1859 = vector.broadcast %c0_i32_860 : i32 to vector<1x128xi32>
    %1860 = arith.cmpi sge, %1858, %1859 : vector<1x128xi32>
    %c-1_i32_861 = arith.constant -1 : i32
    %1861 = vector.broadcast %c-1_i32_861 : i32 to vector<1x128xi32>
    %1862 = arith.addi %1677, %1861 : vector<1x128xi32>
    %c4_i32_862 = arith.constant 4 : i32
    %1863 = vector.broadcast %c4_i32_862 : i32 to vector<1x128xi32>
    %1864 = arith.cmpi slt, %1862, %1863 : vector<1x128xi32>
    %1865 = arith.andi %1860, %1864 : vector<1x128xi1>
    %c1_i32_863 = arith.constant 1 : i32
    %1866 = vector.broadcast %c1_i32_863 : i32 to vector<1x128xi32>
    %1867 = arith.addi %1681, %1866 : vector<1x128xi32>
    %c0_i32_864 = arith.constant 0 : i32
    %1868 = vector.broadcast %c0_i32_864 : i32 to vector<1x128xi32>
    %1869 = arith.cmpi sge, %1867, %1868 : vector<1x128xi32>
    %1870 = arith.andi %1865, %1869 : vector<1x128xi1>
    %c1_i32_865 = arith.constant 1 : i32
    %1871 = vector.broadcast %c1_i32_865 : i32 to vector<1x128xi32>
    %1872 = arith.addi %1681, %1871 : vector<1x128xi32>
    %c4_i32_866 = arith.constant 4 : i32
    %1873 = vector.broadcast %c4_i32_866 : i32 to vector<1x128xi32>
    %1874 = arith.cmpi slt, %1872, %1873 : vector<1x128xi32>
    %1875 = arith.andi %1870, %1874 : vector<1x128xi1>
    %cst_867 = arith.constant 0.000000e+00 : f32
    %1876 = vector.shape_cast %1875 : vector<1x128xi1> to vector<1x128xi1>
    %1877 = vector.broadcast %1876 : vector<1x128xi1> to vector<16x128xi1>
    %1878 = vector.broadcast %cst_867 : f32 to vector<16x128xf32>
    %1879 = arith.select %1877, %1856, %1878 : vector<16x128xi1>, vector<16x128xf32>
    %1880 = arith.truncf %1879 : vector<16x128xf32> to vector<16x128xbf16>
    %c6_868 = arith.constant 6 : index
    %c0_869 = arith.constant 0 : index
    %c0_870 = arith.constant 0 : index
    %1881 = vector.load %arg7[%c6_868, %c0_869, %c0_870] : memref<9x16x16xbf16, #tpu.memory_space<vmem>>, vector<1x16x16xbf16>
    %1882 = vector.shape_cast %1881 : vector<1x16x16xbf16> to vector<16x16xbf16>
    %cst_871 = arith.constant dense<0.000000e+00> : vector<16x128xf32>
    %1883 = tpu.matmul %1882, %1880, %cst_871 {dimension_numbers = #tpu.dot_dimension_numbers<[1], [0], [0], [1], [0, 0, 1, 1], [], []>} : vector<16x16xbf16>, vector<16x128xbf16>, vector<16x128xf32> -> vector<16x128xf32>
    %1884 = arith.addf %1855, %1883 : vector<16x128xf32>
    %c124_i32 = arith.constant 124 : i32
    %1885 = tpu.dynamic_rotate %1674 by %c124_i32 dim 1 : vector<16x128xf32>, i32 -> vector<16x128xf32>
    %c0_i32_872 = arith.constant 0 : i32
    %1886 = vector.broadcast %c0_i32_872 : i32 to vector<1x128xi32>
    %1887 = arith.addi %1677, %1886 : vector<1x128xi32>
    %c0_i32_873 = arith.constant 0 : i32
    %1888 = vector.broadcast %c0_i32_873 : i32 to vector<1x128xi32>
    %1889 = arith.cmpi sge, %1887, %1888 : vector<1x128xi32>
    %c0_i32_874 = arith.constant 0 : i32
    %1890 = vector.broadcast %c0_i32_874 : i32 to vector<1x128xi32>
    %1891 = arith.addi %1677, %1890 : vector<1x128xi32>
    %c4_i32_875 = arith.constant 4 : i32
    %1892 = vector.broadcast %c4_i32_875 : i32 to vector<1x128xi32>
    %1893 = arith.cmpi slt, %1891, %1892 : vector<1x128xi32>
    %1894 = arith.andi %1889, %1893 : vector<1x128xi1>
    %c1_i32_876 = arith.constant 1 : i32
    %1895 = vector.broadcast %c1_i32_876 : i32 to vector<1x128xi32>
    %1896 = arith.addi %1681, %1895 : vector<1x128xi32>
    %c0_i32_877 = arith.constant 0 : i32
    %1897 = vector.broadcast %c0_i32_877 : i32 to vector<1x128xi32>
    %1898 = arith.cmpi sge, %1896, %1897 : vector<1x128xi32>
    %1899 = arith.andi %1894, %1898 : vector<1x128xi1>
    %c1_i32_878 = arith.constant 1 : i32
    %1900 = vector.broadcast %c1_i32_878 : i32 to vector<1x128xi32>
    %1901 = arith.addi %1681, %1900 : vector<1x128xi32>
    %c4_i32_879 = arith.constant 4 : i32
    %1902 = vector.broadcast %c4_i32_879 : i32 to vector<1x128xi32>
    %1903 = arith.cmpi slt, %1901, %1902 : vector<1x128xi32>
    %1904 = arith.andi %1899, %1903 : vector<1x128xi1>
    %cst_880 = arith.constant 0.000000e+00 : f32
    %1905 = vector.shape_cast %1904 : vector<1x128xi1> to vector<1x128xi1>
    %1906 = vector.broadcast %1905 : vector<1x128xi1> to vector<16x128xi1>
    %1907 = vector.broadcast %cst_880 : f32 to vector<16x128xf32>
    %1908 = arith.select %1906, %1885, %1907 : vector<16x128xi1>, vector<16x128xf32>
    %1909 = arith.truncf %1908 : vector<16x128xf32> to vector<16x128xbf16>
    %c7_881 = arith.constant 7 : index
    %c0_882 = arith.constant 0 : index
    %c0_883 = arith.constant 0 : index
    %1910 = vector.load %arg7[%c7_881, %c0_882, %c0_883] : memref<9x16x16xbf16, #tpu.memory_space<vmem>>, vector<1x16x16xbf16>
    %1911 = vector.shape_cast %1910 : vector<1x16x16xbf16> to vector<16x16xbf16>
    %cst_884 = arith.constant dense<0.000000e+00> : vector<16x128xf32>
    %1912 = tpu.matmul %1911, %1909, %cst_884 {dimension_numbers = #tpu.dot_dimension_numbers<[1], [0], [0], [1], [0, 0, 1, 1], [], []>} : vector<16x16xbf16>, vector<16x128xbf16>, vector<16x128xf32> -> vector<16x128xf32>
    %1913 = arith.addf %1884, %1912 : vector<16x128xf32>
    %c123_i32 = arith.constant 123 : i32
    %1914 = tpu.dynamic_rotate %1674 by %c123_i32 dim 1 : vector<16x128xf32>, i32 -> vector<16x128xf32>
    %c1_i32_885 = arith.constant 1 : i32
    %1915 = vector.broadcast %c1_i32_885 : i32 to vector<1x128xi32>
    %1916 = arith.addi %1677, %1915 : vector<1x128xi32>
    %c0_i32_886 = arith.constant 0 : i32
    %1917 = vector.broadcast %c0_i32_886 : i32 to vector<1x128xi32>
    %1918 = arith.cmpi sge, %1916, %1917 : vector<1x128xi32>
    %c1_i32_887 = arith.constant 1 : i32
    %1919 = vector.broadcast %c1_i32_887 : i32 to vector<1x128xi32>
    %1920 = arith.addi %1677, %1919 : vector<1x128xi32>
    %c4_i32_888 = arith.constant 4 : i32
    %1921 = vector.broadcast %c4_i32_888 : i32 to vector<1x128xi32>
    %1922 = arith.cmpi slt, %1920, %1921 : vector<1x128xi32>
    %1923 = arith.andi %1918, %1922 : vector<1x128xi1>
    %c1_i32_889 = arith.constant 1 : i32
    %1924 = vector.broadcast %c1_i32_889 : i32 to vector<1x128xi32>
    %1925 = arith.addi %1681, %1924 : vector<1x128xi32>
    %c0_i32_890 = arith.constant 0 : i32
    %1926 = vector.broadcast %c0_i32_890 : i32 to vector<1x128xi32>
    %1927 = arith.cmpi sge, %1925, %1926 : vector<1x128xi32>
    %1928 = arith.andi %1923, %1927 : vector<1x128xi1>
    %c1_i32_891 = arith.constant 1 : i32
    %1929 = vector.broadcast %c1_i32_891 : i32 to vector<1x128xi32>
    %1930 = arith.addi %1681, %1929 : vector<1x128xi32>
    %c4_i32_892 = arith.constant 4 : i32
    %1931 = vector.broadcast %c4_i32_892 : i32 to vector<1x128xi32>
    %1932 = arith.cmpi slt, %1930, %1931 : vector<1x128xi32>
    %1933 = arith.andi %1928, %1932 : vector<1x128xi1>
    %cst_893 = arith.constant 0.000000e+00 : f32
    %1934 = vector.shape_cast %1933 : vector<1x128xi1> to vector<1x128xi1>
    %1935 = vector.broadcast %1934 : vector<1x128xi1> to vector<16x128xi1>
    %1936 = vector.broadcast %cst_893 : f32 to vector<16x128xf32>
    %1937 = arith.select %1935, %1914, %1936 : vector<16x128xi1>, vector<16x128xf32>
    %1938 = arith.truncf %1937 : vector<16x128xf32> to vector<16x128xbf16>
    %c8_894 = arith.constant 8 : index
    %c0_895 = arith.constant 0 : index
    %c0_896 = arith.constant 0 : index
    %1939 = vector.load %arg7[%c8_894, %c0_895, %c0_896] : memref<9x16x16xbf16, #tpu.memory_space<vmem>>, vector<1x16x16xbf16>
    %1940 = vector.shape_cast %1939 : vector<1x16x16xbf16> to vector<16x16xbf16>
    %cst_897 = arith.constant dense<0.000000e+00> : vector<16x128xf32>
    %1941 = tpu.matmul %1940, %1938, %cst_897 {dimension_numbers = #tpu.dot_dimension_numbers<[1], [0], [0], [1], [0, 0, 1, 1], [], []>} : vector<16x16xbf16>, vector<16x128xbf16>, vector<16x128xf32> -> vector<16x128xf32>
    %1942 = arith.addf %1913, %1941 : vector<16x128xf32>
    %1943 = vector.broadcast %1396 : f32 to vector<16x128xf32>
    %1944 = arith.mulf %1942, %1943 : vector<16x128xf32>
    %1945 = vector.broadcast %1395 : f32 to vector<16x128xf32>
    %1946 = arith.addf %1944, %1945 : vector<16x128xf32>
    %c0_898 = arith.constant 0 : index
    %c0_899 = arith.constant 0 : index
    %1947 = vector.load %arg9[%c0_898, %c0_899] : memref<128x128xf32, #tpu.memory_space<vmem>>, vector<128x128xf32>
    %cst_900 = arith.constant dense<0.000000e+00> : vector<8x128xf32>
    %1948 = tpu.matmul %1398, %1947, %cst_900 {dimension_numbers = #tpu.dot_dimension_numbers<[1], [0], [0], [1], [0, 0, 1, 1], [], []>} : vector<8x128xf32>, vector<128x128xf32>, vector<8x128xf32> -> vector<8x128xf32>
    %c0_901 = arith.constant 0 : index
    %c0_902 = arith.constant 0 : index
    %1949 = vector.load %arg11[%c0_901, %c0_902] : memref<16x8xf32, #tpu.memory_space<vmem>>, vector<16x8xf32>
    %cst_903 = arith.constant dense<0.000000e+00> : vector<16x128xf32>
    %1950 = tpu.matmul %1949, %1948, %cst_903 {dimension_numbers = #tpu.dot_dimension_numbers<[1], [0], [0], [1], [0, 0, 1, 1], [], []>} : vector<16x8xf32>, vector<8x128xf32>, vector<16x128xf32> -> vector<16x128xf32>
    %1951 = arith.addf %1946, %1950 : vector<16x128xf32>
    %cst_904 = arith.constant 0.000000e+00 : f32
    %1952 = vector.broadcast %cst_904 : f32 to vector<16x128xf32>
    %1953 = arith.maximumf %1951, %1952 : vector<16x128xf32>
    %c0_905 = arith.constant 0 : index
    %c0_906 = arith.constant 0 : index
    %1954 = vector.load %arg12[%c0_905, %c0_906] : memref<128x2xf32, #tpu.memory_space<vmem>>, vector<128x2xf32>
    %cst_907 = arith.constant dense<0.000000e+00> : vector<16x2xf32>
    %1955 = tpu.matmul %1953, %1954, %cst_907 {dimension_numbers = #tpu.dot_dimension_numbers<[1], [0], [0], [1], [0, 0, 1, 1], [], []>} : vector<16x128xf32>, vector<128x2xf32>, vector<16x2xf32> -> vector<16x2xf32>
    %c16 = arith.constant 16 : index
    %1956 = memref.load %arg15[%c16] : memref<17xf32, #tpu.memory_space<smem>>
    %1957 = vector.broadcast %1956 : f32 to vector<16x2xf32>
    %1958 = arith.addf %1955, %1957 : vector<16x2xf32>
    %c0_908 = arith.constant 0 : index
    %c0_909 = arith.constant 0 : index
    %1959 = vector.load %arg13[%c0_908, %c0_909] : memref<10x16xf32, #tpu.memory_space<vmem>>, vector<10x16xf32>
    %cst_910 = arith.constant dense<0.000000e+00> : vector<10x2xf32>
    %1960 = tpu.matmul %1959, %1958, %cst_910 {dimension_numbers = #tpu.dot_dimension_numbers<[1], [0], [0], [1], [0, 0, 1, 1], [], []>} : vector<10x16xf32>, vector<16x2xf32>, vector<10x2xf32> -> vector<10x2xf32>
    %c0_911 = arith.constant 0 : index
    %c0_912 = arith.constant 0 : index
    %1961 = vector.load %arg14[%c0_911, %c0_912] : memref<10x1xf32, #tpu.memory_space<vmem>>, vector<10x1xf32>
    %1962 = vector.broadcast %1961 : vector<10x1xf32> to vector<10x2xf32>
    %1963 = arith.addf %1960, %1962 : vector<10x2xf32>
    %c0_913 = arith.constant 0 : index
    %c0_914 = arith.constant 0 : index
    %1964 = vector.load %arg16[%c0_913, %c0_914] : memref<10x2xf32, #tpu.memory_space<vmem>>, vector<10x2xf32>
    tpu.vector_store %arg16[%c0_913, %c0_914], %1963 {strides = array<i32>} : memref<10x2xf32, #tpu.memory_space<vmem>>, vector<10x2xf32>,
    return
  }
}

</mosaic_0001>

<llo_original>
// kernel: forward.1
$region0: #{forward.1}
  #allocation0 [shape = 'u32[]', space=smem, size = 0x4, offset = 0x4, fixed_abs, tag = 'smem constant byte address 0x4 - core index']
  #allocation1 [shape = 'u32[144,128]{1,0:T(1,128)}', space=vmem, size = 0x12000, scoped, tag = 'internal scratch']
  %s0 = inlined_call_operand.vmem [shape: f32[3,512], index: 0, kind: input, shape index: {}]
  %s1 = inlined_call_operand.hbm [shape: bf16[9,4,3], index: 1, kind: input, shape index: {}]
  %s2 = inlined_call_operand.hbm [shape: bf16[9,4,4], index: 2, kind: input, shape index: {}]
  %s3 = inlined_call_operand.hbm [shape: bf16[9,4,4], index: 3, kind: input, shape index: {}]
  %s4 = inlined_call_operand.hbm [shape: bf16[9,8,4], index: 4, kind: input, shape index: {}]
  %s5 = inlined_call_operand.hbm [shape: bf16[9,8,8], index: 5, kind: input, shape index: {}]
  %s6 = inlined_call_operand.hbm [shape: bf16[9,16,8], index: 6, kind: input, shape index: {}]
  %s7 = inlined_call_operand.vmem [shape: bf16[9,16,16], index: 7, kind: input, shape index: {}]
  %s8 = inlined_call_operand.hbm [shape: f32[512,128], index: 8, kind: input, shape index: {}]
  %s9 = inlined_call_operand.vmem [shape: f32[128,128], index: 9, kind: input, shape index: {}]
  %s10 = inlined_call_operand.hbm [shape: f32[8,4], index: 10, kind: input, shape index: {}]
  %s11 = inlined_call_operand.hbm [shape: f32[16,8], index: 11, kind: input, shape index: {}]
  %s12 = inlined_call_operand.vmem [shape: f32[128,2], index: 12, kind: input, shape index: {}]
  %s13 = inlined_call_operand.hbm [shape: f32[10,16], index: 13, kind: input, shape index: {}]
  %s14 = inlined_call_operand.vmem [shape: f32[10,1], index: 14, kind: input, shape index: {}]
  %s15 = inlined_call_operand.vmem [shape: f32[17], index: 15, kind: input, shape index: {}]
  %s16 = inlined_call_operand.vmem [shape: f32[10,2], index: 16, kind: output, shape index: {}]
  %s17 = sld [smem:[#allocation0]]
  $region118: #{forward.1} parent=0
    _
  %s19 = ssub.s32 1, %s17
  %s20 = scalar_select 0, %s19, %s17
  $region1: #{forward.1} parent=0
    #allocation2 [shape = 'u8[9216]{0}', space=vmem, size = 0x2400, scoped, tag = 'input window, operand 1, single buffered']
    #allocation3 [shape = 's32[1]{0}', space=sflag, size = 0x4, scoped, tag = 'scoped memory for forward.1']
    #allocation4 [shape = 's32[1]{0}', space=sflag, size = 0x4, scoped, tag = 'scoped memory for forward.1']
    #allocation5 [shape = 'u8[9216]{0}', space=vmem, size = 0x2400, scoped, tag = 'input window, operand 2, single buffered']
    #allocation6 [shape = 's32[1]{0}', space=sflag, size = 0x4, scoped, tag = 'scoped memory for forward.1']
    #allocation7 [shape = 'u8[9216]{0}', space=vmem, size = 0x2400, scoped, tag = 'input window, operand 3, single buffered']
    #allocation8 [shape = 'u8[18432]{0}', space=vmem, size = 0x4800, scoped, tag = 'input window, operand 4, single buffered']
    #allocation9 [shape = 's32[1]{0}', space=sflag, size = 0x4, scoped, tag = 'scoped memory for forward.1']
    #allocation10 [shape = 'u8[18432]{0}', space=vmem, size = 0x4800, scoped, tag = 'input window, operand 5, single buffered']
    #allocation11 [shape = 'u8[36864]{0}', space=vmem, size = 0x9000, scoped, tag = 'input window, operand 6, single buffered']
    #allocation12 [shape = 's32[1]{0}', space=sflag, size = 0x4, scoped, tag = 'scoped memory for forward.1']
    #allocation13 [shape = 'u8[262144]{0}', space=vmem, size = 0x40000, scoped, tag = 'input window, operand 8, single buffered']
    #allocation14 [shape = 'u8[4096]{0}', space=vmem, size = 0x1000, scoped, tag = 'input window, operand 10, single buffered']
    #allocation15 [shape = 's32[1]{0}', space=sflag, size = 0x4, scoped, tag = 'scoped memory for forward.1']
    #allocation16 [shape = 'u8[8192]{0}', space=vmem, size = 0x2000, scoped, tag = 'input window, operand 11, single buffered']
    #allocation17 [shape = 'u8[8192]{0}', space=vmem, size = 0x2000, scoped, tag = 'input window, operand 13, single buffered']
    #allocation18 [shape = 's32[1]{0}', space=sflag, size = 0x4, scoped, tag = 'scoped memory for forward.1']
    #allocation19 [shape = 'u8[512]{0}', space=smem, size = 0x200, scoped, tag = 'input window, operand 15, single buffered']
    %21 = vsyncpa [#allocation3], 0
    %22 = vsyncpa [#allocation6], 0
    %23 = vsyncpa [#allocation9], 0
    %24 = vsyncpa [#allocation12], 0
    %25 = vsyncpa [#allocation15], 0
    %26 = vsyncpa [#allocation18], 0
    %27 = vsyncpa [#allocation4], 0
    // Predicated region
    $region2: #{forward.1} parent=1 // pred_check
      _
    $region3: #{forward.1} parent=1 // pred_check_branch
      %29 = sbr.rel (0) target = $region5
    $region4: #{forward.1} parent=1 // pred_region
      _
    $region5: #{forward.1} parent=1 // pred_fallthru
      _
    // Predicated region
    $region6: #{forward.1} parent=1 // pred_check
      _
    $region7: #{forward.1} parent=1 // pred_check_branch
      %31 = sbr.rel (0) target = $region9
    $region8: #{forward.1} parent=1 // pred_region
      %s33 = ssub.s32 288, 288
      %34 = vsyncadd [#allocation3], %s33
      %s35 = sshll.u32 [#allocation2], 4
      %s36 = int_to_ptr.vmem [resolvable:$true] %s35
      %41 = dma.hbm_to_vmem [thread:$0]  %s1, 288, %s36, [#allocation3], 32, 32, 2
    $region9: #{forward.1} parent=1 // pred_fallthru
      _
    // Predicated region
    $region10: #{forward.1} parent=1 // pred_check
      _
    $region11: #{forward.1} parent=1 // pred_check_branch
      %43 = sbr.rel (0) target = $region13
    $region12: #{forward.1} parent=1 // pred_region
      %s45 = ssub.s32 288, 288
      %46 = vsyncadd [#allocation6], %s45
      %s47 = sshll.u32 [#allocation5], 4
      %s48 = int_to_ptr.vmem [resolvable:$true] %s47
      %53 = dma.hbm_to_vmem [thread:$0]  %s2, 288, %s48, [#allocation6], 32, 32, 2
    $region13: #{forward.1} parent=1 // pred_fallthru
      _
    // Predicated region
    $region14: #{forward.1} parent=1 // pred_check
      _
    $region15: #{forward.1} parent=1 // pred_check_branch
      %55 = sbr.rel (0) target = $region17
    $region16: #{forward.1} parent=1 // pred_region
      %s57 = ssub.s32 288, 288
      %58 = vsyncadd [#allocation6], %s57
      %s59 = sshll.u32 [#allocation7], 4
      %s60 = int_to_ptr.vmem [resolvable:$true] %s59
      %65 = dma.hbm_to_vmem [thread:$0]  %s3, 288, %s60, [#allocation6], 32, 32, 2
    $region17: #{forward.1} parent=1 // pred_fallthru
      _
    // Predicated region
    $region18: #{forward.1} parent=1 // pred_check
      _
    $region19: #{forward.1} parent=1 // pred_check_branch
      %67 = sbr.rel (0) target = $region21
    $region20: #{forward.1} parent=1 // pred_region
      %s69 = ssub.s32 576, 576
      %70 = vsyncadd [#allocation9], %s69
      %s71 = sshll.u32 [#allocation8], 4
      %s72 = int_to_ptr.vmem [resolvable:$true] %s71
      %77 = dma.hbm_to_vmem [thread:$0]  %s4, 576, %s72, [#allocation9], 64, 64, 4
    $region21: #{forward.1} parent=1 // pred_fallthru
      _
    // Predicated region
    $region22: #{forward.1} parent=1 // pred_check
      _
    $region23: #{forward.1} parent=1 // pred_check_branch
      %79 = sbr.rel (0) target = $region25
    $region24: #{forward.1} parent=1 // pred_region
      %s81 = ssub.s32 576, 576
      %82 = vsyncadd [#allocation9], %s81
      %s83 = sshll.u32 [#allocation10], 4
      %s84 = int_to_ptr.vmem [resolvable:$true] %s83
      %89 = dma.hbm_to_vmem [thread:$0]  %s5, 576, %s84, [#allocation9], 64, 64, 4
    $region25: #{forward.1} parent=1 // pred_fallthru
      _
    // Predicated region
    $region26: #{forward.1} parent=1 // pred_check
      _
    $region27: #{forward.1} parent=1 // pred_check_branch
      %91 = sbr.rel (0) target = $region29
    $region28: #{forward.1} parent=1 // pred_region
      %s93 = ssub.s32 1152, 1152
      %94 = vsyncadd [#allocation12], %s93
      %s95 = sshll.u32 [#allocation11], 4
      %s96 = int_to_ptr.vmem [resolvable:$true] %s95
      %101 = dma.hbm_to_vmem [thread:$0]  %s6, 1152, %s96, [#allocation12], 64, 64, 4
    $region29: #{forward.1} parent=1 // pred_fallthru
      _
    // Predicated region
    $region30: #{forward.1} parent=1 // pred_check
      _
    $region31: #{forward.1} parent=1 // pred_check_branch
      %103 = sbr.rel (0) target = $region33
    $region32: #{forward.1} parent=1 // pred_region
      _
    $region33: #{forward.1} parent=1 // pred_fallthru
      _
    // Predicated region
    $region34: #{forward.1} parent=1 // pred_check
      _
    $region35: #{forward.1} parent=1 // pred_check_branch
      %105 = sbr.rel (0) target = $region37
    $region36: #{forward.1} parent=1 // pred_region
      %s107 = ssub.s32 8192, 8192
      %108 = vsyncadd [#allocation12], %s107
      %s109 = sshll.u32 [#allocation13], 4
      %s110 = int_to_ptr.vmem [resolvable:$true] %s109
      %115 = dma.hbm_to_vmem [thread:$0]  %s8, 8192, %s110, [#allocation12], 128, 128, 8
    $region37: #{forward.1} parent=1 // pred_fallthru
      _
    // Predicated region
    $region38: #{forward.1} parent=1 // pred_check
      _
    $region39: #{forward.1} parent=1 // pred_check_branch
      %117 = sbr.rel (0) target = $region41
    $region40: #{forward.1} parent=1 // pred_region
      _
    $region41: #{forward.1} parent=1 // pred_fallthru
      _
    // Predicated region
    $region42: #{forward.1} parent=1 // pred_check
      _
    $region43: #{forward.1} parent=1 // pred_check_branch
      %119 = sbr.rel (0) target = $region45
    $region44: #{forward.1} parent=1 // pred_region
      %s121 = ssub.s32 128, 128
      %122 = vsyncadd [#allocation15], %s121
      %s124 = sshll.u32 [#allocation14], 4
      %s125 = int_to_ptr.vmem [resolvable:$true] %s124
      %127 = dma.hbm_to_vmem [thread:$0]  %s10, 128, %s125, [#allocation15]
    $region45: #{forward.1} parent=1 // pred_fallthru
      _
    // Predicated region
    $region46: #{forward.1} parent=1 // pred_check
      _
    $region47: #{forward.1} parent=1 // pred_check_branch
      %129 = sbr.rel (0) target = $region49
    $region48: #{forward.1} parent=1 // pred_region
      %s131 = ssub.s32 256, 256
      %132 = vsyncadd [#allocation15], %s131
      %s133 = sshll.u32 [#allocation16], 4
      %s134 = int_to_ptr.vmem [resolvable:$true] %s133
      %139 = dma.hbm_to_vmem [thread:$0]  %s11, 256, %s134, [#allocation15], 128, 128, 8
    $region49: #{forward.1} parent=1 // pred_fallthru
      _
    // Predicated region
    $region50: #{forward.1} parent=1 // pred_check
      _
    $region51: #{forward.1} parent=1 // pred_check_branch
      %141 = sbr.rel (0) target = $region53
    $region52: #{forward.1} parent=1 // pred_region
      _
    $region53: #{forward.1} parent=1 // pred_fallthru
      _
    // Predicated region
    $region54: #{forward.1} parent=1 // pred_check
      _
    $region55: #{forward.1} parent=1 // pred_check_branch
      %143 = sbr.rel (0) target = $region57
    $region56: #{forward.1} parent=1 // pred_region
      %s145 = ssub.s32 256, 256
      %146 = vsyncadd [#allocation18], %s145
      %s147 = sshll.u32 [#allocation17], 4
      %s148 = int_to_ptr.vmem [resolvable:$true] %s147
      %153 = dma.hbm_to_vmem [thread:$0]  %s13, 256, %s148, [#allocation18], 128, 128, 8
    $region57: #{forward.1} parent=1 // pred_fallthru
      _
    // Predicated region
    $region58: #{forward.1} parent=1 // pred_check
      _
    $region59: #{forward.1} parent=1 // pred_check_branch
      %155 = sbr.rel (0) target = $region61
    $region60: #{forward.1} parent=1 // pred_region
      _
    $region61: #{forward.1} parent=1 // pred_fallthru
      _
    // Predicated region
    $region62: #{forward.1} parent=1 // pred_check
      _
    $region63: #{forward.1} parent=1 // pred_check_branch
      %157 = sbr.rel (0) target = $region65
    $region64: #{forward.1} parent=1 // pred_region
      %s159 = ssub.s32 16, 16
      %160 = vsyncadd [#allocation4], %s159
      %s162 = sshll.u32 %s15, 4
      %s163 = int_to_ptr.vmem [resolvable:$true] %s162
      %165 = dma.vmem_to_smem %s163, 16, [#allocation19], [#allocation4]
    $region65: #{forward.1} parent=1 // pred_fallthru
      _
    // Predicated region
    $region66: #{forward.1} parent=1 // pred_check
      _
    $region67: #{forward.1} parent=1 // pred_check_branch
      %167 = sbr.rel (0) target = $region69
    $region68: #{forward.1} parent=1 // pred_region
      %168 = dma.done [#allocation3], 288
    $region69: #{forward.1} parent=1 // pred_fallthru
      _
    // Predicated region
    $region70: #{forward.1} parent=1 // pred_check
      _
    $region71: #{forward.1} parent=1 // pred_check_branch
      %170 = sbr.rel (0) target = $region73
    $region72: #{forward.1} parent=1 // pred_region
      %171 = dma.done [#allocation6], 288
    $region73: #{forward.1} parent=1 // pred_fallthru
      _
    // Predicated region
    $region74: #{forward.1} parent=1 // pred_check
      _
    $region75: #{forward.1} parent=1 // pred_check_branch
      %173 = sbr.rel (0) target = $region77
    $region76: #{forward.1} parent=1 // pred_region
      %174 = dma.done [#allocation6], 288
    $region77: #{forward.1} parent=1 // pred_fallthru
      _
    // Predicated region
    $region78: #{forward.1} parent=1 // pred_check
      _
    $region79: #{forward.1} parent=1 // pred_check_branch
      %176 = sbr.rel (0) target = $region81
    $region80: #{forward.1} parent=1 // pred_region
      %177 = dma.done [#allocation9], 576
    $region81: #{forward.1} parent=1 // pred_fallthru
      _
    // Predicated region
    $region82: #{forward.1} parent=1 // pred_check
      _
    $region83: #{forward.1} parent=1 // pred_check_branch
      %179 = sbr.rel (0) target = $region85
    $region84: #{forward.1} parent=1 // pred_region
      %180 = dma.done [#allocation9], 576
    $region85: #{forward.1} parent=1 // pred_fallthru
      _
    // Predicated region
    $region86: #{forward.1} parent=1 // pred_check
      _
    $region87: #{forward.1} parent=1 // pred_check_branch
      %182 = sbr.rel (0) target = $region89
    $region88: #{forward.1} parent=1 // pred_region
      %183 = dma.done [#allocation12], 1152
    $region89: #{forward.1} parent=1 // pred_fallthru
      _
    // Predicated region
    $region90: #{forward.1} parent=1 // pred_check
      _
    $region91: #{forward.1} parent=1 // pred_check_branch
      %185 = sbr.rel (0) target = $region93
    $region92: #{forward.1} parent=1 // pred_region
      %186 = dma.done [#allocation12], 8192
    $region93: #{forward.1} parent=1 // pred_fallthru
      _
    // Predicated region
    $region94: #{forward.1} parent=1 // pred_check
      _
    $region95: #{forward.1} parent=1 // pred_check_branch
      %188 = sbr.rel (0) target = $region97
    $region96: #{forward.1} parent=1 // pred_region
      %189 = dma.done [#allocation15], 128
    $region97: #{forward.1} parent=1 // pred_fallthru
      _
    // Predicated region
    $region98: #{forward.1} parent=1 // pred_check
      _
    $region99: #{forward.1} parent=1 // pred_check_branch
      %191 = sbr.rel (0) target = $region101
    $region100: #{forward.1} parent=1 // pred_region
      %192 = dma.done [#allocation15], 256
    $region101: #{forward.1} parent=1 // pred_fallthru
      _
    // Predicated region
    $region102: #{forward.1} parent=1 // pred_check
      _
    $region103: #{forward.1} parent=1 // pred_check_branch
      %194 = sbr.rel (0) target = $region105
    $region104: #{forward.1} parent=1 // pred_region
      %195 = dma.done [#allocation18], 256
    $region105: #{forward.1} parent=1 // pred_fallthru
      _
    // Predicated region
    $region106: #{forward.1} parent=1 // pred_check
      _
    $region107: #{forward.1} parent=1 // pred_check_branch
      %197 = sbr.rel (0) target = $region109
    $region108: #{forward.1} parent=1 // pred_region
      %198 = dma.done [#allocation4], 16
    $region109: #{forward.1} parent=1 // pred_fallthru
      _
    %199 = sfence
    %v201 = vld [vmem:[%s0] sm:$0x77]
    %v202 = vld [vmem:[%s0 + $0x8] sm:$0x77]
    %v203 = vlaneseq
    %v204 = vand.u32 %v203, 127
    %v205 = vadd.s32 %v204, 128
    %v206 = vadd.s32 %v204, 256
    %v207 = vadd.s32 %v204, 384
    %v208 = vand.u32 %v204, 15
    %v209 = vand.u32 %v205, 15
    %v210 = vand.u32 %v206, 15
    %v211 = vand.u32 %v207, 15
    %v212 = vshra.s32 %v204, 4
    %v213 = vshra.s32 %v205, 4
    %v214 = vshra.s32 %v206, 4
    %v215 = vshra.s32 %v207, 4
    %v216 = vand.u32 %v212, 15
    %v217 = vand.u32 %v213, 15
    %v218 = vand.u32 %v214, 15
    %v219 = vand.u32 %v215, 15
    %v222 = vcombine.high %v201, %v201
    %v223 = vcombine.high %v202, %v202
    %226 = vrot.lane.b32.xlu0 %v201, 17
    %v227 = vpop.permute.xlu0 %226
    %228 = vrot.lane.b32.xlu0 %v222, 17
    %v229 = vpop.permute.xlu0 %228
    %230 = vrot.lane.b32.xlu0 %v202, 17
    %v231 = vpop.permute.xlu0 %230
    %232 = vrot.lane.b32.xlu0 %v223, 17
    %v233 = vpop.permute.xlu0 %232
    %vm234 = vcmp.lt.s32.totalorder %v204, 17
    %v235 = vsel %vm234, %v231, %v233
    %v236 = vsel %vm234, %v229, %v231
    %v237 = vsel %vm234, %v227, %v229
    %v238 = vsel %vm234, %v233, %v227
    %v239 = vadd.s32 %v208, 4294967295
    %v240 = vadd.s32 %v209, 4294967295
    %v241 = vadd.s32 %v210, 4294967295
    %v242 = vadd.s32 %v211, 4294967295
    %vm243 = vcmp.ge.s32.totalorder %v239, 0
    %vm244 = vcmp.ge.s32.totalorder %v240, 0
    %vm245 = vcmp.ge.s32.totalorder %v241, 0
    %vm246 = vcmp.ge.s32.totalorder %v242, 0
    %vm247 = vcmp.lt.s32.totalorder %v239, 16
    %vm248 = vcmp.lt.s32.totalorder %v240, 16
    %vm249 = vcmp.lt.s32.totalorder %v241, 16
    %vm250 = vcmp.lt.s32.totalorder %v242, 16
    %vm251 = vmand %vm243, %vm247
    %vm252 = vmand %vm244, %vm248
    %vm253 = vmand %vm245, %vm249
    %vm254 = vmand %vm246, %vm250
    %v255 = vadd.s32 %v216, 4294967295
    %v256 = vadd.s32 %v217, 4294967295
    %v257 = vadd.s32 %v218, 4294967295
    %v258 = vadd.s32 %v219, 4294967295
    %vm259 = vcmp.ge.s32.totalorder %v255, 0
    %vm260 = vcmp.ge.s32.totalorder %v256, 0
    %vm261 = vcmp.ge.s32.totalorder %v257, 0
    %vm262 = vcmp.ge.s32.totalorder %v258, 0
    %vm263 = vmand %vm251, %vm259
    %vm264 = vmand %vm252, %vm260
    %vm265 = vmand %vm253, %vm261
    %vm266 = vmand %vm254, %vm262
    %vm267 = vcmp.lt.s32.totalorder %v255, 16
    %vm268 = vcmp.lt.s32.totalorder %v256, 16
    %vm269 = vcmp.lt.s32.totalorder %v257, 16
    %vm270 = vcmp.lt.s32.totalorder %v258, 16
    %vm271 = vmand %vm263, %vm267
    %vm272 = vmand %vm264, %vm268
    %vm273 = vmand %vm265, %vm269
    %vm274 = vmand %vm266, %vm270
    %v275 = vsel %vm271, 1, 0
    %v276 = vsel %vm272, 1, 0
    %v277 = vsel %vm273, 1, 0
    %v278 = vsel %vm274, 1, 0
    %vm279 = vcmp.eq.s32.totalorder %v275, 1
    %vm280 = vcmp.eq.s32.totalorder %v276, 1
    %vm281 = vcmp.eq.s32.totalorder %v277, 1
    %vm282 = vcmp.eq.s32.totalorder %v278, 1
    %v283 = vsel %vm279, %v238, 0.0
    %v284 = vsel %vm280, %v237, 0.0
    %v285 = vsel %vm281, %v236, 0.0
    %v286 = vsel %vm282, %v235, 0.0
    %v287 = vpack.c.bf16 %v283, %v283
    %v288 = vpack.c.bf16 %v284, %v284
    %v289 = vpack.c.bf16 %v285, %v285
    %v290 = vpack.c.bf16 %v286, %v286
    %v291 = vld [vmem:[#allocation2] sm:$0x3]
    %292 = vrot.lane.b32.xlu0 %v201, 16
    %v293 = vpop.permute.xlu0 %292
    %294 = vrot.lane.b32.xlu0 %v222, 16
    %v295 = vpop.permute.xlu0 %294
    %296 = vrot.lane.b32.xlu0 %v202, 16
    %v297 = vpop.permute.xlu0 %296
    %298 = vrot.lane.b32.xlu0 %v223, 16
    %v299 = vpop.permute.xlu0 %298
    %vm300 = vcmp.lt.s32.totalorder %v204, 16
    %v301 = vsel %vm300, %v297, %v299
    %v302 = vsel %vm300, %v295, %v297
    %v303 = vsel %vm300, %v293, %v295
    %v304 = vsel %vm300, %v299, %v293
    %vm305 = vcmp.ge.s32.totalorder %v208, 0
    %vm306 = vcmp.ge.s32.totalorder %v209, 0
    %vm307 = vcmp.ge.s32.totalorder %v210, 0
    %vm308 = vcmp.ge.s32.totalorder %v211, 0
    %vm309 = vcmp.lt.s32.totalorder %v208, 16
    %vm310 = vcmp.lt.s32.totalorder %v209, 16
    %vm311 = vcmp.lt.s32.totalorder %v210, 16
    %vm312 = vcmp.lt.s32.totalorder %v211, 16
    %vm313 = vmand %vm305, %vm309
    %vm314 = vmand %vm306, %vm310
    %vm315 = vmand %vm307, %vm311
    %vm316 = vmand %vm308, %vm312
    %vm317 = vmand %vm313, %vm259
    %vm318 = vmand %vm314, %vm260
    %vm319 = vmand %vm315, %vm261
    %vm320 = vmand %vm316, %vm262
    %vm321 = vmand %vm317, %vm267
    %vm322 = vmand %vm318, %vm268
    %vm323 = vmand %vm319, %vm269
    %vm324 = vmand %vm320, %vm270
    %v325 = vsel %vm321, 1, 0
    %v326 = vsel %vm322, 1, 0
    %v327 = vsel %vm323, 1, 0
    %v328 = vsel %vm324, 1, 0
    %vm329 = vcmp.eq.s32.totalorder %v325, 1
    %vm330 = vcmp.eq.s32.totalorder %v326, 1
    %vm331 = vcmp.eq.s32.totalorder %v327, 1
    %vm332 = vcmp.eq.s32.totalorder %v328, 1
    %v333 = vsel %vm329, %v304, 0.0
    %v334 = vsel %vm330, %v303, 0.0
    %v335 = vsel %vm331, %v302, 0.0
    %v336 = vsel %vm332, %v301, 0.0
    %v337 = vpack.c.bf16 %v333, %v333
    %v338 = vpack.c.bf16 %v334, %v334
    %v339 = vpack.c.bf16 %v335, %v335
    %v340 = vpack.c.bf16 %v336, %v336
    %s341 = scalar_lea.vmem [#allocation2], 2
    %v342 = vld [vmem:[%s341] sm:$0x3]
    %vm343 = vcmask 23552
    %v345 = vsel %vm343, %v342, 0
    %vm347 = vcmask 1040384
    %vm348 = vcmask 1041408
    %v349 = vsel %vm347, 4294967295, 65535
    %v350 = vsel %vm348, %v349, 0
    %v352 = vand.u32 %v337, %v350
    %v355 = vand.u32 %v338, %v350
    %v358 = vand.u32 %v339, %v350
    %v361 = vand.u32 %v340, %v350
    %363 = vmatprep.subr.bf16.mxu0 %v355
    %364 = vmatpush1.bf16.msra.mxu0 %v352
    %365 = vmatprep.subr.bf16.mxu0 0
    %366 = vmatpush1.bf16.msra.mxu0 0
    %367 = vmatprep.subr.bf16.mxu0 0
    %368 = vmatpush1.bf16.msra.mxu0 0
    %369 = vmatprep.subr.bf16.mxu0 0
    %370 = vmatpush1.bf16.msra.mxu0 0
    %371 = vmatprep.subr.bf16.mxu0 0
    %372 = vmatpush1.bf16.msra.mxu0 0
    %373 = vmatprep.subr.bf16.mxu0 0
    %374 = vmatpush1.bf16.msra.mxu0 0
    %375 = vmatprep.subr.bf16.mxu0 0
    %376 = vmatpush1.bf16.msra.mxu0 0
    %377 = vmatprep.subr.bf16.mxu0 0
    %378 = vmatpush1.bf16.msra.mxu0 0
    %379 = vmatprep.subr.bf16.mxu0 0
    %380 = vmatpush1.bf16.msra.mxu0 0
    %381 = vmatprep.subr.bf16.mxu0 0
    %382 = vmatpush1.bf16.msra.mxu0 0
    %383 = vmatprep.subr.bf16.mxu0 0
    %384 = vmatpush1.bf16.msra.mxu0 0
    %385 = vmatprep.subr.bf16.mxu0 0
    %386 = vmatpush1.bf16.msra.mxu0 0
    %387 = vmatprep.subr.bf16.mxu0 0
    %388 = vmatpush1.bf16.msra.mxu0 0
    %389 = vmatprep.subr.bf16.mxu0 0
    %390 = vmatpush1.bf16.msra.mxu0 0
    %391 = vmatprep.subr.bf16.mxu0 0
    %392 = vmatpush1.bf16.msra.mxu0 0
    %393 = vmatprep.subr.bf16.mxu0 0
    %394 = vmatpush1.bf16.msra.mxu0 0
    %395 = vmatprep.mubr.bf16.mxu0 0
    %396 = vmatmul.mubr.bf16.gmra.mrb[0].mxu0 %v345
    %v397 = vpop.f32.mrb[0].mxu0
    %v398 = vadd.f32 0.0, %v397
    %v399 = vpop.f32.mrb[0].mxu0
    %v400 = vadd.f32 0.0, %v399
    %v401 = vpop.f32.mrb[0].mxu0
    %v402 = vpop.f32.mrb[0].mxu0
    %403 = vdwg.mxu0
    %404 = vmatprep.subr.bf16.mxu0 %v361
    %405 = vmatpush1.bf16.msra.mxu0 %v358
    %406 = vmatprep.subr.bf16.mxu0 0
    %407 = vmatpush1.bf16.msra.mxu0 0
    %408 = vmatprep.subr.bf16.mxu0 0
    %409 = vmatpush1.bf16.msra.mxu0 0
    %410 = vmatprep.subr.bf16.mxu0 0
    %411 = vmatpush1.bf16.msra.mxu0 0
    %412 = vmatprep.subr.bf16.mxu0 0
    %413 = vmatpush1.bf16.msra.mxu0 0
    %414 = vmatprep.subr.bf16.mxu0 0
    %415 = vmatpush1.bf16.msra.mxu0 0
    %416 = vmatprep.subr.bf16.mxu0 0
    %417 = vmatpush1.bf16.msra.mxu0 0
    %418 = vmatprep.subr.bf16.mxu0 0
    %419 = vmatpush1.bf16.msra.mxu0 0
    %420 = vmatprep.subr.bf16.mxu0 0
    %421 = vmatpush1.bf16.msra.mxu0 0
    %422 = vmatprep.subr.bf16.mxu0 0
    %423 = vmatpush1.bf16.msra.mxu0 0
    %424 = vmatprep.subr.bf16.mxu0 0
    %425 = vmatpush1.bf16.msra.mxu0 0
    %426 = vmatprep.subr.bf16.mxu0 0
    %427 = vmatpush1.bf16.msra.mxu0 0
    %428 = vmatprep.subr.bf16.mxu0 0
    %429 = vmatpush1.bf16.msra.mxu0 0
    %430 = vmatprep.subr.bf16.mxu0 0
    %431 = vmatpush1.bf16.msra.mxu0 0
    %432 = vmatprep.subr.bf16.mxu0 0
    %433 = vmatpush1.bf16.msra.mxu0 0
    %434 = vmatprep.subr.bf16.mxu0 0
    %435 = vmatpush1.bf16.msra.mxu0 0
    %436 = vmatprep.mubr.bf16.mxu0 0
    %437 = vmatmul.mubr.bf16.gmra.mrb[0].mxu0 %v345
    %v438 = vpop.f32.mrb[0].mxu0
    %v439 = vadd.f32 0.0, %v438
    %v440 = vpop.f32.mrb[0].mxu0
    %v441 = vadd.f32 0.0, %v440
    %v442 = vpop.f32.mrb[0].mxu0
    %v443 = vpop.f32.mrb[0].mxu0
    %444 = vdwg.mxu0
    %v446 = vsel %vm343, %v291, 0
    %v449 = vand.u32 %v287, %v350
    %v452 = vand.u32 %v288, %v350
    %v455 = vand.u32 %v289, %v350
    %v458 = vand.u32 %v290, %v350
    %460 = vmatprep.subr.bf16.mxu0 %v452
    %461 = vmatpush1.bf16.msra.mxu0 %v449
    %462 = vmatprep.subr.bf16.mxu0 0
    %463 = vmatpush1.bf16.msra.mxu0 0
    %464 = vmatprep.subr.bf16.mxu0 0
    %465 = vmatpush1.bf16.msra.mxu0 0
    %466 = vmatprep.subr.bf16.mxu0 0
    %467 = vmatpush1.bf16.msra.mxu0 0
    %468 = vmatprep.subr.bf16.mxu0 0
    %469 = vmatpush1.bf16.msra.mxu0 0
    %470 = vmatprep.subr.bf16.mxu0 0
    %471 = vmatpush1.bf16.msra.mxu0 0
    %472 = vmatprep.subr.bf16.mxu0 0
    %473 = vmatpush1.bf16.msra.mxu0 0
    %474 = vmatprep.subr.bf16.mxu0 0
    %475 = vmatpush1.bf16.msra.mxu0 0
    %476 = vmatprep.subr.bf16.mxu0 0
    %477 = vmatpush1.bf16.msra.mxu0 0
    %478 = vmatprep.subr.bf16.mxu0 0
    %479 = vmatpush1.bf16.msra.mxu0 0
    %480 = vmatprep.subr.bf16.mxu0 0
    %481 = vmatpush1.bf16.msra.mxu0 0
    %482 = vmatprep.subr.bf16.mxu0 0
    %483 = vmatpush1.bf16.msra.mxu0 0
    %484 = vmatprep.subr.bf16.mxu0 0
    %485 = vmatpush1.bf16.msra.mxu0 0
    %486 = vmatprep.subr.bf16.mxu0 0
    %487 = vmatpush1.bf16.msra.mxu0 0
    %488 = vmatprep.subr.bf16.mxu0 0
    %489 = vmatpush1.bf16.msra.mxu0 0
    %490 = vmatprep.subr.bf16.mxu0 0
    %491 = vmatpush1.bf16.msra.mxu0 0
    %492 = vmatprep.mubr.bf16.mxu0 0
    %493 = vmatmul.mubr.bf16.gmra.mrb[0].mxu0 %v446
    %v494 = vpop.f32.mrb[0].mxu0
    %v495 = vadd.f32 %v398, %v494
    %v496 = vpop.f32.mrb[0].mxu0
    %v497 = vadd.f32 %v400, %v496
    %v498 = vpop.f32.mrb[0].mxu0
    %v499 = vpop.f32.mrb[0].mxu0
    %500 = vdwg.mxu0
    %501 = vmatprep.subr.bf16.mxu0 %v458
    %502 = vmatpush1.bf16.msra.mxu0 %v455
    %503 = vmatprep.subr.bf16.mxu0 0
    %504 = vmatpush1.bf16.msra.mxu0 0
    %505 = vmatprep.subr.bf16.mxu0 0
    %506 = vmatpush1.bf16.msra.mxu0 0
    %507 = vmatprep.subr.bf16.mxu0 0
    %508 = vmatpush1.bf16.msra.mxu0 0
    %509 = vmatprep.subr.bf16.mxu0 0
    %510 = vmatpush1.bf16.msra.mxu0 0
    %511 = vmatprep.subr.bf16.mxu0 0
    %512 = vmatpush1.bf16.msra.mxu0 0
    %513 = vmatprep.subr.bf16.mxu0 0
    %514 = vmatpush1.bf16.msra.mxu0 0
    %515 = vmatprep.subr.bf16.mxu0 0
    %516 = vmatpush1.bf16.msra.mxu0 0
    %517 = vmatprep.subr.bf16.mxu0 0
    %518 = vmatpush1.bf16.msra.mxu0 0
    %519 = vmatprep.subr.bf16.mxu0 0
    %520 = vmatpush1.bf16.msra.mxu0 0
    %521 = vmatprep.subr.bf16.mxu0 0
    %522 = vmatpush1.bf16.msra.mxu0 0
    %523 = vmatprep.subr.bf16.mxu0 0
    %524 = vmatpush1.bf16.msra.mxu0 0
    %525 = vmatprep.subr.bf16.mxu0 0
    %526 = vmatpush1.bf16.msra.mxu0 0
    %527 = vmatprep.subr.bf16.mxu0 0
    %528 = vmatpush1.bf16.msra.mxu0 0
    %529 = vmatprep.subr.bf16.mxu0 0
    %530 = vmatpush1.bf16.msra.mxu0 0
    %531 = vmatprep.subr.bf16.mxu0 0
    %532 = vmatpush1.bf16.msra.mxu0 0
    %533 = vmatprep.mubr.bf16.mxu0 0
    %534 = vmatmul.mubr.bf16.gmra.mrb[0].mxu0 %v446
    %v535 = vpop.f32.mrb[0].mxu0
    %v536 = vadd.f32 %v439, %v535
    %v537 = vpop.f32.mrb[0].mxu0
    %v538 = vadd.f32 %v441, %v537
    %v539 = vpop.f32.mrb[0].mxu0
    %v540 = vpop.f32.mrb[0].mxu0
    %541 = vdwg.mxu0
    %542 = vrot.lane.b32.xlu0 %v201, 15
    %v543 = vpop.permute.xlu0 %542
    %544 = vrot.lane.b32.xlu0 %v222, 15
    %v545 = vpop.permute.xlu0 %544
    %546 = vrot.lane.b32.xlu0 %v202, 15
    %v547 = vpop.permute.xlu0 %546
    %548 = vrot.lane.b32.xlu0 %v223, 15
    %v549 = vpop.permute.xlu0 %548
    %vm550 = vcmp.lt.s32.totalorder %v204, 15
    %v551 = vsel %vm550, %v547, %v549
    %v552 = vsel %vm550, %v545, %v547
    %v553 = vsel %vm550, %v543, %v545
    %v554 = vsel %vm550, %v549, %v543
    %v555 = vadd.s32 %v208, 1
    %v556 = vadd.s32 %v209, 1
    %v557 = vadd.s32 %v210, 1
    %v558 = vadd.s32 %v211, 1
    %vm559 = vcmp.ge.s32.totalorder %v555, 0
    %vm560 = vcmp.ge.s32.totalorder %v556, 0
    %vm561 = vcmp.ge.s32.totalorder %v557, 0
    %vm562 = vcmp.ge.s32.totalorder %v558, 0
    %vm563 = vcmp.lt.s32.totalorder %v555, 16
    %vm564 = vcmp.lt.s32.totalorder %v556, 16
    %vm565 = vcmp.lt.s32.totalorder %v557, 16
    %vm566 = vcmp.lt.s32.totalorder %v558, 16
    %vm567 = vmand %vm559, %vm563
    %vm568 = vmand %vm560, %vm564
    %vm569 = vmand %vm561, %vm565
    %vm570 = vmand %vm562, %vm566
    %vm571 = vmand %vm567, %vm259
    %vm572 = vmand %vm568, %vm260
    %vm573 = vmand %vm569, %vm261
    %vm574 = vmand %vm570, %vm262
    %vm575 = vmand %vm571, %vm267
    %vm576 = vmand %vm572, %vm268
    %vm577 = vmand %vm573, %vm269
    %vm578 = vmand %vm574, %vm270
    %v579 = vsel %vm575, 1, 0
    %v580 = vsel %vm576, 1, 0
    %v581 = vsel %vm577, 1, 0
    %v582 = vsel %vm578, 1, 0
    %vm583 = vcmp.eq.s32.totalorder %v579, 1
    %vm584 = vcmp.eq.s32.totalorder %v580, 1
    %vm585 = vcmp.eq.s32.totalorder %v581, 1
    %vm586 = vcmp.eq.s32.totalorder %v582, 1
    %v587 = vsel %vm583, %v554, 0.0
    %v588 = vsel %vm584, %v553, 0.0
    %v589 = vsel %vm585, %v552, 0.0
    %v590 = vsel %vm586, %v551, 0.0
    %v591 = vpack.c.bf16 %v587, %v587
    %v592 = vpack.c.bf16 %v588, %v588
    %v593 = vpack.c.bf16 %v589, %v589
    %v594 = vpack.c.bf16 %v590, %v590
    %s595 = scalar_lea.vmem [#allocation2], 4
    %v596 = vld [vmem:[%s595] sm:$0x3]
    %v598 = vsel %vm343, %v596, 0
    %v601 = vand.u32 %v591, %v350
    %v604 = vand.u32 %v592, %v350
    %v607 = vand.u32 %v593, %v350
    %v610 = vand.u32 %v594, %v350
    %612 = vmatprep.subr.bf16.mxu0 %v604
    %613 = vmatpush1.bf16.msra.mxu0 %v601
    %614 = vmatprep.subr.bf16.mxu0 0
    %615 = vmatpush1.bf16.msra.mxu0 0
    %616 = vmatprep.subr.bf16.mxu0 0
    %617 = vmatpush1.bf16.msra.mxu0 0
    %618 = vmatprep.subr.bf16.mxu0 0
    %619 = vmatpush1.bf16.msra.mxu0 0
    %620 = vmatprep.subr.bf16.mxu0 0
    %621 = vmatpush1.bf16.msra.mxu0 0
    %622 = vmatprep.subr.bf16.mxu0 0
    %623 = vmatpush1.bf16.msra.mxu0 0
    %624 = vmatprep.subr.bf16.mxu0 0
    %625 = vmatpush1.bf16.msra.mxu0 0
    %626 = vmatprep.subr.bf16.mxu0 0
    %627 = vmatpush1.bf16.msra.mxu0 0
    %628 = vmatprep.subr.bf16.mxu0 0
    %629 = vmatpush1.bf16.msra.mxu0 0
    %630 = vmatprep.subr.bf16.mxu0 0
    %631 = vmatpush1.bf16.msra.mxu0 0
    %632 = vmatprep.subr.bf16.mxu0 0
    %633 = vmatpush1.bf16.msra.mxu0 0
    %634 = vmatprep.subr.bf16.mxu0 0
    %635 = vmatpush1.bf16.msra.mxu0 0
    %636 = vmatprep.subr.bf16.mxu0 0
    %637 = vmatpush1.bf16.msra.mxu0 0
    %638 = vmatprep.subr.bf16.mxu0 0
    %639 = vmatpush1.bf16.msra.mxu0 0
    %640 = vmatprep.subr.bf16.mxu0 0
    %641 = vmatpush1.bf16.msra.mxu0 0
    %642 = vmatprep.subr.bf16.mxu0 0
    %643 = vmatpush1.bf16.msra.mxu0 0
    %644 = vmatprep.mubr.bf16.mxu0 0
    %645 = vmatmul.mubr.bf16.gmra.mrb[0].mxu0 %v598
    %v646 = vpop.f32.mrb[0].mxu0
    %v647 = vadd.f32 0.0, %v646
    %v648 = vpop.f32.mrb[0].mxu0
    %v649 = vadd.f32 0.0, %v648
    %v650 = vpop.f32.mrb[0].mxu0
    %v651 = vpop.f32.mrb[0].mxu0
    %652 = vdwg.mxu0
    %653 = vmatprep.subr.bf16.mxu0 %v610
    %654 = vmatpush1.bf16.msra.mxu0 %v607
    %655 = vmatprep.subr.bf16.mxu0 0
    %656 = vmatpush1.bf16.msra.mxu0 0
    %657 = vmatprep.subr.bf16.mxu0 0
    %658 = vmatpush1.bf16.msra.mxu0 0
    %659 = vmatprep.subr.bf16.mxu0 0
    %660 = vmatpush1.bf16.msra.mxu0 0
    %661 = vmatprep.subr.bf16.mxu0 0
    %662 = vmatpush1.bf16.msra.mxu0 0
    %663 = vmatprep.subr.bf16.mxu0 0
    %664 = vmatpush1.bf16.msra.mxu0 0
    %665 = vmatprep.subr.bf16.mxu0 0
    %666 = vmatpush1.bf16.msra.mxu0 0
    %667 = vmatprep.subr.bf16.mxu0 0
    %668 = vmatpush1.bf16.msra.mxu0 0
    %669 = vmatprep.subr.bf16.mxu0 0
    %670 = vmatpush1.bf16.msra.mxu0 0
    %671 = vmatprep.subr.bf16.mxu0 0
    %672 = vmatpush1.bf16.msra.mxu0 0
    %673 = vmatprep.subr.bf16.mxu0 0
    %674 = vmatpush1.bf16.msra.mxu0 0
    %675 = vmatprep.subr.bf16.mxu0 0
    %676 = vmatpush1.bf16.msra.mxu0 0
    %677 = vmatprep.subr.bf16.mxu0 0
    %678 = vmatpush1.bf16.msra.mxu0 0
    %679 = vmatprep.subr.bf16.mxu0 0
    %680 = vmatpush1.bf16.msra.mxu0 0
    %681 = vmatprep.subr.bf16.mxu0 0
    %682 = vmatpush1.bf16.msra.mxu0 0
    %683 = vmatprep.subr.bf16.mxu0 0
    %684 = vmatpush1.bf16.msra.mxu0 0
    %685 = vmatprep.mubr.bf16.mxu0 0
    %686 = vmatmul.mubr.bf16.gmra.mrb[0].mxu0 %v598
    %v687 = vpop.f32.mrb[0].mxu0
    %v688 = vadd.f32 0.0, %v687
    %v689 = vpop.f32.mrb[0].mxu0
    %v690 = vadd.f32 0.0, %v689
    %v691 = vpop.f32.mrb[0].mxu0
    %v692 = vpop.f32.mrb[0].mxu0
    %693 = vdwg.mxu0
    %v694 = vadd.f32 %v495, %v647
    %v695 = vadd.f32 %v497, %v649
    %v696 = vadd.f32 %v536, %v688
    %v697 = vadd.f32 %v538, %v690
    %698 = vrot.lane.b32.xlu0 %v201, 1
    %v699 = vpop.permute.xlu0 %698
    %700 = vrot.lane.b32.xlu0 %v222, 1
    %v701 = vpop.permute.xlu0 %700
    %702 = vrot.lane.b32.xlu0 %v202, 1
    %v703 = vpop.permute.xlu0 %702
    %704 = vrot.lane.b32.xlu0 %v223, 1
    %v705 = vpop.permute.xlu0 %704
    %vm706 = vcmp.lt.s32.totalorder %v204, 1
    %v707 = vsel %vm706, %v703, %v705
    %v708 = vsel %vm706, %v701, %v703
    %v709 = vsel %vm706, %v699, %v701
    %v710 = vsel %vm706, %v705, %v699
    %vm711 = vcmp.ge.s32.totalorder %v216, 0
    %vm712 = vcmp.ge.s32.totalorder %v217, 0
    %vm713 = vcmp.ge.s32.totalorder %v218, 0
    %vm714 = vcmp.ge.s32.totalorder %v219, 0
    %vm715 = vmand %vm251, %vm711
    %vm716 = vmand %vm252, %vm712
    %vm717 = vmand %vm253, %vm713
    %vm718 = vmand %vm254, %vm714
    %vm719 = vcmp.lt.s32.totalorder %v216, 16
    %vm720 = vcmp.lt.s32.totalorder %v217, 16
    %vm721 = vcmp.lt.s32.totalorder %v218, 16
    %vm722 = vcmp.lt.s32.totalorder %v219, 16
    %vm723 = vmand %vm715, %vm719
    %vm724 = vmand %vm716, %vm720
    %vm725 = vmand %vm717, %vm721
    %vm726 = vmand %vm718, %vm722
    %v727 = vsel %vm723, 1, 0
    %v728 = vsel %vm724, 1, 0
    %v729 = vsel %vm725, 1, 0
    %v730 = vsel %vm726, 1, 0
    %vm731 = vcmp.eq.s32.totalorder %v727, 1
    %vm732 = vcmp.eq.s32.totalorder %v728, 1
    %vm733 = vcmp.eq.s32.totalorder %v729, 1
    %vm734 = vcmp.eq.s32.totalorder %v730, 1
    %v735 = vsel %vm731, %v710, 0.0
    %v736 = vsel %vm732, %v709, 0.0
    %v737 = vsel %vm733, %v708, 0.0
    %v738 = vsel %vm734, %v707, 0.0
    %v739 = vpack.c.bf16 %v735, %v735
    %v740 = vpack.c.bf16 %v736, %v736
    %v741 = vpack.c.bf16 %v737, %v737
    %v742 = vpack.c.bf16 %v738, %v738
    %s743 = scalar_lea.vmem [#allocation2], 6
    %v744 = vld [vmem:[%s743] sm:$0x3]
    %v746 = vsel %vm343, %v744, 0
    %v749 = vand.u32 %v739, %v350
    %v752 = vand.u32 %v740, %v350
    %v755 = vand.u32 %v741, %v350
    %v758 = vand.u32 %v742, %v350
    %760 = vmatprep.subr.bf16.mxu0 %v752
    %761 = vmatpush1.bf16.msra.mxu0 %v749
    %762 = vmatprep.subr.bf16.mxu0 0
    %763 = vmatpush1.bf16.msra.mxu0 0
    %764 = vmatprep.subr.bf16.mxu0 0
    %765 = vmatpush1.bf16.msra.mxu0 0
    %766 = vmatprep.subr.bf16.mxu0 0
    %767 = vmatpush1.bf16.msra.mxu0 0
    %768 = vmatprep.subr.bf16.mxu0 0
    %769 = vmatpush1.bf16.msra.mxu0 0
    %770 = vmatprep.subr.bf16.mxu0 0
    %771 = vmatpush1.bf16.msra.mxu0 0
    %772 = vmatprep.subr.bf16.mxu0 0
    %773 = vmatpush1.bf16.msra.mxu0 0
    %774 = vmatprep.subr.bf16.mxu0 0
    %775 = vmatpush1.bf16.msra.mxu0 0
    %776 = vmatprep.subr.bf16.mxu0 0
    %777 = vmatpush1.bf16.msra.mxu0 0
    %778 = vmatprep.subr.bf16.mxu0 0
    %779 = vmatpush1.bf16.msra.mxu0 0
    %780 = vmatprep.subr.bf16.mxu0 0
    %781 = vmatpush1.bf16.msra.mxu0 0
    %782 = vmatprep.subr.bf16.mxu0 0
    %783 = vmatpush1.bf16.msra.mxu0 0
    %784 = vmatprep.subr.bf16.mxu0 0
    %785 = vmatpush1.bf16.msra.mxu0 0
    %786 = vmatprep.subr.bf16.mxu0 0
    %787 = vmatpush1.bf16.msra.mxu0 0
    %788 = vmatprep.subr.bf16.mxu0 0
    %789 = vmatpush1.bf16.msra.mxu0 0
    %790 = vmatprep.subr.bf16.mxu0 0
    %791 = vmatpush1.bf16.msra.mxu0 0
    %792 = vmatprep.mubr.bf16.mxu0 0
    %793 = vmatmul.mubr.bf16.gmra.mrb[0].mxu0 %v746
    %v794 = vpop.f32.mrb[0].mxu0
    %v795 = vadd.f32 0.0, %v794
    %v796 = vpop.f32.mrb[0].mxu0
    %v797 = vadd.f32 0.0, %v796
    %v798 = vpop.f32.mrb[0].mxu0
    %v799 = vpop.f32.mrb[0].mxu0
    %800 = vdwg.mxu0
    %801 = vmatprep.subr.bf16.mxu0 %v758
    %802 = vmatpush1.bf16.msra.mxu0 %v755
    %803 = vmatprep.subr.bf16.mxu0 0
    %804 = vmatpush1.bf16.msra.mxu0 0
    %805 = vmatprep.subr.bf16.mxu0 0
    %806 = vmatpush1.bf16.msra.mxu0 0
    %807 = vmatprep.subr.bf16.mxu0 0
    %808 = vmatpush1.bf16.msra.mxu0 0
    %809 = vmatprep.subr.bf16.mxu0 0
    %810 = vmatpush1.bf16.msra.mxu0 0
    %811 = vmatprep.subr.bf16.mxu0 0
    %812 = vmatpush1.bf16.msra.mxu0 0
    %813 = vmatprep.subr.bf16.mxu0 0
    %814 = vmatpush1.bf16.msra.mxu0 0
    %815 = vmatprep.subr.bf16.mxu0 0
    %816 = vmatpush1.bf16.msra.mxu0 0
    %817 = vmatprep.subr.bf16.mxu0 0
    %818 = vmatpush1.bf16.msra.mxu0 0
    %819 = vmatprep.subr.bf16.mxu0 0
    %820 = vmatpush1.bf16.msra.mxu0 0
    %821 = vmatprep.subr.bf16.mxu0 0
    %822 = vmatpush1.bf16.msra.mxu0 0
    %823 = vmatprep.subr.bf16.mxu0 0
    %824 = vmatpush1.bf16.msra.mxu0 0
    %825 = vmatprep.subr.bf16.mxu0 0
    %826 = vmatpush1.bf16.msra.mxu0 0
    %827 = vmatprep.subr.bf16.mxu0 0
    %828 = vmatpush1.bf16.msra.mxu0 0
    %829 = vmatprep.subr.bf16.mxu0 0
    %830 = vmatpush1.bf16.msra.mxu0 0
    %831 = vmatprep.subr.bf16.mxu0 0
    %832 = vmatpush1.bf16.msra.mxu0 0
    %833 = vmatprep.mubr.bf16.mxu0 0
    %834 = vmatmul.mubr.bf16.gmra.mrb[0].mxu0 %v746
    %v835 = vpop.f32.mrb[0].mxu0
    %v836 = vadd.f32 0.0, %v835
    %v837 = vpop.f32.mrb[0].mxu0
    %v838 = vadd.f32 0.0, %v837
    %v839 = vpop.f32.mrb[0].mxu0
    %v840 = vpop.f32.mrb[0].mxu0
    %841 = vdwg.mxu0
    %v842 = vadd.f32 %v694, %v795
    %v843 = vadd.f32 %v695, %v797
    %v844 = vadd.f32 %v696, %v836
    %v845 = vadd.f32 %v697, %v838
    %vm846 = vmand %vm313, %vm711
    %vm847 = vmand %vm314, %vm712
    %vm848 = vmand %vm315, %vm713
    %vm849 = vmand %vm316, %vm714
    %vm850 = vmand %vm846, %vm719
    %vm851 = vmand %vm847, %vm720
    %vm852 = vmand %vm848, %vm721
    %vm853 = vmand %vm849, %vm722
    %v854 = vsel %vm850, 1, 0
    %v855 = vsel %vm851, 1, 0
    %v856 = vsel %vm852, 1, 0
    %v857 = vsel %vm853, 1, 0
    %vm858 = vcmp.eq.s32.totalorder %v854, 1
    %vm859 = vcmp.eq.s32.totalorder %v855, 1
    %vm860 = vcmp.eq.s32.totalorder %v856, 1
    %vm861 = vcmp.eq.s32.totalorder %v857, 1
    %v862 = vsel %vm858, %v201, 0.0
    %v863 = vsel %vm859, %v222, 0.0
    %v864 = vsel %vm860, %v202, 0.0
    %v865 = vsel %vm861, %v223, 0.0
    %v866 = vpack.c.bf16 %v862, %v862
    %v867 = vpack.c.bf16 %v863, %v863
    %v868 = vpack.c.bf16 %v864, %v864
    %v869 = vpack.c.bf16 %v865, %v865
    %s870 = scalar_lea.vmem [#allocation2], 8
    %v871 = vld [vmem:[%s870] sm:$0x3]
    %v873 = vsel %vm343, %v871, 0
    %v876 = vand.u32 %v866, %v350
    %v879 = vand.u32 %v867, %v350
    %v882 = vand.u32 %v868, %v350
    %v885 = vand.u32 %v869, %v350
    %887 = vmatprep.subr.bf16.mxu0 %v879
    %888 = vmatpush1.bf16.msra.mxu0 %v876
    %889 = vmatprep.subr.bf16.mxu0 0
    %890 = vmatpush1.bf16.msra.mxu0 0
    %891 = vmatprep.subr.bf16.mxu0 0
    %892 = vmatpush1.bf16.msra.mxu0 0
    %893 = vmatprep.subr.bf16.mxu0 0
    %894 = vmatpush1.bf16.msra.mxu0 0
    %895 = vmatprep.subr.bf16.mxu0 0
    %896 = vmatpush1.bf16.msra.mxu0 0
    %897 = vmatprep.subr.bf16.mxu0 0
    %898 = vmatpush1.bf16.msra.mxu0 0
    %899 = vmatprep.subr.bf16.mxu0 0
    %900 = vmatpush1.bf16.msra.mxu0 0
    %901 = vmatprep.subr.bf16.mxu0 0
    %902 = vmatpush1.bf16.msra.mxu0 0
    %903 = vmatprep.subr.bf16.mxu0 0
    %904 = vmatpush1.bf16.msra.mxu0 0
    %905 = vmatprep.subr.bf16.mxu0 0
    %906 = vmatpush1.bf16.msra.mxu0 0
    %907 = vmatprep.subr.bf16.mxu0 0
    %908 = vmatpush1.bf16.msra.mxu0 0
    %909 = vmatprep.subr.bf16.mxu0 0
    %910 = vmatpush1.bf16.msra.mxu0 0
    %911 = vmatprep.subr.bf16.mxu0 0
    %912 = vmatpush1.bf16.msra.mxu0 0
    %913 = vmatprep.subr.bf16.mxu0 0
    %914 = vmatpush1.bf16.msra.mxu0 0
    %915 = vmatprep.subr.bf16.mxu0 0
    %916 = vmatpush1.bf16.msra.mxu0 0
    %917 = vmatprep.subr.bf16.mxu0 0
    %918 = vmatpush1.bf16.msra.mxu0 0
    %919 = vmatprep.mubr.bf16.mxu0 0
    %920 = vmatmul.mubr.bf16.gmra.mrb[0].mxu0 %v873
    %v921 = vpop.f32.mrb[0].mxu0
    %v922 = vadd.f32 0.0, %v921
    %v923 = vpop.f32.mrb[0].mxu0
    %v924 = vadd.f32 0.0, %v923
    %v925 = vpop.f32.mrb[0].mxu0
    %v926 = vpop.f32.mrb[0].mxu0
    %927 = vdwg.mxu0
    %928 = vmatprep.subr.bf16.mxu0 %v885
    %929 = vmatpush1.bf16.msra.mxu0 %v882
    %930 = vmatprep.subr.bf16.mxu0 0
    %931 = vmatpush1.bf16.msra.mxu0 0
    %932 = vmatprep.subr.bf16.mxu0 0
    %933 = vmatpush1.bf16.msra.mxu0 0
    %934 = vmatprep.subr.bf16.mxu0 0
    %935 = vmatpush1.bf16.msra.mxu0 0
    %936 = vmatprep.subr.bf16.mxu0 0
    %937 = vmatpush1.bf16.msra.mxu0 0
    %938 = vmatprep.subr.bf16.mxu0 0
    %939 = vmatpush1.bf16.msra.mxu0 0
    %940 = vmatprep.subr.bf16.mxu0 0
    %941 = vmatpush1.bf16.msra.mxu0 0
    %942 = vmatprep.subr.bf16.mxu0 0
    %943 = vmatpush1.bf16.msra.mxu0 0
    %944 = vmatprep.subr.bf16.mxu0 0
    %945 = vmatpush1.bf16.msra.mxu0 0
    %946 = vmatprep.subr.bf16.mxu0 0
    %947 = vmatpush1.bf16.msra.mxu0 0
    %948 = vmatprep.subr.bf16.mxu0 0
    %949 = vmatpush1.bf16.msra.mxu0 0
    %950 = vmatprep.subr.bf16.mxu0 0
    %951 = vmatpush1.bf16.msra.mxu0 0
    %952 = vmatprep.subr.bf16.mxu0 0
    %953 = vmatpush1.bf16.msra.mxu0 0
    %954 = vmatprep.subr.bf16.mxu0 0
    %955 = vmatpush1.bf16.msra.mxu0 0
    %956 = vmatprep.subr.bf16.mxu0 0
    %957 = vmatpush1.bf16.msra.mxu0 0
    %958 = vmatprep.subr.bf16.mxu0 0
    %959 = vmatpush1.bf16.msra.mxu0 0
    %960 = vmatprep.mubr.bf16.mxu0 0
    %961 = vmatmul.mubr.bf16.gmra.mrb[0].mxu0 %v873
    %v962 = vpop.f32.mrb[0].mxu0
    %v963 = vadd.f32 0.0, %v962
    %v964 = vpop.f32.mrb[0].mxu0
    %v965 = vadd.f32 0.0, %v964
    %v966 = vpop.f32.mrb[0].mxu0
    %v967 = vpop.f32.mrb[0].mxu0
    %968 = vdwg.mxu0
    %v969 = vadd.f32 %v842, %v922
    %v970 = vadd.f32 %v843, %v924
    %v971 = vadd.f32 %v844, %v963
    %v972 = vadd.f32 %v845, %v965
    %973 = vrot.lane.b32.xlu0 %v201, 127
    %v974 = vpop.permute.xlu0 %973
    %975 = vrot.lane.b32.xlu0 %v222, 127
    %v976 = vpop.permute.xlu0 %975
    %977 = vrot.lane.b32.xlu0 %v202, 127
    %v978 = vpop.permute.xlu0 %977
    %979 = vrot.lane.b32.xlu0 %v223, 127
    %v980 = vpop.permute.xlu0 %979
    %vm981 = vcmp.lt.s32.totalorder %v204, 127
    %v982 = vsel %vm981, %v978, %v980
    %v983 = vsel %vm981, %v976, %v978
    %v984 = vsel %vm981, %v974, %v976
    %v985 = vsel %vm981, %v980, %v974
    %vm986 = vmand %vm567, %vm711
    %vm987 = vmand %vm568, %vm712
    %vm988 = vmand %vm569, %vm713
    %vm989 = vmand %vm570, %vm714
    %vm990 = vmand %vm986, %vm719
    %vm991 = vmand %vm987, %vm720
    %vm992 = vmand %vm988, %vm721
    %vm993 = vmand %vm989, %vm722
    %v994 = vsel %vm990, 1, 0
    %v995 = vsel %vm991, 1, 0
    %v996 = vsel %vm992, 1, 0
    %v997 = vsel %vm993, 1, 0
    %vm998 = vcmp.eq.s32.totalorder %v994, 1
    %vm999 = vcmp.eq.s32.totalorder %v995, 1
    %vm1000 = vcmp.eq.s32.totalorder %v996, 1
    %vm1001 = vcmp.eq.s32.totalorder %v997, 1
    %v1002 = vsel %vm998, %v984, 0.0
    %v1003 = vsel %vm999, %v983, 0.0
    %v1004 = vsel %vm1000, %v982, 0.0
    %v1005 = vsel %vm1001, %v985, 0.0
    %v1006 = vpack.c.bf16 %v1002, %v1002
    %v1007 = vpack.c.bf16 %v1003, %v1003
    %v1008 = vpack.c.bf16 %v1004, %v1004
    %v1009 = vpack.c.bf16 %v1005, %v1005
    %s1010 = scalar_lea.vmem [#allocation2], 10
    %v1011 = vld [vmem:[%s1010] sm:$0x3]
    %v1013 = vsel %vm343, %v1011, 0
    %v1016 = vand.u32 %v1006, %v350
    %v1019 = vand.u32 %v1007, %v350
    %v1022 = vand.u32 %v1008, %v350
    %v1025 = vand.u32 %v1009, %v350
    %1027 = vmatprep.subr.bf16.mxu0 %v1019
    %1028 = vmatpush1.bf16.msra.mxu0 %v1016
    %1029 = vmatprep.subr.bf16.mxu0 0
    %1030 = vmatpush1.bf16.msra.mxu0 0
    %1031 = vmatprep.subr.bf16.mxu0 0
    %1032 = vmatpush1.bf16.msra.mxu0 0
    %1033 = vmatprep.subr.bf16.mxu0 0
    %1034 = vmatpush1.bf16.msra.mxu0 0
    %1035 = vmatprep.subr.bf16.mxu0 0
    %1036 = vmatpush1.bf16.msra.mxu0 0
    %1037 = vmatprep.subr.bf16.mxu0 0
    %1038 = vmatpush1.bf16.msra.mxu0 0
    %1039 = vmatprep.subr.bf16.mxu0 0
    %1040 = vmatpush1.bf16.msra.mxu0 0
    %1041 = vmatprep.subr.bf16.mxu0 0
    %1042 = vmatpush1.bf16.msra.mxu0 0
    %1043 = vmatprep.subr.bf16.mxu0 0
    %1044 = vmatpush1.bf16.msra.mxu0 0
    %1045 = vmatprep.subr.bf16.mxu0 0
    %1046 = vmatpush1.bf16.msra.mxu0 0
    %1047 = vmatprep.subr.bf16.mxu0 0
    %1048 = vmatpush1.bf16.msra.mxu0 0
    %1049 = vmatprep.subr.bf16.mxu0 0
    %1050 = vmatpush1.bf16.msra.mxu0 0
    %1051 = vmatprep.subr.bf16.mxu0 0
    %1052 = vmatpush1.bf16.msra.mxu0 0
    %1053 = vmatprep.subr.bf16.mxu0 0
    %1054 = vmatpush1.bf16.msra.mxu0 0
    %1055 = vmatprep.subr.bf16.mxu0 0
    %1056 = vmatpush1.bf16.msra.mxu0 0
    %1057 = vmatprep.subr.bf16.mxu0 0
    %1058 = vmatpush1.bf16.msra.mxu0 0
    %1059 = vmatprep.mubr.bf16.mxu0 0
    %1060 = vmatmul.mubr.bf16.gmra.mrb[0].mxu0 %v1013
    %v1061 = vpop.f32.mrb[0].mxu0
    %v1062 = vadd.f32 0.0, %v1061
    %v1063 = vpop.f32.mrb[0].mxu0
    %v1064 = vadd.f32 0.0, %v1063
    %v1065 = vpop.f32.mrb[0].mxu0
    %v1066 = vpop.f32.mrb[0].mxu0
    %1067 = vdwg.mxu0
    %1068 = vmatprep.subr.bf16.mxu0 %v1025
    %1069 = vmatpush1.bf16.msra.mxu0 %v1022
    %1070 = vmatprep.subr.bf16.mxu0 0
    %1071 = vmatpush1.bf16.msra.mxu0 0
    %1072 = vmatprep.subr.bf16.mxu0 0
    %1073 = vmatpush1.bf16.msra.mxu0 0
    %1074 = vmatprep.subr.bf16.mxu0 0
    %1075 = vmatpush1.bf16.msra.mxu0 0
    %1076 = vmatprep.subr.bf16.mxu0 0
    %1077 = vmatpush1.bf16.msra.mxu0 0
    %1078 = vmatprep.subr.bf16.mxu0 0
    %1079 = vmatpush1.bf16.msra.mxu0 0
    %1080 = vmatprep.subr.bf16.mxu0 0
    %1081 = vmatpush1.bf16.msra.mxu0 0
    %1082 = vmatprep.subr.bf16.mxu0 0
    %1083 = vmatpush1.bf16.msra.mxu0 0
    %1084 = vmatprep.subr.bf16.mxu0 0
    %1085 = vmatpush1.bf16.msra.mxu0 0
    %1086 = vmatprep.subr.bf16.mxu0 0
    %1087 = vmatpush1.bf16.msra.mxu0 0
    %1088 = vmatprep.subr.bf16.mxu0 0
    %1089 = vmatpush1.bf16.msra.mxu0 0
    %1090 = vmatprep.subr.bf16.mxu0 0
    %1091 = vmatpush1.bf16.msra.mxu0 0
    %1092 = vmatprep.subr.bf16.mxu0 0
    %1093 = vmatpush1.bf16.msra.mxu0 0
    %1094 = vmatprep.subr.bf16.mxu0 0
    %1095 = vmatpush1.bf16.msra.mxu0 0
    %1096 = vmatprep.subr.bf16.mxu0 0
    %1097 = vmatpush1.bf16.msra.mxu0 0
    %1098 = vmatprep.subr.bf16.mxu0 0
    %1099 = vmatpush1.bf16.msra.mxu0 0
    %1100 = vmatprep.mubr.bf16.mxu0 0
    %1101 = vmatmul.mubr.bf16.gmra.mrb[0].mxu0 %v1013
    %v1102 = vpop.f32.mrb[0].mxu0
    %v1103 = vadd.f32 0.0, %v1102
    %v1104 = vpop.f32.mrb[0].mxu0
    %v1105 = vadd.f32 0.0, %v1104
    %v1106 = vpop.f32.mrb[0].mxu0
    %v1107 = vpop.f32.mrb[0].mxu0
    %1108 = vdwg.mxu0
    %v1109 = vadd.f32 %v969, %v1062
    %v1110 = vadd.f32 %v970, %v1064
    %v1111 = vadd.f32 %v971, %v1103
    %v1112 = vadd.f32 %v972, %v1105
    %1113 = vrot.lane.b32.xlu0 %v201, 113
    %v1114 = vpop.permute.xlu0 %1113
    %1115 = vrot.lane.b32.xlu0 %v222, 113
    %v1116 = vpop.permute.xlu0 %1115
    %1117 = vrot.lane.b32.xlu0 %v202, 113
    %v1118 = vpop.permute.xlu0 %1117
    %1119 = vrot.lane.b32.xlu0 %v223, 113
    %v1120 = vpop.permute.xlu0 %1119
    %vm1121 = vcmp.lt.s32.totalorder %v204, 113
    %v1122 = vsel %vm1121, %v1118, %v1120
    %v1123 = vsel %vm1121, %v1116, %v1118
    %v1124 = vsel %vm1121, %v1114, %v1116
    %v1125 = vsel %vm1121, %v1120, %v1114
    %v1126 = vadd.s32 %v216, 1
    %v1127 = vadd.s32 %v217, 1
    %v1128 = vadd.s32 %v218, 1
    %v1129 = vadd.s32 %v219, 1
    %vm1130 = vcmp.ge.s32.totalorder %v1126, 0
    %vm1131 = vcmp.ge.s32.totalorder %v1127, 0
    %vm1132 = vcmp.ge.s32.totalorder %v1128, 0
    %vm1133 = vcmp.ge.s32.totalorder %v1129, 0
    %vm1134 = vmand %vm251, %vm1130
    %vm1135 = vmand %vm252, %vm1131
    %vm1136 = vmand %vm253, %vm1132
    %vm1137 = vmand %vm254, %vm1133
    %vm1138 = vcmp.lt.s32.totalorder %v1126, 16
    %vm1139 = vcmp.lt.s32.totalorder %v1127, 16
    %vm1140 = vcmp.lt.s32.totalorder %v1128, 16
    %vm1141 = vcmp.lt.s32.totalorder %v1129, 16
    %vm1142 = vmand %vm1134, %vm1138
    %vm1143 = vmand %vm1135, %vm1139
    %vm1144 = vmand %vm1136, %vm1140
    %vm1145 = vmand %vm1137, %vm1141
    %v1146 = vsel %vm1142, 1, 0
    %v1147 = vsel %vm1143, 1, 0
    %v1148 = vsel %vm1144, 1, 0
    %v1149 = vsel %vm1145, 1, 0
    %vm1150 = vcmp.eq.s32.totalorder %v1146, 1
    %vm1151 = vcmp.eq.s32.totalorder %v1147, 1
    %vm1152 = vcmp.eq.s32.totalorder %v1148, 1
    %vm1153 = vcmp.eq.s32.totalorder %v1149, 1
    %v1154 = vsel %vm1150, %v1124, 0.0
    %v1155 = vsel %vm1151, %v1123, 0.0
    %v1156 = vsel %vm1152, %v1122, 0.0
    %v1157 = vsel %vm1153, %v1125, 0.0
    %v1158 = vpack.c.bf16 %v1154, %v1154
    %v1159 = vpack.c.bf16 %v1155, %v1155
    %v1160 = vpack.c.bf16 %v1156, %v1156
    %v1161 = vpack.c.bf16 %v1157, %v1157
    %s1162 = scalar_lea.vmem [#allocation2], 12
    %v1163 = vld [vmem:[%s1162] sm:$0x3]
    %v1165 = vsel %vm343, %v1163, 0
    %v1168 = vand.u32 %v1158, %v350
    %v1171 = vand.u32 %v1159, %v350
    %v1174 = vand.u32 %v1160, %v350
    %v1177 = vand.u32 %v1161, %v350
    %1179 = vmatprep.subr.bf16.mxu0 %v1171
    %1180 = vmatpush1.bf16.msra.mxu0 %v1168
    %1181 = vmatprep.subr.bf16.mxu0 0
    %1182 = vmatpush1.bf16.msra.mxu0 0
    %1183 = vmatprep.subr.bf16.mxu0 0
    %1184 = vmatpush1.bf16.msra.mxu0 0
    %1185 = vmatprep.subr.bf16.mxu0 0
    %1186 = vmatpush1.bf16.msra.mxu0 0
    %1187 = vmatprep.subr.bf16.mxu0 0
    %1188 = vmatpush1.bf16.msra.mxu0 0
    %1189 = vmatprep.subr.bf16.mxu0 0
    %1190 = vmatpush1.bf16.msra.mxu0 0
    %1191 = vmatprep.subr.bf16.mxu0 0
    %1192 = vmatpush1.bf16.msra.mxu0 0
    %1193 = vmatprep.subr.bf16.mxu0 0
    %1194 = vmatpush1.bf16.msra.mxu0 0
    %1195 = vmatprep.subr.bf16.mxu0 0
    %1196 = vmatpush1.bf16.msra.mxu0 0
    %1197 = vmatprep.subr.bf16.mxu0 0
    %1198 = vmatpush1.bf16.msra.mxu0 0
    %1199 = vmatprep.subr.bf16.mxu0 0
    %1200 = vmatpush1.bf16.msra.mxu0 0
    %1201 = vmatprep.subr.bf16.mxu0 0
    %1202 = vmatpush1.bf16.msra.mxu0 0
    %1203 = vmatprep.subr.bf16.mxu0 0
    %1204 = vmatpush1.bf16.msra.mxu0 0
    %1205 = vmatprep.subr.bf16.mxu0 0
    %1206 = vmatpush1.bf16.msra.mxu0 0
    %1207 = vmatprep.subr.bf16.mxu0 0
    %1208 = vmatpush1.bf16.msra.mxu0 0
    %1209 = vmatprep.subr.bf16.mxu0 0
    %1210 = vmatpush1.bf16.msra.mxu0 0
    %1211 = vmatprep.mubr.bf16.mxu0 0
    %1212 = vmatmul.mubr.bf16.gmra.mrb[0].mxu0 %v1165
    %v1213 = vpop.f32.mrb[0].mxu0
    %v1214 = vadd.f32 0.0, %v1213
    %v1215 = vpop.f32.mrb[0].mxu0
    %v1216 = vadd.f32 0.0, %v1215
    %v1217 = vpop.f32.mrb[0].mxu0
    %v1218 = vpop.f32.mrb[0].mxu0
    %1219 = vdwg.mxu0
    %1220 = vmatprep.subr.bf16.mxu0 %v1177
    %1221 = vmatpush1.bf16.msra.mxu0 %v1174
    %1222 = vmatprep.subr.bf16.mxu0 0
    %1223 = vmatpush1.bf16.msra.mxu0 0
    %1224 = vmatprep.subr.bf16.mxu0 0
    %1225 = vmatpush1.bf16.msra.mxu0 0
    %1226 = vmatprep.subr.bf16.mxu0 0
    %1227 = vmatpush1.bf16.msra.mxu0 0
    %1228 = vmatprep.subr.bf16.mxu0 0
    %1229 = vmatpush1.bf16.msra.mxu0 0
    %1230 = vmatprep.subr.bf16.mxu0 0
    %1231 = vmatpush1.bf16.msra.mxu0 0
    %1232 = vmatprep.subr.bf16.mxu0 0
    %1233 = vmatpush1.bf16.msra.mxu0 0
    %1234 = vmatprep.subr.bf16.mxu0 0
    %1235 = vmatpush1.bf16.msra.mxu0 0
    %1236 = vmatprep.subr.bf16.mxu0 0
    %1237 = vmatpush1.bf16.msra.mxu0 0
    %1238 = vmatprep.subr.bf16.mxu0 0
    %1239 = vmatpush1.bf16.msra.mxu0 0
    %1240 = vmatprep.subr.bf16.mxu0 0
    %1241 = vmatpush1.bf16.msra.mxu0 0
    %1242 = vmatprep.subr.bf16.mxu0 0
    %1243 = vmatpush1.bf16.msra.mxu0 0
    %1244 = vmatprep.subr.bf16.mxu0 0
    %1245 = vmatpush1.bf16.msra.mxu0 0
    %1246 = vmatprep.subr.bf16.mxu0 0
    %1247 = vmatpush1.bf16.msra.mxu0 0
    %1248 = vmatprep.subr.bf16.mxu0 0
    %1249 = vmatpush1.bf16.msra.mxu0 0
    %1250 = vmatprep.subr.bf16.mxu0 0
    %1251 = vmatpush1.bf16.msra.mxu0 0
    %1252 = vmatprep.mubr.bf16.mxu0 0
    %1253 = vmatmul.mubr.bf16.gmra.mrb[0].mxu0 %v1165
    %v1254 = vpop.f32.mrb[0].mxu0
    %v1255 = vadd.f32 0.0, %v1254
    %v1256 = vpop.f32.mrb[0].mxu0
    %v1257 = vadd.f32 0.0, %v1256
    %v1258 = vpop.f32.mrb[0].mxu0
    %v1259 = vpop.f32.mrb[0].mxu0
    %1260 = vdwg.mxu0
    %v1261 = vadd.f32 %v1109, %v1214
    %v1262 = vadd.f32 %v1110, %v1216
    %v1263 = vadd.f32 %v1111, %v1255
    %v1264 = vadd.f32 %v1112, %v1257
    %1265 = vrot.lane.b32.xlu0 %v201, 112
    %v1266 = vpop.permute.xlu0 %1265
    %1267 = vrot.lane.b32.xlu0 %v222, 112
    %v1268 = vpop.permute.xlu0 %1267
    %1269 = vrot.lane.b32.xlu0 %v202, 112
    %v1270 = vpop.permute.xlu0 %1269
    %1271 = vrot.lane.b32.xlu0 %v223, 112
    %v1272 = vpop.permute.xlu0 %1271
    %vm1273 = vcmp.lt.s32.totalorder %v204, 112
    %v1274 = vsel %vm1273, %v1270, %v1272
    %v1275 = vsel %vm1273, %v1268, %v1270
    %v1276 = vsel %vm1273, %v1266, %v1268
    %v1277 = vsel %vm1273, %v1272, %v1266
    %vm1278 = vmand %vm313, %vm1130
    %vm1279 = vmand %vm314, %vm1131
    %vm1280 = vmand %vm315, %vm1132
    %vm1281 = vmand %vm316, %vm1133
    %vm1282 = vmand %vm1278, %vm1138
    %vm1283 = vmand %vm1279, %vm1139
    %vm1284 = vmand %vm1280, %vm1140
    %vm1285 = vmand %vm1281, %vm1141
    %v1286 = vsel %vm1282, 1, 0
    %v1287 = vsel %vm1283, 1, 0
    %v1288 = vsel %vm1284, 1, 0
    %v1289 = vsel %vm1285, 1, 0
    %vm1290 = vcmp.eq.s32.totalorder %v1286, 1
    %vm1291 = vcmp.eq.s32.totalorder %v1287, 1
    %vm1292 = vcmp.eq.s32.totalorder %v1288, 1
    %vm1293 = vcmp.eq.s32.totalorder %v1289, 1
    %v1294 = vsel %vm1290, %v1276, 0.0
    %v1295 = vsel %vm1291, %v1275, 0.0
    %v1296 = vsel %vm1292, %v1274, 0.0
    %v1297 = vsel %vm1293, %v1277, 0.0
    %v1298 = vpack.c.bf16 %v1294, %v1294
    %v1299 = vpack.c.bf16 %v1295, %v1295
    %v1300 = vpack.c.bf16 %v1296, %v1296
    %v1301 = vpack.c.bf16 %v1297, %v1297
    %s1302 = scalar_lea.vmem [#allocation2], 14
    %v1303 = vld [vmem:[%s1302] sm:$0x3]
    %v1305 = vsel %vm343, %v1303, 0
    %v1308 = vand.u32 %v1298, %v350
    %v1311 = vand.u32 %v1299, %v350
    %v1314 = vand.u32 %v1300, %v350
    %v1317 = vand.u32 %v1301, %v350
    %1319 = vmatprep.subr.bf16.mxu0 %v1311
    %1320 = vmatpush1.bf16.msra.mxu0 %v1308
    %1321 = vmatprep.subr.bf16.mxu0 0
    %1322 = vmatpush1.bf16.msra.mxu0 0
    %1323 = vmatprep.subr.bf16.mxu0 0
    %1324 = vmatpush1.bf16.msra.mxu0 0
    %1325 = vmatprep.subr.bf16.mxu0 0
    %1326 = vmatpush1.bf16.msra.mxu0 0
    %1327 = vmatprep.subr.bf16.mxu0 0
    %1328 = vmatpush1.bf16.msra.mxu0 0
    %1329 = vmatprep.subr.bf16.mxu0 0
    %1330 = vmatpush1.bf16.msra.mxu0 0
    %1331 = vmatprep.subr.bf16.mxu0 0
    %1332 = vmatpush1.bf16.msra.mxu0 0
    %1333 = vmatprep.subr.bf16.mxu0 0
    %1334 = vmatpush1.bf16.msra.mxu0 0
    %1335 = vmatprep.subr.bf16.mxu0 0
    %1336 = vmatpush1.bf16.msra.mxu0 0
    %1337 = vmatprep.subr.bf16.mxu0 0
    %1338 = vmatpush1.bf16.msra.mxu0 0
    %1339 = vmatprep.subr.bf16.mxu0 0
    %1340 = vmatpush1.bf16.msra.mxu0 0
    %1341 = vmatprep.subr.bf16.mxu0 0
    %1342 = vmatpush1.bf16.msra.mxu0 0
    %1343 = vmatprep.subr.bf16.mxu0 0
    %1344 = vmatpush1.bf16.msra.mxu0 0
    %1345 = vmatprep.subr.bf16.mxu0 0
    %1346 = vmatpush1.bf16.msra.mxu0 0
    %1347 = vmatprep.subr.bf16.mxu0 0
    %1348 = vmatpush1.bf16.msra.mxu0 0
    %1349 = vmatprep.subr.bf16.mxu0 0
    %1350 = vmatpush1.bf16.msra.mxu0 0
    %1351 = vmatprep.mubr.bf16.mxu0 0
    %1352 = vmatmul.mubr.bf16.gmra.mrb[0].mxu0 %v1305
    %v1353 = vpop.f32.mrb[0].mxu0
    %v1354 = vadd.f32 0.0, %v1353
    %v1355 = vpop.f32.mrb[0].mxu0
    %v1356 = vadd.f32 0.0, %v1355
    %v1357 = vpop.f32.mrb[0].mxu0
    %v1358 = vpop.f32.mrb[0].mxu0
    %1359 = vdwg.mxu0
    %1360 = vmatprep.subr.bf16.mxu0 %v1317
    %1361 = vmatpush1.bf16.msra.mxu0 %v1314
    %1362 = vmatprep.subr.bf16.mxu0 0
    %1363 = vmatpush1.bf16.msra.mxu0 0
    %1364 = vmatprep.subr.bf16.mxu0 0
    %1365 = vmatpush1.bf16.msra.mxu0 0
    %1366 = vmatprep.subr.bf16.mxu0 0
    %1367 = vmatpush1.bf16.msra.mxu0 0
    %1368 = vmatprep.subr.bf16.mxu0 0
    %1369 = vmatpush1.bf16.msra.mxu0 0
    %1370 = vmatprep.subr.bf16.mxu0 0
    %1371 = vmatpush1.bf16.msra.mxu0 0
    %1372 = vmatprep.subr.bf16.mxu0 0
    %1373 = vmatpush1.bf16.msra.mxu0 0
    %1374 = vmatprep.subr.bf16.mxu0 0
    %1375 = vmatpush1.bf16.msra.mxu0 0
    %1376 = vmatprep.subr.bf16.mxu0 0
    %1377 = vmatpush1.bf16.msra.mxu0 0
    %1378 = vmatprep.subr.bf16.mxu0 0
    %1379 = vmatpush1.bf16.msra.mxu0 0
    %1380 = vmatprep.subr.bf16.mxu0 0
    %1381 = vmatpush1.bf16.msra.mxu0 0
    %1382 = vmatprep.subr.bf16.mxu0 0
    %1383 = vmatpush1.bf16.msra.mxu0 0
    %1384 = vmatprep.subr.bf16.mxu0 0
    %1385 = vmatpush1.bf16.msra.mxu0 0
    %1386 = vmatprep.subr.bf16.mxu0 0
    %1387 = vmatpush1.bf16.msra.mxu0 0
    %1388 = vmatprep.subr.bf16.mxu0 0
    %1389 = vmatpush1.bf16.msra.mxu0 0
    %1390 = vmatprep.subr.bf16.mxu0 0
    %1391 = vmatpush1.bf16.msra.mxu0 0
    %1392 = vmatprep.mubr.bf16.mxu0 0
    %1393 = vmatmul.mubr.bf16.gmra.mrb[0].mxu0 %v1305
    %v1394 = vpop.f32.mrb[0].mxu0
    %v1395 = vadd.f32 0.0, %v1394
    %v1396 = vpop.f32.mrb[0].mxu0
    %v1397 = vadd.f32 0.0, %v1396
    %v1398 = vpop.f32.mrb[0].mxu0
    %v1399 = vpop.f32.mrb[0].mxu0
    %1400 = vdwg.mxu0
    %v1401 = vadd.f32 %v1261, %v1354
    %v1402 = vadd.f32 %v1262, %v1356
    %v1403 = vadd.f32 %v1263, %v1395
    %v1404 = vadd.f32 %v1264, %v1397
    %1405 = vrot.lane.b32.xlu0 %v201, 111
    %v1406 = vpop.permute.xlu0 %1405
    %1407 = vrot.lane.b32.xlu0 %v222, 111
    %v1408 = vpop.permute.xlu0 %1407
    %1409 = vrot.lane.b32.xlu0 %v202, 111
    %v1410 = vpop.permute.xlu0 %1409
    %1411 = vrot.lane.b32.xlu0 %v223, 111
    %v1412 = vpop.permute.xlu0 %1411
    %vm1413 = vcmp.lt.s32.totalorder %v204, 111
    %v1414 = vsel %vm1413, %v1410, %v1412
    %v1415 = vsel %vm1413, %v1408, %v1410
    %v1416 = vsel %vm1413, %v1406, %v1408
    %v1417 = vsel %vm1413, %v1412, %v1406
    %vm1418 = vmand %vm567, %vm1130
    %vm1419 = vmand %vm568, %vm1131
    %vm1420 = vmand %vm569, %vm1132
    %vm1421 = vmand %vm570, %vm1133
    %vm1422 = vmand %vm1418, %vm1138
    %vm1423 = vmand %vm1419, %vm1139
    %vm1424 = vmand %vm1420, %vm1140
    %vm1425 = vmand %vm1421, %vm1141
    %v1426 = vsel %vm1422, 1, 0
    %v1427 = vsel %vm1423, 1, 0
    %v1428 = vsel %vm1424, 1, 0
    %v1429 = vsel %vm1425, 1, 0
    %vm1430 = vcmp.eq.s32.totalorder %v1426, 1
    %vm1431 = vcmp.eq.s32.totalorder %v1427, 1
    %vm1432 = vcmp.eq.s32.totalorder %v1428, 1
    %vm1433 = vcmp.eq.s32.totalorder %v1429, 1
    %v1434 = vsel %vm1430, %v1416, 0.0
    %v1435 = vsel %vm1431, %v1415, 0.0
    %v1436 = vsel %vm1432, %v1414, 0.0
    %v1437 = vsel %vm1433, %v1417, 0.0
    %v1438 = vpack.c.bf16 %v1434, %v1434
    %v1439 = vpack.c.bf16 %v1435, %v1435
    %v1440 = vpack.c.bf16 %v1436, %v1436
    %v1441 = vpack.c.bf16 %v1437, %v1437
    %s1442 = scalar_lea.vmem [#allocation2], 16
    %v1443 = vld [vmem:[%s1442] sm:$0x3]
    %v1445 = vsel %vm343, %v1443, 0
    %v1448 = vand.u32 %v1438, %v350
    %v1451 = vand.u32 %v1439, %v350
    %v1454 = vand.u32 %v1440, %v350
    %v1457 = vand.u32 %v1441, %v350
    %1459 = vmatprep.subr.bf16.mxu0 %v1451
    %1460 = vmatpush1.bf16.msra.mxu0 %v1448
    %1461 = vmatprep.subr.bf16.mxu0 0
    %1462 = vmatpush1.bf16.msra.mxu0 0
    %1463 = vmatprep.subr.bf16.mxu0 0
    %1464 = vmatpush1.bf16.msra.mxu0 0
    %1465 = vmatprep.subr.bf16.mxu0 0
    %1466 = vmatpush1.bf16.msra.mxu0 0
    %1467 = vmatprep.subr.bf16.mxu0 0
    %1468 = vmatpush1.bf16.msra.mxu0 0
    %1469 = vmatprep.subr.bf16.mxu0 0
    %1470 = vmatpush1.bf16.msra.mxu0 0
    %1471 = vmatprep.subr.bf16.mxu0 0
    %1472 = vmatpush1.bf16.msra.mxu0 0
    %1473 = vmatprep.subr.bf16.mxu0 0
    %1474 = vmatpush1.bf16.msra.mxu0 0
    %1475 = vmatprep.subr.bf16.mxu0 0
    %1476 = vmatpush1.bf16.msra.mxu0 0
    %1477 = vmatprep.subr.bf16.mxu0 0
    %1478 = vmatpush1.bf16.msra.mxu0 0
    %1479 = vmatprep.subr.bf16.mxu0 0
    %1480 = vmatpush1.bf16.msra.mxu0 0
    %1481 = vmatprep.subr.bf16.mxu0 0
    %1482 = vmatpush1.bf16.msra.mxu0 0
    %1483 = vmatprep.subr.bf16.mxu0 0
    %1484 = vmatpush1.bf16.msra.mxu0 0
    %1485 = vmatprep.subr.bf16.mxu0 0
    %1486 = vmatpush1.bf16.msra.mxu0 0
    %1487 = vmatprep.subr.bf16.mxu0 0
    %1488 = vmatpush1.bf16.msra.mxu0 0
    %1489 = vmatprep.subr.bf16.mxu0 0
    %1490 = vmatpush1.bf16.msra.mxu0 0
    %1491 = vmatprep.mubr.bf16.mxu0 0
    %1492 = vmatmul.mubr.bf16.gmra.mrb[0].mxu0 %v1445
    %v1493 = vpop.f32.mrb[0].mxu0
    %v1494 = vadd.f32 0.0, %v1493
    %v1495 = vpop.f32.mrb[0].mxu0
    %v1496 = vadd.f32 0.0, %v1495
    %v1497 = vpop.f32.mrb[0].mxu0
    %v1498 = vpop.f32.mrb[0].mxu0
    %1499 = vdwg.mxu0
    %1500 = vmatprep.subr.bf16.mxu0 %v1457
    %1501 = vmatpush1.bf16.msra.mxu0 %v1454
    %1502 = vmatprep.subr.bf16.mxu0 0
    %1503 = vmatpush1.bf16.msra.mxu0 0
    %1504 = vmatprep.subr.bf16.mxu0 0
    %1505 = vmatpush1.bf16.msra.mxu0 0
    %1506 = vmatprep.subr.bf16.mxu0 0
    %1507 = vmatpush1.bf16.msra.mxu0 0
    %1508 = vmatprep.subr.bf16.mxu0 0
    %1509 = vmatpush1.bf16.msra.mxu0 0
    %1510 = vmatprep.subr.bf16.mxu0 0
    %1511 = vmatpush1.bf16.msra.mxu0 0
    %1512 = vmatprep.subr.bf16.mxu0 0
    %1513 = vmatpush1.bf16.msra.mxu0 0
    %1514 = vmatprep.subr.bf16.mxu0 0
    %1515 = vmatpush1.bf16.msra.mxu0 0
    %1516 = vmatprep.subr.bf16.mxu0 0
    %1517 = vmatpush1.bf16.msra.mxu0 0
    %1518 = vmatprep.subr.bf16.mxu0 0
    %1519 = vmatpush1.bf16.msra.mxu0 0
    %1520 = vmatprep.subr.bf16.mxu0 0
    %1521 = vmatpush1.bf16.msra.mxu0 0
    %1522 = vmatprep.subr.bf16.mxu0 0
    %1523 = vmatpush1.bf16.msra.mxu0 0
    %1524 = vmatprep.subr.bf16.mxu0 0
    %1525 = vmatpush1.bf16.msra.mxu0 0
    %1526 = vmatprep.subr.bf16.mxu0 0
    %1527 = vmatpush1.bf16.msra.mxu0 0
    %1528 = vmatprep.subr.bf16.mxu0 0
    %1529 = vmatpush1.bf16.msra.mxu0 0
    %1530 = vmatprep.subr.bf16.mxu0 0
    %1531 = vmatpush1.bf16.msra.mxu0 0
    %1532 = vmatprep.mubr.bf16.mxu0 0
    %1533 = vmatmul.mubr.bf16.gmra.mrb[0].mxu0 %v1445
    %v1534 = vpop.f32.mrb[0].mxu0
    %v1535 = vadd.f32 0.0, %v1534
    %v1536 = vpop.f32.mrb[0].mxu0
    %v1537 = vadd.f32 0.0, %v1536
    %v1538 = vpop.f32.mrb[0].mxu0
    %v1539 = vpop.f32.mrb[0].mxu0
    %1540 = vdwg.mxu0
    %v1541 = vadd.f32 %v1401, %v1494
    %v1542 = vadd.f32 %v1402, %v1496
    %v1543 = vadd.f32 %v1403, %v1535
    %v1544 = vadd.f32 %v1404, %v1537
    %s1545 = sld [smem:[#allocation19]]
    %v1546 = vstv %s1545
    %v1547 = vadd.f32 %v1541, %v1546
    %v1548 = vadd.f32 %v1542, %v1546
    %v1549 = vadd.f32 %v1543, %v1546
    %v1550 = vadd.f32 %v1544, %v1546
    %v1551 = vmax.f32 %v1547, 0.0
    %v1552 = vmax.f32 %v1548, 0.0
    %v1553 = vmax.f32 %v1549, 0.0
    %v1554 = vmax.f32 %v1550, 0.0
    %s1555 = sld [smem:[#allocation19 + $0x1]]
    %s1556 = sld [smem:[#allocation19 + $0x2]]
    %s1557 = sld [smem:[#allocation19 + $0x3]]
    %s1558 = sld [smem:[#allocation19 + $0x4]]
    %s1559 = sld [smem:[#allocation19 + $0x5]]
    %v1560 = vstv %s1555
    %v1561 = vadd.f32 %v1551, %v1560
    %v1562 = vadd.f32 %v1552, %v1560
    %v1563 = vadd.f32 %v1553, %v1560
    %v1564 = vadd.f32 %v1554, %v1560
    %1565 = vrot.lane.b32.xlu0 %v1561, 17
    %v1566 = vpop.permute.xlu0 %1565
    %1567 = vrot.lane.b32.xlu0 %v1562, 17
    %v1568 = vpop.permute.xlu0 %1567
    %1569 = vrot.lane.b32.xlu0 %v1563, 17
    %v1570 = vpop.permute.xlu0 %1569
    %1571 = vrot.lane.b32.xlu0 %v1564, 17
    %v1572 = vpop.permute.xlu0 %1571
    %v1573 = vsel %vm234, %v1570, %v1572
    %v1574 = vsel %vm234, %v1568, %v1570
    %v1575 = vsel %vm234, %v1566, %v1568
    %v1576 = vsel %vm234, %v1572, %v1566
    %v1577 = vsel %vm279, %v1576, 0.0
    %v1578 = vsel %vm280, %v1575, 0.0
    %v1579 = vsel %vm281, %v1574, 0.0
    %v1580 = vsel %vm282, %v1573, 0.0
    %v1581 = vpack.c.bf16 %v1577, %v1577
    %v1582 = vpack.c.bf16 %v1578, %v1578
    %v1583 = vpack.c.bf16 %v1579, %v1579
    %v1584 = vpack.c.bf16 %v1580, %v1580
    %v1585 = vld [vmem:[#allocation5] sm:$0x3]
    %1586 = vrot.lane.b32.xlu0 %v1561, 16
    %v1587 = vpop.permute.xlu0 %1586
    %1588 = vrot.lane.b32.xlu0 %v1562, 16
    %v1589 = vpop.permute.xlu0 %1588
    %1590 = vrot.lane.b32.xlu0 %v1563, 16
    %v1591 = vpop.permute.xlu0 %1590
    %1592 = vrot.lane.b32.xlu0 %v1564, 16
    %v1593 = vpop.permute.xlu0 %1592
    %v1594 = vsel %vm300, %v1591, %v1593
    %v1595 = vsel %vm300, %v1589, %v1591
    %v1596 = vsel %vm300, %v1587, %v1589
    %v1597 = vsel %vm300, %v1593, %v1587
    %v1598 = vsel %vm329, %v1597, 0.0
    %v1599 = vsel %vm330, %v1596, 0.0
    %v1600 = vsel %vm331, %v1595, 0.0
    %v1601 = vsel %vm332, %v1594, 0.0
    %v1602 = vpack.c.bf16 %v1598, %v1598
    %v1603 = vpack.c.bf16 %v1599, %v1599
    %v1604 = vpack.c.bf16 %v1600, %v1600
    %v1605 = vpack.c.bf16 %v1601, %v1601
    %s1606 = scalar_lea.vmem [#allocation5], 2
    %v1607 = vld [vmem:[%s1606] sm:$0x3]
    %vm1608 = vcmask 31744
    %v1610 = vsel %vm1608, %v1607, 0
    %v1613 = vsel %vm348, %v1602, 0
    %v1616 = vsel %vm348, %v1603, 0
    %v1619 = vsel %vm348, %v1604, 0
    %v1622 = vsel %vm348, %v1605, 0
    %1624 = vmatprep.subr.bf16.mxu0 %v1616
    %1625 = vmatpush1.bf16.msra.mxu0 %v1613
    %1626 = vmatprep.subr.bf16.mxu0 0
    %1627 = vmatpush1.bf16.msra.mxu0 0
    %1628 = vmatprep.subr.bf16.mxu0 0
    %1629 = vmatpush1.bf16.msra.mxu0 0
    %1630 = vmatprep.subr.bf16.mxu0 0
    %1631 = vmatpush1.bf16.msra.mxu0 0
    %1632 = vmatprep.subr.bf16.mxu0 0
    %1633 = vmatpush1.bf16.msra.mxu0 0
    %1634 = vmatprep.subr.bf16.mxu0 0
    %1635 = vmatpush1.bf16.msra.mxu0 0
    %1636 = vmatprep.subr.bf16.mxu0 0
    %1637 = vmatpush1.bf16.msra.mxu0 0
    %1638 = vmatprep.subr.bf16.mxu0 0
    %1639 = vmatpush1.bf16.msra.mxu0 0
    %1640 = vmatprep.subr.bf16.mxu0 0
    %1641 = vmatpush1.bf16.msra.mxu0 0
    %1642 = vmatprep.subr.bf16.mxu0 0
    %1643 = vmatpush1.bf16.msra.mxu0 0
    %1644 = vmatprep.subr.bf16.mxu0 0
    %1645 = vmatpush1.bf16.msra.mxu0 0
    %1646 = vmatprep.subr.bf16.mxu0 0
    %1647 = vmatpush1.bf16.msra.mxu0 0
    %1648 = vmatprep.subr.bf16.mxu0 0
    %1649 = vmatpush1.bf16.msra.mxu0 0
    %1650 = vmatprep.subr.bf16.mxu0 0
    %1651 = vmatpush1.bf16.msra.mxu0 0
    %1652 = vmatprep.subr.bf16.mxu0 0
    %1653 = vmatpush1.bf16.msra.mxu0 0
    %1654 = vmatprep.subr.bf16.mxu0 0
    %1655 = vmatpush1.bf16.msra.mxu0 0
    %1656 = vmatprep.mubr.bf16.mxu0 0
    %1657 = vmatmul.mubr.bf16.gmra.mrb[0].mxu0 %v1610
    %v1658 = vpop.f32.mrb[0].mxu0
    %v1659 = vadd.f32 0.0, %v1658
    %v1660 = vpop.f32.mrb[0].mxu0
    %v1661 = vadd.f32 0.0, %v1660
    %v1662 = vpop.f32.mrb[0].mxu0
    %v1663 = vpop.f32.mrb[0].mxu0
    %1664 = vdwg.mxu0
    %1665 = vmatprep.subr.bf16.mxu0 %v1622
    %1666 = vmatpush1.bf16.msra.mxu0 %v1619
    %1667 = vmatprep.subr.bf16.mxu0 0
    %1668 = vmatpush1.bf16.msra.mxu0 0
    %1669 = vmatprep.subr.bf16.mxu0 0
    %1670 = vmatpush1.bf16.msra.mxu0 0
    %1671 = vmatprep.subr.bf16.mxu0 0
    %1672 = vmatpush1.bf16.msra.mxu0 0
    %1673 = vmatprep.subr.bf16.mxu0 0
    %1674 = vmatpush1.bf16.msra.mxu0 0
    %1675 = vmatprep.subr.bf16.mxu0 0
    %1676 = vmatpush1.bf16.msra.mxu0 0
    %1677 = vmatprep.subr.bf16.mxu0 0
    %1678 = vmatpush1.bf16.msra.mxu0 0
    %1679 = vmatprep.subr.bf16.mxu0 0
    %1680 = vmatpush1.bf16.msra.mxu0 0
    %1681 = vmatprep.subr.bf16.mxu0 0
    %1682 = vmatpush1.bf16.msra.mxu0 0
    %1683 = vmatprep.subr.bf16.mxu0 0
    %1684 = vmatpush1.bf16.msra.mxu0 0
    %1685 = vmatprep.subr.bf16.mxu0 0
    %1686 = vmatpush1.bf16.msra.mxu0 0
    %1687 = vmatprep.subr.bf16.mxu0 0
    %1688 = vmatpush1.bf16.msra.mxu0 0
    %1689 = vmatprep.subr.bf16.mxu0 0
    %1690 = vmatpush1.bf16.msra.mxu0 0
    %1691 = vmatprep.subr.bf16.mxu0 0
    %1692 = vmatpush1.bf16.msra.mxu0 0
    %1693 = vmatprep.subr.bf16.mxu0 0
    %1694 = vmatpush1.bf16.msra.mxu0 0
    %1695 = vmatprep.subr.bf16.mxu0 0
    %1696 = vmatpush1.bf16.msra.mxu0 0
    %1697 = vmatprep.mubr.bf16.mxu0 0
    %1698 = vmatmul.mubr.bf16.gmra.mrb[0].mxu0 %v1610
    %v1699 = vpop.f32.mrb[0].mxu0
    %v1700 = vadd.f32 0.0, %v1699
    %v1701 = vpop.f32.mrb[0].mxu0
    %v1702 = vadd.f32 0.0, %v1701
    %v1703 = vpop.f32.mrb[0].mxu0
    %v1704 = vpop.f32.mrb[0].mxu0
    %1705 = vdwg.mxu0
    %v1707 = vsel %vm1608, %v1585, 0
    %v1710 = vsel %vm348, %v1581, 0
    %v1713 = vsel %vm348, %v1582, 0
    %v1716 = vsel %vm348, %v1583, 0
    %v1719 = vsel %vm348, %v1584, 0
    %1721 = vmatprep.subr.bf16.mxu0 %v1713
    %1722 = vmatpush1.bf16.msra.mxu0 %v1710
    %1723 = vmatprep.subr.bf16.mxu0 0
    %1724 = vmatpush1.bf16.msra.mxu0 0
    %1725 = vmatprep.subr.bf16.mxu0 0
    %1726 = vmatpush1.bf16.msra.mxu0 0
    %1727 = vmatprep.subr.bf16.mxu0 0
    %1728 = vmatpush1.bf16.msra.mxu0 0
    %1729 = vmatprep.subr.bf16.mxu0 0
    %1730 = vmatpush1.bf16.msra.mxu0 0
    %1731 = vmatprep.subr.bf16.mxu0 0
    %1732 = vmatpush1.bf16.msra.mxu0 0
    %1733 = vmatprep.subr.bf16.mxu0 0
    %1734 = vmatpush1.bf16.msra.mxu0 0
    %1735 = vmatprep.subr.bf16.mxu0 0
    %1736 = vmatpush1.bf16.msra.mxu0 0
    %1737 = vmatprep.subr.bf16.mxu0 0
    %1738 = vmatpush1.bf16.msra.mxu0 0
    %1739 = vmatprep.subr.bf16.mxu0 0
    %1740 = vmatpush1.bf16.msra.mxu0 0
    %1741 = vmatprep.subr.bf16.mxu0 0
    %1742 = vmatpush1.bf16.msra.mxu0 0
    %1743 = vmatprep.subr.bf16.mxu0 0
    %1744 = vmatpush1.bf16.msra.mxu0 0
    %1745 = vmatprep.subr.bf16.mxu0 0
    %1746 = vmatpush1.bf16.msra.mxu0 0
    %1747 = vmatprep.subr.bf16.mxu0 0
    %1748 = vmatpush1.bf16.msra.mxu0 0
    %1749 = vmatprep.subr.bf16.mxu0 0
    %1750 = vmatpush1.bf16.msra.mxu0 0
    %1751 = vmatprep.subr.bf16.mxu0 0
    %1752 = vmatpush1.bf16.msra.mxu0 0
    %1753 = vmatprep.mubr.bf16.mxu0 0
    %1754 = vmatmul.mubr.bf16.gmra.mrb[0].mxu0 %v1707
    %v1755 = vpop.f32.mrb[0].mxu0
    %v1756 = vadd.f32 %v1659, %v1755
    %v1757 = vpop.f32.mrb[0].mxu0
    %v1758 = vadd.f32 %v1661, %v1757
    %v1759 = vpop.f32.mrb[0].mxu0
    %v1760 = vpop.f32.mrb[0].mxu0
    %1761 = vdwg.mxu0
    %1762 = vmatprep.subr.bf16.mxu0 %v1719
    %1763 = vmatpush1.bf16.msra.mxu0 %v1716
    %1764 = vmatprep.subr.bf16.mxu0 0
    %1765 = vmatpush1.bf16.msra.mxu0 0
    %1766 = vmatprep.subr.bf16.mxu0 0
    %1767 = vmatpush1.bf16.msra.mxu0 0
    %1768 = vmatprep.subr.bf16.mxu0 0
    %1769 = vmatpush1.bf16.msra.mxu0 0
    %1770 = vmatprep.subr.bf16.mxu0 0
    %1771 = vmatpush1.bf16.msra.mxu0 0
    %1772 = vmatprep.subr.bf16.mxu0 0
    %1773 = vmatpush1.bf16.msra.mxu0 0
    %1774 = vmatprep.subr.bf16.mxu0 0
    %1775 = vmatpush1.bf16.msra.mxu0 0
    %1776 = vmatprep.subr.bf16.mxu0 0
    %1777 = vmatpush1.bf16.msra.mxu0 0
    %1778 = vmatprep.subr.bf16.mxu0 0
    %1779 = vmatpush1.bf16.msra.mxu0 0
    %1780 = vmatprep.subr.bf16.mxu0 0
    %1781 = vmatpush1.bf16.msra.mxu0 0
    %1782 = vmatprep.subr.bf16.mxu0 0
    %1783 = vmatpush1.bf16.msra.mxu0 0
    %1784 = vmatprep.subr.bf16.mxu0 0
    %1785 = vmatpush1.bf16.msra.mxu0 0
    %1786 = vmatprep.subr.bf16.mxu0 0
    %1787 = vmatpush1.bf16.msra.mxu0 0
    %1788 = vmatprep.subr.bf16.mxu0 0
    %1789 = vmatpush1.bf16.msra.mxu0 0
    %1790 = vmatprep.subr.bf16.mxu0 0
    %1791 = vmatpush1.bf16.msra.mxu0 0
    %1792 = vmatprep.subr.bf16.mxu0 0
    %1793 = vmatpush1.bf16.msra.mxu0 0
    %1794 = vmatprep.mubr.bf16.mxu0 0
    %1795 = vmatmul.mubr.bf16.gmra.mrb[0].mxu0 %v1707
    %v1796 = vpop.f32.mrb[0].mxu0
    %v1797 = vadd.f32 %v1700, %v1796
    %v1798 = vpop.f32.mrb[0].mxu0
    %v1799 = vadd.f32 %v1702, %v1798
    %v1800 = vpop.f32.mrb[0].mxu0
    %v1801 = vpop.f32.mrb[0].mxu0
    %1802 = vdwg.mxu0
    %1803 = vrot.lane.b32.xlu0 %v1561, 15
    %v1804 = vpop.permute.xlu0 %1803
    %1805 = vrot.lane.b32.xlu0 %v1562, 15
    %v1806 = vpop.permute.xlu0 %1805
    %1807 = vrot.lane.b32.xlu0 %v1563, 15
    %v1808 = vpop.permute.xlu0 %1807
    %1809 = vrot.lane.b32.xlu0 %v1564, 15
    %v1810 = vpop.permute.xlu0 %1809
    %v1811 = vsel %vm550, %v1808, %v1810
    %v1812 = vsel %vm550, %v1806, %v1808
    %v1813 = vsel %vm550, %v1804, %v1806
    %v1814 = vsel %vm550, %v1810, %v1804
    %v1815 = vsel %vm583, %v1814, 0.0
    %v1816 = vsel %vm584, %v1813, 0.0
    %v1817 = vsel %vm585, %v1812, 0.0
    %v1818 = vsel %vm586, %v1811, 0.0
    %v1819 = vpack.c.bf16 %v1815, %v1815
    %v1820 = vpack.c.bf16 %v1816, %v1816
    %v1821 = vpack.c.bf16 %v1817, %v1817
    %v1822 = vpack.c.bf16 %v1818, %v1818
    %s1823 = scalar_lea.vmem [#allocation5], 4
    %v1824 = vld [vmem:[%s1823] sm:$0x3]
    %v1826 = vsel %vm1608, %v1824, 0
    %v1829 = vsel %vm348, %v1819, 0
    %v1832 = vsel %vm348, %v1820, 0
    %v1835 = vsel %vm348, %v1821, 0
    %v1838 = vsel %vm348, %v1822, 0
    %1840 = vmatprep.subr.bf16.mxu0 %v1832
    %1841 = vmatpush1.bf16.msra.mxu0 %v1829
    %1842 = vmatprep.subr.bf16.mxu0 0
    %1843 = vmatpush1.bf16.msra.mxu0 0
    %1844 = vmatprep.subr.bf16.mxu0 0
    %1845 = vmatpush1.bf16.msra.mxu0 0
    %1846 = vmatprep.subr.bf16.mxu0 0
    %1847 = vmatpush1.bf16.msra.mxu0 0
    %1848 = vmatprep.subr.bf16.mxu0 0
    %1849 = vmatpush1.bf16.msra.mxu0 0
    %1850 = vmatprep.subr.bf16.mxu0 0
    %1851 = vmatpush1.bf16.msra.mxu0 0
    %1852 = vmatprep.subr.bf16.mxu0 0
    %1853 = vmatpush1.bf16.msra.mxu0 0
    %1854 = vmatprep.subr.bf16.mxu0 0
    %1855 = vmatpush1.bf16.msra.mxu0 0
    %1856 = vmatprep.subr.bf16.mxu0 0
    %1857 = vmatpush1.bf16.msra.mxu0 0
    %1858 = vmatprep.subr.bf16.mxu0 0
    %1859 = vmatpush1.bf16.msra.mxu0 0
    %1860 = vmatprep.subr.bf16.mxu0 0
    %1861 = vmatpush1.bf16.msra.mxu0 0
    %1862 = vmatprep.subr.bf16.mxu0 0
    %1863 = vmatpush1.bf16.msra.mxu0 0
    %1864 = vmatprep.subr.bf16.mxu0 0
    %1865 = vmatpush1.bf16.msra.mxu0 0
    %1866 = vmatprep.subr.bf16.mxu0 0
    %1867 = vmatpush1.bf16.msra.mxu0 0
    %1868 = vmatprep.subr.bf16.mxu0 0
    %1869 = vmatpush1.bf16.msra.mxu0 0
    %1870 = vmatprep.subr.bf16.mxu0 0
    %1871 = vmatpush1.bf16.msra.mxu0 0
    %1872 = vmatprep.mubr.bf16.mxu0 0
    %1873 = vmatmul.mubr.bf16.gmra.mrb[0].mxu0 %v1826
    %v1874 = vpop.f32.mrb[0].mxu0
    %v1875 = vadd.f32 0.0, %v1874
    %v1876 = vpop.f32.mrb[0].mxu0
    %v1877 = vadd.f32 0.0, %v1876
    %v1878 = vpop.f32.mrb[0].mxu0
    %v1879 = vpop.f32.mrb[0].mxu0
    %1880 = vdwg.mxu0
    %1881 = vmatprep.subr.bf16.mxu0 %v1838
    %1882 = vmatpush1.bf16.msra.mxu0 %v1835
    %1883 = vmatprep.subr.bf16.mxu0 0
    %1884 = vmatpush1.bf16.msra.mxu0 0
    %1885 = vmatprep.subr.bf16.mxu0 0
    %1886 = vmatpush1.bf16.msra.mxu0 0
    %1887 = vmatprep.subr.bf16.mxu0 0
    %1888 = vmatpush1.bf16.msra.mxu0 0
    %1889 = vmatprep.subr.bf16.mxu0 0
    %1890 = vmatpush1.bf16.msra.mxu0 0
    %1891 = vmatprep.subr.bf16.mxu0 0
    %1892 = vmatpush1.bf16.msra.mxu0 0
    %1893 = vmatprep.subr.bf16.mxu0 0
    %1894 = vmatpush1.bf16.msra.mxu0 0
    %1895 = vmatprep.subr.bf16.mxu0 0
    %1896 = vmatpush1.bf16.msra.mxu0 0
    %1897 = vmatprep.subr.bf16.mxu0 0
    %1898 = vmatpush1.bf16.msra.mxu0 0
    %1899 = vmatprep.subr.bf16.mxu0 0
    %1900 = vmatpush1.bf16.msra.mxu0 0
    %1901 = vmatprep.subr.bf16.mxu0 0
    %1902 = vmatpush1.bf16.msra.mxu0 0
    %1903 = vmatprep.subr.bf16.mxu0 0
    %1904 = vmatpush1.bf16.msra.mxu0 0
    %1905 = vmatprep.subr.bf16.mxu0 0
    %1906 = vmatpush1.bf16.msra.mxu0 0
    %1907 = vmatprep.subr.bf16.mxu0 0
    %1908 = vmatpush1.bf16.msra.mxu0 0
    %1909 = vmatprep.subr.bf16.mxu0 0
    %1910 = vmatpush1.bf16.msra.mxu0 0
    %1911 = vmatprep.subr.bf16.mxu0 0
    %1912 = vmatpush1.bf16.msra.mxu0 0
    %1913 = vmatprep.mubr.bf16.mxu0 0
    %1914 = vmatmul.mubr.bf16.gmra.mrb[0].mxu0 %v1826
    %v1915 = vpop.f32.mrb[0].mxu0
    %v1916 = vadd.f32 0.0, %v1915
    %v1917 = vpop.f32.mrb[0].mxu0
    %v1918 = vadd.f32 0.0, %v1917
    %v1919 = vpop.f32.mrb[0].mxu0
    %v1920 = vpop.f32.mrb[0].mxu0
    %1921 = vdwg.mxu0
    %v1922 = vadd.f32 %v1756, %v1875
    %v1923 = vadd.f32 %v1758, %v1877
    %v1924 = vadd.f32 %v1797, %v1916
    %v1925 = vadd.f32 %v1799, %v1918
    %1926 = vrot.lane.b32.xlu0 %v1561, 1
    %v1927 = vpop.permute.xlu0 %1926
    %1928 = vrot.lane.b32.xlu0 %v1562, 1
    %v1929 = vpop.permute.xlu0 %1928
    %1930 = vrot.lane.b32.xlu0 %v1563, 1
    %v1931 = vpop.permute.xlu0 %1930
    %1932 = vrot.lane.b32.xlu0 %v1564, 1
    %v1933 = vpop.permute.xlu0 %1932
    %v1934 = vsel %vm706, %v1931, %v1933
    %v1935 = vsel %vm706, %v1929, %v1931
    %v1936 = vsel %vm706, %v1927, %v1929
    %v1937 = vsel %vm706, %v1933, %v1927
    %v1938 = vsel %vm731, %v1937, 0.0
    %v1939 = vsel %vm732, %v1936, 0.0
    %v1940 = vsel %vm733, %v1935, 0.0
    %v1941 = vsel %vm734, %v1934, 0.0
    %v1942 = vpack.c.bf16 %v1938, %v1938
    %v1943 = vpack.c.bf16 %v1939, %v1939
    %v1944 = vpack.c.bf16 %v1940, %v1940
    %v1945 = vpack.c.bf16 %v1941, %v1941
    %s1946 = scalar_lea.vmem [#allocation5], 6
    %v1947 = vld [vmem:[%s1946] sm:$0x3]
    %v1949 = vsel %vm1608, %v1947, 0
    %v1952 = vsel %vm348, %v1942, 0
    %v1955 = vsel %vm348, %v1943, 0
    %v1958 = vsel %vm348, %v1944, 0
    %v1961 = vsel %vm348, %v1945, 0
    %1963 = vmatprep.subr.bf16.mxu0 %v1955
    %1964 = vmatpush1.bf16.msra.mxu0 %v1952
    %1965 = vmatprep.subr.bf16.mxu0 0
    %1966 = vmatpush1.bf16.msra.mxu0 0
    %1967 = vmatprep.subr.bf16.mxu0 0
    %1968 = vmatpush1.bf16.msra.mxu0 0
    %1969 = vmatprep.subr.bf16.mxu0 0
    %1970 = vmatpush1.bf16.msra.mxu0 0
    %1971 = vmatprep.subr.bf16.mxu0 0
    %1972 = vmatpush1.bf16.msra.mxu0 0
    %1973 = vmatprep.subr.bf16.mxu0 0
    %1974 = vmatpush1.bf16.msra.mxu0 0
    %1975 = vmatprep.subr.bf16.mxu0 0
    %1976 = vmatpush1.bf16.msra.mxu0 0
    %1977 = vmatprep.subr.bf16.mxu0 0
    %1978 = vmatpush1.bf16.msra.mxu0 0
    %1979 = vmatprep.subr.bf16.mxu0 0
    %1980 = vmatpush1.bf16.msra.mxu0 0
    %1981 = vmatprep.subr.bf16.mxu0 0
    %1982 = vmatpush1.bf16.msra.mxu0 0
    %1983 = vmatprep.subr.bf16.mxu0 0
    %1984 = vmatpush1.bf16.msra.mxu0 0
    %1985 = vmatprep.subr.bf16.mxu0 0
    %1986 = vmatpush1.bf16.msra.mxu0 0
    %1987 = vmatprep.subr.bf16.mxu0 0
    %1988 = vmatpush1.bf16.msra.mxu0 0
    %1989 = vmatprep.subr.bf16.mxu0 0
    %1990 = vmatpush1.bf16.msra.mxu0 0
    %1991 = vmatprep.subr.bf16.mxu0 0
    %1992 = vmatpush1.bf16.msra.mxu0 0
    %1993 = vmatprep.subr.bf16.mxu0 0
    %1994 = vmatpush1.bf16.msra.mxu0 0
    %1995 = vmatprep.mubr.bf16.mxu0 0
    %1996 = vmatmul.mubr.bf16.gmra.mrb[0].mxu0 %v1949
    %v1997 = vpop.f32.mrb[0].mxu0
    %v1998 = vadd.f32 0.0, %v1997
    %v1999 = vpop.f32.mrb[0].mxu0
    %v2000 = vadd.f32 0.0, %v1999
    %v2001 = vpop.f32.mrb[0].mxu0
    %v2002 = vpop.f32.mrb[0].mxu0
    %2003 = vdwg.mxu0
    %2004 = vmatprep.subr.bf16.mxu0 %v1961
    %2005 = vmatpush1.bf16.msra.mxu0 %v1958
    %2006 = vmatprep.subr.bf16.mxu0 0
    %2007 = vmatpush1.bf16.msra.mxu0 0
    %2008 = vmatprep.subr.bf16.mxu0 0
    %2009 = vmatpush1.bf16.msra.mxu0 0
    %2010 = vmatprep.subr.bf16.mxu0 0
    %2011 = vmatpush1.bf16.msra.mxu0 0
    %2012 = vmatprep.subr.bf16.mxu0 0
    %2013 = vmatpush1.bf16.msra.mxu0 0
    %2014 = vmatprep.subr.bf16.mxu0 0
    %2015 = vmatpush1.bf16.msra.mxu0 0
    %2016 = vmatprep.subr.bf16.mxu0 0
    %2017 = vmatpush1.bf16.msra.mxu0 0
    %2018 = vmatprep.subr.bf16.mxu0 0
    %2019 = vmatpush1.bf16.msra.mxu0 0
    %2020 = vmatprep.subr.bf16.mxu0 0
    %2021 = vmatpush1.bf16.msra.mxu0 0
    %2022 = vmatprep.subr.bf16.mxu0 0
    %2023 = vmatpush1.bf16.msra.mxu0 0
    %2024 = vmatprep.subr.bf16.mxu0 0
    %2025 = vmatpush1.bf16.msra.mxu0 0
    %2026 = vmatprep.subr.bf16.mxu0 0
    %2027 = vmatpush1.bf16.msra.mxu0 0
    %2028 = vmatprep.subr.bf16.mxu0 0
    %2029 = vmatpush1.bf16.msra.mxu0 0
    %2030 = vmatprep.subr.bf16.mxu0 0
    %2031 = vmatpush1.bf16.msra.mxu0 0
    %2032 = vmatprep.subr.bf16.mxu0 0
    %2033 = vmatpush1.bf16.msra.mxu0 0
    %2034 = vmatprep.subr.bf16.mxu0 0
    %2035 = vmatpush1.bf16.msra.mxu0 0
    %2036 = vmatprep.mubr.bf16.mxu0 0
    %2037 = vmatmul.mubr.bf16.gmra.mrb[0].mxu0 %v1949
    %v2038 = vpop.f32.mrb[0].mxu0
    %v2039 = vadd.f32 0.0, %v2038
    %v2040 = vpop.f32.mrb[0].mxu0
    %v2041 = vadd.f32 0.0, %v2040
    %v2042 = vpop.f32.mrb[0].mxu0
    %v2043 = vpop.f32.mrb[0].mxu0
    %2044 = vdwg.mxu0
    %v2045 = vadd.f32 %v1922, %v1998
    %v2046 = vadd.f32 %v1923, %v2000
    %v2047 = vadd.f32 %v1924, %v2039
    %v2048 = vadd.f32 %v1925, %v2041
    %v2049 = vsel %vm858, %v1561, 0.0
    %v2050 = vsel %vm859, %v1562, 0.0
    %v2051 = vsel %vm860, %v1563, 0.0
    %v2052 = vsel %vm861, %v1564, 0.0
    %v2053 = vpack.c.bf16 %v2049, %v2049
    %v2054 = vpack.c.bf16 %v2050, %v2050
    %v2055 = vpack.c.bf16 %v2051, %v2051
    %v2056 = vpack.c.bf16 %v2052, %v2052
    %s2057 = scalar_lea.vmem [#allocation5], 8
    %v2058 = vld [vmem:[%s2057] sm:$0x3]
    %v2060 = vsel %vm1608, %v2058, 0
    %v2063 = vsel %vm348, %v2053, 0
    %v2066 = vsel %vm348, %v2054, 0
    %v2069 = vsel %vm348, %v2055, 0
    %v2072 = vsel %vm348, %v2056, 0
    %2074 = vmatprep.subr.bf16.mxu0 %v2066
    %2075 = vmatpush1.bf16.msra.mxu0 %v2063
    %2076 = vmatprep.subr.bf16.mxu0 0
    %2077 = vmatpush1.bf16.msra.mxu0 0
    %2078 = vmatprep.subr.bf16.mxu0 0
    %2079 = vmatpush1.bf16.msra.mxu0 0
    %2080 = vmatprep.subr.bf16.mxu0 0
    %2081 = vmatpush1.bf16.msra.mxu0 0
    %2082 = vmatprep.subr.bf16.mxu0 0
    %2083 = vmatpush1.bf16.msra.mxu0 0
    %2084 = vmatprep.subr.bf16.mxu0 0
    %2085 = vmatpush1.bf16.msra.mxu0 0
    %2086 = vmatprep.subr.bf16.mxu0 0
    %2087 = vmatpush1.bf16.msra.mxu0 0
    %2088 = vmatprep.subr.bf16.mxu0 0
    %2089 = vmatpush1.bf16.msra.mxu0 0
    %2090 = vmatprep.subr.bf16.mxu0 0
    %2091 = vmatpush1.bf16.msra.mxu0 0
    %2092 = vmatprep.subr.bf16.mxu0 0
    %2093 = vmatpush1.bf16.msra.mxu0 0
    %2094 = vmatprep.subr.bf16.mxu0 0
    %2095 = vmatpush1.bf16.msra.mxu0 0
    %2096 = vmatprep.subr.bf16.mxu0 0
    %2097 = vmatpush1.bf16.msra.mxu0 0
    %2098 = vmatprep.subr.bf16.mxu0 0
    %2099 = vmatpush1.bf16.msra.mxu0 0
    %2100 = vmatprep.subr.bf16.mxu0 0
    %2101 = vmatpush1.bf16.msra.mxu0 0
    %2102 = vmatprep.subr.bf16.mxu0 0
    %2103 = vmatpush1.bf16.msra.mxu0 0
    %2104 = vmatprep.subr.bf16.mxu0 0
    %2105 = vmatpush1.bf16.msra.mxu0 0
    %2106 = vmatprep.mubr.bf16.mxu0 0
    %2107 = vmatmul.mubr.bf16.gmra.mrb[0].mxu0 %v2060
    %v2108 = vpop.f32.mrb[0].mxu0
    %v2109 = vadd.f32 0.0, %v2108
    %v2110 = vpop.f32.mrb[0].mxu0
    %v2111 = vadd.f32 0.0, %v2110
    %v2112 = vpop.f32.mrb[0].mxu0
    %v2113 = vpop.f32.mrb[0].mxu0
    %2114 = vdwg.mxu0
    %2115 = vmatprep.subr.bf16.mxu0 %v2072
    %2116 = vmatpush1.bf16.msra.mxu0 %v2069
    %2117 = vmatprep.subr.bf16.mxu0 0
    %2118 = vmatpush1.bf16.msra.mxu0 0
    %2119 = vmatprep.subr.bf16.mxu0 0
    %2120 = vmatpush1.bf16.msra.mxu0 0
    %2121 = vmatprep.subr.bf16.mxu0 0
    %2122 = vmatpush1.bf16.msra.mxu0 0
    %2123 = vmatprep.subr.bf16.mxu0 0
    %2124 = vmatpush1.bf16.msra.mxu0 0
    %2125 = vmatprep.subr.bf16.mxu0 0
    %2126 = vmatpush1.bf16.msra.mxu0 0
    %2127 = vmatprep.subr.bf16.mxu0 0
    %2128 = vmatpush1.bf16.msra.mxu0 0
    %2129 = vmatprep.subr.bf16.mxu0 0
    %2130 = vmatpush1.bf16.msra.mxu0 0
    %2131 = vmatprep.subr.bf16.mxu0 0
    %2132 = vmatpush1.bf16.msra.mxu0 0
    %2133 = vmatprep.subr.bf16.mxu0 0
    %2134 = vmatpush1.bf16.msra.mxu0 0
    %2135 = vmatprep.subr.bf16.mxu0 0
    %2136 = vmatpush1.bf16.msra.mxu0 0
    %2137 = vmatprep.subr.bf16.mxu0 0
    %2138 = vmatpush1.bf16.msra.mxu0 0
    %2139 = vmatprep.subr.bf16.mxu0 0
    %2140 = vmatpush1.bf16.msra.mxu0 0
    %2141 = vmatprep.subr.bf16.mxu0 0
    %2142 = vmatpush1.bf16.msra.mxu0 0
    %2143 = vmatprep.subr.bf16.mxu0 0
    %2144 = vmatpush1.bf16.msra.mxu0 0
    %2145 = vmatprep.subr.bf16.mxu0 0
    %2146 = vmatpush1.bf16.msra.mxu0 0
    %2147 = vmatprep.mubr.bf16.mxu0 0
    %2148 = vmatmul.mubr.bf16.gmra.mrb[0].mxu0 %v2060
    %v2149 = vpop.f32.mrb[0].mxu0
    %v2150 = vadd.f32 0.0, %v2149
    %v2151 = vpop.f32.mrb[0].mxu0
    %v2152 = vadd.f32 0.0, %v2151
    %v2153 = vpop.f32.mrb[0].mxu0
    %v2154 = vpop.f32.mrb[0].mxu0
    %2155 = vdwg.mxu0
    %v2156 = vadd.f32 %v2045, %v2109
    %v2157 = vadd.f32 %v2046, %v2111
    %v2158 = vadd.f32 %v2047, %v2150
    %v2159 = vadd.f32 %v2048, %v2152
    %2160 = vrot.lane.b32.xlu0 %v1561, 127
    %v2161 = vpop.permute.xlu0 %2160
    %2162 = vrot.lane.b32.xlu0 %v1562, 127
    %v2163 = vpop.permute.xlu0 %2162
    %2164 = vrot.lane.b32.xlu0 %v1563, 127
    %v2165 = vpop.permute.xlu0 %2164
    %2166 = vrot.lane.b32.xlu0 %v1564, 127
    %v2167 = vpop.permute.xlu0 %2166
    %v2168 = vsel %vm981, %v2165, %v2167
    %v2169 = vsel %vm981, %v2163, %v2165
    %v2170 = vsel %vm981, %v2161, %v2163
    %v2171 = vsel %vm981, %v2167, %v2161
    %v2172 = vsel %vm998, %v2170, 0.0
    %v2173 = vsel %vm999, %v2169, 0.0
    %v2174 = vsel %vm1000, %v2168, 0.0
    %v2175 = vsel %vm1001, %v2171, 0.0
    %v2176 = vpack.c.bf16 %v2172, %v2172
    %v2177 = vpack.c.bf16 %v2173, %v2173
    %v2178 = vpack.c.bf16 %v2174, %v2174
    %v2179 = vpack.c.bf16 %v2175, %v2175
    %s2180 = scalar_lea.vmem [#allocation5], 10
    %v2181 = vld [vmem:[%s2180] sm:$0x3]
    %v2183 = vsel %vm1608, %v2181, 0
    %v2186 = vsel %vm348, %v2176, 0
    %v2189 = vsel %vm348, %v2177, 0
    %v2192 = vsel %vm348, %v2178, 0
    %v2195 = vsel %vm348, %v2179, 0
    %2197 = vmatprep.subr.bf16.mxu0 %v2189
    %2198 = vmatpush1.bf16.msra.mxu0 %v2186
    %2199 = vmatprep.subr.bf16.mxu0 0
    %2200 = vmatpush1.bf16.msra.mxu0 0
    %2201 = vmatprep.subr.bf16.mxu0 0
    %2202 = vmatpush1.bf16.msra.mxu0 0
    %2203 = vmatprep.subr.bf16.mxu0 0
    %2204 = vmatpush1.bf16.msra.mxu0 0
    %2205 = vmatprep.subr.bf16.mxu0 0
    %2206 = vmatpush1.bf16.msra.mxu0 0
    %2207 = vmatprep.subr.bf16.mxu0 0
    %2208 = vmatpush1.bf16.msra.mxu0 0
    %2209 = vmatprep.subr.bf16.mxu0 0
    %2210 = vmatpush1.bf16.msra.mxu0 0
    %2211 = vmatprep.subr.bf16.mxu0 0
    %2212 = vmatpush1.bf16.msra.mxu0 0
    %2213 = vmatprep.subr.bf16.mxu0 0
    %2214 = vmatpush1.bf16.msra.mxu0 0
    %2215 = vmatprep.subr.bf16.mxu0 0
    %2216 = vmatpush1.bf16.msra.mxu0 0
    %2217 = vmatprep.subr.bf16.mxu0 0
    %2218 = vmatpush1.bf16.msra.mxu0 0
    %2219 = vmatprep.subr.bf16.mxu0 0
    %2220 = vmatpush1.bf16.msra.mxu0 0
    %2221 = vmatprep.subr.bf16.mxu0 0
    %2222 = vmatpush1.bf16.msra.mxu0 0
    %2223 = vmatprep.subr.bf16.mxu0 0
    %2224 = vmatpush1.bf16.msra.mxu0 0
    %2225 = vmatprep.subr.bf16.mxu0 0
    %2226 = vmatpush1.bf16.msra.mxu0 0
    %2227 = vmatprep.subr.bf16.mxu0 0
    %2228 = vmatpush1.bf16.msra.mxu0 0
    %2229 = vmatprep.mubr.bf16.mxu0 0
    %2230 = vmatmul.mubr.bf16.gmra.mrb[0].mxu0 %v2183
    %v2231 = vpop.f32.mrb[0].mxu0
    %v2232 = vadd.f32 0.0, %v2231
    %v2233 = vpop.f32.mrb[0].mxu0
    %v2234 = vadd.f32 0.0, %v2233
    %v2235 = vpop.f32.mrb[0].mxu0
    %v2236 = vpop.f32.mrb[0].mxu0
    %2237 = vdwg.mxu0
    %2238 = vmatprep.subr.bf16.mxu0 %v2195
    %2239 = vmatpush1.bf16.msra.mxu0 %v2192
    %2240 = vmatprep.subr.bf16.mxu0 0
    %2241 = vmatpush1.bf16.msra.mxu0 0
    %2242 = vmatprep.subr.bf16.mxu0 0
    %2243 = vmatpush1.bf16.msra.mxu0 0
    %2244 = vmatprep.subr.bf16.mxu0 0
    %2245 = vmatpush1.bf16.msra.mxu0 0
    %2246 = vmatprep.subr.bf16.mxu0 0
    %2247 = vmatpush1.bf16.msra.mxu0 0
    %2248 = vmatprep.subr.bf16.mxu0 0
    %2249 = vmatpush1.bf16.msra.mxu0 0
    %2250 = vmatprep.subr.bf16.mxu0 0
    %2251 = vmatpush1.bf16.msra.mxu0 0
    %2252 = vmatprep.subr.bf16.mxu0 0
    %2253 = vmatpush1.bf16.msra.mxu0 0
    %2254 = vmatprep.subr.bf16.mxu0 0
    %2255 = vmatpush1.bf16.msra.mxu0 0
    %2256 = vmatprep.subr.bf16.mxu0 0
    %2257 = vmatpush1.bf16.msra.mxu0 0
    %2258 = vmatprep.subr.bf16.mxu0 0
    %2259 = vmatpush1.bf16.msra.mxu0 0
    %2260 = vmatprep.subr.bf16.mxu0 0
    %2261 = vmatpush1.bf16.msra.mxu0 0
    %2262 = vmatprep.subr.bf16.mxu0 0
    %2263 = vmatpush1.bf16.msra.mxu0 0
    %2264 = vmatprep.subr.bf16.mxu0 0
    %2265 = vmatpush1.bf16.msra.mxu0 0
    %2266 = vmatprep.subr.bf16.mxu0 0
    %2267 = vmatpush1.bf16.msra.mxu0 0
    %2268 = vmatprep.subr.bf16.mxu0 0
    %2269 = vmatpush1.bf16.msra.mxu0 0
    %2270 = vmatprep.mubr.bf16.mxu0 0
    %2271 = vmatmul.mubr.bf16.gmra.mrb[0].mxu0 %v2183
    %v2272 = vpop.f32.mrb[0].mxu0
    %v2273 = vadd.f32 0.0, %v2272
    %v2274 = vpop.f32.mrb[0].mxu0
    %v2275 = vadd.f32 0.0, %v2274
    %v2276 = vpop.f32.mrb[0].mxu0
    %v2277 = vpop.f32.mrb[0].mxu0
    %2278 = vdwg.mxu0
    %v2279 = vadd.f32 %v2156, %v2232
    %v2280 = vadd.f32 %v2157, %v2234
    %v2281 = vadd.f32 %v2158, %v2273
    %v2282 = vadd.f32 %v2159, %v2275
    %2283 = vrot.lane.b32.xlu0 %v1561, 113
    %v2284 = vpop.permute.xlu0 %2283
    %2285 = vrot.lane.b32.xlu0 %v1562, 113
    %v2286 = vpop.permute.xlu0 %2285
    %2287 = vrot.lane.b32.xlu0 %v1563, 113
    %v2288 = vpop.permute.xlu0 %2287
    %2289 = vrot.lane.b32.xlu0 %v1564, 113
    %v2290 = vpop.permute.xlu0 %2289
    %v2291 = vsel %vm1121, %v2288, %v2290
    %v2292 = vsel %vm1121, %v2286, %v2288
    %v2293 = vsel %vm1121, %v2284, %v2286
    %v2294 = vsel %vm1121, %v2290, %v2284
    %v2295 = vsel %vm1150, %v2293, 0.0
    %v2296 = vsel %vm1151, %v2292, 0.0
    %v2297 = vsel %vm1152, %v2291, 0.0
    %v2298 = vsel %vm1153, %v2294, 0.0
    %v2299 = vpack.c.bf16 %v2295, %v2295
    %v2300 = vpack.c.bf16 %v2296, %v2296
    %v2301 = vpack.c.bf16 %v2297, %v2297
    %v2302 = vpack.c.bf16 %v2298, %v2298
    %s2303 = scalar_lea.vmem [#allocation5], 12
    %v2304 = vld [vmem:[%s2303] sm:$0x3]
    %v2306 = vsel %vm1608, %v2304, 0
    %v2309 = vsel %vm348, %v2299, 0
    %v2312 = vsel %vm348, %v2300, 0
    %v2315 = vsel %vm348, %v2301, 0
    %v2318 = vsel %vm348, %v2302, 0
    %2320 = vmatprep.subr.bf16.mxu0 %v2312
    %2321 = vmatpush1.bf16.msra.mxu0 %v2309
    %2322 = vmatprep.subr.bf16.mxu0 0
    %2323 = vmatpush1.bf16.msra.mxu0 0
    %2324 = vmatprep.subr.bf16.mxu0 0
    %2325 = vmatpush1.bf16.msra.mxu0 0
    %2326 = vmatprep.subr.bf16.mxu0 0
    %2327 = vmatpush1.bf16.msra.mxu0 0
    %2328 = vmatprep.subr.bf16.mxu0 0
    %2329 = vmatpush1.bf16.msra.mxu0 0
    %2330 = vmatprep.subr.bf16.mxu0 0
    %2331 = vmatpush1.bf16.msra.mxu0 0
    %2332 = vmatprep.subr.bf16.mxu0 0
    %2333 = vmatpush1.bf16.msra.mxu0 0
    %2334 = vmatprep.subr.bf16.mxu0 0
    %2335 = vmatpush1.bf16.msra.mxu0 0
    %2336 = vmatprep.subr.bf16.mxu0 0
    %2337 = vmatpush1.bf16.msra.mxu0 0
    %2338 = vmatprep.subr.bf16.mxu0 0
    %2339 = vmatpush1.bf16.msra.mxu0 0
    %2340 = vmatprep.subr.bf16.mxu0 0
    %2341 = vmatpush1.bf16.msra.mxu0 0
    %2342 = vmatprep.subr.bf16.mxu0 0
    %2343 = vmatpush1.bf16.msra.mxu0 0
    %2344 = vmatprep.subr.bf16.mxu0 0
    %2345 = vmatpush1.bf16.msra.mxu0 0
    %2346 = vmatprep.subr.bf16.mxu0 0
    %2347 = vmatpush1.bf16.msra.mxu0 0
    %2348 = vmatprep.subr.bf16.mxu0 0
    %2349 = vmatpush1.bf16.msra.mxu0 0
    %2350 = vmatprep.subr.bf16.mxu0 0
    %2351 = vmatpush1.bf16.msra.mxu0 0
    %2352 = vmatprep.mubr.bf16.mxu0 0
    %2353 = vmatmul.mubr.bf16.gmra.mrb[0].mxu0 %v2306
    %v2354 = vpop.f32.mrb[0].mxu0
    %v2355 = vadd.f32 0.0, %v2354
    %v2356 = vpop.f32.mrb[0].mxu0
    %v2357 = vadd.f32 0.0, %v2356
    %v2358 = vpop.f32.mrb[0].mxu0
    %v2359 = vpop.f32.mrb[0].mxu0
    %2360 = vdwg.mxu0
    %2361 = vmatprep.subr.bf16.mxu0 %v2318
    %2362 = vmatpush1.bf16.msra.mxu0 %v2315
    %2363 = vmatprep.subr.bf16.mxu0 0
    %2364 = vmatpush1.bf16.msra.mxu0 0
    %2365 = vmatprep.subr.bf16.mxu0 0
    %2366 = vmatpush1.bf16.msra.mxu0 0
    %2367 = vmatprep.subr.bf16.mxu0 0
    %2368 = vmatpush1.bf16.msra.mxu0 0
    %2369 = vmatprep.subr.bf16.mxu0 0
    %2370 = vmatpush1.bf16.msra.mxu0 0
    %2371 = vmatprep.subr.bf16.mxu0 0
    %2372 = vmatpush1.bf16.msra.mxu0 0
    %2373 = vmatprep.subr.bf16.mxu0 0
    %2374 = vmatpush1.bf16.msra.mxu0 0
    %2375 = vmatprep.subr.bf16.mxu0 0
    %2376 = vmatpush1.bf16.msra.mxu0 0
    %2377 = vmatprep.subr.bf16.mxu0 0
    %2378 = vmatpush1.bf16.msra.mxu0 0
    %2379 = vmatprep.subr.bf16.mxu0 0
    %2380 = vmatpush1.bf16.msra.mxu0 0
    %2381 = vmatprep.subr.bf16.mxu0 0
    %2382 = vmatpush1.bf16.msra.mxu0 0
    %2383 = vmatprep.subr.bf16.mxu0 0
    %2384 = vmatpush1.bf16.msra.mxu0 0
    %2385 = vmatprep.subr.bf16.mxu0 0
    %2386 = vmatpush1.bf16.msra.mxu0 0
    %2387 = vmatprep.subr.bf16.mxu0 0
    %2388 = vmatpush1.bf16.msra.mxu0 0
    %2389 = vmatprep.subr.bf16.mxu0 0
    %2390 = vmatpush1.bf16.msra.mxu0 0
    %2391 = vmatprep.subr.bf16.mxu0 0
    %2392 = vmatpush1.bf16.msra.mxu0 0
    %2393 = vmatprep.mubr.bf16.mxu0 0
    %2394 = vmatmul.mubr.bf16.gmra.mrb[0].mxu0 %v2306
    %v2395 = vpop.f32.mrb[0].mxu0
    %v2396 = vadd.f32 0.0, %v2395
    %v2397 = vpop.f32.mrb[0].mxu0
    %v2398 = vadd.f32 0.0, %v2397
    %v2399 = vpop.f32.mrb[0].mxu0
    %v2400 = vpop.f32.mrb[0].mxu0
    %2401 = vdwg.mxu0
    %v2402 = vadd.f32 %v2279, %v2355
    %v2403 = vadd.f32 %v2280, %v2357
    %v2404 = vadd.f32 %v2281, %v2396
    %v2405 = vadd.f32 %v2282, %v2398
    %2406 = vrot.lane.b32.xlu0 %v1561, 112
    %v2407 = vpop.permute.xlu0 %2406
    %2408 = vrot.lane.b32.xlu0 %v1562, 112
    %v2409 = vpop.permute.xlu0 %2408
    %2410 = vrot.lane.b32.xlu0 %v1563, 112
    %v2411 = vpop.permute.xlu0 %2410
    %2412 = vrot.lane.b32.xlu0 %v1564, 112
    %v2413 = vpop.permute.xlu0 %2412
    %v2414 = vsel %vm1273, %v2411, %v2413
    %v2415 = vsel %vm1273, %v2409, %v2411
    %v2416 = vsel %vm1273, %v2407, %v2409
    %v2417 = vsel %vm1273, %v2413, %v2407
    %v2418 = vsel %vm1290, %v2416, 0.0
    %v2419 = vsel %vm1291, %v2415, 0.0
    %v2420 = vsel %vm1292, %v2414, 0.0
    %v2421 = vsel %vm1293, %v2417, 0.0
    %v2422 = vpack.c.bf16 %v2418, %v2418
    %v2423 = vpack.c.bf16 %v2419, %v2419
    %v2424 = vpack.c.bf16 %v2420, %v2420
    %v2425 = vpack.c.bf16 %v2421, %v2421
    %s2426 = scalar_lea.vmem [#allocation5], 14
    %v2427 = vld [vmem:[%s2426] sm:$0x3]
    %v2429 = vsel %vm1608, %v2427, 0
    %v2432 = vsel %vm348, %v2422, 0
    %v2435 = vsel %vm348, %v2423, 0
    %v2438 = vsel %vm348, %v2424, 0
    %v2441 = vsel %vm348, %v2425, 0
    %2443 = vmatprep.subr.bf16.mxu0 %v2435
    %2444 = vmatpush1.bf16.msra.mxu0 %v2432
    %2445 = vmatprep.subr.bf16.mxu0 0
    %2446 = vmatpush1.bf16.msra.mxu0 0
    %2447 = vmatprep.subr.bf16.mxu0 0
    %2448 = vmatpush1.bf16.msra.mxu0 0
    %2449 = vmatprep.subr.bf16.mxu0 0
    %2450 = vmatpush1.bf16.msra.mxu0 0
    %2451 = vmatprep.subr.bf16.mxu0 0
    %2452 = vmatpush1.bf16.msra.mxu0 0
    %2453 = vmatprep.subr.bf16.mxu0 0
    %2454 = vmatpush1.bf16.msra.mxu0 0
    %2455 = vmatprep.subr.bf16.mxu0 0
    %2456 = vmatpush1.bf16.msra.mxu0 0
    %2457 = vmatprep.subr.bf16.mxu0 0
    %2458 = vmatpush1.bf16.msra.mxu0 0
    %2459 = vmatprep.subr.bf16.mxu0 0
    %2460 = vmatpush1.bf16.msra.mxu0 0
    %2461 = vmatprep.subr.bf16.mxu0 0
    %2462 = vmatpush1.bf16.msra.mxu0 0
    %2463 = vmatprep.subr.bf16.mxu0 0
    %2464 = vmatpush1.bf16.msra.mxu0 0
    %2465 = vmatprep.subr.bf16.mxu0 0
    %2466 = vmatpush1.bf16.msra.mxu0 0
    %2467 = vmatprep.subr.bf16.mxu0 0
    %2468 = vmatpush1.bf16.msra.mxu0 0
    %2469 = vmatprep.subr.bf16.mxu0 0
    %2470 = vmatpush1.bf16.msra.mxu0 0
    %2471 = vmatprep.subr.bf16.mxu0 0
    %2472 = vmatpush1.bf16.msra.mxu0 0
    %2473 = vmatprep.subr.bf16.mxu0 0
    %2474 = vmatpush1.bf16.msra.mxu0 0
    %2475 = vmatprep.mubr.bf16.mxu0 0
    %2476 = vmatmul.mubr.bf16.gmra.mrb[0].mxu0 %v2429
    %v2477 = vpop.f32.mrb[0].mxu0
    %v2478 = vadd.f32 0.0, %v2477
    %v2479 = vpop.f32.mrb[0].mxu0
    %v2480 = vadd.f32 0.0, %v2479
    %v2481 = vpop.f32.mrb[0].mxu0
    %v2482 = vpop.f32.mrb[0].mxu0
    %2483 = vdwg.mxu0
    %2484 = vmatprep.subr.bf16.mxu0 %v2441
    %2485 = vmatpush1.bf16.msra.mxu0 %v2438
    %2486 = vmatprep.subr.bf16.mxu0 0
    %2487 = vmatpush1.bf16.msra.mxu0 0
    %2488 = vmatprep.subr.bf16.mxu0 0
    %2489 = vmatpush1.bf16.msra.mxu0 0
    %2490 = vmatprep.subr.bf16.mxu0 0
    %2491 = vmatpush1.bf16.msra.mxu0 0
    %2492 = vmatprep.subr.bf16.mxu0 0
    %2493 = vmatpush1.bf16.msra.mxu0 0
    %2494 = vmatprep.subr.bf16.mxu0 0
    %2495 = vmatpush1.bf16.msra.mxu0 0
    %2496 = vmatprep.subr.bf16.mxu0 0
    %2497 = vmatpush1.bf16.msra.mxu0 0
    %2498 = vmatprep.subr.bf16.mxu0 0
    %2499 = vmatpush1.bf16.msra.mxu0 0
    %2500 = vmatprep.subr.bf16.mxu0 0
    %2501 = vmatpush1.bf16.msra.mxu0 0
    %2502 = vmatprep.subr.bf16.mxu0 0
    %2503 = vmatpush1.bf16.msra.mxu0 0
    %2504 = vmatprep.subr.bf16.mxu0 0
    %2505 = vmatpush1.bf16.msra.mxu0 0
    %2506 = vmatprep.subr.bf16.mxu0 0
    %2507 = vmatpush1.bf16.msra.mxu0 0
    %2508 = vmatprep.subr.bf16.mxu0 0
    %2509 = vmatpush1.bf16.msra.mxu0 0
    %2510 = vmatprep.subr.bf16.mxu0 0
    %2511 = vmatpush1.bf16.msra.mxu0 0
    %2512 = vmatprep.subr.bf16.mxu0 0
    %2513 = vmatpush1.bf16.msra.mxu0 0
    %2514 = vmatprep.subr.bf16.mxu0 0
    %2515 = vmatpush1.bf16.msra.mxu0 0
    %2516 = vmatprep.mubr.bf16.mxu0 0
    %2517 = vmatmul.mubr.bf16.gmra.mrb[0].mxu0 %v2429
    %v2518 = vpop.f32.mrb[0].mxu0
    %v2519 = vadd.f32 0.0, %v2518
    %v2520 = vpop.f32.mrb[0].mxu0
    %v2521 = vadd.f32 0.0, %v2520
    %v2522 = vpop.f32.mrb[0].mxu0
    %v2523 = vpop.f32.mrb[0].mxu0
    %2524 = vdwg.mxu0
    %v2525 = vadd.f32 %v2402, %v2478
    %v2526 = vadd.f32 %v2403, %v2480
    %v2527 = vadd.f32 %v2404, %v2519
    %v2528 = vadd.f32 %v2405, %v2521
    %2529 = vrot.lane.b32.xlu0 %v1561, 111
    %v2530 = vpop.permute.xlu0 %2529
    %2531 = vrot.lane.b32.xlu0 %v1562, 111
    %v2532 = vpop.permute.xlu0 %2531
    %2533 = vrot.lane.b32.xlu0 %v1563, 111
    %v2534 = vpop.permute.xlu0 %2533
    %2535 = vrot.lane.b32.xlu0 %v1564, 111
    %v2536 = vpop.permute.xlu0 %2535
    %v2537 = vsel %vm1413, %v2534, %v2536
    %v2538 = vsel %vm1413, %v2532, %v2534
    %v2539 = vsel %vm1413, %v2530, %v2532
    %v2540 = vsel %vm1413, %v2536, %v2530
    %v2541 = vsel %vm1430, %v2539, 0.0
    %v2542 = vsel %vm1431, %v2538, 0.0
    %v2543 = vsel %vm1432, %v2537, 0.0
    %v2544 = vsel %vm1433, %v2540, 0.0
    %v2545 = vpack.c.bf16 %v2541, %v2541
    %v2546 = vpack.c.bf16 %v2542, %v2542
    %v2547 = vpack.c.bf16 %v2543, %v2543
    %v2548 = vpack.c.bf16 %v2544, %v2544
    %s2549 = scalar_lea.vmem [#allocation5], 16
    %v2550 = vld [vmem:[%s2549] sm:$0x3]
    %v2552 = vsel %vm1608, %v2550, 0
    %v2555 = vsel %vm348, %v2545, 0
    %v2558 = vsel %vm348, %v2546, 0
    %v2561 = vsel %vm348, %v2547, 0
    %v2564 = vsel %vm348, %v2548, 0
    %2566 = vmatprep.subr.bf16.mxu0 %v2558
    %2567 = vmatpush1.bf16.msra.mxu0 %v2555
    %2568 = vmatprep.subr.bf16.mxu0 0
    %2569 = vmatpush1.bf16.msra.mxu0 0
    %2570 = vmatprep.subr.bf16.mxu0 0
    %2571 = vmatpush1.bf16.msra.mxu0 0
    %2572 = vmatprep.subr.bf16.mxu0 0
    %2573 = vmatpush1.bf16.msra.mxu0 0
    %2574 = vmatprep.subr.bf16.mxu0 0
    %2575 = vmatpush1.bf16.msra.mxu0 0
    %2576 = vmatprep.subr.bf16.mxu0 0
    %2577 = vmatpush1.bf16.msra.mxu0 0
    %2578 = vmatprep.subr.bf16.mxu0 0
    %2579 = vmatpush1.bf16.msra.mxu0 0
    %2580 = vmatprep.subr.bf16.mxu0 0
    %2581 = vmatpush1.bf16.msra.mxu0 0
    %2582 = vmatprep.subr.bf16.mxu0 0
    %2583 = vmatpush1.bf16.msra.mxu0 0
    %2584 = vmatprep.subr.bf16.mxu0 0
    %2585 = vmatpush1.bf16.msra.mxu0 0
    %2586 = vmatprep.subr.bf16.mxu0 0
    %2587 = vmatpush1.bf16.msra.mxu0 0
    %2588 = vmatprep.subr.bf16.mxu0 0
    %2589 = vmatpush1.bf16.msra.mxu0 0
    %2590 = vmatprep.subr.bf16.mxu0 0
    %2591 = vmatpush1.bf16.msra.mxu0 0
    %2592 = vmatprep.subr.bf16.mxu0 0
    %2593 = vmatpush1.bf16.msra.mxu0 0
    %2594 = vmatprep.subr.bf16.mxu0 0
    %2595 = vmatpush1.bf16.msra.mxu0 0
    %2596 = vmatprep.subr.bf16.mxu0 0
    %2597 = vmatpush1.bf16.msra.mxu0 0
    %2598 = vmatprep.mubr.bf16.mxu0 0
    %2599 = vmatmul.mubr.bf16.gmra.mrb[0].mxu0 %v2552
    %v2600 = vpop.f32.mrb[0].mxu0
    %v2601 = vadd.f32 0.0, %v2600
    %v2602 = vpop.f32.mrb[0].mxu0
    %v2603 = vadd.f32 0.0, %v2602
    %v2604 = vpop.f32.mrb[0].mxu0
    %v2605 = vpop.f32.mrb[0].mxu0
    %2606 = vdwg.mxu0
    %2607 = vmatprep.subr.bf16.mxu0 %v2564
    %2608 = vmatpush1.bf16.msra.mxu0 %v2561
    %2609 = vmatprep.subr.bf16.mxu0 0
    %2610 = vmatpush1.bf16.msra.mxu0 0
    %2611 = vmatprep.subr.bf16.mxu0 0
    %2612 = vmatpush1.bf16.msra.mxu0 0
    %2613 = vmatprep.subr.bf16.mxu0 0
    %2614 = vmatpush1.bf16.msra.mxu0 0
    %2615 = vmatprep.subr.bf16.mxu0 0
    %2616 = vmatpush1.bf16.msra.mxu0 0
    %2617 = vmatprep.subr.bf16.mxu0 0
    %2618 = vmatpush1.bf16.msra.mxu0 0
    %2619 = vmatprep.subr.bf16.mxu0 0
    %2620 = vmatpush1.bf16.msra.mxu0 0
    %2621 = vmatprep.subr.bf16.mxu0 0
    %2622 = vmatpush1.bf16.msra.mxu0 0
    %2623 = vmatprep.subr.bf16.mxu0 0
    %2624 = vmatpush1.bf16.msra.mxu0 0
    %2625 = vmatprep.subr.bf16.mxu0 0
    %2626 = vmatpush1.bf16.msra.mxu0 0
    %2627 = vmatprep.subr.bf16.mxu0 0
    %2628 = vmatpush1.bf16.msra.mxu0 0
    %2629 = vmatprep.subr.bf16.mxu0 0
    %2630 = vmatpush1.bf16.msra.mxu0 0
    %2631 = vmatprep.subr.bf16.mxu0 0
    %2632 = vmatpush1.bf16.msra.mxu0 0
    %2633 = vmatprep.subr.bf16.mxu0 0
    %2634 = vmatpush1.bf16.msra.mxu0 0
    %2635 = vmatprep.subr.bf16.mxu0 0
    %2636 = vmatpush1.bf16.msra.mxu0 0
    %2637 = vmatprep.subr.bf16.mxu0 0
    %2638 = vmatpush1.bf16.msra.mxu0 0
    %2639 = vmatprep.mubr.bf16.mxu0 0
    %2640 = vmatmul.mubr.bf16.gmra.mrb[0].mxu0 %v2552
    %v2641 = vpop.f32.mrb[0].mxu0
    %v2642 = vadd.f32 0.0, %v2641
    %v2643 = vpop.f32.mrb[0].mxu0
    %v2644 = vadd.f32 0.0, %v2643
    %v2645 = vpop.f32.mrb[0].mxu0
    %v2646 = vpop.f32.mrb[0].mxu0
    %2647 = vdwg.mxu0
    %v2648 = vadd.f32 %v2525, %v2601
    %v2649 = vadd.f32 %v2526, %v2603
    %v2650 = vadd.f32 %v2527, %v2642
    %v2651 = vadd.f32 %v2528, %v2644
    %v2652 = vstv %s1556
    %v2653 = vadd.f32 %v2648, %v2652
    %v2654 = vadd.f32 %v2649, %v2652
    %v2655 = vadd.f32 %v2650, %v2652
    %v2656 = vadd.f32 %v2651, %v2652
    %v2657 = vmax.f32 %v2653, 0.0
    %v2658 = vmax.f32 %v2654, 0.0
    %v2659 = vmax.f32 %v2655, 0.0
    %v2660 = vmax.f32 %v2656, 0.0
    %v2661 = vstv %s1557
    %v2662 = vadd.f32 %v2657, %v2661
    %v2663 = vadd.f32 %v2658, %v2661
    %v2664 = vadd.f32 %v2659, %v2661
    %v2665 = vadd.f32 %v2660, %v2661
    %2666 = vrot.lane.b32.xlu0 %v2662, 17
    %v2667 = vpop.permute.xlu0 %2666
    %2668 = vrot.lane.b32.xlu0 %v2663, 17
    %v2669 = vpop.permute.xlu0 %2668
    %2670 = vrot.lane.b32.xlu0 %v2664, 17
    %v2671 = vpop.permute.xlu0 %2670
    %2672 = vrot.lane.b32.xlu0 %v2665, 17
    %v2673 = vpop.permute.xlu0 %2672
    %v2674 = vsel %vm234, %v2671, %v2673
    %v2675 = vsel %vm234, %v2669, %v2671
    %v2676 = vsel %vm234, %v2667, %v2669
    %v2677 = vsel %vm234, %v2673, %v2667
    %v2678 = vsel %vm279, %v2677, 0.0
    %v2679 = vsel %vm280, %v2676, 0.0
    %v2680 = vsel %vm281, %v2675, 0.0
    %v2681 = vsel %vm282, %v2674, 0.0
    %v2682 = vpack.c.bf16 %v2678, %v2678
    %v2683 = vpack.c.bf16 %v2679, %v2679
    %v2684 = vpack.c.bf16 %v2680, %v2680
    %v2685 = vpack.c.bf16 %v2681, %v2681
    %v2686 = vld [vmem:[#allocation7] sm:$0x3]
    %2687 = vrot.lane.b32.xlu0 %v2662, 16
    %v2688 = vpop.permute.xlu0 %2687
    %2689 = vrot.lane.b32.xlu0 %v2663, 16
    %v2690 = vpop.permute.xlu0 %2689
    %2691 = vrot.lane.b32.xlu0 %v2664, 16
    %v2692 = vpop.permute.xlu0 %2691
    %2693 = vrot.lane.b32.xlu0 %v2665, 16
    %v2694 = vpop.permute.xlu0 %2693
    %v2695 = vsel %vm300, %v2692, %v2694
    %v2696 = vsel %vm300, %v2690, %v2692
    %v2697 = vsel %vm300, %v2688, %v2690
    %v2698 = vsel %vm300, %v2694, %v2688
    %v2699 = vsel %vm329, %v2698, 0.0
    %v2700 = vsel %vm330, %v2697, 0.0
    %v2701 = vsel %vm331, %v2696, 0.0
    %v2702 = vsel %vm332, %v2695, 0.0
    %v2703 = vpack.c.bf16 %v2699, %v2699
    %v2704 = vpack.c.bf16 %v2700, %v2700
    %v2705 = vpack.c.bf16 %v2701, %v2701
    %v2706 = vpack.c.bf16 %v2702, %v2702
    %s2707 = scalar_lea.vmem [#allocation7], 2
    %v2708 = vld [vmem:[%s2707] sm:$0x3]
    %v2710 = vsel %vm1608, %v2708, 0
    %v2713 = vsel %vm348, %v2703, 0
    %v2716 = vsel %vm348, %v2704, 0
    %v2719 = vsel %vm348, %v2705, 0
    %v2722 = vsel %vm348, %v2706, 0
    %2724 = vmatprep.subr.bf16.mxu0 %v2716
    %2725 = vmatpush1.bf16.msra.mxu0 %v2713
    %2726 = vmatprep.subr.bf16.mxu0 0
    %2727 = vmatpush1.bf16.msra.mxu0 0
    %2728 = vmatprep.subr.bf16.mxu0 0
    %2729 = vmatpush1.bf16.msra.mxu0 0
    %2730 = vmatprep.subr.bf16.mxu0 0
    %2731 = vmatpush1.bf16.msra.mxu0 0
    %2732 = vmatprep.subr.bf16.mxu0 0
    %2733 = vmatpush1.bf16.msra.mxu0 0
    %2734 = vmatprep.subr.bf16.mxu0 0
    %2735 = vmatpush1.bf16.msra.mxu0 0
    %2736 = vmatprep.subr.bf16.mxu0 0
    %2737 = vmatpush1.bf16.msra.mxu0 0
    %2738 = vmatprep.subr.bf16.mxu0 0
    %2739 = vmatpush1.bf16.msra.mxu0 0
    %2740 = vmatprep.subr.bf16.mxu0 0
    %2741 = vmatpush1.bf16.msra.mxu0 0
    %2742 = vmatprep.subr.bf16.mxu0 0
    %2743 = vmatpush1.bf16.msra.mxu0 0
    %2744 = vmatprep.subr.bf16.mxu0 0
    %2745 = vmatpush1.bf16.msra.mxu0 0
    %2746 = vmatprep.subr.bf16.mxu0 0
    %2747 = vmatpush1.bf16.msra.mxu0 0
    %2748 = vmatprep.subr.bf16.mxu0 0
    %2749 = vmatpush1.bf16.msra.mxu0 0
    %2750 = vmatprep.subr.bf16.mxu0 0
    %2751 = vmatpush1.bf16.msra.mxu0 0
    %2752 = vmatprep.subr.bf16.mxu0 0
    %2753 = vmatpush1.bf16.msra.mxu0 0
    %2754 = vmatprep.subr.bf16.mxu0 0
    %2755 = vmatpush1.bf16.msra.mxu0 0
    %2756 = vmatprep.mubr.bf16.mxu0 0
    %2757 = vmatmul.mubr.bf16.gmra.mrb[0].mxu0 %v2710
    %v2758 = vpop.f32.mrb[0].mxu0
    %v2759 = vadd.f32 0.0, %v2758
    %v2760 = vpop.f32.mrb[0].mxu0
    %v2761 = vadd.f32 0.0, %v2760
    %v2762 = vpop.f32.mrb[0].mxu0
    %v2763 = vpop.f32.mrb[0].mxu0
    %2764 = vdwg.mxu0
    %2765 = vmatprep.subr.bf16.mxu0 %v2722
    %2766 = vmatpush1.bf16.msra.mxu0 %v2719
    %2767 = vmatprep.subr.bf16.mxu0 0
    %2768 = vmatpush1.bf16.msra.mxu0 0
    %2769 = vmatprep.subr.bf16.mxu0 0
    %2770 = vmatpush1.bf16.msra.mxu0 0
    %2771 = vmatprep.subr.bf16.mxu0 0
    %2772 = vmatpush1.bf16.msra.mxu0 0
    %2773 = vmatprep.subr.bf16.mxu0 0
    %2774 = vmatpush1.bf16.msra.mxu0 0
    %2775 = vmatprep.subr.bf16.mxu0 0
    %2776 = vmatpush1.bf16.msra.mxu0 0
    %2777 = vmatprep.subr.bf16.mxu0 0
    %2778 = vmatpush1.bf16.msra.mxu0 0
    %2779 = vmatprep.subr.bf16.mxu0 0
    %2780 = vmatpush1.bf16.msra.mxu0 0
    %2781 = vmatprep.subr.bf16.mxu0 0
    %2782 = vmatpush1.bf16.msra.mxu0 0
    %2783 = vmatprep.subr.bf16.mxu0 0
    %2784 = vmatpush1.bf16.msra.mxu0 0
    %2785 = vmatprep.subr.bf16.mxu0 0
    %2786 = vmatpush1.bf16.msra.mxu0 0
    %2787 = vmatprep.subr.bf16.mxu0 0
    %2788 = vmatpush1.bf16.msra.mxu0 0
    %2789 = vmatprep.subr.bf16.mxu0 0
    %2790 = vmatpush1.bf16.msra.mxu0 0
    %2791 = vmatprep.subr.bf16.mxu0 0
    %2792 = vmatpush1.bf16.msra.mxu0 0
    %2793 = vmatprep.subr.bf16.mxu0 0
    %2794 = vmatpush1.bf16.msra.mxu0 0
    %2795 = vmatprep.subr.bf16.mxu0 0
    %2796 = vmatpush1.bf16.msra.mxu0 0
    %2797 = vmatprep.mubr.bf16.mxu0 0
    %2798 = vmatmul.mubr.bf16.gmra.mrb[0].mxu0 %v2710
    %v2799 = vpop.f32.mrb[0].mxu0
    %v2800 = vadd.f32 0.0, %v2799
    %v2801 = vpop.f32.mrb[0].mxu0
    %v2802 = vadd.f32 0.0, %v2801
    %v2803 = vpop.f32.mrb[0].mxu0
    %v2804 = vpop.f32.mrb[0].mxu0
    %2805 = vdwg.mxu0
    %v2807 = vsel %vm1608, %v2686, 0
    %v2810 = vsel %vm348, %v2682, 0
    %v2813 = vsel %vm348, %v2683, 0
    %v2816 = vsel %vm348, %v2684, 0
    %v2819 = vsel %vm348, %v2685, 0
    %2821 = vmatprep.subr.bf16.mxu0 %v2813
    %2822 = vmatpush1.bf16.msra.mxu0 %v2810
    %2823 = vmatprep.subr.bf16.mxu0 0
    %2824 = vmatpush1.bf16.msra.mxu0 0
    %2825 = vmatprep.subr.bf16.mxu0 0
    %2826 = vmatpush1.bf16.msra.mxu0 0
    %2827 = vmatprep.subr.bf16.mxu0 0
    %2828 = vmatpush1.bf16.msra.mxu0 0
    %2829 = vmatprep.subr.bf16.mxu0 0
    %2830 = vmatpush1.bf16.msra.mxu0 0
    %2831 = vmatprep.subr.bf16.mxu0 0
    %2832 = vmatpush1.bf16.msra.mxu0 0
    %2833 = vmatprep.subr.bf16.mxu0 0
    %2834 = vmatpush1.bf16.msra.mxu0 0
    %2835 = vmatprep.subr.bf16.mxu0 0
    %2836 = vmatpush1.bf16.msra.mxu0 0
    %2837 = vmatprep.subr.bf16.mxu0 0
    %2838 = vmatpush1.bf16.msra.mxu0 0
    %2839 = vmatprep.subr.bf16.mxu0 0
    %2840 = vmatpush1.bf16.msra.mxu0 0
    %2841 = vmatprep.subr.bf16.mxu0 0
    %2842 = vmatpush1.bf16.msra.mxu0 0
    %2843 = vmatprep.subr.bf16.mxu0 0
    %2844 = vmatpush1.bf16.msra.mxu0 0
    %2845 = vmatprep.subr.bf16.mxu0 0
    %2846 = vmatpush1.bf16.msra.mxu0 0
    %2847 = vmatprep.subr.bf16.mxu0 0
    %2848 = vmatpush1.bf16.msra.mxu0 0
    %2849 = vmatprep.subr.bf16.mxu0 0
    %2850 = vmatpush1.bf16.msra.mxu0 0
    %2851 = vmatprep.subr.bf16.mxu0 0
    %2852 = vmatpush1.bf16.msra.mxu0 0
    %2853 = vmatprep.mubr.bf16.mxu0 0
    %2854 = vmatmul.mubr.bf16.gmra.mrb[0].mxu0 %v2807
    %v2855 = vpop.f32.mrb[0].mxu0
    %v2856 = vadd.f32 %v2759, %v2855
    %v2857 = vpop.f32.mrb[0].mxu0
    %v2858 = vadd.f32 %v2761, %v2857
    %v2859 = vpop.f32.mrb[0].mxu0
    %v2860 = vpop.f32.mrb[0].mxu0
    %2861 = vdwg.mxu0
    %2862 = vmatprep.subr.bf16.mxu0 %v2819
    %2863 = vmatpush1.bf16.msra.mxu0 %v2816
    %2864 = vmatprep.subr.bf16.mxu0 0
    %2865 = vmatpush1.bf16.msra.mxu0 0
    %2866 = vmatprep.subr.bf16.mxu0 0
    %2867 = vmatpush1.bf16.msra.mxu0 0
    %2868 = vmatprep.subr.bf16.mxu0 0
    %2869 = vmatpush1.bf16.msra.mxu0 0
    %2870 = vmatprep.subr.bf16.mxu0 0
    %2871 = vmatpush1.bf16.msra.mxu0 0
    %2872 = vmatprep.subr.bf16.mxu0 0
    %2873 = vmatpush1.bf16.msra.mxu0 0
    %2874 = vmatprep.subr.bf16.mxu0 0
    %2875 = vmatpush1.bf16.msra.mxu0 0
    %2876 = vmatprep.subr.bf16.mxu0 0
    %2877 = vmatpush1.bf16.msra.mxu0 0
    %2878 = vmatprep.subr.bf16.mxu0 0
    %2879 = vmatpush1.bf16.msra.mxu0 0
    %2880 = vmatprep.subr.bf16.mxu0 0
    %2881 = vmatpush1.bf16.msra.mxu0 0
    %2882 = vmatprep.subr.bf16.mxu0 0
    %2883 = vmatpush1.bf16.msra.mxu0 0
    %2884 = vmatprep.subr.bf16.mxu0 0
    %2885 = vmatpush1.bf16.msra.mxu0 0
    %2886 = vmatprep.subr.bf16.mxu0 0
    %2887 = vmatpush1.bf16.msra.mxu0 0
    %2888 = vmatprep.subr.bf16.mxu0 0
    %2889 = vmatpush1.bf16.msra.mxu0 0
    %2890 = vmatprep.subr.bf16.mxu0 0
    %2891 = vmatpush1.bf16.msra.mxu0 0
    %2892 = vmatprep.subr.bf16.mxu0 0
    %2893 = vmatpush1.bf16.msra.mxu0 0
    %2894 = vmatprep.mubr.bf16.mxu0 0
    %2895 = vmatmul.mubr.bf16.gmra.mrb[0].mxu0 %v2807
    %v2896 = vpop.f32.mrb[0].mxu0
    %v2897 = vadd.f32 %v2800, %v2896
    %v2898 = vpop.f32.mrb[0].mxu0
    %v2899 = vadd.f32 %v2802, %v2898
    %v2900 = vpop.f32.mrb[0].mxu0
    %v2901 = vpop.f32.mrb[0].mxu0
    %2902 = vdwg.mxu0
    %2903 = vrot.lane.b32.xlu0 %v2662, 15
    %v2904 = vpop.permute.xlu0 %2903
    %2905 = vrot.lane.b32.xlu0 %v2663, 15
    %v2906 = vpop.permute.xlu0 %2905
    %2907 = vrot.lane.b32.xlu0 %v2664, 15
    %v2908 = vpop.permute.xlu0 %2907
    %2909 = vrot.lane.b32.xlu0 %v2665, 15
    %v2910 = vpop.permute.xlu0 %2909
    %v2911 = vsel %vm550, %v2908, %v2910
    %v2912 = vsel %vm550, %v2906, %v2908
    %v2913 = vsel %vm550, %v2904, %v2906
    %v2914 = vsel %vm550, %v2910, %v2904
    %v2915 = vsel %vm583, %v2914, 0.0
    %v2916 = vsel %vm584, %v2913, 0.0
    %v2917 = vsel %vm585, %v2912, 0.0
    %v2918 = vsel %vm586, %v2911, 0.0
    %v2919 = vpack.c.bf16 %v2915, %v2915
    %v2920 = vpack.c.bf16 %v2916, %v2916
    %v2921 = vpack.c.bf16 %v2917, %v2917
    %v2922 = vpack.c.bf16 %v2918, %v2918
    %s2923 = scalar_lea.vmem [#allocation7], 4
    %v2924 = vld [vmem:[%s2923] sm:$0x3]
    %v2926 = vsel %vm1608, %v2924, 0
    %v2929 = vsel %vm348, %v2919, 0
    %v2932 = vsel %vm348, %v2920, 0
    %v2935 = vsel %vm348, %v2921, 0
    %v2938 = vsel %vm348, %v2922, 0
    %2940 = vmatprep.subr.bf16.mxu0 %v2932
    %2941 = vmatpush1.bf16.msra.mxu0 %v2929
    %2942 = vmatprep.subr.bf16.mxu0 0
    %2943 = vmatpush1.bf16.msra.mxu0 0
    %2944 = vmatprep.subr.bf16.mxu0 0
    %2945 = vmatpush1.bf16.msra.mxu0 0
    %2946 = vmatprep.subr.bf16.mxu0 0
    %2947 = vmatpush1.bf16.msra.mxu0 0
    %2948 = vmatprep.subr.bf16.mxu0 0
    %2949 = vmatpush1.bf16.msra.mxu0 0
    %2950 = vmatprep.subr.bf16.mxu0 0
    %2951 = vmatpush1.bf16.msra.mxu0 0
    %2952 = vmatprep.subr.bf16.mxu0 0
    %2953 = vmatpush1.bf16.msra.mxu0 0
    %2954 = vmatprep.subr.bf16.mxu0 0
    %2955 = vmatpush1.bf16.msra.mxu0 0
    %2956 = vmatprep.subr.bf16.mxu0 0
    %2957 = vmatpush1.bf16.msra.mxu0 0
    %2958 = vmatprep.subr.bf16.mxu0 0
    %2959 = vmatpush1.bf16.msra.mxu0 0
    %2960 = vmatprep.subr.bf16.mxu0 0
    %2961 = vmatpush1.bf16.msra.mxu0 0
    %2962 = vmatprep.subr.bf16.mxu0 0
    %2963 = vmatpush1.bf16.msra.mxu0 0
    %2964 = vmatprep.subr.bf16.mxu0 0
    %2965 = vmatpush1.bf16.msra.mxu0 0
    %2966 = vmatprep.subr.bf16.mxu0 0
    %2967 = vmatpush1.bf16.msra.mxu0 0
    %2968 = vmatprep.subr.bf16.mxu0 0
    %2969 = vmatpush1.bf16.msra.mxu0 0
    %2970 = vmatprep.subr.bf16.mxu0 0
    %2971 = vmatpush1.bf16.msra.mxu0 0
    %2972 = vmatprep.mubr.bf16.mxu0 0
    %2973 = vmatmul.mubr.bf16.gmra.mrb[0].mxu0 %v2926
    %v2974 = vpop.f32.mrb[0].mxu0
    %v2975 = vadd.f32 0.0, %v2974
    %v2976 = vpop.f32.mrb[0].mxu0
    %v2977 = vadd.f32 0.0, %v2976
    %v2978 = vpop.f32.mrb[0].mxu0
    %v2979 = vpop.f32.mrb[0].mxu0
    %2980 = vdwg.mxu0
    %2981 = vmatprep.subr.bf16.mxu0 %v2938
    %2982 = vmatpush1.bf16.msra.mxu0 %v2935
    %2983 = vmatprep.subr.bf16.mxu0 0
    %2984 = vmatpush1.bf16.msra.mxu0 0
    %2985 = vmatprep.subr.bf16.mxu0 0
    %2986 = vmatpush1.bf16.msra.mxu0 0
    %2987 = vmatprep.subr.bf16.mxu0 0
    %2988 = vmatpush1.bf16.msra.mxu0 0
    %2989 = vmatprep.subr.bf16.mxu0 0
    %2990 = vmatpush1.bf16.msra.mxu0 0
    %2991 = vmatprep.subr.bf16.mxu0 0
    %2992 = vmatpush1.bf16.msra.mxu0 0
    %2993 = vmatprep.subr.bf16.mxu0 0
    %2994 = vmatpush1.bf16.msra.mxu0 0
    %2995 = vmatprep.subr.bf16.mxu0 0
    %2996 = vmatpush1.bf16.msra.mxu0 0
    %2997 = vmatprep.subr.bf16.mxu0 0
    %2998 = vmatpush1.bf16.msra.mxu0 0
    %2999 = vmatprep.subr.bf16.mxu0 0
    %3000 = vmatpush1.bf16.msra.mxu0 0
    %3001 = vmatprep.subr.bf16.mxu0 0
    %3002 = vmatpush1.bf16.msra.mxu0 0
    %3003 = vmatprep.subr.bf16.mxu0 0
    %3004 = vmatpush1.bf16.msra.mxu0 0
    %3005 = vmatprep.subr.bf16.mxu0 0
    %3006 = vmatpush1.bf16.msra.mxu0 0
    %3007 = vmatprep.subr.bf16.mxu0 0
    %3008 = vmatpush1.bf16.msra.mxu0 0
    %3009 = vmatprep.subr.bf16.mxu0 0
    %3010 = vmatpush1.bf16.msra.mxu0 0
    %3011 = vmatprep.subr.bf16.mxu0 0
    %3012 = vmatpush1.bf16.msra.mxu0 0
    %3013 = vmatprep.mubr.bf16.mxu0 0
    %3014 = vmatmul.mubr.bf16.gmra.mrb[0].mxu0 %v2926
    %v3015 = vpop.f32.mrb[0].mxu0
    %v3016 = vadd.f32 0.0, %v3015
    %v3017 = vpop.f32.mrb[0].mxu0
    %v3018 = vadd.f32 0.0, %v3017
    %v3019 = vpop.f32.mrb[0].mxu0
    %v3020 = vpop.f32.mrb[0].mxu0
    %3021 = vdwg.mxu0
    %v3022 = vadd.f32 %v2856, %v2975
    %v3023 = vadd.f32 %v2858, %v2977
    %v3024 = vadd.f32 %v2897, %v3016
    %v3025 = vadd.f32 %v2899, %v3018
    %3026 = vrot.lane.b32.xlu0 %v2662, 1
    %v3027 = vpop.permute.xlu0 %3026
    %3028 = vrot.lane.b32.xlu0 %v2663, 1
    %v3029 = vpop.permute.xlu0 %3028
    %3030 = vrot.lane.b32.xlu0 %v2664, 1
    %v3031 = vpop.permute.xlu0 %3030
    %3032 = vrot.lane.b32.xlu0 %v2665, 1
    %v3033 = vpop.permute.xlu0 %3032
    %v3034 = vsel %vm706, %v3031, %v3033
    %v3035 = vsel %vm706, %v3029, %v3031
    %v3036 = vsel %vm706, %v3027, %v3029
    %v3037 = vsel %vm706, %v3033, %v3027
    %v3038 = vsel %vm731, %v3037, 0.0
    %v3039 = vsel %vm732, %v3036, 0.0
    %v3040 = vsel %vm733, %v3035, 0.0
    %v3041 = vsel %vm734, %v3034, 0.0
    %v3042 = vpack.c.bf16 %v3038, %v3038
    %v3043 = vpack.c.bf16 %v3039, %v3039
    %v3044 = vpack.c.bf16 %v3040, %v3040
    %v3045 = vpack.c.bf16 %v3041, %v3041
    %s3046 = scalar_lea.vmem [#allocation7], 6
    %v3047 = vld [vmem:[%s3046] sm:$0x3]
    %v3049 = vsel %vm1608, %v3047, 0
    %v3052 = vsel %vm348, %v3042, 0
    %v3055 = vsel %vm348, %v3043, 0
    %v3058 = vsel %vm348, %v3044, 0
    %v3061 = vsel %vm348, %v3045, 0
    %3063 = vmatprep.subr.bf16.mxu0 %v3055
    %3064 = vmatpush1.bf16.msra.mxu0 %v3052
    %3065 = vmatprep.subr.bf16.mxu0 0
    %3066 = vmatpush1.bf16.msra.mxu0 0
    %3067 = vmatprep.subr.bf16.mxu0 0
    %3068 = vmatpush1.bf16.msra.mxu0 0
    %3069 = vmatprep.subr.bf16.mxu0 0
    %3070 = vmatpush1.bf16.msra.mxu0 0
    %3071 = vmatprep.subr.bf16.mxu0 0
    %3072 = vmatpush1.bf16.msra.mxu0 0
    %3073 = vmatprep.subr.bf16.mxu0 0
    %3074 = vmatpush1.bf16.msra.mxu0 0
    %3075 = vmatprep.subr.bf16.mxu0 0
    %3076 = vmatpush1.bf16.msra.mxu0 0
    %3077 = vmatprep.subr.bf16.mxu0 0
    %3078 = vmatpush1.bf16.msra.mxu0 0
    %3079 = vmatprep.subr.bf16.mxu0 0
    %3080 = vmatpush1.bf16.msra.mxu0 0
    %3081 = vmatprep.subr.bf16.mxu0 0
    %3082 = vmatpush1.bf16.msra.mxu0 0
    %3083 = vmatprep.subr.bf16.mxu0 0
    %3084 = vmatpush1.bf16.msra.mxu0 0
    %3085 = vmatprep.subr.bf16.mxu0 0
    %3086 = vmatpush1.bf16.msra.mxu0 0
    %3087 = vmatprep.subr.bf16.mxu0 0
    %3088 = vmatpush1.bf16.msra.mxu0 0
    %3089 = vmatprep.subr.bf16.mxu0 0
    %3090 = vmatpush1.bf16.msra.mxu0 0
    %3091 = vmatprep.subr.bf16.mxu0 0
    %3092 = vmatpush1.bf16.msra.mxu0 0
    %3093 = vmatprep.subr.bf16.mxu0 0
    %3094 = vmatpush1.bf16.msra.mxu0 0
    %3095 = vmatprep.mubr.bf16.mxu0 0
    %3096 = vmatmul.mubr.bf16.gmra.mrb[0].mxu0 %v3049
    %v3097 = vpop.f32.mrb[0].mxu0
    %v3098 = vadd.f32 0.0, %v3097
    %v3099 = vpop.f32.mrb[0].mxu0
    %v3100 = vadd.f32 0.0, %v3099
    %v3101 = vpop.f32.mrb[0].mxu0
    %v3102 = vpop.f32.mrb[0].mxu0
    %3103 = vdwg.mxu0
    %3104 = vmatprep.subr.bf16.mxu0 %v3061
    %3105 = vmatpush1.bf16.msra.mxu0 %v3058
    %3106 = vmatprep.subr.bf16.mxu0 0
    %3107 = vmatpush1.bf16.msra.mxu0 0
    %3108 = vmatprep.subr.bf16.mxu0 0
    %3109 = vmatpush1.bf16.msra.mxu0 0
    %3110 = vmatprep.subr.bf16.mxu0 0
    %3111 = vmatpush1.bf16.msra.mxu0 0
    %3112 = vmatprep.subr.bf16.mxu0 0
    %3113 = vmatpush1.bf16.msra.mxu0 0
    %3114 = vmatprep.subr.bf16.mxu0 0
    %3115 = vmatpush1.bf16.msra.mxu0 0
    %3116 = vmatprep.subr.bf16.mxu0 0
    %3117 = vmatpush1.bf16.msra.mxu0 0
    %3118 = vmatprep.subr.bf16.mxu0 0
    %3119 = vmatpush1.bf16.msra.mxu0 0
    %3120 = vmatprep.subr.bf16.mxu0 0
    %3121 = vmatpush1.bf16.msra.mxu0 0
    %3122 = vmatprep.subr.bf16.mxu0 0
    %3123 = vmatpush1.bf16.msra.mxu0 0
    %3124 = vmatprep.subr.bf16.mxu0 0
    %3125 = vmatpush1.bf16.msra.mxu0 0
    %3126 = vmatprep.subr.bf16.mxu0 0
    %3127 = vmatpush1.bf16.msra.mxu0 0
    %3128 = vmatprep.subr.bf16.mxu0 0
    %3129 = vmatpush1.bf16.msra.mxu0 0
    %3130 = vmatprep.subr.bf16.mxu0 0
    %3131 = vmatpush1.bf16.msra.mxu0 0
    %3132 = vmatprep.subr.bf16.mxu0 0
    %3133 = vmatpush1.bf16.msra.mxu0 0
    %3134 = vmatprep.subr.bf16.mxu0 0
    %3135 = vmatpush1.bf16.msra.mxu0 0
    %3136 = vmatprep.mubr.bf16.mxu0 0
    %3137 = vmatmul.mubr.bf16.gmra.mrb[0].mxu0 %v3049
    %v3138 = vpop.f32.mrb[0].mxu0
    %v3139 = vadd.f32 0.0, %v3138
    %v3140 = vpop.f32.mrb[0].mxu0
    %v3141 = vadd.f32 0.0, %v3140
    %v3142 = vpop.f32.mrb[0].mxu0
    %v3143 = vpop.f32.mrb[0].mxu0
    %3144 = vdwg.mxu0
    %v3145 = vadd.f32 %v3022, %v3098
    %v3146 = vadd.f32 %v3023, %v3100
    %v3147 = vadd.f32 %v3024, %v3139
    %v3148 = vadd.f32 %v3025, %v3141
    %v3149 = vsel %vm858, %v2662, 0.0
    %v3150 = vsel %vm859, %v2663, 0.0
    %v3151 = vsel %vm860, %v2664, 0.0
    %v3152 = vsel %vm861, %v2665, 0.0
    %v3153 = vpack.c.bf16 %v3149, %v3149
    %v3154 = vpack.c.bf16 %v3150, %v3150
    %v3155 = vpack.c.bf16 %v3151, %v3151
    %v3156 = vpack.c.bf16 %v3152, %v3152
    %s3157 = scalar_lea.vmem [#allocation7], 8
    %v3158 = vld [vmem:[%s3157] sm:$0x3]
    %v3160 = vsel %vm1608, %v3158, 0
    %v3163 = vsel %vm348, %v3153, 0
    %v3166 = vsel %vm348, %v3154, 0
    %v3169 = vsel %vm348, %v3155, 0
    %v3172 = vsel %vm348, %v3156, 0
    %3174 = vmatprep.subr.bf16.mxu0 %v3166
    %3175 = vmatpush1.bf16.msra.mxu0 %v3163
    %3176 = vmatprep.subr.bf16.mxu0 0
    %3177 = vmatpush1.bf16.msra.mxu0 0
    %3178 = vmatprep.subr.bf16.mxu0 0
    %3179 = vmatpush1.bf16.msra.mxu0 0
    %3180 = vmatprep.subr.bf16.mxu0 0
    %3181 = vmatpush1.bf16.msra.mxu0 0
    %3182 = vmatprep.subr.bf16.mxu0 0
    %3183 = vmatpush1.bf16.msra.mxu0 0
    %3184 = vmatprep.subr.bf16.mxu0 0
    %3185 = vmatpush1.bf16.msra.mxu0 0
    %3186 = vmatprep.subr.bf16.mxu0 0
    %3187 = vmatpush1.bf16.msra.mxu0 0
    %3188 = vmatprep.subr.bf16.mxu0 0
    %3189 = vmatpush1.bf16.msra.mxu0 0
    %3190 = vmatprep.subr.bf16.mxu0 0
    %3191 = vmatpush1.bf16.msra.mxu0 0
    %3192 = vmatprep.subr.bf16.mxu0 0
    %3193 = vmatpush1.bf16.msra.mxu0 0
    %3194 = vmatprep.subr.bf16.mxu0 0
    %3195 = vmatpush1.bf16.msra.mxu0 0
    %3196 = vmatprep.subr.bf16.mxu0 0
    %3197 = vmatpush1.bf16.msra.mxu0 0
    %3198 = vmatprep.subr.bf16.mxu0 0
    %3199 = vmatpush1.bf16.msra.mxu0 0
    %3200 = vmatprep.subr.bf16.mxu0 0
    %3201 = vmatpush1.bf16.msra.mxu0 0
    %3202 = vmatprep.subr.bf16.mxu0 0
    %3203 = vmatpush1.bf16.msra.mxu0 0
    %3204 = vmatprep.subr.bf16.mxu0 0
    %3205 = vmatpush1.bf16.msra.mxu0 0
    %3206 = vmatprep.mubr.bf16.mxu0 0
    %3207 = vmatmul.mubr.bf16.gmra.mrb[0].mxu0 %v3160
    %v3208 = vpop.f32.mrb[0].mxu0
    %v3209 = vadd.f32 0.0, %v3208
    %v3210 = vpop.f32.mrb[0].mxu0
    %v3211 = vadd.f32 0.0, %v3210
    %v3212 = vpop.f32.mrb[0].mxu0
    %v3213 = vpop.f32.mrb[0].mxu0
    %3214 = vdwg.mxu0
    %3215 = vmatprep.subr.bf16.mxu0 %v3172
    %3216 = vmatpush1.bf16.msra.mxu0 %v3169
    %3217 = vmatprep.subr.bf16.mxu0 0
    %3218 = vmatpush1.bf16.msra.mxu0 0
    %3219 = vmatprep.subr.bf16.mxu0 0
    %3220 = vmatpush1.bf16.msra.mxu0 0
    %3221 = vmatprep.subr.bf16.mxu0 0
    %3222 = vmatpush1.bf16.msra.mxu0 0
    %3223 = vmatprep.subr.bf16.mxu0 0
    %3224 = vmatpush1.bf16.msra.mxu0 0
    %3225 = vmatprep.subr.bf16.mxu0 0
    %3226 = vmatpush1.bf16.msra.mxu0 0
    %3227 = vmatprep.subr.bf16.mxu0 0
    %3228 = vmatpush1.bf16.msra.mxu0 0
    %3229 = vmatprep.subr.bf16.mxu0 0
    %3230 = vmatpush1.bf16.msra.mxu0 0
    %3231 = vmatprep.subr.bf16.mxu0 0
    %3232 = vmatpush1.bf16.msra.mxu0 0
    %3233 = vmatprep.subr.bf16.mxu0 0
    %3234 = vmatpush1.bf16.msra.mxu0 0
    %3235 = vmatprep.subr.bf16.mxu0 0
    %3236 = vmatpush1.bf16.msra.mxu0 0
    %3237 = vmatprep.subr.bf16.mxu0 0
    %3238 = vmatpush1.bf16.msra.mxu0 0
    %3239 = vmatprep.subr.bf16.mxu0 0
    %3240 = vmatpush1.bf16.msra.mxu0 0
    %3241 = vmatprep.subr.bf16.mxu0 0
    %3242 = vmatpush1.bf16.msra.mxu0 0
    %3243 = vmatprep.subr.bf16.mxu0 0
    %3244 = vmatpush1.bf16.msra.mxu0 0
    %3245 = vmatprep.subr.bf16.mxu0 0
    %3246 = vmatpush1.bf16.msra.mxu0 0
    %3247 = vmatprep.mubr.bf16.mxu0 0
    %3248 = vmatmul.mubr.bf16.gmra.mrb[0].mxu0 %v3160
    %v3249 = vpop.f32.mrb[0].mxu0
    %v3250 = vadd.f32 0.0, %v3249
    %v3251 = vpop.f32.mrb[0].mxu0
    %v3252 = vadd.f32 0.0, %v3251
    %v3253 = vpop.f32.mrb[0].mxu0
    %v3254 = vpop.f32.mrb[0].mxu0
    %3255 = vdwg.mxu0
    %v3256 = vadd.f32 %v3145, %v3209
    %v3257 = vadd.f32 %v3146, %v3211
    %v3258 = vadd.f32 %v3147, %v3250
    %v3259 = vadd.f32 %v3148, %v3252
    %3260 = vrot.lane.b32.xlu0 %v2662, 127
    %v3261 = vpop.permute.xlu0 %3260
    %3262 = vrot.lane.b32.xlu0 %v2663, 127
    %v3263 = vpop.permute.xlu0 %3262
    %3264 = vrot.lane.b32.xlu0 %v2664, 127
    %v3265 = vpop.permute.xlu0 %3264
    %3266 = vrot.lane.b32.xlu0 %v2665, 127
    %v3267 = vpop.permute.xlu0 %3266
    %v3268 = vsel %vm981, %v3265, %v3267
    %v3269 = vsel %vm981, %v3263, %v3265
    %v3270 = vsel %vm981, %v3261, %v3263
    %v3271 = vsel %vm981, %v3267, %v3261
    %v3272 = vsel %vm998, %v3270, 0.0
    %v3273 = vsel %vm999, %v3269, 0.0
    %v3274 = vsel %vm1000, %v3268, 0.0
    %v3275 = vsel %vm1001, %v3271, 0.0
    %v3276 = vpack.c.bf16 %v3272, %v3272
    %v3277 = vpack.c.bf16 %v3273, %v3273
    %v3278 = vpack.c.bf16 %v3274, %v3274
    %v3279 = vpack.c.bf16 %v3275, %v3275
    %s3280 = scalar_lea.vmem [#allocation7], 10
    %v3281 = vld [vmem:[%s3280] sm:$0x3]
    %v3283 = vsel %vm1608, %v3281, 0
    %v3286 = vsel %vm348, %v3276, 0
    %v3289 = vsel %vm348, %v3277, 0
    %v3292 = vsel %vm348, %v3278, 0
    %v3295 = vsel %vm348, %v3279, 0
    %3297 = vmatprep.subr.bf16.mxu0 %v3289
    %3298 = vmatpush1.bf16.msra.mxu0 %v3286
    %3299 = vmatprep.subr.bf16.mxu0 0
    %3300 = vmatpush1.bf16.msra.mxu0 0
    %3301 = vmatprep.subr.bf16.mxu0 0
    %3302 = vmatpush1.bf16.msra.mxu0 0
    %3303 = vmatprep.subr.bf16.mxu0 0
    %3304 = vmatpush1.bf16.msra.mxu0 0
    %3305 = vmatprep.subr.bf16.mxu0 0
    %3306 = vmatpush1.bf16.msra.mxu0 0
    %3307 = vmatprep.subr.bf16.mxu0 0
    %3308 = vmatpush1.bf16.msra.mxu0 0
    %3309 = vmatprep.subr.bf16.mxu0 0
    %3310 = vmatpush1.bf16.msra.mxu0 0
    %3311 = vmatprep.subr.bf16.mxu0 0
    %3312 = vmatpush1.bf16.msra.mxu0 0
    %3313 = vmatprep.subr.bf16.mxu0 0
    %3314 = vmatpush1.bf16.msra.mxu0 0
    %3315 = vmatprep.subr.bf16.mxu0 0
    %3316 = vmatpush1.bf16.msra.mxu0 0
    %3317 = vmatprep.subr.bf16.mxu0 0
    %3318 = vmatpush1.bf16.msra.mxu0 0
    %3319 = vmatprep.subr.bf16.mxu0 0
    %3320 = vmatpush1.bf16.msra.mxu0 0
    %3321 = vmatprep.subr.bf16.mxu0 0
    %3322 = vmatpush1.bf16.msra.mxu0 0
    %3323 = vmatprep.subr.bf16.mxu0 0
    %3324 = vmatpush1.bf16.msra.mxu0 0
    %3325 = vmatprep.subr.bf16.mxu0 0
    %3326 = vmatpush1.bf16.msra.mxu0 0
    %3327 = vmatprep.subr.bf16.mxu0 0
    %3328 = vmatpush1.bf16.msra.mxu0 0
    %3329 = vmatprep.mubr.bf16.mxu0 0
    %3330 = vmatmul.mubr.bf16.gmra.mrb[0].mxu0 %v3283
    %v3331 = vpop.f32.mrb[0].mxu0
    %v3332 = vadd.f32 0.0, %v3331
    %v3333 = vpop.f32.mrb[0].mxu0
    %v3334 = vadd.f32 0.0, %v3333
    %v3335 = vpop.f32.mrb[0].mxu0
    %v3336 = vpop.f32.mrb[0].mxu0
    %3337 = vdwg.mxu0
    %3338 = vmatprep.subr.bf16.mxu0 %v3295
    %3339 = vmatpush1.bf16.msra.mxu0 %v3292
    %3340 = vmatprep.subr.bf16.mxu0 0
    %3341 = vmatpush1.bf16.msra.mxu0 0
    %3342 = vmatprep.subr.bf16.mxu0 0
    %3343 = vmatpush1.bf16.msra.mxu0 0
    %3344 = vmatprep.subr.bf16.mxu0 0
    %3345 = vmatpush1.bf16.msra.mxu0 0
    %3346 = vmatprep.subr.bf16.mxu0 0
    %3347 = vmatpush1.bf16.msra.mxu0 0
    %3348 = vmatprep.subr.bf16.mxu0 0
    %3349 = vmatpush1.bf16.msra.mxu0 0
    %3350 = vmatprep.subr.bf16.mxu0 0
    %3351 = vmatpush1.bf16.msra.mxu0 0
    %3352 = vmatprep.subr.bf16.mxu0 0
    %3353 = vmatpush1.bf16.msra.mxu0 0
    %3354 = vmatprep.subr.bf16.mxu0 0
    %3355 = vmatpush1.bf16.msra.mxu0 0
    %3356 = vmatprep.subr.bf16.mxu0 0
    %3357 = vmatpush1.bf16.msra.mxu0 0
    %3358 = vmatprep.subr.bf16.mxu0 0
    %3359 = vmatpush1.bf16.msra.mxu0 0
    %3360 = vmatprep.subr.bf16.mxu0 0
    %3361 = vmatpush1.bf16.msra.mxu0 0
    %3362 = vmatprep.subr.bf16.mxu0 0
    %3363 = vmatpush1.bf16.msra.mxu0 0
    %3364 = vmatprep.subr.bf16.mxu0 0
    %3365 = vmatpush1.bf16.msra.mxu0 0
    %3366 = vmatprep.subr.bf16.mxu0 0
    %3367 = vmatpush1.bf16.msra.mxu0 0
    %3368 = vmatprep.subr.bf16.mxu0 0
    %3369 = vmatpush1.bf16.msra.mxu0 0
    %3370 = vmatprep.mubr.bf16.mxu0 0
    %3371 = vmatmul.mubr.bf16.gmra.mrb[0].mxu0 %v3283
    %v3372 = vpop.f32.mrb[0].mxu0
    %v3373 = vadd.f32 0.0, %v3372
    %v3374 = vpop.f32.mrb[0].mxu0
    %v3375 = vadd.f32 0.0, %v3374
    %v3376 = vpop.f32.mrb[0].mxu0
    %v3377 = vpop.f32.mrb[0].mxu0
    %3378 = vdwg.mxu0
    %v3379 = vadd.f32 %v3256, %v3332
    %v3380 = vadd.f32 %v3257, %v3334
    %v3381 = vadd.f32 %v3258, %v3373
    %v3382 = vadd.f32 %v3259, %v3375
    %3383 = vrot.lane.b32.xlu0 %v2662, 113
    %v3384 = vpop.permute.xlu0 %3383
    %3385 = vrot.lane.b32.xlu0 %v2663, 113
    %v3386 = vpop.permute.xlu0 %3385
    %3387 = vrot.lane.b32.xlu0 %v2664, 113
    %v3388 = vpop.permute.xlu0 %3387
    %3389 = vrot.lane.b32.xlu0 %v2665, 113
    %v3390 = vpop.permute.xlu0 %3389
    %v3391 = vsel %vm1121, %v3388, %v3390
    %v3392 = vsel %vm1121, %v3386, %v3388
    %v3393 = vsel %vm1121, %v3384, %v3386
    %v3394 = vsel %vm1121, %v3390, %v3384
    %v3395 = vsel %vm1150, %v3393, 0.0
    %v3396 = vsel %vm1151, %v3392, 0.0
    %v3397 = vsel %vm1152, %v3391, 0.0
    %v3398 = vsel %vm1153, %v3394, 0.0
    %v3399 = vpack.c.bf16 %v3395, %v3395
    %v3400 = vpack.c.bf16 %v3396, %v3396
    %v3401 = vpack.c.bf16 %v3397, %v3397
    %v3402 = vpack.c.bf16 %v3398, %v3398
    %s3403 = scalar_lea.vmem [#allocation7], 12
    %v3404 = vld [vmem:[%s3403] sm:$0x3]
    %v3406 = vsel %vm1608, %v3404, 0
    %v3409 = vsel %vm348, %v3399, 0
    %v3412 = vsel %vm348, %v3400, 0
    %v3415 = vsel %vm348, %v3401, 0
    %v3418 = vsel %vm348, %v3402, 0
    %3420 = vmatprep.subr.bf16.mxu0 %v3412
    %3421 = vmatpush1.bf16.msra.mxu0 %v3409
    %3422 = vmatprep.subr.bf16.mxu0 0
    %3423 = vmatpush1.bf16.msra.mxu0 0
    %3424 = vmatprep.subr.bf16.mxu0 0
    %3425 = vmatpush1.bf16.msra.mxu0 0
    %3426 = vmatprep.subr.bf16.mxu0 0
    %3427 = vmatpush1.bf16.msra.mxu0 0
    %3428 = vmatprep.subr.bf16.mxu0 0
    %3429 = vmatpush1.bf16.msra.mxu0 0
    %3430 = vmatprep.subr.bf16.mxu0 0
    %3431 = vmatpush1.bf16.msra.mxu0 0
    %3432 = vmatprep.subr.bf16.mxu0 0
    %3433 = vmatpush1.bf16.msra.mxu0 0
    %3434 = vmatprep.subr.bf16.mxu0 0
    %3435 = vmatpush1.bf16.msra.mxu0 0
    %3436 = vmatprep.subr.bf16.mxu0 0
    %3437 = vmatpush1.bf16.msra.mxu0 0
    %3438 = vmatprep.subr.bf16.mxu0 0
    %3439 = vmatpush1.bf16.msra.mxu0 0
    %3440 = vmatprep.subr.bf16.mxu0 0
    %3441 = vmatpush1.bf16.msra.mxu0 0
    %3442 = vmatprep.subr.bf16.mxu0 0
    %3443 = vmatpush1.bf16.msra.mxu0 0
    %3444 = vmatprep.subr.bf16.mxu0 0
    %3445 = vmatpush1.bf16.msra.mxu0 0
    %3446 = vmatprep.subr.bf16.mxu0 0
    %3447 = vmatpush1.bf16.msra.mxu0 0
    %3448 = vmatprep.subr.bf16.mxu0 0
    %3449 = vmatpush1.bf16.msra.mxu0 0
    %3450 = vmatprep.subr.bf16.mxu0 0
    %3451 = vmatpush1.bf16.msra.mxu0 0
    %3452 = vmatprep.mubr.bf16.mxu0 0
    %3453 = vmatmul.mubr.bf16.gmra.mrb[0].mxu0 %v3406
    %v3454 = vpop.f32.mrb[0].mxu0
    %v3455 = vadd.f32 0.0, %v3454
    %v3456 = vpop.f32.mrb[0].mxu0
    %v3457 = vadd.f32 0.0, %v3456
    %v3458 = vpop.f32.mrb[0].mxu0
    %v3459 = vpop.f32.mrb[0].mxu0
    %3460 = vdwg.mxu0
    %3461 = vmatprep.subr.bf16.mxu0 %v3418
    %3462 = vmatpush1.bf16.msra.mxu0 %v3415
    %3463 = vmatprep.subr.bf16.mxu0 0
    %3464 = vmatpush1.bf16.msra.mxu0 0
    %3465 = vmatprep.subr.bf16.mxu0 0
    %3466 = vmatpush1.bf16.msra.mxu0 0
    %3467 = vmatprep.subr.bf16.mxu0 0
    %3468 = vmatpush1.bf16.msra.mxu0 0
    %3469 = vmatprep.subr.bf16.mxu0 0
    %3470 = vmatpush1.bf16.msra.mxu0 0
    %3471 = vmatprep.subr.bf16.mxu0 0
    %3472 = vmatpush1.bf16.msra.mxu0 0
    %3473 = vmatprep.subr.bf16.mxu0 0
    %3474 = vmatpush1.bf16.msra.mxu0 0
    %3475 = vmatprep.subr.bf16.mxu0 0
    %3476 = vmatpush1.bf16.msra.mxu0 0
    %3477 = vmatprep.subr.bf16.mxu0 0
    %3478 = vmatpush1.bf16.msra.mxu0 0
    %3479 = vmatprep.subr.bf16.mxu0 0
    %3480 = vmatpush1.bf16.msra.mxu0 0
    %3481 = vmatprep.subr.bf16.mxu0 0
    %3482 = vmatpush1.bf16.msra.mxu0 0
    %3483 = vmatprep.subr.bf16.mxu0 0
    %3484 = vmatpush1.bf16.msra.mxu0 0
    %3485 = vmatprep.subr.bf16.mxu0 0
    %3486 = vmatpush1.bf16.msra.mxu0 0
    %3487 = vmatprep.subr.bf16.mxu0 0
    %3488 = vmatpush1.bf16.msra.mxu0 0
    %3489 = vmatprep.subr.bf16.mxu0 0
    %3490 = vmatpush1.bf16.msra.mxu0 0
    %3491 = vmatprep.subr.bf16.mxu0 0
    %3492 = vmatpush1.bf16.msra.mxu0 0
    %3493 = vmatprep.mubr.bf16.mxu0 0
    %3494 = vmatmul.mubr.bf16.gmra.mrb[0].mxu0 %v3406
    %v3495 = vpop.f32.mrb[0].mxu0
    %v3496 = vadd.f32 0.0, %v3495
    %v3497 = vpop.f32.mrb[0].mxu0
    %v3498 = vadd.f32 0.0, %v3497
    %v3499 = vpop.f32.mrb[0].mxu0
    %v3500 = vpop.f32.mrb[0].mxu0
    %3501 = vdwg.mxu0
    %v3502 = vadd.f32 %v3379, %v3455
    %v3503 = vadd.f32 %v3380, %v3457
    %v3504 = vadd.f32 %v3381, %v3496
    %v3505 = vadd.f32 %v3382, %v3498
    %3506 = vrot.lane.b32.xlu0 %v2662, 112
    %v3507 = vpop.permute.xlu0 %3506
    %3508 = vrot.lane.b32.xlu0 %v2663, 112
    %v3509 = vpop.permute.xlu0 %3508
    %3510 = vrot.lane.b32.xlu0 %v2664, 112
    %v3511 = vpop.permute.xlu0 %3510
    %3512 = vrot.lane.b32.xlu0 %v2665, 112
    %v3513 = vpop.permute.xlu0 %3512
    %v3514 = vsel %vm1273, %v3511, %v3513
    %v3515 = vsel %vm1273, %v3509, %v3511
    %v3516 = vsel %vm1273, %v3507, %v3509
    %v3517 = vsel %vm1273, %v3513, %v3507
    %v3518 = vsel %vm1290, %v3516, 0.0
    %v3519 = vsel %vm1291, %v3515, 0.0
    %v3520 = vsel %vm1292, %v3514, 0.0
    %v3521 = vsel %vm1293, %v3517, 0.0
    %v3522 = vpack.c.bf16 %v3518, %v3518
    %v3523 = vpack.c.bf16 %v3519, %v3519
    %v3524 = vpack.c.bf16 %v3520, %v3520
    %v3525 = vpack.c.bf16 %v3521, %v3521
    %s3526 = scalar_lea.vmem [#allocation7], 14
    %v3527 = vld [vmem:[%s3526] sm:$0x3]
    %v3529 = vsel %vm1608, %v3527, 0
    %v3532 = vsel %vm348, %v3522, 0
    %v3535 = vsel %vm348, %v3523, 0
    %v3538 = vsel %vm348, %v3524, 0
    %v3541 = vsel %vm348, %v3525, 0
    %3543 = vmatprep.subr.bf16.mxu0 %v3535
    %3544 = vmatpush1.bf16.msra.mxu0 %v3532
    %3545 = vmatprep.subr.bf16.mxu0 0
    %3546 = vmatpush1.bf16.msra.mxu0 0
    %3547 = vmatprep.subr.bf16.mxu0 0
    %3548 = vmatpush1.bf16.msra.mxu0 0
    %3549 = vmatprep.subr.bf16.mxu0 0
    %3550 = vmatpush1.bf16.msra.mxu0 0
    %3551 = vmatprep.subr.bf16.mxu0 0
    %3552 = vmatpush1.bf16.msra.mxu0 0
    %3553 = vmatprep.subr.bf16.mxu0 0
    %3554 = vmatpush1.bf16.msra.mxu0 0
    %3555 = vmatprep.subr.bf16.mxu0 0
    %3556 = vmatpush1.bf16.msra.mxu0 0
    %3557 = vmatprep.subr.bf16.mxu0 0
    %3558 = vmatpush1.bf16.msra.mxu0 0
    %3559 = vmatprep.subr.bf16.mxu0 0
    %3560 = vmatpush1.bf16.msra.mxu0 0
    %3561 = vmatprep.subr.bf16.mxu0 0
    %3562 = vmatpush1.bf16.msra.mxu0 0
    %3563 = vmatprep.subr.bf16.mxu0 0
    %3564 = vmatpush1.bf16.msra.mxu0 0
    %3565 = vmatprep.subr.bf16.mxu0 0
    %3566 = vmatpush1.bf16.msra.mxu0 0
    %3567 = vmatprep.subr.bf16.mxu0 0
    %3568 = vmatpush1.bf16.msra.mxu0 0
    %3569 = vmatprep.subr.bf16.mxu0 0
    %3570 = vmatpush1.bf16.msra.mxu0 0
    %3571 = vmatprep.subr.bf16.mxu0 0
    %3572 = vmatpush1.bf16.msra.mxu0 0
    %3573 = vmatprep.subr.bf16.mxu0 0
    %3574 = vmatpush1.bf16.msra.mxu0 0
    %3575 = vmatprep.mubr.bf16.mxu0 0
    %3576 = vmatmul.mubr.bf16.gmra.mrb[0].mxu0 %v3529
    %v3577 = vpop.f32.mrb[0].mxu0
    %v3578 = vadd.f32 0.0, %v3577
    %v3579 = vpop.f32.mrb[0].mxu0
    %v3580 = vadd.f32 0.0, %v3579
    %v3581 = vpop.f32.mrb[0].mxu0
    %v3582 = vpop.f32.mrb[0].mxu0
    %3583 = vdwg.mxu0
    %3584 = vmatprep.subr.bf16.mxu0 %v3541
    %3585 = vmatpush1.bf16.msra.mxu0 %v3538
    %3586 = vmatprep.subr.bf16.mxu0 0
    %3587 = vmatpush1.bf16.msra.mxu0 0
    %3588 = vmatprep.subr.bf16.mxu0 0
    %3589 = vmatpush1.bf16.msra.mxu0 0
    %3590 = vmatprep.subr.bf16.mxu0 0
    %3591 = vmatpush1.bf16.msra.mxu0 0
    %3592 = vmatprep.subr.bf16.mxu0 0
    %3593 = vmatpush1.bf16.msra.mxu0 0
    %3594 = vmatprep.subr.bf16.mxu0 0
    %3595 = vmatpush1.bf16.msra.mxu0 0
    %3596 = vmatprep.subr.bf16.mxu0 0
    %3597 = vmatpush1.bf16.msra.mxu0 0
    %3598 = vmatprep.subr.bf16.mxu0 0
    %3599 = vmatpush1.bf16.msra.mxu0 0
    %3600 = vmatprep.subr.bf16.mxu0 0
    %3601 = vmatpush1.bf16.msra.mxu0 0
    %3602 = vmatprep.subr.bf16.mxu0 0
    %3603 = vmatpush1.bf16.msra.mxu0 0
    %3604 = vmatprep.subr.bf16.mxu0 0
    %3605 = vmatpush1.bf16.msra.mxu0 0
    %3606 = vmatprep.subr.bf16.mxu0 0
    %3607 = vmatpush1.bf16.msra.mxu0 0
    %3608 = vmatprep.subr.bf16.mxu0 0
    %3609 = vmatpush1.bf16.msra.mxu0 0
    %3610 = vmatprep.subr.bf16.mxu0 0
    %3611 = vmatpush1.bf16.msra.mxu0 0
    %3612 = vmatprep.subr.bf16.mxu0 0
    %3613 = vmatpush1.bf16.msra.mxu0 0
    %3614 = vmatprep.subr.bf16.mxu0 0
    %3615 = vmatpush1.bf16.msra.mxu0 0
    %3616 = vmatprep.mubr.bf16.mxu0 0
    %3617 = vmatmul.mubr.bf16.gmra.mrb[0].mxu0 %v3529
    %v3618 = vpop.f32.mrb[0].mxu0
    %v3619 = vadd.f32 0.0, %v3618
    %v3620 = vpop.f32.mrb[0].mxu0
    %v3621 = vadd.f32 0.0, %v3620
    %v3622 = vpop.f32.mrb[0].mxu0
    %v3623 = vpop.f32.mrb[0].mxu0
    %3624 = vdwg.mxu0
    %v3625 = vadd.f32 %v3502, %v3578
    %v3626 = vadd.f32 %v3503, %v3580
    %v3627 = vadd.f32 %v3504, %v3619
    %v3628 = vadd.f32 %v3505, %v3621
    %3629 = vrot.lane.b32.xlu0 %v2662, 111
    %v3630 = vpop.permute.xlu0 %3629
    %3631 = vrot.lane.b32.xlu0 %v2663, 111
    %v3632 = vpop.permute.xlu0 %3631
    %3633 = vrot.lane.b32.xlu0 %v2664, 111
    %v3634 = vpop.permute.xlu0 %3633
    %3635 = vrot.lane.b32.xlu0 %v2665, 111
    %v3636 = vpop.permute.xlu0 %3635
    %v3637 = vsel %vm1413, %v3634, %v3636
    %v3638 = vsel %vm1413, %v3632, %v3634
    %v3639 = vsel %vm1413, %v3630, %v3632
    %v3640 = vsel %vm1413, %v3636, %v3630
    %v3641 = vsel %vm1430, %v3639, 0.0
    %v3642 = vsel %vm1431, %v3638, 0.0
    %v3643 = vsel %vm1432, %v3637, 0.0
    %v3644 = vsel %vm1433, %v3640, 0.0
    %v3645 = vpack.c.bf16 %v3641, %v3641
    %v3646 = vpack.c.bf16 %v3642, %v3642
    %v3647 = vpack.c.bf16 %v3643, %v3643
    %v3648 = vpack.c.bf16 %v3644, %v3644
    %s3649 = scalar_lea.vmem [#allocation7], 16
    %v3650 = vld [vmem:[%s3649] sm:$0x3]
    %v3652 = vsel %vm1608, %v3650, 0
    %v3655 = vsel %vm348, %v3645, 0
    %v3658 = vsel %vm348, %v3646, 0
    %v3661 = vsel %vm348, %v3647, 0
    %v3664 = vsel %vm348, %v3648, 0
    %3666 = vmatprep.subr.bf16.mxu0 %v3658
    %3667 = vmatpush1.bf16.msra.mxu0 %v3655
    %3668 = vmatprep.subr.bf16.mxu0 0
    %3669 = vmatpush1.bf16.msra.mxu0 0
    %3670 = vmatprep.subr.bf16.mxu0 0
    %3671 = vmatpush1.bf16.msra.mxu0 0
    %3672 = vmatprep.subr.bf16.mxu0 0
    %3673 = vmatpush1.bf16.msra.mxu0 0
    %3674 = vmatprep.subr.bf16.mxu0 0
    %3675 = vmatpush1.bf16.msra.mxu0 0
    %3676 = vmatprep.subr.bf16.mxu0 0
    %3677 = vmatpush1.bf16.msra.mxu0 0
    %3678 = vmatprep.subr.bf16.mxu0 0
    %3679 = vmatpush1.bf16.msra.mxu0 0
    %3680 = vmatprep.subr.bf16.mxu0 0
    %3681 = vmatpush1.bf16.msra.mxu0 0
    %3682 = vmatprep.subr.bf16.mxu0 0
    %3683 = vmatpush1.bf16.msra.mxu0 0
    %3684 = vmatprep.subr.bf16.mxu0 0
    %3685 = vmatpush1.bf16.msra.mxu0 0
    %3686 = vmatprep.subr.bf16.mxu0 0
    %3687 = vmatpush1.bf16.msra.mxu0 0
    %3688 = vmatprep.subr.bf16.mxu0 0
    %3689 = vmatpush1.bf16.msra.mxu0 0
    %3690 = vmatprep.subr.bf16.mxu0 0
    %3691 = vmatpush1.bf16.msra.mxu0 0
    %3692 = vmatprep.subr.bf16.mxu0 0
    %3693 = vmatpush1.bf16.msra.mxu0 0
    %3694 = vmatprep.subr.bf16.mxu0 0
    %3695 = vmatpush1.bf16.msra.mxu0 0
    %3696 = vmatprep.subr.bf16.mxu0 0
    %3697 = vmatpush1.bf16.msra.mxu0 0
    %3698 = vmatprep.mubr.bf16.mxu0 0
    %3699 = vmatmul.mubr.bf16.gmra.mrb[0].mxu0 %v3652
    %v3700 = vpop.f32.mrb[0].mxu0
    %v3701 = vadd.f32 0.0, %v3700
    %v3702 = vpop.f32.mrb[0].mxu0
    %v3703 = vadd.f32 0.0, %v3702
    %v3704 = vpop.f32.mrb[0].mxu0
    %v3705 = vpop.f32.mrb[0].mxu0
    %3706 = vdwg.mxu0
    %3707 = vmatprep.subr.bf16.mxu0 %v3664
    %3708 = vmatpush1.bf16.msra.mxu0 %v3661
    %3709 = vmatprep.subr.bf16.mxu0 0
    %3710 = vmatpush1.bf16.msra.mxu0 0
    %3711 = vmatprep.subr.bf16.mxu0 0
    %3712 = vmatpush1.bf16.msra.mxu0 0
    %3713 = vmatprep.subr.bf16.mxu0 0
    %3714 = vmatpush1.bf16.msra.mxu0 0
    %3715 = vmatprep.subr.bf16.mxu0 0
    %3716 = vmatpush1.bf16.msra.mxu0 0
    %3717 = vmatprep.subr.bf16.mxu0 0
    %3718 = vmatpush1.bf16.msra.mxu0 0
    %3719 = vmatprep.subr.bf16.mxu0 0
    %3720 = vmatpush1.bf16.msra.mxu0 0
    %3721 = vmatprep.subr.bf16.mxu0 0
    %3722 = vmatpush1.bf16.msra.mxu0 0
    %3723 = vmatprep.subr.bf16.mxu0 0
    %3724 = vmatpush1.bf16.msra.mxu0 0
    %3725 = vmatprep.subr.bf16.mxu0 0
    %3726 = vmatpush1.bf16.msra.mxu0 0
    %3727 = vmatprep.subr.bf16.mxu0 0
    %3728 = vmatpush1.bf16.msra.mxu0 0
    %3729 = vmatprep.subr.bf16.mxu0 0
    %3730 = vmatpush1.bf16.msra.mxu0 0
    %3731 = vmatprep.subr.bf16.mxu0 0
    %3732 = vmatpush1.bf16.msra.mxu0 0
    %3733 = vmatprep.subr.bf16.mxu0 0
    %3734 = vmatpush1.bf16.msra.mxu0 0
    %3735 = vmatprep.subr.bf16.mxu0 0
    %3736 = vmatpush1.bf16.msra.mxu0 0
    %3737 = vmatprep.subr.bf16.mxu0 0
    %3738 = vmatpush1.bf16.msra.mxu0 0
    %3739 = vmatprep.mubr.bf16.mxu0 0
    %3740 = vmatmul.mubr.bf16.gmra.mrb[0].mxu0 %v3652
    %v3741 = vpop.f32.mrb[0].mxu0
    %v3742 = vadd.f32 0.0, %v3741
    %v3743 = vpop.f32.mrb[0].mxu0
    %v3744 = vadd.f32 0.0, %v3743
    %v3745 = vpop.f32.mrb[0].mxu0
    %v3746 = vpop.f32.mrb[0].mxu0
    %3747 = vdwg.mxu0
    %v3748 = vadd.f32 %v3625, %v3701
    %v3749 = vadd.f32 %v3626, %v3703
    %v3750 = vadd.f32 %v3627, %v3742
    %v3751 = vadd.f32 %v3628, %v3744
    %v3752 = vstv %s1559
    %v3753 = vmul.f32 %v3748, %v3752
    %v3754 = vmul.f32 %v3749, %v3752
    %v3755 = vmul.f32 %v3750, %v3752
    %v3756 = vmul.f32 %v3751, %v3752
    %v3757 = vstv %s1558
    %v3758 = vadd.f32 %v3753, %v3757
    %v3759 = vadd.f32 %v3754, %v3757
    %v3760 = vadd.f32 %v3755, %v3757
    %v3761 = vadd.f32 %v3756, %v3757
    %v3762 = vadd.f32 %v3758, %v1551
    %v3763 = vadd.f32 %v3759, %v1552
    %v3764 = vadd.f32 %v3760, %v1553
    %v3765 = vadd.f32 %v3761, %v1554
    %v3766 = vmax.f32 %v3762, 0.0
    %v3767 = vmax.f32 %v3763, 0.0
    %v3768 = vmax.f32 %v3764, 0.0
    %v3769 = vmax.f32 %v3765, 0.0
    %s3770 = sld [smem:[#allocation19 + $0x6]]
    %s3771 = sld [smem:[#allocation19 + $0x7]]
    %s3772 = sld [smem:[#allocation19 + $0x8]]
    %s3773 = sld [smem:[#allocation19 + $0x9]]
    %s3774 = sld [smem:[#allocation19 + $0xa]]
    %v3775 = vstv %s3770
    %v3776 = vadd.f32 %v3766, %v3775
    %v3777 = vadd.f32 %v3767, %v3775
    %v3778 = vadd.f32 %v3768, %v3775
    %v3779 = vadd.f32 %v3769, %v3775
    %3780 = vrot.lane.b32.xlu0 %v3776, 17
    %v3781 = vpop.permute.xlu0 %3780
    %3782 = vrot.lane.b32.xlu0 %v3777, 17
    %v3783 = vpop.permute.xlu0 %3782
    %3784 = vrot.lane.b32.xlu0 %v3778, 17
    %v3785 = vpop.permute.xlu0 %3784
    %3786 = vrot.lane.b32.xlu0 %v3779, 17
    %v3787 = vpop.permute.xlu0 %3786
    %v3788 = vsel %vm234, %v3785, %v3787
    %v3789 = vsel %vm234, %v3783, %v3785
    %v3790 = vsel %vm234, %v3781, %v3783
    %v3791 = vsel %vm234, %v3787, %v3781
    %v3792 = vsel %vm279, %v3791, 0.0
    %v3793 = vsel %vm280, %v3790, 0.0
    %v3794 = vsel %vm281, %v3789, 0.0
    %v3795 = vsel %vm282, %v3788, 0.0
    %v3796 = vpack.c.bf16 %v3792, %v3792
    %v3797 = vpack.c.bf16 %v3793, %v3793
    %v3798 = vpack.c.bf16 %v3794, %v3794
    %v3799 = vpack.c.bf16 %v3795, %v3795
    %v3800 = vld [vmem:[#allocation8] sm:$0xf]
    %3801 = vrot.lane.b32.xlu0 %v3776, 16
    %v3802 = vpop.permute.xlu0 %3801
    %3803 = vrot.lane.b32.xlu0 %v3777, 16
    %v3804 = vpop.permute.xlu0 %3803
    %3805 = vrot.lane.b32.xlu0 %v3778, 16
    %v3806 = vpop.permute.xlu0 %3805
    %3807 = vrot.lane.b32.xlu0 %v3779, 16
    %v3808 = vpop.permute.xlu0 %3807
    %v3809 = vsel %vm300, %v3806, %v3808
    %v3810 = vsel %vm300, %v3804, %v3806
    %v3811 = vsel %vm300, %v3802, %v3804
    %v3812 = vsel %vm300, %v3808, %v3802
    %v3813 = vsel %vm329, %v3812, 0.0
    %v3814 = vsel %vm330, %v3811, 0.0
    %v3815 = vsel %vm331, %v3810, 0.0
    %v3816 = vsel %vm332, %v3809, 0.0
    %v3817 = vpack.c.bf16 %v3813, %v3813
    %v3818 = vpack.c.bf16 %v3814, %v3814
    %v3819 = vpack.c.bf16 %v3815, %v3815
    %v3820 = vpack.c.bf16 %v3816, %v3816
    %s3821 = scalar_lea.vmem [#allocation8], 4
    %v3822 = vld [vmem:[%s3821] sm:$0xf]
    %v3824 = vsel %vm1608, %v3822, 0
    %v3827 = vsel %vm348, %v3817, 0
    %v3830 = vsel %vm348, %v3818, 0
    %v3833 = vsel %vm348, %v3819, 0
    %v3836 = vsel %vm348, %v3820, 0
    %3838 = vmatprep.subr.bf16.mxu0 %v3830
    %3839 = vmatpush1.bf16.msra.mxu0 %v3827
    %3840 = vmatprep.subr.bf16.mxu0 0
    %3841 = vmatpush1.bf16.msra.mxu0 0
    %3842 = vmatprep.subr.bf16.mxu0 0
    %3843 = vmatpush1.bf16.msra.mxu0 0
    %3844 = vmatprep.subr.bf16.mxu0 0
    %3845 = vmatpush1.bf16.msra.mxu0 0
    %3846 = vmatprep.subr.bf16.mxu0 0
    %3847 = vmatpush1.bf16.msra.mxu0 0
    %3848 = vmatprep.subr.bf16.mxu0 0
    %3849 = vmatpush1.bf16.msra.mxu0 0
    %3850 = vmatprep.subr.bf16.mxu0 0
    %3851 = vmatpush1.bf16.msra.mxu0 0
    %3852 = vmatprep.subr.bf16.mxu0 0
    %3853 = vmatpush1.bf16.msra.mxu0 0
    %3854 = vmatprep.subr.bf16.mxu0 0
    %3855 = vmatpush1.bf16.msra.mxu0 0
    %3856 = vmatprep.subr.bf16.mxu0 0
    %3857 = vmatpush1.bf16.msra.mxu0 0
    %3858 = vmatprep.subr.bf16.mxu0 0
    %3859 = vmatpush1.bf16.msra.mxu0 0
    %3860 = vmatprep.subr.bf16.mxu0 0
    %3861 = vmatpush1.bf16.msra.mxu0 0
    %3862 = vmatprep.subr.bf16.mxu0 0
    %3863 = vmatpush1.bf16.msra.mxu0 0
    %3864 = vmatprep.subr.bf16.mxu0 0
    %3865 = vmatpush1.bf16.msra.mxu0 0
    %3866 = vmatprep.subr.bf16.mxu0 0
    %3867 = vmatpush1.bf16.msra.mxu0 0
    %3868 = vmatprep.subr.bf16.mxu0 0
    %3869 = vmatpush1.bf16.msra.mxu0 0
    %3870 = vmatprep.mubr.bf16.mxu0 0
    %3871 = vmatmul.mubr.bf16.gmra.mrb[0].mxu0 %v3824
    %v3872 = vpop.f32.mrb[0].mxu0
    %v3873 = vadd.f32 0.0, %v3872
    %v3874 = vpop.f32.mrb[0].mxu0
    %v3875 = vadd.f32 0.0, %v3874
    %v3876 = vpop.f32.mrb[0].mxu0
    %v3877 = vpop.f32.mrb[0].mxu0
    %3878 = vdwg.mxu0
    %3879 = vmatprep.subr.bf16.mxu0 %v3836
    %3880 = vmatpush1.bf16.msra.mxu0 %v3833
    %3881 = vmatprep.subr.bf16.mxu0 0
    %3882 = vmatpush1.bf16.msra.mxu0 0
    %3883 = vmatprep.subr.bf16.mxu0 0
    %3884 = vmatpush1.bf16.msra.mxu0 0
    %3885 = vmatprep.subr.bf16.mxu0 0
    %3886 = vmatpush1.bf16.msra.mxu0 0
    %3887 = vmatprep.subr.bf16.mxu0 0
    %3888 = vmatpush1.bf16.msra.mxu0 0
    %3889 = vmatprep.subr.bf16.mxu0 0
    %3890 = vmatpush1.bf16.msra.mxu0 0
    %3891 = vmatprep.subr.bf16.mxu0 0
    %3892 = vmatpush1.bf16.msra.mxu0 0
    %3893 = vmatprep.subr.bf16.mxu0 0
    %3894 = vmatpush1.bf16.msra.mxu0 0
    %3895 = vmatprep.subr.bf16.mxu0 0
    %3896 = vmatpush1.bf16.msra.mxu0 0
    %3897 = vmatprep.subr.bf16.mxu0 0
    %3898 = vmatpush1.bf16.msra.mxu0 0
    %3899 = vmatprep.subr.bf16.mxu0 0
    %3900 = vmatpush1.bf16.msra.mxu0 0
    %3901 = vmatprep.subr.bf16.mxu0 0
    %3902 = vmatpush1.bf16.msra.mxu0 0
    %3903 = vmatprep.subr.bf16.mxu0 0
    %3904 = vmatpush1.bf16.msra.mxu0 0
    %3905 = vmatprep.subr.bf16.mxu0 0
    %3906 = vmatpush1.bf16.msra.mxu0 0
    %3907 = vmatprep.subr.bf16.mxu0 0
    %3908 = vmatpush1.bf16.msra.mxu0 0
    %3909 = vmatprep.subr.bf16.mxu0 0
    %3910 = vmatpush1.bf16.msra.mxu0 0
    %3911 = vmatprep.mubr.bf16.mxu0 0
    %3912 = vmatmul.mubr.bf16.gmra.mrb[0].mxu0 %v3824
    %v3913 = vpop.f32.mrb[0].mxu0
    %v3914 = vadd.f32 0.0, %v3913
    %v3915 = vpop.f32.mrb[0].mxu0
    %v3916 = vadd.f32 0.0, %v3915
    %v3917 = vpop.f32.mrb[0].mxu0
    %v3918 = vpop.f32.mrb[0].mxu0
    %3919 = vdwg.mxu0
    %v3921 = vsel %vm1608, %v3800, 0
    %v3924 = vsel %vm348, %v3796, 0
    %v3927 = vsel %vm348, %v3797, 0
    %v3930 = vsel %vm348, %v3798, 0
    %v3933 = vsel %vm348, %v3799, 0
    %3935 = vmatprep.subr.bf16.mxu0 %v3927
    %3936 = vmatpush1.bf16.msra.mxu0 %v3924
    %3937 = vmatprep.subr.bf16.mxu0 0
    %3938 = vmatpush1.bf16.msra.mxu0 0
    %3939 = vmatprep.subr.bf16.mxu0 0
    %3940 = vmatpush1.bf16.msra.mxu0 0
    %3941 = vmatprep.subr.bf16.mxu0 0
    %3942 = vmatpush1.bf16.msra.mxu0 0
    %3943 = vmatprep.subr.bf16.mxu0 0
    %3944 = vmatpush1.bf16.msra.mxu0 0
    %3945 = vmatprep.subr.bf16.mxu0 0
    %3946 = vmatpush1.bf16.msra.mxu0 0
    %3947 = vmatprep.subr.bf16.mxu0 0
    %3948 = vmatpush1.bf16.msra.mxu0 0
    %3949 = vmatprep.subr.bf16.mxu0 0
    %3950 = vmatpush1.bf16.msra.mxu0 0
    %3951 = vmatprep.subr.bf16.mxu0 0
    %3952 = vmatpush1.bf16.msra.mxu0 0
    %3953 = vmatprep.subr.bf16.mxu0 0
    %3954 = vmatpush1.bf16.msra.mxu0 0
    %3955 = vmatprep.subr.bf16.mxu0 0
    %3956 = vmatpush1.bf16.msra.mxu0 0
    %3957 = vmatprep.subr.bf16.mxu0 0
    %3958 = vmatpush1.bf16.msra.mxu0 0
    %3959 = vmatprep.subr.bf16.mxu0 0
    %3960 = vmatpush1.bf16.msra.mxu0 0
    %3961 = vmatprep.subr.bf16.mxu0 0
    %3962 = vmatpush1.bf16.msra.mxu0 0
    %3963 = vmatprep.subr.bf16.mxu0 0
    %3964 = vmatpush1.bf16.msra.mxu0 0
    %3965 = vmatprep.subr.bf16.mxu0 0
    %3966 = vmatpush1.bf16.msra.mxu0 0
    %3967 = vmatprep.mubr.bf16.mxu0 0
    %3968 = vmatmul.mubr.bf16.gmra.mrb[0].mxu0 %v3921
    %v3969 = vpop.f32.mrb[0].mxu0
    %v3970 = vadd.f32 %v3873, %v3969
    %v3971 = vpop.f32.mrb[0].mxu0
    %v3972 = vadd.f32 %v3875, %v3971
    %v3973 = vpop.f32.mrb[0].mxu0
    %v3974 = vpop.f32.mrb[0].mxu0
    %3975 = vdwg.mxu0
    %3976 = vmatprep.subr.bf16.mxu0 %v3933
    %3977 = vmatpush1.bf16.msra.mxu0 %v3930
    %3978 = vmatprep.subr.bf16.mxu0 0
    %3979 = vmatpush1.bf16.msra.mxu0 0
    %3980 = vmatprep.subr.bf16.mxu0 0
    %3981 = vmatpush1.bf16.msra.mxu0 0
    %3982 = vmatprep.subr.bf16.mxu0 0
    %3983 = vmatpush1.bf16.msra.mxu0 0
    %3984 = vmatprep.subr.bf16.mxu0 0
    %3985 = vmatpush1.bf16.msra.mxu0 0
    %3986 = vmatprep.subr.bf16.mxu0 0
    %3987 = vmatpush1.bf16.msra.mxu0 0
    %3988 = vmatprep.subr.bf16.mxu0 0
    %3989 = vmatpush1.bf16.msra.mxu0 0
    %3990 = vmatprep.subr.bf16.mxu0 0
    %3991 = vmatpush1.bf16.msra.mxu0 0
    %3992 = vmatprep.subr.bf16.mxu0 0
    %3993 = vmatpush1.bf16.msra.mxu0 0
    %3994 = vmatprep.subr.bf16.mxu0 0
    %3995 = vmatpush1.bf16.msra.mxu0 0
    %3996 = vmatprep.subr.bf16.mxu0 0
    %3997 = vmatpush1.bf16.msra.mxu0 0
    %3998 = vmatprep.subr.bf16.mxu0 0
    %3999 = vmatpush1.bf16.msra.mxu0 0
    %4000 = vmatprep.subr.bf16.mxu0 0
    %4001 = vmatpush1.bf16.msra.mxu0 0
    %4002 = vmatprep.subr.bf16.mxu0 0
    %4003 = vmatpush1.bf16.msra.mxu0 0
    %4004 = vmatprep.subr.bf16.mxu0 0
    %4005 = vmatpush1.bf16.msra.mxu0 0
    %4006 = vmatprep.subr.bf16.mxu0 0
    %4007 = vmatpush1.bf16.msra.mxu0 0
    %4008 = vmatprep.mubr.bf16.mxu0 0
    %4009 = vmatmul.mubr.bf16.gmra.mrb[0].mxu0 %v3921
    %v4010 = vpop.f32.mrb[0].mxu0
    %v4011 = vadd.f32 %v3914, %v4010
    %v4012 = vpop.f32.mrb[0].mxu0
    %v4013 = vadd.f32 %v3916, %v4012
    %v4014 = vpop.f32.mrb[0].mxu0
    %v4015 = vpop.f32.mrb[0].mxu0
    %4016 = vdwg.mxu0
    %4017 = vrot.lane.b32.xlu0 %v3776, 15
    %v4018 = vpop.permute.xlu0 %4017
    %4019 = vrot.lane.b32.xlu0 %v3777, 15
    %v4020 = vpop.permute.xlu0 %4019
    %4021 = vrot.lane.b32.xlu0 %v3778, 15
    %v4022 = vpop.permute.xlu0 %4021
    %4023 = vrot.lane.b32.xlu0 %v3779, 15
    %v4024 = vpop.permute.xlu0 %4023
    %v4025 = vsel %vm550, %v4022, %v4024
    %v4026 = vsel %vm550, %v4020, %v4022
    %v4027 = vsel %vm550, %v4018, %v4020
    %v4028 = vsel %vm550, %v4024, %v4018
    %v4029 = vsel %vm583, %v4028, 0.0
    %v4030 = vsel %vm584, %v4027, 0.0
    %v4031 = vsel %vm585, %v4026, 0.0
    %v4032 = vsel %vm586, %v4025, 0.0
    %v4033 = vpack.c.bf16 %v4029, %v4029
    %v4034 = vpack.c.bf16 %v4030, %v4030
    %v4035 = vpack.c.bf16 %v4031, %v4031
    %v4036 = vpack.c.bf16 %v4032, %v4032
    %s4037 = scalar_lea.vmem [#allocation8], 8
    %v4038 = vld [vmem:[%s4037] sm:$0xf]
    %v4040 = vsel %vm1608, %v4038, 0
    %v4043 = vsel %vm348, %v4033, 0
    %v4046 = vsel %vm348, %v4034, 0
    %v4049 = vsel %vm348, %v4035, 0
    %v4052 = vsel %vm348, %v4036, 0
    %4054 = vmatprep.subr.bf16.mxu0 %v4046
    %4055 = vmatpush1.bf16.msra.mxu0 %v4043
    %4056 = vmatprep.subr.bf16.mxu0 0
    %4057 = vmatpush1.bf16.msra.mxu0 0
    %4058 = vmatprep.subr.bf16.mxu0 0
    %4059 = vmatpush1.bf16.msra.mxu0 0
    %4060 = vmatprep.subr.bf16.mxu0 0
    %4061 = vmatpush1.bf16.msra.mxu0 0
    %4062 = vmatprep.subr.bf16.mxu0 0
    %4063 = vmatpush1.bf16.msra.mxu0 0
    %4064 = vmatprep.subr.bf16.mxu0 0
    %4065 = vmatpush1.bf16.msra.mxu0 0
    %4066 = vmatprep.subr.bf16.mxu0 0
    %4067 = vmatpush1.bf16.msra.mxu0 0
    %4068 = vmatprep.subr.bf16.mxu0 0
    %4069 = vmatpush1.bf16.msra.mxu0 0
    %4070 = vmatprep.subr.bf16.mxu0 0
    %4071 = vmatpush1.bf16.msra.mxu0 0
    %4072 = vmatprep.subr.bf16.mxu0 0
    %4073 = vmatpush1.bf16.msra.mxu0 0
    %4074 = vmatprep.subr.bf16.mxu0 0
    %4075 = vmatpush1.bf16.msra.mxu0 0
    %4076 = vmatprep.subr.bf16.mxu0 0
    %4077 = vmatpush1.bf16.msra.mxu0 0
    %4078 = vmatprep.subr.bf16.mxu0 0
    %4079 = vmatpush1.bf16.msra.mxu0 0
    %4080 = vmatprep.subr.bf16.mxu0 0
    %4081 = vmatpush1.bf16.msra.mxu0 0
    %4082 = vmatprep.subr.bf16.mxu0 0
    %4083 = vmatpush1.bf16.msra.mxu0 0
    %4084 = vmatprep.subr.bf16.mxu0 0
    %4085 = vmatpush1.bf16.msra.mxu0 0
    %4086 = vmatprep.mubr.bf16.mxu0 0
    %4087 = vmatmul.mubr.bf16.gmra.mrb[0].mxu0 %v4040
    %v4088 = vpop.f32.mrb[0].mxu0
    %v4089 = vadd.f32 0.0, %v4088
    %v4090 = vpop.f32.mrb[0].mxu0
    %v4091 = vadd.f32 0.0, %v4090
    %v4092 = vpop.f32.mrb[0].mxu0
    %v4093 = vpop.f32.mrb[0].mxu0
    %4094 = vdwg.mxu0
    %4095 = vmatprep.subr.bf16.mxu0 %v4052
    %4096 = vmatpush1.bf16.msra.mxu0 %v4049
    %4097 = vmatprep.subr.bf16.mxu0 0
    %4098 = vmatpush1.bf16.msra.mxu0 0
    %4099 = vmatprep.subr.bf16.mxu0 0
    %4100 = vmatpush1.bf16.msra.mxu0 0
    %4101 = vmatprep.subr.bf16.mxu0 0
    %4102 = vmatpush1.bf16.msra.mxu0 0
    %4103 = vmatprep.subr.bf16.mxu0 0
    %4104 = vmatpush1.bf16.msra.mxu0 0
    %4105 = vmatprep.subr.bf16.mxu0 0
    %4106 = vmatpush1.bf16.msra.mxu0 0
    %4107 = vmatprep.subr.bf16.mxu0 0
    %4108 = vmatpush1.bf16.msra.mxu0 0
    %4109 = vmatprep.subr.bf16.mxu0 0
    %4110 = vmatpush1.bf16.msra.mxu0 0
    %4111 = vmatprep.subr.bf16.mxu0 0
    %4112 = vmatpush1.bf16.msra.mxu0 0
    %4113 = vmatprep.subr.bf16.mxu0 0
    %4114 = vmatpush1.bf16.msra.mxu0 0
    %4115 = vmatprep.subr.bf16.mxu0 0
    %4116 = vmatpush1.bf16.msra.mxu0 0
    %4117 = vmatprep.subr.bf16.mxu0 0
    %4118 = vmatpush1.bf16.msra.mxu0 0
    %4119 = vmatprep.subr.bf16.mxu0 0
    %4120 = vmatpush1.bf16.msra.mxu0 0
    %4121 = vmatprep.subr.bf16.mxu0 0
    %4122 = vmatpush1.bf16.msra.mxu0 0
    %4123 = vmatprep.subr.bf16.mxu0 0
    %4124 = vmatpush1.bf16.msra.mxu0 0
    %4125 = vmatprep.subr.bf16.mxu0 0
    %4126 = vmatpush1.bf16.msra.mxu0 0
    %4127 = vmatprep.mubr.bf16.mxu0 0
    %4128 = vmatmul.mubr.bf16.gmra.mrb[0].mxu0 %v4040
    %v4129 = vpop.f32.mrb[0].mxu0
    %v4130 = vadd.f32 0.0, %v4129
    %v4131 = vpop.f32.mrb[0].mxu0
    %v4132 = vadd.f32 0.0, %v4131
    %v4133 = vpop.f32.mrb[0].mxu0
    %v4134 = vpop.f32.mrb[0].mxu0
    %4135 = vdwg.mxu0
    %v4136 = vadd.f32 %v3970, %v4089
    %v4137 = vadd.f32 %v3972, %v4091
    %v4138 = vadd.f32 %v4011, %v4130
    %v4139 = vadd.f32 %v4013, %v4132
    %4140 = vrot.lane.b32.xlu0 %v3776, 1
    %v4141 = vpop.permute.xlu0 %4140
    %4142 = vrot.lane.b32.xlu0 %v3777, 1
    %v4143 = vpop.permute.xlu0 %4142
    %4144 = vrot.lane.b32.xlu0 %v3778, 1
    %v4145 = vpop.permute.xlu0 %4144
    %4146 = vrot.lane.b32.xlu0 %v3779, 1
    %v4147 = vpop.permute.xlu0 %4146
    %v4148 = vsel %vm706, %v4145, %v4147
    %v4149 = vsel %vm706, %v4143, %v4145
    %v4150 = vsel %vm706, %v4141, %v4143
    %v4151 = vsel %vm706, %v4147, %v4141
    %v4152 = vsel %vm731, %v4151, 0.0
    %v4153 = vsel %vm732, %v4150, 0.0
    %v4154 = vsel %vm733, %v4149, 0.0
    %v4155 = vsel %vm734, %v4148, 0.0
    %v4156 = vpack.c.bf16 %v4152, %v4152
    %v4157 = vpack.c.bf16 %v4153, %v4153
    %v4158 = vpack.c.bf16 %v4154, %v4154
    %v4159 = vpack.c.bf16 %v4155, %v4155
    %s4160 = scalar_lea.vmem [#allocation8], 12
    %v4161 = vld [vmem:[%s4160] sm:$0xf]
    %v4163 = vsel %vm1608, %v4161, 0
    %v4166 = vsel %vm348, %v4156, 0
    %v4169 = vsel %vm348, %v4157, 0
    %v4172 = vsel %vm348, %v4158, 0
    %v4175 = vsel %vm348, %v4159, 0
    %4177 = vmatprep.subr.bf16.mxu0 %v4169
    %4178 = vmatpush1.bf16.msra.mxu0 %v4166
    %4179 = vmatprep.subr.bf16.mxu0 0
    %4180 = vmatpush1.bf16.msra.mxu0 0
    %4181 = vmatprep.subr.bf16.mxu0 0
    %4182 = vmatpush1.bf16.msra.mxu0 0
    %4183 = vmatprep.subr.bf16.mxu0 0
    %4184 = vmatpush1.bf16.msra.mxu0 0
    %4185 = vmatprep.subr.bf16.mxu0 0
    %4186 = vmatpush1.bf16.msra.mxu0 0
    %4187 = vmatprep.subr.bf16.mxu0 0
    %4188 = vmatpush1.bf16.msra.mxu0 0
    %4189 = vmatprep.subr.bf16.mxu0 0
    %4190 = vmatpush1.bf16.msra.mxu0 0
    %4191 = vmatprep.subr.bf16.mxu0 0
    %4192 = vmatpush1.bf16.msra.mxu0 0
    %4193 = vmatprep.subr.bf16.mxu0 0
    %4194 = vmatpush1.bf16.msra.mxu0 0
    %4195 = vmatprep.subr.bf16.mxu0 0
    %4196 = vmatpush1.bf16.msra.mxu0 0
    %4197 = vmatprep.subr.bf16.mxu0 0
    %4198 = vmatpush1.bf16.msra.mxu0 0
    %4199 = vmatprep.subr.bf16.mxu0 0
    %4200 = vmatpush1.bf16.msra.mxu0 0
    %4201 = vmatprep.subr.bf16.mxu0 0
    %4202 = vmatpush1.bf16.msra.mxu0 0
    %4203 = vmatprep.subr.bf16.mxu0 0
    %4204 = vmatpush1.bf16.msra.mxu0 0
    %4205 = vmatprep.subr.bf16.mxu0 0
    %4206 = vmatpush1.bf16.msra.mxu0 0
    %4207 = vmatprep.subr.bf16.mxu0 0
    %4208 = vmatpush1.bf16.msra.mxu0 0
    %4209 = vmatprep.mubr.bf16.mxu0 0
    %4210 = vmatmul.mubr.bf16.gmra.mrb[0].mxu0 %v4163
    %v4211 = vpop.f32.mrb[0].mxu0
    %v4212 = vadd.f32 0.0, %v4211
    %v4213 = vpop.f32.mrb[0].mxu0
    %v4214 = vadd.f32 0.0, %v4213
    %v4215 = vpop.f32.mrb[0].mxu0
    %v4216 = vpop.f32.mrb[0].mxu0
    %4217 = vdwg.mxu0
    %4218 = vmatprep.subr.bf16.mxu0 %v4175
    %4219 = vmatpush1.bf16.msra.mxu0 %v4172
    %4220 = vmatprep.subr.bf16.mxu0 0
    %4221 = vmatpush1.bf16.msra.mxu0 0
    %4222 = vmatprep.subr.bf16.mxu0 0
    %4223 = vmatpush1.bf16.msra.mxu0 0
    %4224 = vmatprep.subr.bf16.mxu0 0
    %4225 = vmatpush1.bf16.msra.mxu0 0
    %4226 = vmatprep.subr.bf16.mxu0 0
    %4227 = vmatpush1.bf16.msra.mxu0 0
    %4228 = vmatprep.subr.bf16.mxu0 0
    %4229 = vmatpush1.bf16.msra.mxu0 0
    %4230 = vmatprep.subr.bf16.mxu0 0
    %4231 = vmatpush1.bf16.msra.mxu0 0
    %4232 = vmatprep.subr.bf16.mxu0 0
    %4233 = vmatpush1.bf16.msra.mxu0 0
    %4234 = vmatprep.subr.bf16.mxu0 0
    %4235 = vmatpush1.bf16.msra.mxu0 0
    %4236 = vmatprep.subr.bf16.mxu0 0
    %4237 = vmatpush1.bf16.msra.mxu0 0
    %4238 = vmatprep.subr.bf16.mxu0 0
    %4239 = vmatpush1.bf16.msra.mxu0 0
    %4240 = vmatprep.subr.bf16.mxu0 0
    %4241 = vmatpush1.bf16.msra.mxu0 0
    %4242 = vmatprep.subr.bf16.mxu0 0
    %4243 = vmatpush1.bf16.msra.mxu0 0
    %4244 = vmatprep.subr.bf16.mxu0 0
    %4245 = vmatpush1.bf16.msra.mxu0 0
    %4246 = vmatprep.subr.bf16.mxu0 0
    %4247 = vmatpush1.bf16.msra.mxu0 0
    %4248 = vmatprep.subr.bf16.mxu0 0
    %4249 = vmatpush1.bf16.msra.mxu0 0
    %4250 = vmatprep.mubr.bf16.mxu0 0
    %4251 = vmatmul.mubr.bf16.gmra.mrb[0].mxu0 %v4163
    %v4252 = vpop.f32.mrb[0].mxu0
    %v4253 = vadd.f32 0.0, %v4252
    %v4254 = vpop.f32.mrb[0].mxu0
    %v4255 = vadd.f32 0.0, %v4254
    %v4256 = vpop.f32.mrb[0].mxu0
    %v4257 = vpop.f32.mrb[0].mxu0
    %4258 = vdwg.mxu0
    %v4259 = vadd.f32 %v4136, %v4212
    %v4260 = vadd.f32 %v4137, %v4214
    %v4261 = vadd.f32 %v4138, %v4253
    %v4262 = vadd.f32 %v4139, %v4255
    %v4263 = vsel %vm858, %v3776, 0.0
    %v4264 = vsel %vm859, %v3777, 0.0
    %v4265 = vsel %vm860, %v3778, 0.0
    %v4266 = vsel %vm861, %v3779, 0.0
    %v4267 = vpack.c.bf16 %v4263, %v4263
    %v4268 = vpack.c.bf16 %v4264, %v4264
    %v4269 = vpack.c.bf16 %v4265, %v4265
    %v4270 = vpack.c.bf16 %v4266, %v4266
    %s4271 = scalar_lea.vmem [#allocation8], 16
    %v4272 = vld [vmem:[%s4271] sm:$0xf]
    %v4274 = vsel %vm1608, %v4272, 0
    %v4277 = vsel %vm348, %v4267, 0
    %v4280 = vsel %vm348, %v4268, 0
    %v4283 = vsel %vm348, %v4269, 0
    %v4286 = vsel %vm348, %v4270, 0
    %4288 = vmatprep.subr.bf16.mxu0 %v4280
    %4289 = vmatpush1.bf16.msra.mxu0 %v4277
    %4290 = vmatprep.subr.bf16.mxu0 0
    %4291 = vmatpush1.bf16.msra.mxu0 0
    %4292 = vmatprep.subr.bf16.mxu0 0
    %4293 = vmatpush1.bf16.msra.mxu0 0
    %4294 = vmatprep.subr.bf16.mxu0 0
    %4295 = vmatpush1.bf16.msra.mxu0 0
    %4296 = vmatprep.subr.bf16.mxu0 0
    %4297 = vmatpush1.bf16.msra.mxu0 0
    %4298 = vmatprep.subr.bf16.mxu0 0
    %4299 = vmatpush1.bf16.msra.mxu0 0
    %4300 = vmatprep.subr.bf16.mxu0 0
    %4301 = vmatpush1.bf16.msra.mxu0 0
    %4302 = vmatprep.subr.bf16.mxu0 0
    %4303 = vmatpush1.bf16.msra.mxu0 0
    %4304 = vmatprep.subr.bf16.mxu0 0
    %4305 = vmatpush1.bf16.msra.mxu0 0
    %4306 = vmatprep.subr.bf16.mxu0 0
    %4307 = vmatpush1.bf16.msra.mxu0 0
    %4308 = vmatprep.subr.bf16.mxu0 0
    %4309 = vmatpush1.bf16.msra.mxu0 0
    %4310 = vmatprep.subr.bf16.mxu0 0
    %4311 = vmatpush1.bf16.msra.mxu0 0
    %4312 = vmatprep.subr.bf16.mxu0 0
    %4313 = vmatpush1.bf16.msra.mxu0 0
    %4314 = vmatprep.subr.bf16.mxu0 0
    %4315 = vmatpush1.bf16.msra.mxu0 0
    %4316 = vmatprep.subr.bf16.mxu0 0
    %4317 = vmatpush1.bf16.msra.mxu0 0
    %4318 = vmatprep.subr.bf16.mxu0 0
    %4319 = vmatpush1.bf16.msra.mxu0 0
    %4320 = vmatprep.mubr.bf16.mxu0 0
    %4321 = vmatmul.mubr.bf16.gmra.mrb[0].mxu0 %v4274
    %v4322 = vpop.f32.mrb[0].mxu0
    %v4323 = vadd.f32 0.0, %v4322
    %v4324 = vpop.f32.mrb[0].mxu0
    %v4325 = vadd.f32 0.0, %v4324
    %v4326 = vpop.f32.mrb[0].mxu0
    %v4327 = vpop.f32.mrb[0].mxu0
    %4328 = vdwg.mxu0
    %4329 = vmatprep.subr.bf16.mxu0 %v4286
    %4330 = vmatpush1.bf16.msra.mxu0 %v4283
    %4331 = vmatprep.subr.bf16.mxu0 0
    %4332 = vmatpush1.bf16.msra.mxu0 0
    %4333 = vmatprep.subr.bf16.mxu0 0
    %4334 = vmatpush1.bf16.msra.mxu0 0
    %4335 = vmatprep.subr.bf16.mxu0 0
    %4336 = vmatpush1.bf16.msra.mxu0 0
    %4337 = vmatprep.subr.bf16.mxu0 0
    %4338 = vmatpush1.bf16.msra.mxu0 0
    %4339 = vmatprep.subr.bf16.mxu0 0
    %4340 = vmatpush1.bf16.msra.mxu0 0
    %4341 = vmatprep.subr.bf16.mxu0 0
    %4342 = vmatpush1.bf16.msra.mxu0 0
    %4343 = vmatprep.subr.bf16.mxu0 0
    %4344 = vmatpush1.bf16.msra.mxu0 0
    %4345 = vmatprep.subr.bf16.mxu0 0
    %4346 = vmatpush1.bf16.msra.mxu0 0
    %4347 = vmatprep.subr.bf16.mxu0 0
    %4348 = vmatpush1.bf16.msra.mxu0 0
    %4349 = vmatprep.subr.bf16.mxu0 0
    %4350 = vmatpush1.bf16.msra.mxu0 0
    %4351 = vmatprep.subr.bf16.mxu0 0
    %4352 = vmatpush1.bf16.msra.mxu0 0
    %4353 = vmatprep.subr.bf16.mxu0 0
    %4354 = vmatpush1.bf16.msra.mxu0 0
    %4355 = vmatprep.subr.bf16.mxu0 0
    %4356 = vmatpush1.bf16.msra.mxu0 0
    %4357 = vmatprep.subr.bf16.mxu0 0
    %4358 = vmatpush1.bf16.msra.mxu0 0
    %4359 = vmatprep.subr.bf16.mxu0 0
    %4360 = vmatpush1.bf16.msra.mxu0 0
    %4361 = vmatprep.mubr.bf16.mxu0 0
    %4362 = vmatmul.mubr.bf16.gmra.mrb[0].mxu0 %v4274
    %v4363 = vpop.f32.mrb[0].mxu0
    %v4364 = vadd.f32 0.0, %v4363
    %v4365 = vpop.f32.mrb[0].mxu0
    %v4366 = vadd.f32 0.0, %v4365
    %v4367 = vpop.f32.mrb[0].mxu0
    %v4368 = vpop.f32.mrb[0].mxu0
    %4369 = vdwg.mxu0
    %v4370 = vadd.f32 %v4259, %v4323
    %v4371 = vadd.f32 %v4260, %v4325
    %v4372 = vadd.f32 %v4261, %v4364
    %v4373 = vadd.f32 %v4262, %v4366
    %4374 = vrot.lane.b32.xlu0 %v3776, 127
    %v4375 = vpop.permute.xlu0 %4374
    %4376 = vrot.lane.b32.xlu0 %v3777, 127
    %v4377 = vpop.permute.xlu0 %4376
    %4378 = vrot.lane.b32.xlu0 %v3778, 127
    %v4379 = vpop.permute.xlu0 %4378
    %4380 = vrot.lane.b32.xlu0 %v3779, 127
    %v4381 = vpop.permute.xlu0 %4380
    %v4382 = vsel %vm981, %v4379, %v4381
    %v4383 = vsel %vm981, %v4377, %v4379
    %v4384 = vsel %vm981, %v4375, %v4377
    %v4385 = vsel %vm981, %v4381, %v4375
    %v4386 = vsel %vm998, %v4384, 0.0
    %v4387 = vsel %vm999, %v4383, 0.0
    %v4388 = vsel %vm1000, %v4382, 0.0
    %v4389 = vsel %vm1001, %v4385, 0.0
    %v4390 = vpack.c.bf16 %v4386, %v4386
    %v4391 = vpack.c.bf16 %v4387, %v4387
    %v4392 = vpack.c.bf16 %v4388, %v4388
    %v4393 = vpack.c.bf16 %v4389, %v4389
    %s4394 = scalar_lea.vmem [#allocation8], 20
    %v4395 = vld [vmem:[%s4394] sm:$0xf]
    %v4397 = vsel %vm1608, %v4395, 0
    %v4400 = vsel %vm348, %v4390, 0
    %v4403 = vsel %vm348, %v4391, 0
    %v4406 = vsel %vm348, %v4392, 0
    %v4409 = vsel %vm348, %v4393, 0
    %4411 = vmatprep.subr.bf16.mxu0 %v4403
    %4412 = vmatpush1.bf16.msra.mxu0 %v4400
    %4413 = vmatprep.subr.bf16.mxu0 0
    %4414 = vmatpush1.bf16.msra.mxu0 0
    %4415 = vmatprep.subr.bf16.mxu0 0
    %4416 = vmatpush1.bf16.msra.mxu0 0
    %4417 = vmatprep.subr.bf16.mxu0 0
    %4418 = vmatpush1.bf16.msra.mxu0 0
    %4419 = vmatprep.subr.bf16.mxu0 0
    %4420 = vmatpush1.bf16.msra.mxu0 0
    %4421 = vmatprep.subr.bf16.mxu0 0
    %4422 = vmatpush1.bf16.msra.mxu0 0
    %4423 = vmatprep.subr.bf16.mxu0 0
    %4424 = vmatpush1.bf16.msra.mxu0 0
    %4425 = vmatprep.subr.bf16.mxu0 0
    %4426 = vmatpush1.bf16.msra.mxu0 0
    %4427 = vmatprep.subr.bf16.mxu0 0
    %4428 = vmatpush1.bf16.msra.mxu0 0
    %4429 = vmatprep.subr.bf16.mxu0 0
    %4430 = vmatpush1.bf16.msra.mxu0 0
    %4431 = vmatprep.subr.bf16.mxu0 0
    %4432 = vmatpush1.bf16.msra.mxu0 0
    %4433 = vmatprep.subr.bf16.mxu0 0
    %4434 = vmatpush1.bf16.msra.mxu0 0
    %4435 = vmatprep.subr.bf16.mxu0 0
    %4436 = vmatpush1.bf16.msra.mxu0 0
    %4437 = vmatprep.subr.bf16.mxu0 0
    %4438 = vmatpush1.bf16.msra.mxu0 0
    %4439 = vmatprep.subr.bf16.mxu0 0
    %4440 = vmatpush1.bf16.msra.mxu0 0
    %4441 = vmatprep.subr.bf16.mxu0 0
    %4442 = vmatpush1.bf16.msra.mxu0 0
    %4443 = vmatprep.mubr.bf16.mxu0 0
    %4444 = vmatmul.mubr.bf16.gmra.mrb[0].mxu0 %v4397
    %v4445 = vpop.f32.mrb[0].mxu0
    %v4446 = vadd.f32 0.0, %v4445
    %v4447 = vpop.f32.mrb[0].mxu0
    %v4448 = vadd.f32 0.0, %v4447
    %v4449 = vpop.f32.mrb[0].mxu0
    %v4450 = vpop.f32.mrb[0].mxu0
    %4451 = vdwg.mxu0
    %4452 = vmatprep.subr.bf16.mxu0 %v4409
    %4453 = vmatpush1.bf16.msra.mxu0 %v4406
    %4454 = vmatprep.subr.bf16.mxu0 0
    %4455 = vmatpush1.bf16.msra.mxu0 0
    %4456 = vmatprep.subr.bf16.mxu0 0
    %4457 = vmatpush1.bf16.msra.mxu0 0
    %4458 = vmatprep.subr.bf16.mxu0 0
    %4459 = vmatpush1.bf16.msra.mxu0 0
    %4460 = vmatprep.subr.bf16.mxu0 0
    %4461 = vmatpush1.bf16.msra.mxu0 0
    %4462 = vmatprep.subr.bf16.mxu0 0
    %4463 = vmatpush1.bf16.msra.mxu0 0
    %4464 = vmatprep.subr.bf16.mxu0 0
    %4465 = vmatpush1.bf16.msra.mxu0 0
    %4466 = vmatprep.subr.bf16.mxu0 0
    %4467 = vmatpush1.bf16.msra.mxu0 0
    %4468 = vmatprep.subr.bf16.mxu0 0
    %4469 = vmatpush1.bf16.msra.mxu0 0
    %4470 = vmatprep.subr.bf16.mxu0 0
    %4471 = vmatpush1.bf16.msra.mxu0 0
    %4472 = vmatprep.subr.bf16.mxu0 0
    %4473 = vmatpush1.bf16.msra.mxu0 0
    %4474 = vmatprep.subr.bf16.mxu0 0
    %4475 = vmatpush1.bf16.msra.mxu0 0
    %4476 = vmatprep.subr.bf16.mxu0 0
    %4477 = vmatpush1.bf16.msra.mxu0 0
    %4478 = vmatprep.subr.bf16.mxu0 0
    %4479 = vmatpush1.bf16.msra.mxu0 0
    %4480 = vmatprep.subr.bf16.mxu0 0
    %4481 = vmatpush1.bf16.msra.mxu0 0
    %4482 = vmatprep.subr.bf16.mxu0 0
    %4483 = vmatpush1.bf16.msra.mxu0 0
    %4484 = vmatprep.mubr.bf16.mxu0 0
    %4485 = vmatmul.mubr.bf16.gmra.mrb[0].mxu0 %v4397
    %v4486 = vpop.f32.mrb[0].mxu0
    %v4487 = vadd.f32 0.0, %v4486
    %v4488 = vpop.f32.mrb[0].mxu0
    %v4489 = vadd.f32 0.0, %v4488
    %v4490 = vpop.f32.mrb[0].mxu0
    %v4491 = vpop.f32.mrb[0].mxu0
    %4492 = vdwg.mxu0
    %v4493 = vadd.f32 %v4370, %v4446
    %v4494 = vadd.f32 %v4371, %v4448
    %v4495 = vadd.f32 %v4372, %v4487
    %v4496 = vadd.f32 %v4373, %v4489
    %4497 = vrot.lane.b32.xlu0 %v3776, 113
    %v4498 = vpop.permute.xlu0 %4497
    %4499 = vrot.lane.b32.xlu0 %v3777, 113
    %v4500 = vpop.permute.xlu0 %4499
    %4501 = vrot.lane.b32.xlu0 %v3778, 113
    %v4502 = vpop.permute.xlu0 %4501
    %4503 = vrot.lane.b32.xlu0 %v3779, 113
    %v4504 = vpop.permute.xlu0 %4503
    %v4505 = vsel %vm1121, %v4502, %v4504
    %v4506 = vsel %vm1121, %v4500, %v4502
    %v4507 = vsel %vm1121, %v4498, %v4500
    %v4508 = vsel %vm1121, %v4504, %v4498
    %v4509 = vsel %vm1150, %v4507, 0.0
    %v4510 = vsel %vm1151, %v4506, 0.0
    %v4511 = vsel %vm1152, %v4505, 0.0
    %v4512 = vsel %vm1153, %v4508, 0.0
    %v4513 = vpack.c.bf16 %v4509, %v4509
    %v4514 = vpack.c.bf16 %v4510, %v4510
    %v4515 = vpack.c.bf16 %v4511, %v4511
    %v4516 = vpack.c.bf16 %v4512, %v4512
    %s4517 = scalar_lea.vmem [#allocation8], 24
    %v4518 = vld [vmem:[%s4517] sm:$0xf]
    %v4520 = vsel %vm1608, %v4518, 0
    %v4523 = vsel %vm348, %v4513, 0
    %v4526 = vsel %vm348, %v4514, 0
    %v4529 = vsel %vm348, %v4515, 0
    %v4532 = vsel %vm348, %v4516, 0
    %4534 = vmatprep.subr.bf16.mxu0 %v4526
    %4535 = vmatpush1.bf16.msra.mxu0 %v4523
    %4536 = vmatprep.subr.bf16.mxu0 0
    %4537 = vmatpush1.bf16.msra.mxu0 0
    %4538 = vmatprep.subr.bf16.mxu0 0
    %4539 = vmatpush1.bf16.msra.mxu0 0
    %4540 = vmatprep.subr.bf16.mxu0 0
    %4541 = vmatpush1.bf16.msra.mxu0 0
    %4542 = vmatprep.subr.bf16.mxu0 0
    %4543 = vmatpush1.bf16.msra.mxu0 0
    %4544 = vmatprep.subr.bf16.mxu0 0
    %4545 = vmatpush1.bf16.msra.mxu0 0
    %4546 = vmatprep.subr.bf16.mxu0 0
    %4547 = vmatpush1.bf16.msra.mxu0 0
    %4548 = vmatprep.subr.bf16.mxu0 0
    %4549 = vmatpush1.bf16.msra.mxu0 0
    %4550 = vmatprep.subr.bf16.mxu0 0
    %4551 = vmatpush1.bf16.msra.mxu0 0
    %4552 = vmatprep.subr.bf16.mxu0 0
    %4553 = vmatpush1.bf16.msra.mxu0 0
    %4554 = vmatprep.subr.bf16.mxu0 0
    %4555 = vmatpush1.bf16.msra.mxu0 0
    %4556 = vmatprep.subr.bf16.mxu0 0
    %4557 = vmatpush1.bf16.msra.mxu0 0
    %4558 = vmatprep.subr.bf16.mxu0 0
    %4559 = vmatpush1.bf16.msra.mxu0 0
    %4560 = vmatprep.subr.bf16.mxu0 0
    %4561 = vmatpush1.bf16.msra.mxu0 0
    %4562 = vmatprep.subr.bf16.mxu0 0
    %4563 = vmatpush1.bf16.msra.mxu0 0
    %4564 = vmatprep.subr.bf16.mxu0 0
    %4565 = vmatpush1.bf16.msra.mxu0 0
    %4566 = vmatprep.mubr.bf16.mxu0 0
    %4567 = vmatmul.mubr.bf16.gmra.mrb[0].mxu0 %v4520
    %v4568 = vpop.f32.mrb[0].mxu0
    %v4569 = vadd.f32 0.0, %v4568
    %v4570 = vpop.f32.mrb[0].mxu0
    %v4571 = vadd.f32 0.0, %v4570
    %v4572 = vpop.f32.mrb[0].mxu0
    %v4573 = vpop.f32.mrb[0].mxu0
    %4574 = vdwg.mxu0
    %4575 = vmatprep.subr.bf16.mxu0 %v4532
    %4576 = vmatpush1.bf16.msra.mxu0 %v4529
    %4577 = vmatprep.subr.bf16.mxu0 0
    %4578 = vmatpush1.bf16.msra.mxu0 0
    %4579 = vmatprep.subr.bf16.mxu0 0
    %4580 = vmatpush1.bf16.msra.mxu0 0
    %4581 = vmatprep.subr.bf16.mxu0 0
    %4582 = vmatpush1.bf16.msra.mxu0 0
    %4583 = vmatprep.subr.bf16.mxu0 0
    %4584 = vmatpush1.bf16.msra.mxu0 0
    %4585 = vmatprep.subr.bf16.mxu0 0
    %4586 = vmatpush1.bf16.msra.mxu0 0
    %4587 = vmatprep.subr.bf16.mxu0 0
    %4588 = vmatpush1.bf16.msra.mxu0 0
    %4589 = vmatprep.subr.bf16.mxu0 0
    %4590 = vmatpush1.bf16.msra.mxu0 0
    %4591 = vmatprep.subr.bf16.mxu0 0
    %4592 = vmatpush1.bf16.msra.mxu0 0
    %4593 = vmatprep.subr.bf16.mxu0 0
    %4594 = vmatpush1.bf16.msra.mxu0 0
    %4595 = vmatprep.subr.bf16.mxu0 0
    %4596 = vmatpush1.bf16.msra.mxu0 0
    %4597 = vmatprep.subr.bf16.mxu0 0
    %4598 = vmatpush1.bf16.msra.mxu0 0
    %4599 = vmatprep.subr.bf16.mxu0 0
    %4600 = vmatpush1.bf16.msra.mxu0 0
    %4601 = vmatprep.subr.bf16.mxu0 0
    %4602 = vmatpush1.bf16.msra.mxu0 0
    %4603 = vmatprep.subr.bf16.mxu0 0
    %4604 = vmatpush1.bf16.msra.mxu0 0
    %4605 = vmatprep.subr.bf16.mxu0 0
    %4606 = vmatpush1.bf16.msra.mxu0 0
    %4607 = vmatprep.mubr.bf16.mxu0 0
    %4608 = vmatmul.mubr.bf16.gmra.mrb[0].mxu0 %v4520
    %v4609 = vpop.f32.mrb[0].mxu0
    %v4610 = vadd.f32 0.0, %v4609
    %v4611 = vpop.f32.mrb[0].mxu0
    %v4612 = vadd.f32 0.0, %v4611
    %v4613 = vpop.f32.mrb[0].mxu0
    %v4614 = vpop.f32.mrb[0].mxu0
    %4615 = vdwg.mxu0
    %v4616 = vadd.f32 %v4493, %v4569
    %v4617 = vadd.f32 %v4494, %v4571
    %v4618 = vadd.f32 %v4495, %v4610
    %v4619 = vadd.f32 %v4496, %v4612
    %4620 = vrot.lane.b32.xlu0 %v3776, 112
    %v4621 = vpop.permute.xlu0 %4620
    %4622 = vrot.lane.b32.xlu0 %v3777, 112
    %v4623 = vpop.permute.xlu0 %4622
    %4624 = vrot.lane.b32.xlu0 %v3778, 112
    %v4625 = vpop.permute.xlu0 %4624
    %4626 = vrot.lane.b32.xlu0 %v3779, 112
    %v4627 = vpop.permute.xlu0 %4626
    %v4628 = vsel %vm1273, %v4625, %v4627
    %v4629 = vsel %vm1273, %v4623, %v4625
    %v4630 = vsel %vm1273, %v4621, %v4623
    %v4631 = vsel %vm1273, %v4627, %v4621
    %v4632 = vsel %vm1290, %v4630, 0.0
    %v4633 = vsel %vm1291, %v4629, 0.0
    %v4634 = vsel %vm1292, %v4628, 0.0
    %v4635 = vsel %vm1293, %v4631, 0.0
    %v4636 = vpack.c.bf16 %v4632, %v4632
    %v4637 = vpack.c.bf16 %v4633, %v4633
    %v4638 = vpack.c.bf16 %v4634, %v4634
    %v4639 = vpack.c.bf16 %v4635, %v4635
    %s4640 = scalar_lea.vmem [#allocation8], 28
    %v4641 = vld [vmem:[%s4640] sm:$0xf]
    %v4643 = vsel %vm1608, %v4641, 0
    %v4646 = vsel %vm348, %v4636, 0
    %v4649 = vsel %vm348, %v4637, 0
    %v4652 = vsel %vm348, %v4638, 0
    %v4655 = vsel %vm348, %v4639, 0
    %4657 = vmatprep.subr.bf16.mxu0 %v4649
    %4658 = vmatpush1.bf16.msra.mxu0 %v4646
    %4659 = vmatprep.subr.bf16.mxu0 0
    %4660 = vmatpush1.bf16.msra.mxu0 0
    %4661 = vmatprep.subr.bf16.mxu0 0
    %4662 = vmatpush1.bf16.msra.mxu0 0
    %4663 = vmatprep.subr.bf16.mxu0 0
    %4664 = vmatpush1.bf16.msra.mxu0 0
    %4665 = vmatprep.subr.bf16.mxu0 0
    %4666 = vmatpush1.bf16.msra.mxu0 0
    %4667 = vmatprep.subr.bf16.mxu0 0
    %4668 = vmatpush1.bf16.msra.mxu0 0
    %4669 = vmatprep.subr.bf16.mxu0 0
    %4670 = vmatpush1.bf16.msra.mxu0 0
    %4671 = vmatprep.subr.bf16.mxu0 0
    %4672 = vmatpush1.bf16.msra.mxu0 0
    %4673 = vmatprep.subr.bf16.mxu0 0
    %4674 = vmatpush1.bf16.msra.mxu0 0
    %4675 = vmatprep.subr.bf16.mxu0 0
    %4676 = vmatpush1.bf16.msra.mxu0 0
    %4677 = vmatprep.subr.bf16.mxu0 0
    %4678 = vmatpush1.bf16.msra.mxu0 0
    %4679 = vmatprep.subr.bf16.mxu0 0
    %4680 = vmatpush1.bf16.msra.mxu0 0
    %4681 = vmatprep.subr.bf16.mxu0 0
    %4682 = vmatpush1.bf16.msra.mxu0 0
    %4683 = vmatprep.subr.bf16.mxu0 0
    %4684 = vmatpush1.bf16.msra.mxu0 0
    %4685 = vmatprep.subr.bf16.mxu0 0
    %4686 = vmatpush1.bf16.msra.mxu0 0
    %4687 = vmatprep.subr.bf16.mxu0 0
    %4688 = vmatpush1.bf16.msra.mxu0 0
    %4689 = vmatprep.mubr.bf16.mxu0 0
    %4690 = vmatmul.mubr.bf16.gmra.mrb[0].mxu0 %v4643
    %v4691 = vpop.f32.mrb[0].mxu0
    %v4692 = vadd.f32 0.0, %v4691
    %v4693 = vpop.f32.mrb[0].mxu0
    %v4694 = vadd.f32 0.0, %v4693
    %v4695 = vpop.f32.mrb[0].mxu0
    %v4696 = vpop.f32.mrb[0].mxu0
    %4697 = vdwg.mxu0
    %4698 = vmatprep.subr.bf16.mxu0 %v4655
    %4699 = vmatpush1.bf16.msra.mxu0 %v4652
    %4700 = vmatprep.subr.bf16.mxu0 0
    %4701 = vmatpush1.bf16.msra.mxu0 0
    %4702 = vmatprep.subr.bf16.mxu0 0
    %4703 = vmatpush1.bf16.msra.mxu0 0
    %4704 = vmatprep.subr.bf16.mxu0 0
    %4705 = vmatpush1.bf16.msra.mxu0 0
    %4706 = vmatprep.subr.bf16.mxu0 0
    %4707 = vmatpush1.bf16.msra.mxu0 0
    %4708 = vmatprep.subr.bf16.mxu0 0
    %4709 = vmatpush1.bf16.msra.mxu0 0
    %4710 = vmatprep.subr.bf16.mxu0 0
    %4711 = vmatpush1.bf16.msra.mxu0 0
    %4712 = vmatprep.subr.bf16.mxu0 0
    %4713 = vmatpush1.bf16.msra.mxu0 0
    %4714 = vmatprep.subr.bf16.mxu0 0
    %4715 = vmatpush1.bf16.msra.mxu0 0
    %4716 = vmatprep.subr.bf16.mxu0 0
    %4717 = vmatpush1.bf16.msra.mxu0 0
    %4718 = vmatprep.subr.bf16.mxu0 0
    %4719 = vmatpush1.bf16.msra.mxu0 0
    %4720 = vmatprep.subr.bf16.mxu0 0
    %4721 = vmatpush1.bf16.msra.mxu0 0
    %4722 = vmatprep.subr.bf16.mxu0 0
    %4723 = vmatpush1.bf16.msra.mxu0 0
    %4724 = vmatprep.subr.bf16.mxu0 0
    %4725 = vmatpush1.bf16.msra.mxu0 0
    %4726 = vmatprep.subr.bf16.mxu0 0
    %4727 = vmatpush1.bf16.msra.mxu0 0
    %4728 = vmatprep.subr.bf16.mxu0 0
    %4729 = vmatpush1.bf16.msra.mxu0 0
    %4730 = vmatprep.mubr.bf16.mxu0 0
    %4731 = vmatmul.mubr.bf16.gmra.mrb[0].mxu0 %v4643
    %v4732 = vpop.f32.mrb[0].mxu0
    %v4733 = vadd.f32 0.0, %v4732
    %v4734 = vpop.f32.mrb[0].mxu0
    %v4735 = vadd.f32 0.0, %v4734
    %v4736 = vpop.f32.mrb[0].mxu0
    %v4737 = vpop.f32.mrb[0].mxu0
    %4738 = vdwg.mxu0
    %v4739 = vadd.f32 %v4616, %v4692
    %v4740 = vadd.f32 %v4617, %v4694
    %v4741 = vadd.f32 %v4618, %v4733
    %v4742 = vadd.f32 %v4619, %v4735
    %4743 = vrot.lane.b32.xlu0 %v3776, 111
    %v4744 = vpop.permute.xlu0 %4743
    %4745 = vrot.lane.b32.xlu0 %v3777, 111
    %v4746 = vpop.permute.xlu0 %4745
    %4747 = vrot.lane.b32.xlu0 %v3778, 111
    %v4748 = vpop.permute.xlu0 %4747
    %4749 = vrot.lane.b32.xlu0 %v3779, 111
    %v4750 = vpop.permute.xlu0 %4749
    %v4751 = vsel %vm1413, %v4748, %v4750
    %v4752 = vsel %vm1413, %v4746, %v4748
    %v4753 = vsel %vm1413, %v4744, %v4746
    %v4754 = vsel %vm1413, %v4750, %v4744
    %v4755 = vsel %vm1430, %v4753, 0.0
    %v4756 = vsel %vm1431, %v4752, 0.0
    %v4757 = vsel %vm1432, %v4751, 0.0
    %v4758 = vsel %vm1433, %v4754, 0.0
    %v4759 = vpack.c.bf16 %v4755, %v4755
    %v4760 = vpack.c.bf16 %v4756, %v4756
    %v4761 = vpack.c.bf16 %v4757, %v4757
    %v4762 = vpack.c.bf16 %v4758, %v4758
    %s4763 = scalar_lea.vmem [#allocation8], 32
    %v4764 = vld [vmem:[%s4763] sm:$0xf]
    %v4766 = vsel %vm1608, %v4764, 0
    %v4769 = vsel %vm348, %v4759, 0
    %v4772 = vsel %vm348, %v4760, 0
    %v4775 = vsel %vm348, %v4761, 0
    %v4778 = vsel %vm348, %v4762, 0
    %4780 = vmatprep.subr.bf16.mxu0 %v4772
    %4781 = vmatpush1.bf16.msra.mxu0 %v4769
    %4782 = vmatprep.subr.bf16.mxu0 0
    %4783 = vmatpush1.bf16.msra.mxu0 0
    %4784 = vmatprep.subr.bf16.mxu0 0
    %4785 = vmatpush1.bf16.msra.mxu0 0
    %4786 = vmatprep.subr.bf16.mxu0 0
    %4787 = vmatpush1.bf16.msra.mxu0 0
    %4788 = vmatprep.subr.bf16.mxu0 0
    %4789 = vmatpush1.bf16.msra.mxu0 0
    %4790 = vmatprep.subr.bf16.mxu0 0
    %4791 = vmatpush1.bf16.msra.mxu0 0
    %4792 = vmatprep.subr.bf16.mxu0 0
    %4793 = vmatpush1.bf16.msra.mxu0 0
    %4794 = vmatprep.subr.bf16.mxu0 0
    %4795 = vmatpush1.bf16.msra.mxu0 0
    %4796 = vmatprep.subr.bf16.mxu0 0
    %4797 = vmatpush1.bf16.msra.mxu0 0
    %4798 = vmatprep.subr.bf16.mxu0 0
    %4799 = vmatpush1.bf16.msra.mxu0 0
    %4800 = vmatprep.subr.bf16.mxu0 0
    %4801 = vmatpush1.bf16.msra.mxu0 0
    %4802 = vmatprep.subr.bf16.mxu0 0
    %4803 = vmatpush1.bf16.msra.mxu0 0
    %4804 = vmatprep.subr.bf16.mxu0 0
    %4805 = vmatpush1.bf16.msra.mxu0 0
    %4806 = vmatprep.subr.bf16.mxu0 0
    %4807 = vmatpush1.bf16.msra.mxu0 0
    %4808 = vmatprep.subr.bf16.mxu0 0
    %4809 = vmatpush1.bf16.msra.mxu0 0
    %4810 = vmatprep.subr.bf16.mxu0 0
    %4811 = vmatpush1.bf16.msra.mxu0 0
    %4812 = vmatprep.mubr.bf16.mxu0 0
    %4813 = vmatmul.mubr.bf16.gmra.mrb[0].mxu0 %v4766
    %v4814 = vpop.f32.mrb[0].mxu0
    %v4815 = vadd.f32 0.0, %v4814
    %v4816 = vpop.f32.mrb[0].mxu0
    %v4817 = vadd.f32 0.0, %v4816
    %v4818 = vpop.f32.mrb[0].mxu0
    %v4819 = vpop.f32.mrb[0].mxu0
    %4820 = vdwg.mxu0
    %4821 = vmatprep.subr.bf16.mxu0 %v4778
    %4822 = vmatpush1.bf16.msra.mxu0 %v4775
    %4823 = vmatprep.subr.bf16.mxu0 0
    %4824 = vmatpush1.bf16.msra.mxu0 0
    %4825 = vmatprep.subr.bf16.mxu0 0
    %4826 = vmatpush1.bf16.msra.mxu0 0
    %4827 = vmatprep.subr.bf16.mxu0 0
    %4828 = vmatpush1.bf16.msra.mxu0 0
    %4829 = vmatprep.subr.bf16.mxu0 0
    %4830 = vmatpush1.bf16.msra.mxu0 0
    %4831 = vmatprep.subr.bf16.mxu0 0
    %4832 = vmatpush1.bf16.msra.mxu0 0
    %4833 = vmatprep.subr.bf16.mxu0 0
    %4834 = vmatpush1.bf16.msra.mxu0 0
    %4835 = vmatprep.subr.bf16.mxu0 0
    %4836 = vmatpush1.bf16.msra.mxu0 0
    %4837 = vmatprep.subr.bf16.mxu0 0
    %4838 = vmatpush1.bf16.msra.mxu0 0
    %4839 = vmatprep.subr.bf16.mxu0 0
    %4840 = vmatpush1.bf16.msra.mxu0 0
    %4841 = vmatprep.subr.bf16.mxu0 0
    %4842 = vmatpush1.bf16.msra.mxu0 0
    %4843 = vmatprep.subr.bf16.mxu0 0
    %4844 = vmatpush1.bf16.msra.mxu0 0
    %4845 = vmatprep.subr.bf16.mxu0 0
    %4846 = vmatpush1.bf16.msra.mxu0 0
    %4847 = vmatprep.subr.bf16.mxu0 0
    %4848 = vmatpush1.bf16.msra.mxu0 0
    %4849 = vmatprep.subr.bf16.mxu0 0
    %4850 = vmatpush1.bf16.msra.mxu0 0
    %4851 = vmatprep.subr.bf16.mxu0 0
    %4852 = vmatpush1.bf16.msra.mxu0 0
    %4853 = vmatprep.mubr.bf16.mxu0 0
    %4854 = vmatmul.mubr.bf16.gmra.mrb[0].mxu0 %v4766
    %v4855 = vpop.f32.mrb[0].mxu0
    %v4856 = vadd.f32 0.0, %v4855
    %v4857 = vpop.f32.mrb[0].mxu0
    %v4858 = vadd.f32 0.0, %v4857
    %v4859 = vpop.f32.mrb[0].mxu0
    %v4860 = vpop.f32.mrb[0].mxu0
    %4861 = vdwg.mxu0
    %v4862 = vadd.f32 %v4739, %v4815
    %v4863 = vadd.f32 %v4740, %v4817
    %v4864 = vadd.f32 %v4741, %v4856
    %v4865 = vadd.f32 %v4742, %v4858
    %v4866 = vld [vmem:[#allocation13] sm:$0xff]
    %v4867 = vld [vmem:[#allocation13 + $0x8] sm:$0xff]
    %v4868 = vld [vmem:[#allocation13 + $0x10] sm:$0xff]
    %v4869 = vld [vmem:[#allocation13 + $0x18] sm:$0xff]
    %v4870 = vld [vmem:[#allocation13 + $0x20] sm:$0xff]
    %v4871 = vld [vmem:[#allocation13 + $0x28] sm:$0xff]
    %v4872 = vld [vmem:[#allocation13 + $0x30] sm:$0xff]
    %v4873 = vld [vmem:[#allocation13 + $0x38] sm:$0xff]
    %v4874 = vld [vmem:[#allocation13 + $0x40] sm:$0xff]
    %v4875 = vld [vmem:[#allocation13 + $0x48] sm:$0xff]
    %v4876 = vld [vmem:[#allocation13 + $0x50] sm:$0xff]
    %v4877 = vld [vmem:[#allocation13 + $0x58] sm:$0xff]
    %v4878 = vld [vmem:[#allocation13 + $0x60] sm:$0xff]
    %v4879 = vld [vmem:[#allocation13 + $0x68] sm:$0xff]
    %v4880 = vld [vmem:[#allocation13 + $0x70] sm:$0xff]
    %v4881 = vld [vmem:[#allocation13 + $0x78] sm:$0xff]
    %v4882 = vld [vmem:[#allocation13 + $0x80] sm:$0xff]
    %v4883 = vld [vmem:[#allocation13 + $0x88] sm:$0xff]
    %v4884 = vld [vmem:[#allocation13 + $0x90] sm:$0xff]
    %v4885 = vld [vmem:[#allocation13 + $0x98] sm:$0xff]
    %v4886 = vld [vmem:[#allocation13 + $0xa0] sm:$0xff]
    %v4887 = vld [vmem:[#allocation13 + $0xa8] sm:$0xff]
    %v4888 = vld [vmem:[#allocation13 + $0xb0] sm:$0xff]
    %v4889 = vld [vmem:[#allocation13 + $0xb8] sm:$0xff]
    %v4890 = vld [vmem:[#allocation13 + $0xc0] sm:$0xff]
    %v4891 = vld [vmem:[#allocation13 + $0xc8] sm:$0xff]
    %v4892 = vld [vmem:[#allocation13 + $0xd0] sm:$0xff]
    %v4893 = vld [vmem:[#allocation13 + $0xd8] sm:$0xff]
    %v4894 = vld [vmem:[#allocation13 + $0xe0] sm:$0xff]
    %v4895 = vld [vmem:[#allocation13 + $0xe8] sm:$0xff]
    %v4896 = vld [vmem:[#allocation13 + $0xf0] sm:$0xff]
    %v4897 = vld [vmem:[#allocation13 + $0xf8] sm:$0xff]
    %v4898 = vld [vmem:[#allocation13 + $0x100] sm:$0xff]
    %v4899 = vld [vmem:[#allocation13 + $0x108] sm:$0xff]
    %v4900 = vld [vmem:[#allocation13 + $0x110] sm:$0xff]
    %v4901 = vld [vmem:[#allocation13 + $0x118] sm:$0xff]
    %v4902 = vld [vmem:[#allocation13 + $0x120] sm:$0xff]
    %v4903 = vld [vmem:[#allocation13 + $0x128] sm:$0xff]
    %v4904 = vld [vmem:[#allocation13 + $0x130] sm:$0xff]
    %v4905 = vld [vmem:[#allocation13 + $0x138] sm:$0xff]
    %v4906 = vld [vmem:[#allocation13 + $0x140] sm:$0xff]
    %v4907 = vld [vmem:[#allocation13 + $0x148] sm:$0xff]
    %v4908 = vld [vmem:[#allocation13 + $0x150] sm:$0xff]
    %v4909 = vld [vmem:[#allocation13 + $0x158] sm:$0xff]
    %v4910 = vld [vmem:[#allocation13 + $0x160] sm:$0xff]
    %v4911 = vld [vmem:[#allocation13 + $0x168] sm:$0xff]
    %v4912 = vld [vmem:[#allocation13 + $0x170] sm:$0xff]
    %v4913 = vld [vmem:[#allocation13 + $0x178] sm:$0xff]
    %v4914 = vld [vmem:[#allocation13 + $0x180] sm:$0xff]
    %v4915 = vld [vmem:[#allocation13 + $0x188] sm:$0xff]
    %v4916 = vld [vmem:[#allocation13 + $0x190] sm:$0xff]
    %v4917 = vld [vmem:[#allocation13 + $0x198] sm:$0xff]
    %v4918 = vld [vmem:[#allocation13 + $0x1a0] sm:$0xff]
    %v4919 = vld [vmem:[#allocation13 + $0x1a8] sm:$0xff]
    %v4920 = vld [vmem:[#allocation13 + $0x1b0] sm:$0xff]
    %v4921 = vld [vmem:[#allocation13 + $0x1b8] sm:$0xff]
    %v4922 = vld [vmem:[#allocation13 + $0x1c0] sm:$0xff]
    %v4923 = vld [vmem:[#allocation13 + $0x1c8] sm:$0xff]
    %v4924 = vld [vmem:[#allocation13 + $0x1d0] sm:$0xff]
    %v4925 = vld [vmem:[#allocation13 + $0x1d8] sm:$0xff]
    %v4926 = vld [vmem:[#allocation13 + $0x1e0] sm:$0xff]
    %v4927 = vld [vmem:[#allocation13 + $0x1e8] sm:$0xff]
    %v4928 = vld [vmem:[#allocation13 + $0x1f0] sm:$0xff]
    %v4929 = vld [vmem:[#allocation13 + $0x1f8] sm:$0xff]
    %v4930 = vstv %s3771
    %4931 = vmatprep.subr.mxu0 0.0
    %4932 = vmatpush1.msra.mxu0 %v4866
    %4933 = vmatprep.subr.mxu0 0.0
    %4934 = vmatpush1.msra.mxu0 %v4867
    %4935 = vmatprep.subr.mxu0 0.0
    %4936 = vmatpush1.msra.mxu0 %v4868
    %4937 = vmatprep.subr.mxu0 0.0
    %4938 = vmatpush1.msra.mxu0 %v4869
    %4939 = vmatprep.subr.mxu0 0.0
    %4940 = vmatpush1.msra.mxu0 %v4870
    %4941 = vmatprep.subr.mxu0 0.0
    %4942 = vmatpush1.msra.mxu0 %v4871
    %4943 = vmatprep.subr.mxu0 0.0
    %4944 = vmatpush1.msra.mxu0 %v4872
    %4945 = vmatprep.subr.mxu0 0.0
    %4946 = vmatpush1.msra.mxu0 %v4873
    %4947 = vmatprep.subr.mxu0 0.0
    %4948 = vmatpush1.msra.mxu0 %v4874
    %4949 = vmatprep.subr.mxu0 0.0
    %4950 = vmatpush1.msra.mxu0 %v4875
    %4951 = vmatprep.subr.mxu0 0.0
    %4952 = vmatpush1.msra.mxu0 %v4876
    %4953 = vmatprep.subr.mxu0 0.0
    %4954 = vmatpush1.msra.mxu0 %v4877
    %4955 = vmatprep.subr.mxu0 0.0
    %4956 = vmatpush1.msra.mxu0 %v4878
    %4957 = vmatprep.subr.mxu0 0.0
    %4958 = vmatpush1.msra.mxu0 %v4879
    %4959 = vmatprep.subr.mxu0 0.0
    %4960 = vmatpush1.msra.mxu0 %v4880
    %4961 = vmatprep.subr.mxu0 0.0
    %4962 = vmatpush1.msra.mxu0 %v4881
    %4963 = vmatprep.subr.mxu0 0.0
    %4964 = vmatpush1.msra.mxu0 %v4882
    %4965 = vmatprep.subr.mxu0 0.0
    %4966 = vmatpush1.msra.mxu0 %v4883
    %4967 = vmatprep.subr.mxu0 0.0
    %4968 = vmatpush1.msra.mxu0 %v4884
    %4969 = vmatprep.subr.mxu0 0.0
    %4970 = vmatpush1.msra.mxu0 %v4885
    %4971 = vmatprep.subr.mxu0 0.0
    %4972 = vmatpush1.msra.mxu0 %v4886
    %4973 = vmatprep.subr.mxu0 0.0
    %4974 = vmatpush1.msra.mxu0 %v4887
    %4975 = vmatprep.subr.mxu0 0.0
    %4976 = vmatpush1.msra.mxu0 %v4888
    %4977 = vmatprep.subr.mxu0 0.0
    %4978 = vmatpush1.msra.mxu0 %v4889
    %4979 = vmatprep.subr.mxu0 0.0
    %4980 = vmatpush1.msra.mxu0 %v4890
    %4981 = vmatprep.subr.mxu0 0.0
    %4982 = vmatpush1.msra.mxu0 %v4891
    %4983 = vmatprep.subr.mxu0 0.0
    %4984 = vmatpush1.msra.mxu0 %v4892
    %4985 = vmatprep.subr.mxu0 0.0
    %4986 = vmatpush1.msra.mxu0 %v4893
    %4987 = vmatprep.subr.mxu0 0.0
    %4988 = vmatpush1.msra.mxu0 %v4894
    %4989 = vmatprep.subr.mxu0 0.0
    %4990 = vmatpush1.msra.mxu0 %v4895
    %4991 = vmatprep.subr.mxu0 0.0
    %4992 = vmatpush1.msra.mxu0 %v4896
    %4993 = vmatprep.subr.mxu0 0.0
    %4994 = vmatpush1.msra.mxu0 %v4897
    %4995 = vmatprep.mubr.f32.mxu0 %v4863
    %4996 = vmatmul.mubr.f32.gmra.mrb[0].mxu0 %v4862
    %v4997 = vpop.f32.mrb[0].mxu0
    %v4998 = vadd.f32 %v4930, %v4997
    %v4999 = vpop.f32.mrb[0].mxu0
    %5000 = vdwg.mxu0
    %5001 = vmatprep.subr.mxu0 0.0
    %5002 = vmatpush1.msra.mxu0 %v4898
    %5003 = vmatprep.subr.mxu0 0.0
    %5004 = vmatpush1.msra.mxu0 %v4899
    %5005 = vmatprep.subr.mxu0 0.0
    %5006 = vmatpush1.msra.mxu0 %v4900
    %5007 = vmatprep.subr.mxu0 0.0
    %5008 = vmatpush1.msra.mxu0 %v4901
    %5009 = vmatprep.subr.mxu0 0.0
    %5010 = vmatpush1.msra.mxu0 %v4902
    %5011 = vmatprep.subr.mxu0 0.0
    %5012 = vmatpush1.msra.mxu0 %v4903
    %5013 = vmatprep.subr.mxu0 0.0
    %5014 = vmatpush1.msra.mxu0 %v4904
    %5015 = vmatprep.subr.mxu0 0.0
    %5016 = vmatpush1.msra.mxu0 %v4905
    %5017 = vmatprep.subr.mxu0 0.0
    %5018 = vmatpush1.msra.mxu0 %v4906
    %5019 = vmatprep.subr.mxu0 0.0
    %5020 = vmatpush1.msra.mxu0 %v4907
    %5021 = vmatprep.subr.mxu0 0.0
    %5022 = vmatpush1.msra.mxu0 %v4908
    %5023 = vmatprep.subr.mxu0 0.0
    %5024 = vmatpush1.msra.mxu0 %v4909
    %5025 = vmatprep.subr.mxu0 0.0
    %5026 = vmatpush1.msra.mxu0 %v4910
    %5027 = vmatprep.subr.mxu0 0.0
    %5028 = vmatpush1.msra.mxu0 %v4911
    %5029 = vmatprep.subr.mxu0 0.0
    %5030 = vmatpush1.msra.mxu0 %v4912
    %5031 = vmatprep.subr.mxu0 0.0
    %5032 = vmatpush1.msra.mxu0 %v4913
    %5033 = vmatprep.subr.mxu0 0.0
    %5034 = vmatpush1.msra.mxu0 %v4914
    %5035 = vmatprep.subr.mxu0 0.0
    %5036 = vmatpush1.msra.mxu0 %v4915
    %5037 = vmatprep.subr.mxu0 0.0
    %5038 = vmatpush1.msra.mxu0 %v4916
    %5039 = vmatprep.subr.mxu0 0.0
    %5040 = vmatpush1.msra.mxu0 %v4917
    %5041 = vmatprep.subr.mxu0 0.0
    %5042 = vmatpush1.msra.mxu0 %v4918
    %5043 = vmatprep.subr.mxu0 0.0
    %5044 = vmatpush1.msra.mxu0 %v4919
    %5045 = vmatprep.subr.mxu0 0.0
    %5046 = vmatpush1.msra.mxu0 %v4920
    %5047 = vmatprep.subr.mxu0 0.0
    %5048 = vmatpush1.msra.mxu0 %v4921
    %5049 = vmatprep.subr.mxu0 0.0
    %5050 = vmatpush1.msra.mxu0 %v4922
    %5051 = vmatprep.subr.mxu0 0.0
    %5052 = vmatpush1.msra.mxu0 %v4923
    %5053 = vmatprep.subr.mxu0 0.0
    %5054 = vmatpush1.msra.mxu0 %v4924
    %5055 = vmatprep.subr.mxu0 0.0
    %5056 = vmatpush1.msra.mxu0 %v4925
    %5057 = vmatprep.subr.mxu0 0.0
    %5058 = vmatpush1.msra.mxu0 %v4926
    %5059 = vmatprep.subr.mxu0 0.0
    %5060 = vmatpush1.msra.mxu0 %v4927
    %5061 = vmatprep.subr.mxu0 0.0
    %5062 = vmatpush1.msra.mxu0 %v4928
    %5063 = vmatprep.subr.mxu0 0.0
    %5064 = vmatpush1.msra.mxu0 %v4929
    %5065 = vmatprep.mubr.f32.mxu0 %v4865
    %5066 = vmatmul.mubr.f32.gmra.mrb[0].mxu0 %v4864
    %v5067 = vpop.f32.mrb[0].mxu0
    %v5068 = vadd.f32 %v4998, %v5067
    %v5069 = vpop.f32.mrb[0].mxu0
    %5070 = vdwg.mxu0
    %v5071 = vmax.f32 %v5068, 0.0
    %v5072 = vstv %s3772
    %v5073 = vadd.f32 %v5071, %v5072
    %v5074 = vand.u32 %v204, 7
    %v5075 = vshra.s32 %v204, 3
    %v5076 = vand.u32 %v5075, 7
    %5077 = vrot.lane.b32.xlu0 %v5073, 9
    %v5078 = vpop.permute.xlu0 %5077
    %v5079 = vadd.s32 %v5074, 4294967295
    %vm5080 = vcmp.ge.s32.totalorder %v5079, 0
    %vm5081 = vcmp.lt.s32.totalorder %v5079, 8
    %vm5082 = vmand %vm5080, %vm5081
    %v5083 = vadd.s32 %v5076, 4294967295
    %vm5084 = vcmp.ge.s32.totalorder %v5083, 0
    %vm5085 = vmand %vm5082, %vm5084
    %vm5086 = vcmp.lt.s32.totalorder %v5083, 8
    %vm5087 = vmand %vm5085, %vm5086
    %v5088 = vsel %vm5087, 1, 0
    %vm5089 = vcmp.eq.s32.totalorder %v5088, 1
    %v5090 = vsel %vm5089, %v5078, 0.0
    %v5091 = vpack.c.bf16 %v5090, %v5090
    %v5092 = vld [vmem:[#allocation10] sm:$0xf]
    %5093 = vrot.lane.b32.xlu0 %v5073, 8
    %v5094 = vpop.permute.xlu0 %5093
    %vm5095 = vcmp.ge.s32.totalorder %v5074, 0
    %vm5096 = vcmp.lt.s32.totalorder %v5074, 8
    %vm5097 = vmand %vm5095, %vm5096
    %vm5098 = vmand %vm5097, %vm5084
    %vm5099 = vmand %vm5098, %vm5086
    %v5100 = vsel %vm5099, 1, 0
    %vm5101 = vcmp.eq.s32.totalorder %v5100, 1
    %v5102 = vsel %vm5101, %v5094, 0.0
    %v5103 = vpack.c.bf16 %v5102, %v5102
    %s5104 = scalar_lea.vmem [#allocation10], 4
    %v5105 = vld [vmem:[%s5104] sm:$0xf]
    %vm5106 = vcmask 64512
    %v5108 = vsel %vm5106, %v5105, 0
    %vm5110 = vcmask 1043456
    %v5112 = vsel %vm5110, %v5103, 0
    %5114 = vmatprep.subr.bf16.mxu0 0
    %5115 = vmatpush1.bf16.msra.mxu0 %v5112
    %5116 = vmatprep.subr.bf16.mxu0 0
    %5117 = vmatpush1.bf16.msra.mxu0 0
    %5118 = vmatprep.subr.bf16.mxu0 0
    %5119 = vmatpush1.bf16.msra.mxu0 0
    %5120 = vmatprep.subr.bf16.mxu0 0
    %5121 = vmatpush1.bf16.msra.mxu0 0
    %5122 = vmatprep.subr.bf16.mxu0 0
    %5123 = vmatpush1.bf16.msra.mxu0 0
    %5124 = vmatprep.subr.bf16.mxu0 0
    %5125 = vmatpush1.bf16.msra.mxu0 0
    %5126 = vmatprep.subr.bf16.mxu0 0
    %5127 = vmatpush1.bf16.msra.mxu0 0
    %5128 = vmatprep.subr.bf16.mxu0 0
    %5129 = vmatpush1.bf16.msra.mxu0 0
    %5130 = vmatprep.subr.bf16.mxu0 0
    %5131 = vmatpush1.bf16.msra.mxu0 0
    %5132 = vmatprep.subr.bf16.mxu0 0
    %5133 = vmatpush1.bf16.msra.mxu0 0
    %5134 = vmatprep.subr.bf16.mxu0 0
    %5135 = vmatpush1.bf16.msra.mxu0 0
    %5136 = vmatprep.subr.bf16.mxu0 0
    %5137 = vmatpush1.bf16.msra.mxu0 0
    %5138 = vmatprep.subr.bf16.mxu0 0
    %5139 = vmatpush1.bf16.msra.mxu0 0
    %5140 = vmatprep.subr.bf16.mxu0 0
    %5141 = vmatpush1.bf16.msra.mxu0 0
    %5142 = vmatprep.subr.bf16.mxu0 0
    %5143 = vmatpush1.bf16.msra.mxu0 0
    %5144 = vmatprep.subr.bf16.mxu0 0
    %5145 = vmatpush1.bf16.msra.mxu0 0
    %5146 = vmatprep.mubr.bf16.mxu0 0
    %5147 = vmatmul.mubr.bf16.gmra.mrb[0].mxu0 %v5108
    %v5148 = vpop.f32.mrb[0].mxu0
    %v5149 = vadd.f32 0.0, %v5148
    %v5150 = vpop.f32.mrb[0].mxu0
    %v5151 = vpop.f32.mrb[0].mxu0
    %v5152 = vpop.f32.mrb[0].mxu0
    %5153 = vdwg.mxu0
    %v5155 = vsel %vm5106, %v5092, 0
    %v5158 = vsel %vm5110, %v5091, 0
    %5160 = vmatprep.subr.bf16.mxu0 0
    %5161 = vmatpush1.bf16.msra.mxu0 %v5158
    %5162 = vmatprep.subr.bf16.mxu0 0
    %5163 = vmatpush1.bf16.msra.mxu0 0
    %5164 = vmatprep.subr.bf16.mxu0 0
    %5165 = vmatpush1.bf16.msra.mxu0 0
    %5166 = vmatprep.subr.bf16.mxu0 0
    %5167 = vmatpush1.bf16.msra.mxu0 0
    %5168 = vmatprep.subr.bf16.mxu0 0
    %5169 = vmatpush1.bf16.msra.mxu0 0
    %5170 = vmatprep.subr.bf16.mxu0 0
    %5171 = vmatpush1.bf16.msra.mxu0 0
    %5172 = vmatprep.subr.bf16.mxu0 0
    %5173 = vmatpush1.bf16.msra.mxu0 0
    %5174 = vmatprep.subr.bf16.mxu0 0
    %5175 = vmatpush1.bf16.msra.mxu0 0
    %5176 = vmatprep.subr.bf16.mxu0 0
    %5177 = vmatpush1.bf16.msra.mxu0 0
    %5178 = vmatprep.subr.bf16.mxu0 0
    %5179 = vmatpush1.bf16.msra.mxu0 0
    %5180 = vmatprep.subr.bf16.mxu0 0
    %5181 = vmatpush1.bf16.msra.mxu0 0
    %5182 = vmatprep.subr.bf16.mxu0 0
    %5183 = vmatpush1.bf16.msra.mxu0 0
    %5184 = vmatprep.subr.bf16.mxu0 0
    %5185 = vmatpush1.bf16.msra.mxu0 0
    %5186 = vmatprep.subr.bf16.mxu0 0
    %5187 = vmatpush1.bf16.msra.mxu0 0
    %5188 = vmatprep.subr.bf16.mxu0 0
    %5189 = vmatpush1.bf16.msra.mxu0 0
    %5190 = vmatprep.subr.bf16.mxu0 0
    %5191 = vmatpush1.bf16.msra.mxu0 0
    %5192 = vmatprep.mubr.bf16.mxu0 0
    %5193 = vmatmul.mubr.bf16.gmra.mrb[0].mxu0 %v5155
    %v5194 = vpop.f32.mrb[0].mxu0
    %v5195 = vadd.f32 %v5149, %v5194
    %v5196 = vpop.f32.mrb[0].mxu0
    %v5197 = vpop.f32.mrb[0].mxu0
    %v5198 = vpop.f32.mrb[0].mxu0
    %5199 = vdwg.mxu0
    %5200 = vrot.lane.b32.xlu0 %v5073, 7
    %v5201 = vpop.permute.xlu0 %5200
    %v5202 = vadd.s32 %v5074, 1
    %vm5203 = vcmp.ge.s32.totalorder %v5202, 0
    %vm5204 = vcmp.lt.s32.totalorder %v5202, 8
    %vm5205 = vmand %vm5203, %vm5204
    %vm5206 = vmand %vm5205, %vm5084
    %vm5207 = vmand %vm5206, %vm5086
    %v5208 = vsel %vm5207, 1, 0
    %vm5209 = vcmp.eq.s32.totalorder %v5208, 1
    %v5210 = vsel %vm5209, %v5201, 0.0
    %v5211 = vpack.c.bf16 %v5210, %v5210
    %s5212 = scalar_lea.vmem [#allocation10], 8
    %v5213 = vld [vmem:[%s5212] sm:$0xf]
    %v5215 = vsel %vm5106, %v5213, 0
    %v5218 = vsel %vm5110, %v5211, 0
    %5220 = vmatprep.subr.bf16.mxu0 0
    %5221 = vmatpush1.bf16.msra.mxu0 %v5218
    %5222 = vmatprep.subr.bf16.mxu0 0
    %5223 = vmatpush1.bf16.msra.mxu0 0
    %5224 = vmatprep.subr.bf16.mxu0 0
    %5225 = vmatpush1.bf16.msra.mxu0 0
    %5226 = vmatprep.subr.bf16.mxu0 0
    %5227 = vmatpush1.bf16.msra.mxu0 0
    %5228 = vmatprep.subr.bf16.mxu0 0
    %5229 = vmatpush1.bf16.msra.mxu0 0
    %5230 = vmatprep.subr.bf16.mxu0 0
    %5231 = vmatpush1.bf16.msra.mxu0 0
    %5232 = vmatprep.subr.bf16.mxu0 0
    %5233 = vmatpush1.bf16.msra.mxu0 0
    %5234 = vmatprep.subr.bf16.mxu0 0
    %5235 = vmatpush1.bf16.msra.mxu0 0
    %5236 = vmatprep.subr.bf16.mxu0 0
    %5237 = vmatpush1.bf16.msra.mxu0 0
    %5238 = vmatprep.subr.bf16.mxu0 0
    %5239 = vmatpush1.bf16.msra.mxu0 0
    %5240 = vmatprep.subr.bf16.mxu0 0
    %5241 = vmatpush1.bf16.msra.mxu0 0
    %5242 = vmatprep.subr.bf16.mxu0 0
    %5243 = vmatpush1.bf16.msra.mxu0 0
    %5244 = vmatprep.subr.bf16.mxu0 0
    %5245 = vmatpush1.bf16.msra.mxu0 0
    %5246 = vmatprep.subr.bf16.mxu0 0
    %5247 = vmatpush1.bf16.msra.mxu0 0
    %5248 = vmatprep.subr.bf16.mxu0 0
    %5249 = vmatpush1.bf16.msra.mxu0 0
    %5250 = vmatprep.subr.bf16.mxu0 0
    %5251 = vmatpush1.bf16.msra.mxu0 0
    %5252 = vmatprep.mubr.bf16.mxu0 0
    %5253 = vmatmul.mubr.bf16.gmra.mrb[0].mxu0 %v5215
    %v5254 = vpop.f32.mrb[0].mxu0
    %v5255 = vadd.f32 0.0, %v5254
    %v5256 = vpop.f32.mrb[0].mxu0
    %v5257 = vpop.f32.mrb[0].mxu0
    %v5258 = vpop.f32.mrb[0].mxu0
    %5259 = vdwg.mxu0
    %v5260 = vadd.f32 %v5195, %v5255
    %5261 = vrot.lane.b32.xlu0 %v5073, 1
    %v5262 = vpop.permute.xlu0 %5261
    %vm5263 = vcmp.ge.s32.totalorder %v5076, 0
    %vm5264 = vmand %vm5082, %vm5263
    %vm5265 = vcmp.lt.s32.totalorder %v5076, 8
    %vm5266 = vmand %vm5264, %vm5265
    %v5267 = vsel %vm5266, 1, 0
    %vm5268 = vcmp.eq.s32.totalorder %v5267, 1
    %v5269 = vsel %vm5268, %v5262, 0.0
    %v5270 = vpack.c.bf16 %v5269, %v5269
    %s5271 = scalar_lea.vmem [#allocation10], 12
    %v5272 = vld [vmem:[%s5271] sm:$0xf]
    %v5274 = vsel %vm5106, %v5272, 0
    %v5277 = vsel %vm5110, %v5270, 0
    %5279 = vmatprep.subr.bf16.mxu0 0
    %5280 = vmatpush1.bf16.msra.mxu0 %v5277
    %5281 = vmatprep.subr.bf16.mxu0 0
    %5282 = vmatpush1.bf16.msra.mxu0 0
    %5283 = vmatprep.subr.bf16.mxu0 0
    %5284 = vmatpush1.bf16.msra.mxu0 0
    %5285 = vmatprep.subr.bf16.mxu0 0
    %5286 = vmatpush1.bf16.msra.mxu0 0
    %5287 = vmatprep.subr.bf16.mxu0 0
    %5288 = vmatpush1.bf16.msra.mxu0 0
    %5289 = vmatprep.subr.bf16.mxu0 0
    %5290 = vmatpush1.bf16.msra.mxu0 0
    %5291 = vmatprep.subr.bf16.mxu0 0
    %5292 = vmatpush1.bf16.msra.mxu0 0
    %5293 = vmatprep.subr.bf16.mxu0 0
    %5294 = vmatpush1.bf16.msra.mxu0 0
    %5295 = vmatprep.subr.bf16.mxu0 0
    %5296 = vmatpush1.bf16.msra.mxu0 0
    %5297 = vmatprep.subr.bf16.mxu0 0
    %5298 = vmatpush1.bf16.msra.mxu0 0
    %5299 = vmatprep.subr.bf16.mxu0 0
    %5300 = vmatpush1.bf16.msra.mxu0 0
    %5301 = vmatprep.subr.bf16.mxu0 0
    %5302 = vmatpush1.bf16.msra.mxu0 0
    %5303 = vmatprep.subr.bf16.mxu0 0
    %5304 = vmatpush1.bf16.msra.mxu0 0
    %5305 = vmatprep.subr.bf16.mxu0 0
    %5306 = vmatpush1.bf16.msra.mxu0 0
    %5307 = vmatprep.subr.bf16.mxu0 0
    %5308 = vmatpush1.bf16.msra.mxu0 0
    %5309 = vmatprep.subr.bf16.mxu0 0
    %5310 = vmatpush1.bf16.msra.mxu0 0
    %5311 = vmatprep.mubr.bf16.mxu0 0
    %5312 = vmatmul.mubr.bf16.gmra.mrb[0].mxu0 %v5274
    %v5313 = vpop.f32.mrb[0].mxu0
    %v5314 = vadd.f32 0.0, %v5313
    %v5315 = vpop.f32.mrb[0].mxu0
    %v5316 = vpop.f32.mrb[0].mxu0
    %v5317 = vpop.f32.mrb[0].mxu0
    %5318 = vdwg.mxu0
    %v5319 = vadd.f32 %v5260, %v5314
    %vm5320 = vmand %vm5097, %vm5263
    %vm5321 = vmand %vm5320, %vm5265
    %v5322 = vsel %vm5321, 1, 0
    %vm5323 = vcmp.eq.s32.totalorder %v5322, 1
    %v5324 = vsel %vm5323, %v5073, 0.0
    %v5325 = vpack.c.bf16 %v5324, %v5324
    %s5326 = scalar_lea.vmem [#allocation10], 16
    %v5327 = vld [vmem:[%s5326] sm:$0xf]
    %v5329 = vsel %vm5106, %v5327, 0
    %v5332 = vsel %vm5110, %v5325, 0
    %5334 = vmatprep.subr.bf16.mxu0 0
    %5335 = vmatpush1.bf16.msra.mxu0 %v5332
    %5336 = vmatprep.subr.bf16.mxu0 0
    %5337 = vmatpush1.bf16.msra.mxu0 0
    %5338 = vmatprep.subr.bf16.mxu0 0
    %5339 = vmatpush1.bf16.msra.mxu0 0
    %5340 = vmatprep.subr.bf16.mxu0 0
    %5341 = vmatpush1.bf16.msra.mxu0 0
    %5342 = vmatprep.subr.bf16.mxu0 0
    %5343 = vmatpush1.bf16.msra.mxu0 0
    %5344 = vmatprep.subr.bf16.mxu0 0
    %5345 = vmatpush1.bf16.msra.mxu0 0
    %5346 = vmatprep.subr.bf16.mxu0 0
    %5347 = vmatpush1.bf16.msra.mxu0 0
    %5348 = vmatprep.subr.bf16.mxu0 0
    %5349 = vmatpush1.bf16.msra.mxu0 0
    %5350 = vmatprep.subr.bf16.mxu0 0
    %5351 = vmatpush1.bf16.msra.mxu0 0
    %5352 = vmatprep.subr.bf16.mxu0 0
    %5353 = vmatpush1.bf16.msra.mxu0 0
    %5354 = vmatprep.subr.bf16.mxu0 0
    %5355 = vmatpush1.bf16.msra.mxu0 0
    %5356 = vmatprep.subr.bf16.mxu0 0
    %5357 = vmatpush1.bf16.msra.mxu0 0
    %5358 = vmatprep.subr.bf16.mxu0 0
    %5359 = vmatpush1.bf16.msra.mxu0 0
    %5360 = vmatprep.subr.bf16.mxu0 0
    %5361 = vmatpush1.bf16.msra.mxu0 0
    %5362 = vmatprep.subr.bf16.mxu0 0
    %5363 = vmatpush1.bf16.msra.mxu0 0
    %5364 = vmatprep.subr.bf16.mxu0 0
    %5365 = vmatpush1.bf16.msra.mxu0 0
    %5366 = vmatprep.mubr.bf16.mxu0 0
    %5367 = vmatmul.mubr.bf16.gmra.mrb[0].mxu0 %v5329
    %v5368 = vpop.f32.mrb[0].mxu0
    %v5369 = vadd.f32 0.0, %v5368
    %v5370 = vpop.f32.mrb[0].mxu0
    %v5371 = vpop.f32.mrb[0].mxu0
    %v5372 = vpop.f32.mrb[0].mxu0
    %5373 = vdwg.mxu0
    %v5374 = vadd.f32 %v5319, %v5369
    %5375 = vrot.lane.b32.xlu0 %v5073, 127
    %v5376 = vpop.permute.xlu0 %5375
    %vm5377 = vmand %vm5205, %vm5263
    %vm5378 = vmand %vm5377, %vm5265
    %v5379 = vsel %vm5378, 1, 0
    %vm5380 = vcmp.eq.s32.totalorder %v5379, 1
    %v5381 = vsel %vm5380, %v5376, 0.0
    %v5382 = vpack.c.bf16 %v5381, %v5381
    %s5383 = scalar_lea.vmem [#allocation10], 20
    %v5384 = vld [vmem:[%s5383] sm:$0xf]
    %v5386 = vsel %vm5106, %v5384, 0
    %v5389 = vsel %vm5110, %v5382, 0
    %5391 = vmatprep.subr.bf16.mxu0 0
    %5392 = vmatpush1.bf16.msra.mxu0 %v5389
    %5393 = vmatprep.subr.bf16.mxu0 0
    %5394 = vmatpush1.bf16.msra.mxu0 0
    %5395 = vmatprep.subr.bf16.mxu0 0
    %5396 = vmatpush1.bf16.msra.mxu0 0
    %5397 = vmatprep.subr.bf16.mxu0 0
    %5398 = vmatpush1.bf16.msra.mxu0 0
    %5399 = vmatprep.subr.bf16.mxu0 0
    %5400 = vmatpush1.bf16.msra.mxu0 0
    %5401 = vmatprep.subr.bf16.mxu0 0
    %5402 = vmatpush1.bf16.msra.mxu0 0
    %5403 = vmatprep.subr.bf16.mxu0 0
    %5404 = vmatpush1.bf16.msra.mxu0 0
    %5405 = vmatprep.subr.bf16.mxu0 0
    %5406 = vmatpush1.bf16.msra.mxu0 0
    %5407 = vmatprep.subr.bf16.mxu0 0
    %5408 = vmatpush1.bf16.msra.mxu0 0
    %5409 = vmatprep.subr.bf16.mxu0 0
    %5410 = vmatpush1.bf16.msra.mxu0 0
    %5411 = vmatprep.subr.bf16.mxu0 0
    %5412 = vmatpush1.bf16.msra.mxu0 0
    %5413 = vmatprep.subr.bf16.mxu0 0
    %5414 = vmatpush1.bf16.msra.mxu0 0
    %5415 = vmatprep.subr.bf16.mxu0 0
    %5416 = vmatpush1.bf16.msra.mxu0 0
    %5417 = vmatprep.subr.bf16.mxu0 0
    %5418 = vmatpush1.bf16.msra.mxu0 0
    %5419 = vmatprep.subr.bf16.mxu0 0
    %5420 = vmatpush1.bf16.msra.mxu0 0
    %5421 = vmatprep.subr.bf16.mxu0 0
    %5422 = vmatpush1.bf16.msra.mxu0 0
    %5423 = vmatprep.mubr.bf16.mxu0 0
    %5424 = vmatmul.mubr.bf16.gmra.mrb[0].mxu0 %v5386
    %v5425 = vpop.f32.mrb[0].mxu0
    %v5426 = vadd.f32 0.0, %v5425
    %v5427 = vpop.f32.mrb[0].mxu0
    %v5428 = vpop.f32.mrb[0].mxu0
    %v5429 = vpop.f32.mrb[0].mxu0
    %5430 = vdwg.mxu0
    %v5431 = vadd.f32 %v5374, %v5426
    %5432 = vrot.lane.b32.xlu0 %v5073, 121
    %v5433 = vpop.permute.xlu0 %5432
    %v5434 = vadd.s32 %v5076, 1
    %vm5435 = vcmp.ge.s32.totalorder %v5434, 0
    %vm5436 = vmand %vm5082, %vm5435
    %vm5437 = vcmp.lt.s32.totalorder %v5434, 8
    %vm5438 = vmand %vm5436, %vm5437
    %v5439 = vsel %vm5438, 1, 0
    %vm5440 = vcmp.eq.s32.totalorder %v5439, 1
    %v5441 = vsel %vm5440, %v5433, 0.0
    %v5442 = vpack.c.bf16 %v5441, %v5441
    %s5443 = scalar_lea.vmem [#allocation10], 24
    %v5444 = vld [vmem:[%s5443] sm:$0xf]
    %v5446 = vsel %vm5106, %v5444, 0
    %v5449 = vsel %vm5110, %v5442, 0
    %5451 = vmatprep.subr.bf16.mxu0 0
    %5452 = vmatpush1.bf16.msra.mxu0 %v5449
    %5453 = vmatprep.subr.bf16.mxu0 0
    %5454 = vmatpush1.bf16.msra.mxu0 0
    %5455 = vmatprep.subr.bf16.mxu0 0
    %5456 = vmatpush1.bf16.msra.mxu0 0
    %5457 = vmatprep.subr.bf16.mxu0 0
    %5458 = vmatpush1.bf16.msra.mxu0 0
    %5459 = vmatprep.subr.bf16.mxu0 0
    %5460 = vmatpush1.bf16.msra.mxu0 0
    %5461 = vmatprep.subr.bf16.mxu0 0
    %5462 = vmatpush1.bf16.msra.mxu0 0
    %5463 = vmatprep.subr.bf16.mxu0 0
    %5464 = vmatpush1.bf16.msra.mxu0 0
    %5465 = vmatprep.subr.bf16.mxu0 0
    %5466 = vmatpush1.bf16.msra.mxu0 0
    %5467 = vmatprep.subr.bf16.mxu0 0
    %5468 = vmatpush1.bf16.msra.mxu0 0
    %5469 = vmatprep.subr.bf16.mxu0 0
    %5470 = vmatpush1.bf16.msra.mxu0 0
    %5471 = vmatprep.subr.bf16.mxu0 0
    %5472 = vmatpush1.bf16.msra.mxu0 0
    %5473 = vmatprep.subr.bf16.mxu0 0
    %5474 = vmatpush1.bf16.msra.mxu0 0
    %5475 = vmatprep.subr.bf16.mxu0 0
    %5476 = vmatpush1.bf16.msra.mxu0 0
    %5477 = vmatprep.subr.bf16.mxu0 0
    %5478 = vmatpush1.bf16.msra.mxu0 0
    %5479 = vmatprep.subr.bf16.mxu0 0
    %5480 = vmatpush1.bf16.msra.mxu0 0
    %5481 = vmatprep.subr.bf16.mxu0 0
    %5482 = vmatpush1.bf16.msra.mxu0 0
    %5483 = vmatprep.mubr.bf16.mxu0 0
    %5484 = vmatmul.mubr.bf16.gmra.mrb[0].mxu0 %v5446
    %v5485 = vpop.f32.mrb[0].mxu0
    %v5486 = vadd.f32 0.0, %v5485
    %v5487 = vpop.f32.mrb[0].mxu0
    %v5488 = vpop.f32.mrb[0].mxu0
    %v5489 = vpop.f32.mrb[0].mxu0
    %5490 = vdwg.mxu0
    %v5491 = vadd.f32 %v5431, %v5486
    %5492 = vrot.lane.b32.xlu0 %v5073, 120
    %v5493 = vpop.permute.xlu0 %5492
    %vm5494 = vmand %vm5097, %vm5435
    %vm5495 = vmand %vm5494, %vm5437
    %v5496 = vsel %vm5495, 1, 0
    %vm5497 = vcmp.eq.s32.totalorder %v5496, 1
    %v5498 = vsel %vm5497, %v5493, 0.0
    %v5499 = vpack.c.bf16 %v5498, %v5498
    %s5500 = scalar_lea.vmem [#allocation10], 28
    %v5501 = vld [vmem:[%s5500] sm:$0xf]
    %v5503 = vsel %vm5106, %v5501, 0
    %v5506 = vsel %vm5110, %v5499, 0
    %5508 = vmatprep.subr.bf16.mxu0 0
    %5509 = vmatpush1.bf16.msra.mxu0 %v5506
    %5510 = vmatprep.subr.bf16.mxu0 0
    %5511 = vmatpush1.bf16.msra.mxu0 0
    %5512 = vmatprep.subr.bf16.mxu0 0
    %5513 = vmatpush1.bf16.msra.mxu0 0
    %5514 = vmatprep.subr.bf16.mxu0 0
    %5515 = vmatpush1.bf16.msra.mxu0 0
    %5516 = vmatprep.subr.bf16.mxu0 0
    %5517 = vmatpush1.bf16.msra.mxu0 0
    %5518 = vmatprep.subr.bf16.mxu0 0
    %5519 = vmatpush1.bf16.msra.mxu0 0
    %5520 = vmatprep.subr.bf16.mxu0 0
    %5521 = vmatpush1.bf16.msra.mxu0 0
    %5522 = vmatprep.subr.bf16.mxu0 0
    %5523 = vmatpush1.bf16.msra.mxu0 0
    %5524 = vmatprep.subr.bf16.mxu0 0
    %5525 = vmatpush1.bf16.msra.mxu0 0
    %5526 = vmatprep.subr.bf16.mxu0 0
    %5527 = vmatpush1.bf16.msra.mxu0 0
    %5528 = vmatprep.subr.bf16.mxu0 0
    %5529 = vmatpush1.bf16.msra.mxu0 0
    %5530 = vmatprep.subr.bf16.mxu0 0
    %5531 = vmatpush1.bf16.msra.mxu0 0
    %5532 = vmatprep.subr.bf16.mxu0 0
    %5533 = vmatpush1.bf16.msra.mxu0 0
    %5534 = vmatprep.subr.bf16.mxu0 0
    %5535 = vmatpush1.bf16.msra.mxu0 0
    %5536 = vmatprep.subr.bf16.mxu0 0
    %5537 = vmatpush1.bf16.msra.mxu0 0
    %5538 = vmatprep.subr.bf16.mxu0 0
    %5539 = vmatpush1.bf16.msra.mxu0 0
    %5540 = vmatprep.mubr.bf16.mxu0 0
    %5541 = vmatmul.mubr.bf16.gmra.mrb[0].mxu0 %v5503
    %v5542 = vpop.f32.mrb[0].mxu0
    %v5543 = vadd.f32 0.0, %v5542
    %v5544 = vpop.f32.mrb[0].mxu0
    %v5545 = vpop.f32.mrb[0].mxu0
    %v5546 = vpop.f32.mrb[0].mxu0
    %5547 = vdwg.mxu0
    %v5548 = vadd.f32 %v5491, %v5543
    %5549 = vrot.lane.b32.xlu0 %v5073, 119
    %v5550 = vpop.permute.xlu0 %5549
    %vm5551 = vmand %vm5205, %vm5435
    %vm5552 = vmand %vm5551, %vm5437
    %v5553 = vsel %vm5552, 1, 0
    %vm5554 = vcmp.eq.s32.totalorder %v5553, 1
    %v5555 = vsel %vm5554, %v5550, 0.0
    %v5556 = vpack.c.bf16 %v5555, %v5555
    %s5557 = scalar_lea.vmem [#allocation10], 32
    %v5558 = vld [vmem:[%s5557] sm:$0xf]
    %v5560 = vsel %vm5106, %v5558, 0
    %v5563 = vsel %vm5110, %v5556, 0
    %5565 = vmatprep.subr.bf16.mxu0 0
    %5566 = vmatpush1.bf16.msra.mxu0 %v5563
    %5567 = vmatprep.subr.bf16.mxu0 0
    %5568 = vmatpush1.bf16.msra.mxu0 0
    %5569 = vmatprep.subr.bf16.mxu0 0
    %5570 = vmatpush1.bf16.msra.mxu0 0
    %5571 = vmatprep.subr.bf16.mxu0 0
    %5572 = vmatpush1.bf16.msra.mxu0 0
    %5573 = vmatprep.subr.bf16.mxu0 0
    %5574 = vmatpush1.bf16.msra.mxu0 0
    %5575 = vmatprep.subr.bf16.mxu0 0
    %5576 = vmatpush1.bf16.msra.mxu0 0
    %5577 = vmatprep.subr.bf16.mxu0 0
    %5578 = vmatpush1.bf16.msra.mxu0 0
    %5579 = vmatprep.subr.bf16.mxu0 0
    %5580 = vmatpush1.bf16.msra.mxu0 0
    %5581 = vmatprep.subr.bf16.mxu0 0
    %5582 = vmatpush1.bf16.msra.mxu0 0
    %5583 = vmatprep.subr.bf16.mxu0 0
    %5584 = vmatpush1.bf16.msra.mxu0 0
    %5585 = vmatprep.subr.bf16.mxu0 0
    %5586 = vmatpush1.bf16.msra.mxu0 0
    %5587 = vmatprep.subr.bf16.mxu0 0
    %5588 = vmatpush1.bf16.msra.mxu0 0
    %5589 = vmatprep.subr.bf16.mxu0 0
    %5590 = vmatpush1.bf16.msra.mxu0 0
    %5591 = vmatprep.subr.bf16.mxu0 0
    %5592 = vmatpush1.bf16.msra.mxu0 0
    %5593 = vmatprep.subr.bf16.mxu0 0
    %5594 = vmatpush1.bf16.msra.mxu0 0
    %5595 = vmatprep.subr.bf16.mxu0 0
    %5596 = vmatpush1.bf16.msra.mxu0 0
    %5597 = vmatprep.mubr.bf16.mxu0 0
    %5598 = vmatmul.mubr.bf16.gmra.mrb[0].mxu0 %v5560
    %v5599 = vpop.f32.mrb[0].mxu0
    %v5600 = vadd.f32 0.0, %v5599
    %v5601 = vpop.f32.mrb[0].mxu0
    %v5602 = vpop.f32.mrb[0].mxu0
    %v5603 = vpop.f32.mrb[0].mxu0
    %5604 = vdwg.mxu0
    %v5605 = vadd.f32 %v5548, %v5600
    %v5606 = vstv %s3774
    %v5607 = vmul.f32 %v5605, %v5606
    %v5608 = vstv %s3773
    %v5609 = vadd.f32 %v5607, %v5608
    %5610 = vmatprep.subr.mxu0 0.0
    %5611 = vmatpush1.msra.mxu0 %v4866
    %5612 = vmatprep.subr.mxu0 0.0
    %5613 = vmatpush1.msra.mxu0 %v4867
    %5614 = vmatprep.subr.mxu0 0.0
    %5615 = vmatpush1.msra.mxu0 %v4868
    %5616 = vmatprep.subr.mxu0 0.0
    %5617 = vmatpush1.msra.mxu0 %v4869
    %5618 = vmatprep.subr.mxu0 0.0
    %5619 = vmatpush1.msra.mxu0 %v4870
    %5620 = vmatprep.subr.mxu0 0.0
    %5621 = vmatpush1.msra.mxu0 %v4871
    %5622 = vmatprep.subr.mxu0 0.0
    %5623 = vmatpush1.msra.mxu0 %v4872
    %5624 = vmatprep.subr.mxu0 0.0
    %5625 = vmatpush1.msra.mxu0 %v4873
    %5626 = vmatprep.subr.mxu0 0.0
    %5627 = vmatpush1.msra.mxu0 %v4874
    %5628 = vmatprep.subr.mxu0 0.0
    %5629 = vmatpush1.msra.mxu0 %v4875
    %5630 = vmatprep.subr.mxu0 0.0
    %5631 = vmatpush1.msra.mxu0 %v4876
    %5632 = vmatprep.subr.mxu0 0.0
    %5633 = vmatpush1.msra.mxu0 %v4877
    %5634 = vmatprep.subr.mxu0 0.0
    %5635 = vmatpush1.msra.mxu0 %v4878
    %5636 = vmatprep.subr.mxu0 0.0
    %5637 = vmatpush1.msra.mxu0 %v4879
    %5638 = vmatprep.subr.mxu0 0.0
    %5639 = vmatpush1.msra.mxu0 %v4880
    %5640 = vmatprep.subr.mxu0 0.0
    %5641 = vmatpush1.msra.mxu0 %v4881
    %5642 = vmatprep.subr.mxu0 0.0
    %5643 = vmatpush1.msra.mxu0 %v4882
    %5644 = vmatprep.subr.mxu0 0.0
    %5645 = vmatpush1.msra.mxu0 %v4883
    %5646 = vmatprep.subr.mxu0 0.0
    %5647 = vmatpush1.msra.mxu0 %v4884
    %5648 = vmatprep.subr.mxu0 0.0
    %5649 = vmatpush1.msra.mxu0 %v4885
    %5650 = vmatprep.subr.mxu0 0.0
    %5651 = vmatpush1.msra.mxu0 %v4886
    %5652 = vmatprep.subr.mxu0 0.0
    %5653 = vmatpush1.msra.mxu0 %v4887
    %5654 = vmatprep.subr.mxu0 0.0
    %5655 = vmatpush1.msra.mxu0 %v4888
    %5656 = vmatprep.subr.mxu0 0.0
    %5657 = vmatpush1.msra.mxu0 %v4889
    %5658 = vmatprep.subr.mxu0 0.0
    %5659 = vmatpush1.msra.mxu0 %v4890
    %5660 = vmatprep.subr.mxu0 0.0
    %5661 = vmatpush1.msra.mxu0 %v4891
    %5662 = vmatprep.subr.mxu0 0.0
    %5663 = vmatpush1.msra.mxu0 %v4892
    %5664 = vmatprep.subr.mxu0 0.0
    %5665 = vmatpush1.msra.mxu0 %v4893
    %5666 = vmatprep.subr.mxu0 0.0
    %5667 = vmatpush1.msra.mxu0 %v4894
    %5668 = vmatprep.subr.mxu0 0.0
    %5669 = vmatpush1.msra.mxu0 %v4895
    %5670 = vmatprep.subr.mxu0 0.0
    %5671 = vmatpush1.msra.mxu0 %v4896
    %5672 = vmatprep.subr.mxu0 0.0
    %5673 = vmatpush1.msra.mxu0 %v4897
    %5674 = vmatprep.mubr.f32.mxu0 %v3777
    %5675 = vmatmul.mubr.f32.gmra.mrb[0].mxu0 %v3776
    %v5676 = vpop.f32.mrb[0].mxu0
    %v5677 = vadd.f32 0.0, %v5676
    %v5678 = vpop.f32.mrb[0].mxu0
    %5679 = vdwg.mxu0
    %5680 = vmatprep.subr.mxu0 0.0
    %5681 = vmatpush1.msra.mxu0 %v4898
    %5682 = vmatprep.subr.mxu0 0.0
    %5683 = vmatpush1.msra.mxu0 %v4899
    %5684 = vmatprep.subr.mxu0 0.0
    %5685 = vmatpush1.msra.mxu0 %v4900
    %5686 = vmatprep.subr.mxu0 0.0
    %5687 = vmatpush1.msra.mxu0 %v4901
    %5688 = vmatprep.subr.mxu0 0.0
    %5689 = vmatpush1.msra.mxu0 %v4902
    %5690 = vmatprep.subr.mxu0 0.0
    %5691 = vmatpush1.msra.mxu0 %v4903
    %5692 = vmatprep.subr.mxu0 0.0
    %5693 = vmatpush1.msra.mxu0 %v4904
    %5694 = vmatprep.subr.mxu0 0.0
    %5695 = vmatpush1.msra.mxu0 %v4905
    %5696 = vmatprep.subr.mxu0 0.0
    %5697 = vmatpush1.msra.mxu0 %v4906
    %5698 = vmatprep.subr.mxu0 0.0
    %5699 = vmatpush1.msra.mxu0 %v4907
    %5700 = vmatprep.subr.mxu0 0.0
    %5701 = vmatpush1.msra.mxu0 %v4908
    %5702 = vmatprep.subr.mxu0 0.0
    %5703 = vmatpush1.msra.mxu0 %v4909
    %5704 = vmatprep.subr.mxu0 0.0
    %5705 = vmatpush1.msra.mxu0 %v4910
    %5706 = vmatprep.subr.mxu0 0.0
    %5707 = vmatpush1.msra.mxu0 %v4911
    %5708 = vmatprep.subr.mxu0 0.0
    %5709 = vmatpush1.msra.mxu0 %v4912
    %5710 = vmatprep.subr.mxu0 0.0
    %5711 = vmatpush1.msra.mxu0 %v4913
    %5712 = vmatprep.subr.mxu0 0.0
    %5713 = vmatpush1.msra.mxu0 %v4914
    %5714 = vmatprep.subr.mxu0 0.0
    %5715 = vmatpush1.msra.mxu0 %v4915
    %5716 = vmatprep.subr.mxu0 0.0
    %5717 = vmatpush1.msra.mxu0 %v4916
    %5718 = vmatprep.subr.mxu0 0.0
    %5719 = vmatpush1.msra.mxu0 %v4917
    %5720 = vmatprep.subr.mxu0 0.0
    %5721 = vmatpush1.msra.mxu0 %v4918
    %5722 = vmatprep.subr.mxu0 0.0
    %5723 = vmatpush1.msra.mxu0 %v4919
    %5724 = vmatprep.subr.mxu0 0.0
    %5725 = vmatpush1.msra.mxu0 %v4920
    %5726 = vmatprep.subr.mxu0 0.0
    %5727 = vmatpush1.msra.mxu0 %v4921
    %5728 = vmatprep.subr.mxu0 0.0
    %5729 = vmatpush1.msra.mxu0 %v4922
    %5730 = vmatprep.subr.mxu0 0.0
    %5731 = vmatpush1.msra.mxu0 %v4923
    %5732 = vmatprep.subr.mxu0 0.0
    %5733 = vmatpush1.msra.mxu0 %v4924
    %5734 = vmatprep.subr.mxu0 0.0
    %5735 = vmatpush1.msra.mxu0 %v4925
    %5736 = vmatprep.subr.mxu0 0.0
    %5737 = vmatpush1.msra.mxu0 %v4926
    %5738 = vmatprep.subr.mxu0 0.0
    %5739 = vmatpush1.msra.mxu0 %v4927
    %5740 = vmatprep.subr.mxu0 0.0
    %5741 = vmatpush1.msra.mxu0 %v4928
    %5742 = vmatprep.subr.mxu0 0.0
    %5743 = vmatpush1.msra.mxu0 %v4929
    %5744 = vmatprep.mubr.f32.mxu0 %v3779
    %5745 = vmatmul.mubr.f32.gmra.mrb[0].mxu0 %v3778
    %v5746 = vpop.f32.mrb[0].mxu0
    %v5747 = vadd.f32 %v5677, %v5746
    %v5748 = vpop.f32.mrb[0].mxu0
    %5749 = vdwg.mxu0
    %v5750 = vld [vmem:[#allocation14] sm:$0xff]
    %v5752 = vsel %vm1608, %v5750, 0
    %v5755 = vsel %vm5110, %v5747, 0
    %5757 = vmatprep.subr.mxu0 0.0
    %5758 = vmatpush1.msra.mxu0 %v5755
    %5759 = vmatprep.subr.mxu0 0.0
    %5760 = vmatpush1.msra.mxu0 0.0
    %5761 = vmatprep.subr.mxu0 0.0
    %5762 = vmatpush1.msra.mxu0 0.0
    %5763 = vmatprep.subr.mxu0 0.0
    %5764 = vmatpush1.msra.mxu0 0.0
    %5765 = vmatprep.subr.mxu0 0.0
    %5766 = vmatpush1.msra.mxu0 0.0
    %5767 = vmatprep.subr.mxu0 0.0
    %5768 = vmatpush1.msra.mxu0 0.0
    %5769 = vmatprep.subr.mxu0 0.0
    %5770 = vmatpush1.msra.mxu0 0.0
    %5771 = vmatprep.subr.mxu0 0.0
    %5772 = vmatpush1.msra.mxu0 0.0
    %5773 = vmatprep.subr.mxu0 0.0
    %5774 = vmatpush1.msra.mxu0 0.0
    %5775 = vmatprep.subr.mxu0 0.0
    %5776 = vmatpush1.msra.mxu0 0.0
    %5777 = vmatprep.subr.mxu0 0.0
    %5778 = vmatpush1.msra.mxu0 0.0
    %5779 = vmatprep.subr.mxu0 0.0
    %5780 = vmatpush1.msra.mxu0 0.0
    %5781 = vmatprep.subr.mxu0 0.0
    %5782 = vmatpush1.msra.mxu0 0.0
    %5783 = vmatprep.subr.mxu0 0.0
    %5784 = vmatpush1.msra.mxu0 0.0
    %5785 = vmatprep.subr.mxu0 0.0
    %5786 = vmatpush1.msra.mxu0 0.0
    %5787 = vmatprep.subr.mxu0 0.0
    %5788 = vmatpush1.msra.mxu0 0.0
    %5789 = vmatprep.subr.mxu0 0.0
    %5790 = vmatpush1.msra.mxu0 0.0
    %5791 = vmatprep.subr.mxu0 0.0
    %5792 = vmatpush1.msra.mxu0 0.0
    %5793 = vmatprep.subr.mxu0 0.0
    %5794 = vmatpush1.msra.mxu0 0.0
    %5795 = vmatprep.subr.mxu0 0.0
    %5796 = vmatpush1.msra.mxu0 0.0
    %5797 = vmatprep.subr.mxu0 0.0
    %5798 = vmatpush1.msra.mxu0 0.0
    %5799 = vmatprep.subr.mxu0 0.0
    %5800 = vmatpush1.msra.mxu0 0.0
    %5801 = vmatprep.subr.mxu0 0.0
    %5802 = vmatpush1.msra.mxu0 0.0
    %5803 = vmatprep.subr.mxu0 0.0
    %5804 = vmatpush1.msra.mxu0 0.0
    %5805 = vmatprep.subr.mxu0 0.0
    %5806 = vmatpush1.msra.mxu0 0.0
    %5807 = vmatprep.subr.mxu0 0.0
    %5808 = vmatpush1.msra.mxu0 0.0
    %5809 = vmatprep.subr.mxu0 0.0
    %5810 = vmatpush1.msra.mxu0 0.0
    %5811 = vmatprep.subr.mxu0 0.0
    %5812 = vmatpush1.msra.mxu0 0.0
    %5813 = vmatprep.subr.mxu0 0.0
    %5814 = vmatpush1.msra.mxu0 0.0
    %5815 = vmatprep.subr.mxu0 0.0
    %5816 = vmatpush1.msra.mxu0 0.0
    %5817 = vmatprep.subr.mxu0 0.0
    %5818 = vmatpush1.msra.mxu0 0.0
    %5819 = vmatprep.subr.mxu0 0.0
    %5820 = vmatpush1.msra.mxu0 0.0
    %5821 = vmatprep.mubr.f32.mxu0 0.0
    %5822 = vmatmul.mubr.f32.gmra.mrb[0].mxu0 %v5752
    %v5823 = vpop.f32.mrb[0].mxu0
    %v5824 = vadd.f32 0.0, %v5823
    %v5825 = vpop.f32.mrb[0].mxu0
    %5826 = vdwg.mxu0
    %v5827 = vadd.f32 %v5609, %v5824
    %v5828 = vmax.f32 %v5827, 0.0
    %s5829 = sld [smem:[#allocation19 + $0xb]]
    %s5830 = sld [smem:[#allocation19 + $0xc]]
    %s5831 = sld [smem:[#allocation19 + $0xd]]
    %s5832 = sld [smem:[#allocation19 + $0xe]]
    %s5833 = sld [smem:[#allocation19 + $0xf]]
    %v5834 = vstv %s5829
    %v5835 = vadd.f32 %v5828, %v5834
    %5836 = vrot.lane.b32.xlu0 %v5835, 9
    %v5837 = vpop.permute.xlu0 %5836
    %v5838 = vsel %vm5089, %v5837, 0.0
    %v5839 = vpack.c.bf16 %v5838, %v5838
    %v5840 = vld [vmem:[#allocation11] sm:$0xf]
    %v5841 = vld [vmem:[#allocation11 + $0x4] sm:$0xf]
    %5842 = vrot.lane.b32.xlu0 %v5835, 8
    %v5843 = vpop.permute.xlu0 %5842
    %v5844 = vsel %vm5101, %v5843, 0.0
    %v5845 = vpack.c.bf16 %v5844, %v5844
    %s5846 = scalar_lea.vmem [#allocation11], 8
    %v5847 = vld [vmem:[%s5846] sm:$0xf]
    %v5848 = vld [vmem:[%s5846 + $0x4] sm:$0xf]
    %v5851 = vunpack.c.l.b16 %v5847
    %v5852 = vunpack.c.l.b16 %v5848
    %v5853 = vpack.c.b16 %v5852, %v5851
    %v5855 = vsel %vm5106, %v5853, 0
    %v5858 = vsel %vm5110, %v5845, 0
    %5860 = vmatprep.subr.bf16.mxu0 0
    %5861 = vmatpush1.bf16.msra.mxu0 %v5858
    %5862 = vmatprep.subr.bf16.mxu0 0
    %5863 = vmatpush1.bf16.msra.mxu0 0
    %5864 = vmatprep.subr.bf16.mxu0 0
    %5865 = vmatpush1.bf16.msra.mxu0 0
    %5866 = vmatprep.subr.bf16.mxu0 0
    %5867 = vmatpush1.bf16.msra.mxu0 0
    %5868 = vmatprep.subr.bf16.mxu0 0
    %5869 = vmatpush1.bf16.msra.mxu0 0
    %5870 = vmatprep.subr.bf16.mxu0 0
    %5871 = vmatpush1.bf16.msra.mxu0 0
    %5872 = vmatprep.subr.bf16.mxu0 0
    %5873 = vmatpush1.bf16.msra.mxu0 0
    %5874 = vmatprep.subr.bf16.mxu0 0
    %5875 = vmatpush1.bf16.msra.mxu0 0
    %5876 = vmatprep.subr.bf16.mxu0 0
    %5877 = vmatpush1.bf16.msra.mxu0 0
    %5878 = vmatprep.subr.bf16.mxu0 0
    %5879 = vmatpush1.bf16.msra.mxu0 0
    %5880 = vmatprep.subr.bf16.mxu0 0
    %5881 = vmatpush1.bf16.msra.mxu0 0
    %5882 = vmatprep.subr.bf16.mxu0 0
    %5883 = vmatpush1.bf16.msra.mxu0 0
    %5884 = vmatprep.subr.bf16.mxu0 0
    %5885 = vmatpush1.bf16.msra.mxu0 0
    %5886 = vmatprep.subr.bf16.mxu0 0
    %5887 = vmatpush1.bf16.msra.mxu0 0
    %5888 = vmatprep.subr.bf16.mxu0 0
    %5889 = vmatpush1.bf16.msra.mxu0 0
    %5890 = vmatprep.subr.bf16.mxu0 0
    %5891 = vmatpush1.bf16.msra.mxu0 0
    %5892 = vmatprep.mubr.bf16.mxu0 0
    %5893 = vmatmul.mubr.bf16.gmra.mrb[0].mxu0 %v5855
    %v5894 = vpop.f32.mrb[0].mxu0
    %v5895 = vadd.f32 0.0, %v5894
    %v5896 = vpop.f32.mrb[0].mxu0
    %v5897 = vpop.f32.mrb[0].mxu0
    %v5898 = vadd.f32 0.0, %v5897
    %v5899 = vpop.f32.mrb[0].mxu0
    %5900 = vdwg.mxu0
    %v5903 = vunpack.c.l.b16 %v5840
    %v5904 = vunpack.c.l.b16 %v5841
    %v5905 = vpack.c.b16 %v5904, %v5903
    %v5907 = vsel %vm5106, %v5905, 0
    %v5910 = vsel %vm5110, %v5839, 0
    %5912 = vmatprep.subr.bf16.mxu0 0
    %5913 = vmatpush1.bf16.msra.mxu0 %v5910
    %5914 = vmatprep.subr.bf16.mxu0 0
    %5915 = vmatpush1.bf16.msra.mxu0 0
    %5916 = vmatprep.subr.bf16.mxu0 0
    %5917 = vmatpush1.bf16.msra.mxu0 0
    %5918 = vmatprep.subr.bf16.mxu0 0
    %5919 = vmatpush1.bf16.msra.mxu0 0
    %5920 = vmatprep.subr.bf16.mxu0 0
    %5921 = vmatpush1.bf16.msra.mxu0 0
    %5922 = vmatprep.subr.bf16.mxu0 0
    %5923 = vmatpush1.bf16.msra.mxu0 0
    %5924 = vmatprep.subr.bf16.mxu0 0
    %5925 = vmatpush1.bf16.msra.mxu0 0
    %5926 = vmatprep.subr.bf16.mxu0 0
    %5927 = vmatpush1.bf16.msra.mxu0 0
    %5928 = vmatprep.subr.bf16.mxu0 0
    %5929 = vmatpush1.bf16.msra.mxu0 0
    %5930 = vmatprep.subr.bf16.mxu0 0
    %5931 = vmatpush1.bf16.msra.mxu0 0
    %5932 = vmatprep.subr.bf16.mxu0 0
    %5933 = vmatpush1.bf16.msra.mxu0 0
    %5934 = vmatprep.subr.bf16.mxu0 0
    %5935 = vmatpush1.bf16.msra.mxu0 0
    %5936 = vmatprep.subr.bf16.mxu0 0
    %5937 = vmatpush1.bf16.msra.mxu0 0
    %5938 = vmatprep.subr.bf16.mxu0 0
    %5939 = vmatpush1.bf16.msra.mxu0 0
    %5940 = vmatprep.subr.bf16.mxu0 0
    %5941 = vmatpush1.bf16.msra.mxu0 0
    %5942 = vmatprep.subr.bf16.mxu0 0
    %5943 = vmatpush1.bf16.msra.mxu0 0
    %5944 = vmatprep.mubr.bf16.mxu0 0
    %5945 = vmatmul.mubr.bf16.gmra.mrb[0].mxu0 %v5907
    %v5946 = vpop.f32.mrb[0].mxu0
    %v5947 = vadd.f32 %v5895, %v5946
    %v5948 = vpop.f32.mrb[0].mxu0
    %v5949 = vpop.f32.mrb[0].mxu0
    %v5950 = vadd.f32 %v5898, %v5949
    %v5951 = vpop.f32.mrb[0].mxu0
    %5952 = vdwg.mxu0
    %5953 = vrot.lane.b32.xlu0 %v5835, 7
    %v5954 = vpop.permute.xlu0 %5953
    %v5955 = vsel %vm5209, %v5954, 0.0
    %v5956 = vpack.c.bf16 %v5955, %v5955
    %s5957 = scalar_lea.vmem [#allocation11], 16
    %v5958 = vld [vmem:[%s5957] sm:$0xf]
    %v5959 = vld [vmem:[%s5957 + $0x4] sm:$0xf]
    %v5962 = vunpack.c.l.b16 %v5958
    %v5963 = vunpack.c.l.b16 %v5959
    %v5964 = vpack.c.b16 %v5963, %v5962
    %v5966 = vsel %vm5106, %v5964, 0
    %v5969 = vsel %vm5110, %v5956, 0
    %5971 = vmatprep.subr.bf16.mxu0 0
    %5972 = vmatpush1.bf16.msra.mxu0 %v5969
    %5973 = vmatprep.subr.bf16.mxu0 0
    %5974 = vmatpush1.bf16.msra.mxu0 0
    %5975 = vmatprep.subr.bf16.mxu0 0
    %5976 = vmatpush1.bf16.msra.mxu0 0
    %5977 = vmatprep.subr.bf16.mxu0 0
    %5978 = vmatpush1.bf16.msra.mxu0 0
    %5979 = vmatprep.subr.bf16.mxu0 0
    %5980 = vmatpush1.bf16.msra.mxu0 0
    %5981 = vmatprep.subr.bf16.mxu0 0
    %5982 = vmatpush1.bf16.msra.mxu0 0
    %5983 = vmatprep.subr.bf16.mxu0 0
    %5984 = vmatpush1.bf16.msra.mxu0 0
    %5985 = vmatprep.subr.bf16.mxu0 0
    %5986 = vmatpush1.bf16.msra.mxu0 0
    %5987 = vmatprep.subr.bf16.mxu0 0
    %5988 = vmatpush1.bf16.msra.mxu0 0
    %5989 = vmatprep.subr.bf16.mxu0 0
    %5990 = vmatpush1.bf16.msra.mxu0 0
    %5991 = vmatprep.subr.bf16.mxu0 0
    %5992 = vmatpush1.bf16.msra.mxu0 0
    %5993 = vmatprep.subr.bf16.mxu0 0
    %5994 = vmatpush1.bf16.msra.mxu0 0
    %5995 = vmatprep.subr.bf16.mxu0 0
    %5996 = vmatpush1.bf16.msra.mxu0 0
    %5997 = vmatprep.subr.bf16.mxu0 0
    %5998 = vmatpush1.bf16.msra.mxu0 0
    %5999 = vmatprep.subr.bf16.mxu0 0
    %6000 = vmatpush1.bf16.msra.mxu0 0
    %6001 = vmatprep.subr.bf16.mxu0 0
    %6002 = vmatpush1.bf16.msra.mxu0 0
    %6003 = vmatprep.mubr.bf16.mxu0 0
    %6004 = vmatmul.mubr.bf16.gmra.mrb[0].mxu0 %v5966
    %v6005 = vpop.f32.mrb[0].mxu0
    %v6006 = vadd.f32 0.0, %v6005
    %v6007 = vpop.f32.mrb[0].mxu0
    %v6008 = vpop.f32.mrb[0].mxu0
    %v6009 = vadd.f32 0.0, %v6008
    %v6010 = vpop.f32.mrb[0].mxu0
    %6011 = vdwg.mxu0
    %v6012 = vadd.f32 %v5947, %v6006
    %v6013 = vadd.f32 %v5950, %v6009
    %6014 = vrot.lane.b32.xlu0 %v5835, 1
    %v6015 = vpop.permute.xlu0 %6014
    %v6016 = vsel %vm5268, %v6015, 0.0
    %v6017 = vpack.c.bf16 %v6016, %v6016
    %s6018 = scalar_lea.vmem [#allocation11], 24
    %v6019 = vld [vmem:[%s6018] sm:$0xf]
    %v6020 = vld [vmem:[%s6018 + $0x4] sm:$0xf]
    %v6023 = vunpack.c.l.b16 %v6019
    %v6024 = vunpack.c.l.b16 %v6020
    %v6025 = vpack.c.b16 %v6024, %v6023
    %v6027 = vsel %vm5106, %v6025, 0
    %v6030 = vsel %vm5110, %v6017, 0
    %6032 = vmatprep.subr.bf16.mxu0 0
    %6033 = vmatpush1.bf16.msra.mxu0 %v6030
    %6034 = vmatprep.subr.bf16.mxu0 0
    %6035 = vmatpush1.bf16.msra.mxu0 0
    %6036 = vmatprep.subr.bf16.mxu0 0
    %6037 = vmatpush1.bf16.msra.mxu0 0
    %6038 = vmatprep.subr.bf16.mxu0 0
    %6039 = vmatpush1.bf16.msra.mxu0 0
    %6040 = vmatprep.subr.bf16.mxu0 0
    %6041 = vmatpush1.bf16.msra.mxu0 0
    %6042 = vmatprep.subr.bf16.mxu0 0
    %6043 = vmatpush1.bf16.msra.mxu0 0
    %6044 = vmatprep.subr.bf16.mxu0 0
    %6045 = vmatpush1.bf16.msra.mxu0 0
    %6046 = vmatprep.subr.bf16.mxu0 0
    %6047 = vmatpush1.bf16.msra.mxu0 0
    %6048 = vmatprep.subr.bf16.mxu0 0
    %6049 = vmatpush1.bf16.msra.mxu0 0
    %6050 = vmatprep.subr.bf16.mxu0 0
    %6051 = vmatpush1.bf16.msra.mxu0 0
    %6052 = vmatprep.subr.bf16.mxu0 0
    %6053 = vmatpush1.bf16.msra.mxu0 0
    %6054 = vmatprep.subr.bf16.mxu0 0
    %6055 = vmatpush1.bf16.msra.mxu0 0
    %6056 = vmatprep.subr.bf16.mxu0 0
    %6057 = vmatpush1.bf16.msra.mxu0 0
    %6058 = vmatprep.subr.bf16.mxu0 0
    %6059 = vmatpush1.bf16.msra.mxu0 0
    %6060 = vmatprep.subr.bf16.mxu0 0
    %6061 = vmatpush1.bf16.msra.mxu0 0
    %6062 = vmatprep.subr.bf16.mxu0 0
    %6063 = vmatpush1.bf16.msra.mxu0 0
    %6064 = vmatprep.mubr.bf16.mxu0 0
    %6065 = vmatmul.mubr.bf16.gmra.mrb[0].mxu0 %v6027
    %v6066 = vpop.f32.mrb[0].mxu0
    %v6067 = vadd.f32 0.0, %v6066
    %v6068 = vpop.f32.mrb[0].mxu0
    %v6069 = vpop.f32.mrb[0].mxu0
    %v6070 = vadd.f32 0.0, %v6069
    %v6071 = vpop.f32.mrb[0].mxu0
    %6072 = vdwg.mxu0
    %v6073 = vadd.f32 %v6012, %v6067
    %v6074 = vadd.f32 %v6013, %v6070
    %v6075 = vsel %vm5323, %v5835, 0.0
    %v6076 = vpack.c.bf16 %v6075, %v6075
    %s6077 = scalar_lea.vmem [#allocation11], 32
    %v6078 = vld [vmem:[%s6077] sm:$0xf]
    %v6079 = vld [vmem:[%s6077 + $0x4] sm:$0xf]
    %v6082 = vunpack.c.l.b16 %v6078
    %v6083 = vunpack.c.l.b16 %v6079
    %v6084 = vpack.c.b16 %v6083, %v6082
    %v6086 = vsel %vm5106, %v6084, 0
    %v6089 = vsel %vm5110, %v6076, 0
    %6091 = vmatprep.subr.bf16.mxu0 0
    %6092 = vmatpush1.bf16.msra.mxu0 %v6089
    %6093 = vmatprep.subr.bf16.mxu0 0
    %6094 = vmatpush1.bf16.msra.mxu0 0
    %6095 = vmatprep.subr.bf16.mxu0 0
    %6096 = vmatpush1.bf16.msra.mxu0 0
    %6097 = vmatprep.subr.bf16.mxu0 0
    %6098 = vmatpush1.bf16.msra.mxu0 0
    %6099 = vmatprep.subr.bf16.mxu0 0
    %6100 = vmatpush1.bf16.msra.mxu0 0
    %6101 = vmatprep.subr.bf16.mxu0 0
    %6102 = vmatpush1.bf16.msra.mxu0 0
    %6103 = vmatprep.subr.bf16.mxu0 0
    %6104 = vmatpush1.bf16.msra.mxu0 0
    %6105 = vmatprep.subr.bf16.mxu0 0
    %6106 = vmatpush1.bf16.msra.mxu0 0
    %6107 = vmatprep.subr.bf16.mxu0 0
    %6108 = vmatpush1.bf16.msra.mxu0 0
    %6109 = vmatprep.subr.bf16.mxu0 0
    %6110 = vmatpush1.bf16.msra.mxu0 0
    %6111 = vmatprep.subr.bf16.mxu0 0
    %6112 = vmatpush1.bf16.msra.mxu0 0
    %6113 = vmatprep.subr.bf16.mxu0 0
    %6114 = vmatpush1.bf16.msra.mxu0 0
    %6115 = vmatprep.subr.bf16.mxu0 0
    %6116 = vmatpush1.bf16.msra.mxu0 0
    %6117 = vmatprep.subr.bf16.mxu0 0
    %6118 = vmatpush1.bf16.msra.mxu0 0
    %6119 = vmatprep.subr.bf16.mxu0 0
    %6120 = vmatpush1.bf16.msra.mxu0 0
    %6121 = vmatprep.subr.bf16.mxu0 0
    %6122 = vmatpush1.bf16.msra.mxu0 0
    %6123 = vmatprep.mubr.bf16.mxu0 0
    %6124 = vmatmul.mubr.bf16.gmra.mrb[0].mxu0 %v6086
    %v6125 = vpop.f32.mrb[0].mxu0
    %v6126 = vadd.f32 0.0, %v6125
    %v6127 = vpop.f32.mrb[0].mxu0
    %v6128 = vpop.f32.mrb[0].mxu0
    %v6129 = vadd.f32 0.0, %v6128
    %v6130 = vpop.f32.mrb[0].mxu0
    %6131 = vdwg.mxu0
    %v6132 = vadd.f32 %v6073, %v6126
    %v6133 = vadd.f32 %v6074, %v6129
    %6134 = vrot.lane.b32.xlu0 %v5835, 127
    %v6135 = vpop.permute.xlu0 %6134
    %v6136 = vsel %vm5380, %v6135, 0.0
    %v6137 = vpack.c.bf16 %v6136, %v6136
    %s6138 = scalar_lea.vmem [#allocation11], 40
    %v6139 = vld [vmem:[%s6138] sm:$0xf]
    %v6140 = vld [vmem:[%s6138 + $0x4] sm:$0xf]
    %v6143 = vunpack.c.l.b16 %v6139
    %v6144 = vunpack.c.l.b16 %v6140
    %v6145 = vpack.c.b16 %v6144, %v6143
    %v6147 = vsel %vm5106, %v6145, 0
    %v6150 = vsel %vm5110, %v6137, 0
    %6152 = vmatprep.subr.bf16.mxu0 0
    %6153 = vmatpush1.bf16.msra.mxu0 %v6150
    %6154 = vmatprep.subr.bf16.mxu0 0
    %6155 = vmatpush1.bf16.msra.mxu0 0
    %6156 = vmatprep.subr.bf16.mxu0 0
    %6157 = vmatpush1.bf16.msra.mxu0 0
    %6158 = vmatprep.subr.bf16.mxu0 0
    %6159 = vmatpush1.bf16.msra.mxu0 0
    %6160 = vmatprep.subr.bf16.mxu0 0
    %6161 = vmatpush1.bf16.msra.mxu0 0
    %6162 = vmatprep.subr.bf16.mxu0 0
    %6163 = vmatpush1.bf16.msra.mxu0 0
    %6164 = vmatprep.subr.bf16.mxu0 0
    %6165 = vmatpush1.bf16.msra.mxu0 0
    %6166 = vmatprep.subr.bf16.mxu0 0
    %6167 = vmatpush1.bf16.msra.mxu0 0
    %6168 = vmatprep.subr.bf16.mxu0 0
    %6169 = vmatpush1.bf16.msra.mxu0 0
    %6170 = vmatprep.subr.bf16.mxu0 0
    %6171 = vmatpush1.bf16.msra.mxu0 0
    %6172 = vmatprep.subr.bf16.mxu0 0
    %6173 = vmatpush1.bf16.msra.mxu0 0
    %6174 = vmatprep.subr.bf16.mxu0 0
    %6175 = vmatpush1.bf16.msra.mxu0 0
    %6176 = vmatprep.subr.bf16.mxu0 0
    %6177 = vmatpush1.bf16.msra.mxu0 0
    %6178 = vmatprep.subr.bf16.mxu0 0
    %6179 = vmatpush1.bf16.msra.mxu0 0
    %6180 = vmatprep.subr.bf16.mxu0 0
    %6181 = vmatpush1.bf16.msra.mxu0 0
    %6182 = vmatprep.subr.bf16.mxu0 0
    %6183 = vmatpush1.bf16.msra.mxu0 0
    %6184 = vmatprep.mubr.bf16.mxu0 0
    %6185 = vmatmul.mubr.bf16.gmra.mrb[0].mxu0 %v6147
    %v6186 = vpop.f32.mrb[0].mxu0
    %v6187 = vadd.f32 0.0, %v6186
    %v6188 = vpop.f32.mrb[0].mxu0
    %v6189 = vpop.f32.mrb[0].mxu0
    %v6190 = vadd.f32 0.0, %v6189
    %v6191 = vpop.f32.mrb[0].mxu0
    %6192 = vdwg.mxu0
    %v6193 = vadd.f32 %v6132, %v6187
    %v6194 = vadd.f32 %v6133, %v6190
    %6195 = vrot.lane.b32.xlu0 %v5835, 121
    %v6196 = vpop.permute.xlu0 %6195
    %v6197 = vsel %vm5440, %v6196, 0.0
    %v6198 = vpack.c.bf16 %v6197, %v6197
    %s6199 = scalar_lea.vmem [#allocation11], 48
    %v6200 = vld [vmem:[%s6199] sm:$0xf]
    %v6201 = vld [vmem:[%s6199 + $0x4] sm:$0xf]
    %v6204 = vunpack.c.l.b16 %v6200
    %v6205 = vunpack.c.l.b16 %v6201
    %v6206 = vpack.c.b16 %v6205, %v6204
    %v6208 = vsel %vm5106, %v6206, 0
    %v6211 = vsel %vm5110, %v6198, 0
    %6213 = vmatprep.subr.bf16.mxu0 0
    %6214 = vmatpush1.bf16.msra.mxu0 %v6211
    %6215 = vmatprep.subr.bf16.mxu0 0
    %6216 = vmatpush1.bf16.msra.mxu0 0
    %6217 = vmatprep.subr.bf16.mxu0 0
    %6218 = vmatpush1.bf16.msra.mxu0 0
    %6219 = vmatprep.subr.bf16.mxu0 0
    %6220 = vmatpush1.bf16.msra.mxu0 0
    %6221 = vmatprep.subr.bf16.mxu0 0
    %6222 = vmatpush1.bf16.msra.mxu0 0
    %6223 = vmatprep.subr.bf16.mxu0 0
    %6224 = vmatpush1.bf16.msra.mxu0 0
    %6225 = vmatprep.subr.bf16.mxu0 0
    %6226 = vmatpush1.bf16.msra.mxu0 0
    %6227 = vmatprep.subr.bf16.mxu0 0
    %6228 = vmatpush1.bf16.msra.mxu0 0
    %6229 = vmatprep.subr.bf16.mxu0 0
    %6230 = vmatpush1.bf16.msra.mxu0 0
    %6231 = vmatprep.subr.bf16.mxu0 0
    %6232 = vmatpush1.bf16.msra.mxu0 0
    %6233 = vmatprep.subr.bf16.mxu0 0
    %6234 = vmatpush1.bf16.msra.mxu0 0
    %6235 = vmatprep.subr.bf16.mxu0 0
    %6236 = vmatpush1.bf16.msra.mxu0 0
    %6237 = vmatprep.subr.bf16.mxu0 0
    %6238 = vmatpush1.bf16.msra.mxu0 0
    %6239 = vmatprep.subr.bf16.mxu0 0
    %6240 = vmatpush1.bf16.msra.mxu0 0
    %6241 = vmatprep.subr.bf16.mxu0 0
    %6242 = vmatpush1.bf16.msra.mxu0 0
    %6243 = vmatprep.subr.bf16.mxu0 0
    %6244 = vmatpush1.bf16.msra.mxu0 0
    %6245 = vmatprep.mubr.bf16.mxu0 0
    %6246 = vmatmul.mubr.bf16.gmra.mrb[0].mxu0 %v6208
    %v6247 = vpop.f32.mrb[0].mxu0
    %v6248 = vadd.f32 0.0, %v6247
    %v6249 = vpop.f32.mrb[0].mxu0
    %v6250 = vpop.f32.mrb[0].mxu0
    %v6251 = vadd.f32 0.0, %v6250
    %v6252 = vpop.f32.mrb[0].mxu0
    %6253 = vdwg.mxu0
    %v6254 = vadd.f32 %v6193, %v6248
    %v6255 = vadd.f32 %v6194, %v6251
    %6256 = vrot.lane.b32.xlu0 %v5835, 120
    %v6257 = vpop.permute.xlu0 %6256
    %v6258 = vsel %vm5497, %v6257, 0.0
    %v6259 = vpack.c.bf16 %v6258, %v6258
    %s6260 = scalar_lea.vmem [#allocation11], 56
    %v6261 = vld [vmem:[%s6260] sm:$0xf]
    %v6262 = vld [vmem:[%s6260 + $0x4] sm:$0xf]
    %v6265 = vunpack.c.l.b16 %v6261
    %v6266 = vunpack.c.l.b16 %v6262
    %v6267 = vpack.c.b16 %v6266, %v6265
    %v6269 = vsel %vm5106, %v6267, 0
    %v6272 = vsel %vm5110, %v6259, 0
    %6274 = vmatprep.subr.bf16.mxu0 0
    %6275 = vmatpush1.bf16.msra.mxu0 %v6272
    %6276 = vmatprep.subr.bf16.mxu0 0
    %6277 = vmatpush1.bf16.msra.mxu0 0
    %6278 = vmatprep.subr.bf16.mxu0 0
    %6279 = vmatpush1.bf16.msra.mxu0 0
    %6280 = vmatprep.subr.bf16.mxu0 0
    %6281 = vmatpush1.bf16.msra.mxu0 0
    %6282 = vmatprep.subr.bf16.mxu0 0
    %6283 = vmatpush1.bf16.msra.mxu0 0
    %6284 = vmatprep.subr.bf16.mxu0 0
    %6285 = vmatpush1.bf16.msra.mxu0 0
    %6286 = vmatprep.subr.bf16.mxu0 0
    %6287 = vmatpush1.bf16.msra.mxu0 0
    %6288 = vmatprep.subr.bf16.mxu0 0
    %6289 = vmatpush1.bf16.msra.mxu0 0
    %6290 = vmatprep.subr.bf16.mxu0 0
    %6291 = vmatpush1.bf16.msra.mxu0 0
    %6292 = vmatprep.subr.bf16.mxu0 0
    %6293 = vmatpush1.bf16.msra.mxu0 0
    %6294 = vmatprep.subr.bf16.mxu0 0
    %6295 = vmatpush1.bf16.msra.mxu0 0
    %6296 = vmatprep.subr.bf16.mxu0 0
    %6297 = vmatpush1.bf16.msra.mxu0 0
    %6298 = vmatprep.subr.bf16.mxu0 0
    %6299 = vmatpush1.bf16.msra.mxu0 0
    %6300 = vmatprep.subr.bf16.mxu0 0
    %6301 = vmatpush1.bf16.msra.mxu0 0
    %6302 = vmatprep.subr.bf16.mxu0 0
    %6303 = vmatpush1.bf16.msra.mxu0 0
    %6304 = vmatprep.subr.bf16.mxu0 0
    %6305 = vmatpush1.bf16.msra.mxu0 0
    %6306 = vmatprep.mubr.bf16.mxu0 0
    %6307 = vmatmul.mubr.bf16.gmra.mrb[0].mxu0 %v6269
    %v6308 = vpop.f32.mrb[0].mxu0
    %v6309 = vadd.f32 0.0, %v6308
    %v6310 = vpop.f32.mrb[0].mxu0
    %v6311 = vpop.f32.mrb[0].mxu0
    %v6312 = vadd.f32 0.0, %v6311
    %v6313 = vpop.f32.mrb[0].mxu0
    %6314 = vdwg.mxu0
    %v6315 = vadd.f32 %v6254, %v6309
    %v6316 = vadd.f32 %v6255, %v6312
    %6317 = vrot.lane.b32.xlu0 %v5835, 119
    %v6318 = vpop.permute.xlu0 %6317
    %v6319 = vsel %vm5554, %v6318, 0.0
    %v6320 = vpack.c.bf16 %v6319, %v6319
    %s6321 = scalar_lea.vmem [#allocation11], 64
    %v6322 = vld [vmem:[%s6321] sm:$0xf]
    %v6323 = vld [vmem:[%s6321 + $0x4] sm:$0xf]
    %v6326 = vunpack.c.l.b16 %v6322
    %v6327 = vunpack.c.l.b16 %v6323
    %v6328 = vpack.c.b16 %v6327, %v6326
    %v6330 = vsel %vm5106, %v6328, 0
    %v6333 = vsel %vm5110, %v6320, 0
    %6335 = vmatprep.subr.bf16.mxu0 0
    %6336 = vmatpush1.bf16.msra.mxu0 %v6333
    %6337 = vmatprep.subr.bf16.mxu0 0
    %6338 = vmatpush1.bf16.msra.mxu0 0
    %6339 = vmatprep.subr.bf16.mxu0 0
    %6340 = vmatpush1.bf16.msra.mxu0 0
    %6341 = vmatprep.subr.bf16.mxu0 0
    %6342 = vmatpush1.bf16.msra.mxu0 0
    %6343 = vmatprep.subr.bf16.mxu0 0
    %6344 = vmatpush1.bf16.msra.mxu0 0
    %6345 = vmatprep.subr.bf16.mxu0 0
    %6346 = vmatpush1.bf16.msra.mxu0 0
    %6347 = vmatprep.subr.bf16.mxu0 0
    %6348 = vmatpush1.bf16.msra.mxu0 0
    %6349 = vmatprep.subr.bf16.mxu0 0
    %6350 = vmatpush1.bf16.msra.mxu0 0
    %6351 = vmatprep.subr.bf16.mxu0 0
    %6352 = vmatpush1.bf16.msra.mxu0 0
    %6353 = vmatprep.subr.bf16.mxu0 0
    %6354 = vmatpush1.bf16.msra.mxu0 0
    %6355 = vmatprep.subr.bf16.mxu0 0
    %6356 = vmatpush1.bf16.msra.mxu0 0
    %6357 = vmatprep.subr.bf16.mxu0 0
    %6358 = vmatpush1.bf16.msra.mxu0 0
    %6359 = vmatprep.subr.bf16.mxu0 0
    %6360 = vmatpush1.bf16.msra.mxu0 0
    %6361 = vmatprep.subr.bf16.mxu0 0
    %6362 = vmatpush1.bf16.msra.mxu0 0
    %6363 = vmatprep.subr.bf16.mxu0 0
    %6364 = vmatpush1.bf16.msra.mxu0 0
    %6365 = vmatprep.subr.bf16.mxu0 0
    %6366 = vmatpush1.bf16.msra.mxu0 0
    %6367 = vmatprep.mubr.bf16.mxu0 0
    %6368 = vmatmul.mubr.bf16.gmra.mrb[0].mxu0 %v6330
    %v6369 = vpop.f32.mrb[0].mxu0
    %v6370 = vadd.f32 0.0, %v6369
    %v6371 = vpop.f32.mrb[0].mxu0
    %v6372 = vpop.f32.mrb[0].mxu0
    %v6373 = vadd.f32 0.0, %v6372
    %v6374 = vpop.f32.mrb[0].mxu0
    %6375 = vdwg.mxu0
    %v6376 = vadd.f32 %v6315, %v6370
    %v6377 = vadd.f32 %v6316, %v6373
    %v6378 = vld [vmem:[%s9] sm:$0xff]
    %v6379 = vld [vmem:[%s9 + $0x8] sm:$0xff]
    %v6380 = vld [vmem:[%s9 + $0x10] sm:$0xff]
    %v6381 = vld [vmem:[%s9 + $0x18] sm:$0xff]
    %v6382 = vld [vmem:[%s9 + $0x20] sm:$0xff]
    %v6383 = vld [vmem:[%s9 + $0x28] sm:$0xff]
    %v6384 = vld [vmem:[%s9 + $0x30] sm:$0xff]
    %v6385 = vld [vmem:[%s9 + $0x38] sm:$0xff]
    %v6386 = vld [vmem:[%s9 + $0x40] sm:$0xff]
    %v6387 = vld [vmem:[%s9 + $0x48] sm:$0xff]
    %v6388 = vld [vmem:[%s9 + $0x50] sm:$0xff]
    %v6389 = vld [vmem:[%s9 + $0x58] sm:$0xff]
    %v6390 = vld [vmem:[%s9 + $0x60] sm:$0xff]
    %v6391 = vld [vmem:[%s9 + $0x68] sm:$0xff]
    %v6392 = vld [vmem:[%s9 + $0x70] sm:$0xff]
    %v6393 = vld [vmem:[%s9 + $0x78] sm:$0xff]
    %v6394 = vstv %s5830
    %6395 = vmatprep.subr.mxu0 0.0
    %6396 = vmatpush1.msra.mxu0 %v6378
    %6397 = vmatprep.subr.mxu0 0.0
    %6398 = vmatpush1.msra.mxu0 %v6379
    %6399 = vmatprep.subr.mxu0 0.0
    %6400 = vmatpush1.msra.mxu0 %v6380
    %6401 = vmatprep.subr.mxu0 0.0
    %6402 = vmatpush1.msra.mxu0 %v6381
    %6403 = vmatprep.subr.mxu0 0.0
    %6404 = vmatpush1.msra.mxu0 %v6382
    %6405 = vmatprep.subr.mxu0 0.0
    %6406 = vmatpush1.msra.mxu0 %v6383
    %6407 = vmatprep.subr.mxu0 0.0
    %6408 = vmatpush1.msra.mxu0 %v6384
    %6409 = vmatprep.subr.mxu0 0.0
    %6410 = vmatpush1.msra.mxu0 %v6385
    %6411 = vmatprep.subr.mxu0 0.0
    %6412 = vmatpush1.msra.mxu0 %v6386
    %6413 = vmatprep.subr.mxu0 0.0
    %6414 = vmatpush1.msra.mxu0 %v6387
    %6415 = vmatprep.subr.mxu0 0.0
    %6416 = vmatpush1.msra.mxu0 %v6388
    %6417 = vmatprep.subr.mxu0 0.0
    %6418 = vmatpush1.msra.mxu0 %v6389
    %6419 = vmatprep.subr.mxu0 0.0
    %6420 = vmatpush1.msra.mxu0 %v6390
    %6421 = vmatprep.subr.mxu0 0.0
    %6422 = vmatpush1.msra.mxu0 %v6391
    %6423 = vmatprep.subr.mxu0 0.0
    %6424 = vmatpush1.msra.mxu0 %v6392
    %6425 = vmatprep.subr.mxu0 0.0
    %6426 = vmatpush1.msra.mxu0 %v6393
    %6427 = vmatprep.subr.mxu0 0.0
    %6428 = vmatpush1.msra.mxu0 0.0
    %6429 = vmatprep.subr.mxu0 0.0
    %6430 = vmatpush1.msra.mxu0 0.0
    %6431 = vmatprep.subr.mxu0 0.0
    %6432 = vmatpush1.msra.mxu0 0.0
    %6433 = vmatprep.subr.mxu0 0.0
    %6434 = vmatpush1.msra.mxu0 0.0
    %6435 = vmatprep.subr.mxu0 0.0
    %6436 = vmatpush1.msra.mxu0 0.0
    %6437 = vmatprep.subr.mxu0 0.0
    %6438 = vmatpush1.msra.mxu0 0.0
    %6439 = vmatprep.subr.mxu0 0.0
    %6440 = vmatpush1.msra.mxu0 0.0
    %6441 = vmatprep.subr.mxu0 0.0
    %6442 = vmatpush1.msra.mxu0 0.0
    %6443 = vmatprep.subr.mxu0 0.0
    %6444 = vmatpush1.msra.mxu0 0.0
    %6445 = vmatprep.subr.mxu0 0.0
    %6446 = vmatpush1.msra.mxu0 0.0
    %6447 = vmatprep.subr.mxu0 0.0
    %6448 = vmatpush1.msra.mxu0 0.0
    %6449 = vmatprep.subr.mxu0 0.0
    %6450 = vmatpush1.msra.mxu0 0.0
    %6451 = vmatprep.subr.mxu0 0.0
    %6452 = vmatpush1.msra.mxu0 0.0
    %6453 = vmatprep.subr.mxu0 0.0
    %6454 = vmatpush1.msra.mxu0 0.0
    %6455 = vmatprep.subr.mxu0 0.0
    %6456 = vmatpush1.msra.mxu0 0.0
    %6457 = vmatprep.subr.mxu0 0.0
    %6458 = vmatpush1.msra.mxu0 0.0
    %6459 = vmatprep.mubr.f32.mxu0 0.0
    %6460 = vmatmul.mubr.f32.gmra.mrb[0].mxu0 %v6376
    %v6461 = vpop.f32.mrb[0].mxu0
    %v6462 = vadd.f32 %v6394, %v6461
    %v6463 = vpop.f32.mrb[0].mxu0
    %6464 = vmatprep.mubr.f32.mxu0 0.0
    %6465 = vmatmul.mubr.f32.gmra.mrb[0].mxu0 %v6377
    %v6466 = vpop.f32.mrb[0].mxu0
    %v6467 = vadd.f32 %v6394, %v6466
    %v6468 = vpop.f32.mrb[0].mxu0
    %6469 = vdwg.mxu0
    %v6470 = vmax.f32 %v6462, 0.0
    %v6471 = vmax.f32 %v6467, 0.0
    %v6472 = vstv %s5831
    %v6473 = vadd.f32 %v6470, %v6472
    %v6474 = vadd.f32 %v6471, %v6472
    %v6475 = vand.u32 %v204, 3
    %v6476 = vshra.s32 %v204, 2
    %v6477 = vand.u32 %v6476, 3
    %6478 = vrot.lane.b32.xlu0 %v6473, 5
    %v6479 = vpop.permute.xlu0 %6478
    %6480 = vrot.lane.b32.xlu0 %v6474, 5
    %v6481 = vpop.permute.xlu0 %6480
    %v6482 = vadd.s32 %v6475, 4294967295
    %vm6483 = vcmp.ge.s32.totalorder %v6482, 0
    %vm6484 = vcmp.lt.s32.totalorder %v6482, 4
    %vm6485 = vmand %vm6483, %vm6484
    %v6486 = vadd.s32 %v6477, 4294967295
    %vm6487 = vcmp.ge.s32.totalorder %v6486, 0
    %vm6488 = vmand %vm6485, %vm6487
    %vm6489 = vcmp.lt.s32.totalorder %v6486, 4
    %vm6490 = vmand %vm6488, %vm6489
    %v6491 = vsel %vm6490, 1, 0
    %vm6492 = vcmp.eq.s32.totalorder %v6491, 1
    %v6493 = vsel %vm6492, %v6479, 0.0
    %v6494 = vsel %vm6492, %v6481, 0.0
    %v6495 = vpack.c.bf16 %v6494, %v6493
    %v6496 = vld [vmem:[%s7] sm:$0xf]
    %v6497 = vld [vmem:[%s7 + $0x4] sm:$0xf]
    %6498 = vrot.lane.b32.xlu0 %v6473, 4
    %v6499 = vpop.permute.xlu0 %6498
    %6500 = vrot.lane.b32.xlu0 %v6474, 4
    %v6501 = vpop.permute.xlu0 %6500
    %vm6502 = vcmp.ge.s32.totalorder %v6475, 0
    %vm6503 = vcmp.lt.s32.totalorder %v6475, 4
    %vm6504 = vmand %vm6502, %vm6503
    %vm6505 = vmand %vm6504, %vm6487
    %vm6506 = vmand %vm6505, %vm6489
    %v6507 = vsel %vm6506, 1, 0
    %vm6508 = vcmp.eq.s32.totalorder %v6507, 1
    %v6509 = vsel %vm6508, %v6499, 0.0
    %v6510 = vsel %vm6508, %v6501, 0.0
    %v6511 = vpack.c.bf16 %v6510, %v6509
    %s6512 = scalar_lea.vmem %s7, 8
    %v6513 = vld [vmem:[%s6512] sm:$0xf]
    %v6514 = vld [vmem:[%s6512 + $0x4] sm:$0xf]
    %v6517 = vunpack.c.l.b16 %v6513
    %v6518 = vunpack.c.l.b16 %v6514
    %v6519 = vpack.c.b16 %v6518, %v6517
    %vm6520 = vcmask 130048
    %v6522 = vsel %vm6520, %v6519, 0
    %6524 = vmatprep.subr.bf16.mxu0 0
    %6525 = vmatpush1.bf16.msra.mxu0 %v6511
    %6526 = vmatprep.subr.bf16.mxu0 0
    %6527 = vmatpush1.bf16.msra.mxu0 0
    %6528 = vmatprep.subr.bf16.mxu0 0
    %6529 = vmatpush1.bf16.msra.mxu0 0
    %6530 = vmatprep.subr.bf16.mxu0 0
    %6531 = vmatpush1.bf16.msra.mxu0 0
    %6532 = vmatprep.subr.bf16.mxu0 0
    %6533 = vmatpush1.bf16.msra.mxu0 0
    %6534 = vmatprep.subr.bf16.mxu0 0
    %6535 = vmatpush1.bf16.msra.mxu0 0
    %6536 = vmatprep.subr.bf16.mxu0 0
    %6537 = vmatpush1.bf16.msra.mxu0 0
    %6538 = vmatprep.subr.bf16.mxu0 0
    %6539 = vmatpush1.bf16.msra.mxu0 0
    %6540 = vmatprep.subr.bf16.mxu0 0
    %6541 = vmatpush1.bf16.msra.mxu0 0
    %6542 = vmatprep.subr.bf16.mxu0 0
    %6543 = vmatpush1.bf16.msra.mxu0 0
    %6544 = vmatprep.subr.bf16.mxu0 0
    %6545 = vmatpush1.bf16.msra.mxu0 0
    %6546 = vmatprep.subr.bf16.mxu0 0
    %6547 = vmatpush1.bf16.msra.mxu0 0
    %6548 = vmatprep.subr.bf16.mxu0 0
    %6549 = vmatpush1.bf16.msra.mxu0 0
    %6550 = vmatprep.subr.bf16.mxu0 0
    %6551 = vmatpush1.bf16.msra.mxu0 0
    %6552 = vmatprep.subr.bf16.mxu0 0
    %6553 = vmatpush1.bf16.msra.mxu0 0
    %6554 = vmatprep.subr.bf16.mxu0 0
    %6555 = vmatpush1.bf16.msra.mxu0 0
    %6556 = vmatprep.mubr.bf16.mxu0 0
    %6557 = vmatmul.mubr.bf16.gmra.mrb[0].mxu0 %v6522
    %v6558 = vpop.f32.mrb[0].mxu0
    %v6559 = vadd.f32 0.0, %v6558
    %v6560 = vpop.f32.mrb[0].mxu0
    %v6561 = vpop.f32.mrb[0].mxu0
    %v6562 = vadd.f32 0.0, %v6561
    %v6563 = vpop.f32.mrb[0].mxu0
    %6564 = vdwg.mxu0
    %v6567 = vunpack.c.l.b16 %v6496
    %v6568 = vunpack.c.l.b16 %v6497
    %v6569 = vpack.c.b16 %v6568, %v6567
    %v6571 = vsel %vm6520, %v6569, 0
    %6573 = vmatprep.subr.bf16.mxu0 0
    %6574 = vmatpush1.bf16.msra.mxu0 %v6495
    %6575 = vmatprep.subr.bf16.mxu0 0
    %6576 = vmatpush1.bf16.msra.mxu0 0
    %6577 = vmatprep.subr.bf16.mxu0 0
    %6578 = vmatpush1.bf16.msra.mxu0 0
    %6579 = vmatprep.subr.bf16.mxu0 0
    %6580 = vmatpush1.bf16.msra.mxu0 0
    %6581 = vmatprep.subr.bf16.mxu0 0
    %6582 = vmatpush1.bf16.msra.mxu0 0
    %6583 = vmatprep.subr.bf16.mxu0 0
    %6584 = vmatpush1.bf16.msra.mxu0 0
    %6585 = vmatprep.subr.bf16.mxu0 0
    %6586 = vmatpush1.bf16.msra.mxu0 0
    %6587 = vmatprep.subr.bf16.mxu0 0
    %6588 = vmatpush1.bf16.msra.mxu0 0
    %6589 = vmatprep.subr.bf16.mxu0 0
    %6590 = vmatpush1.bf16.msra.mxu0 0
    %6591 = vmatprep.subr.bf16.mxu0 0
    %6592 = vmatpush1.bf16.msra.mxu0 0
    %6593 = vmatprep.subr.bf16.mxu0 0
    %6594 = vmatpush1.bf16.msra.mxu0 0
    %6595 = vmatprep.subr.bf16.mxu0 0
    %6596 = vmatpush1.bf16.msra.mxu0 0
    %6597 = vmatprep.subr.bf16.mxu0 0
    %6598 = vmatpush1.bf16.msra.mxu0 0
    %6599 = vmatprep.subr.bf16.mxu0 0
    %6600 = vmatpush1.bf16.msra.mxu0 0
    %6601 = vmatprep.subr.bf16.mxu0 0
    %6602 = vmatpush1.bf16.msra.mxu0 0
    %6603 = vmatprep.subr.bf16.mxu0 0
    %6604 = vmatpush1.bf16.msra.mxu0 0
    %6605 = vmatprep.mubr.bf16.mxu0 0
    %6606 = vmatmul.mubr.bf16.gmra.mrb[0].mxu0 %v6571
    %v6607 = vpop.f32.mrb[0].mxu0
    %v6608 = vadd.f32 %v6559, %v6607
    %v6609 = vpop.f32.mrb[0].mxu0
    %v6610 = vpop.f32.mrb[0].mxu0
    %v6611 = vadd.f32 %v6562, %v6610
    %v6612 = vpop.f32.mrb[0].mxu0
    %6613 = vdwg.mxu0
    %6614 = vrot.lane.b32.xlu0 %v6473, 3
    %v6615 = vpop.permute.xlu0 %6614
    %6616 = vrot.lane.b32.xlu0 %v6474, 3
    %v6617 = vpop.permute.xlu0 %6616
    %v6618 = vadd.s32 %v6475, 1
    %vm6619 = vcmp.ge.s32.totalorder %v6618, 0
    %vm6620 = vcmp.lt.s32.totalorder %v6618, 4
    %vm6621 = vmand %vm6619, %vm6620
    %vm6622 = vmand %vm6621, %vm6487
    %vm6623 = vmand %vm6622, %vm6489
    %v6624 = vsel %vm6623, 1, 0
    %vm6625 = vcmp.eq.s32.totalorder %v6624, 1
    %v6626 = vsel %vm6625, %v6615, 0.0
    %v6627 = vsel %vm6625, %v6617, 0.0
    %v6628 = vpack.c.bf16 %v6627, %v6626
    %s6629 = scalar_lea.vmem %s7, 16
    %v6630 = vld [vmem:[%s6629] sm:$0xf]
    %v6631 = vld [vmem:[%s6629 + $0x4] sm:$0xf]
    %v6634 = vunpack.c.l.b16 %v6630
    %v6635 = vunpack.c.l.b16 %v6631
    %v6636 = vpack.c.b16 %v6635, %v6634
    %v6638 = vsel %vm6520, %v6636, 0
    %6640 = vmatprep.subr.bf16.mxu0 0
    %6641 = vmatpush1.bf16.msra.mxu0 %v6628
    %6642 = vmatprep.subr.bf16.mxu0 0
    %6643 = vmatpush1.bf16.msra.mxu0 0
    %6644 = vmatprep.subr.bf16.mxu0 0
    %6645 = vmatpush1.bf16.msra.mxu0 0
    %6646 = vmatprep.subr.bf16.mxu0 0
    %6647 = vmatpush1.bf16.msra.mxu0 0
    %6648 = vmatprep.subr.bf16.mxu0 0
    %6649 = vmatpush1.bf16.msra.mxu0 0
    %6650 = vmatprep.subr.bf16.mxu0 0
    %6651 = vmatpush1.bf16.msra.mxu0 0
    %6652 = vmatprep.subr.bf16.mxu0 0
    %6653 = vmatpush1.bf16.msra.mxu0 0
    %6654 = vmatprep.subr.bf16.mxu0 0
    %6655 = vmatpush1.bf16.msra.mxu0 0
    %6656 = vmatprep.subr.bf16.mxu0 0
    %6657 = vmatpush1.bf16.msra.mxu0 0
    %6658 = vmatprep.subr.bf16.mxu0 0
    %6659 = vmatpush1.bf16.msra.mxu0 0
    %6660 = vmatprep.subr.bf16.mxu0 0
    %6661 = vmatpush1.bf16.msra.mxu0 0
    %6662 = vmatprep.subr.bf16.mxu0 0
    %6663 = vmatpush1.bf16.msra.mxu0 0
    %6664 = vmatprep.subr.bf16.mxu0 0
    %6665 = vmatpush1.bf16.msra.mxu0 0
    %6666 = vmatprep.subr.bf16.mxu0 0
    %6667 = vmatpush1.bf16.msra.mxu0 0
    %6668 = vmatprep.subr.bf16.mxu0 0
    %6669 = vmatpush1.bf16.msra.mxu0 0
    %6670 = vmatprep.subr.bf16.mxu0 0
    %6671 = vmatpush1.bf16.msra.mxu0 0
    %6672 = vmatprep.mubr.bf16.mxu0 0
    %6673 = vmatmul.mubr.bf16.gmra.mrb[0].mxu0 %v6638
    %v6674 = vpop.f32.mrb[0].mxu0
    %v6675 = vadd.f32 0.0, %v6674
    %v6676 = vpop.f32.mrb[0].mxu0
    %v6677 = vpop.f32.mrb[0].mxu0
    %v6678 = vadd.f32 0.0, %v6677
    %v6679 = vpop.f32.mrb[0].mxu0
    %6680 = vdwg.mxu0
    %v6681 = vadd.f32 %v6608, %v6675
    %v6682 = vadd.f32 %v6611, %v6678
    %6683 = vrot.lane.b32.xlu0 %v6473, 1
    %v6684 = vpop.permute.xlu0 %6683
    %6685 = vrot.lane.b32.xlu0 %v6474, 1
    %v6686 = vpop.permute.xlu0 %6685
    %vm6687 = vcmp.ge.s32.totalorder %v6477, 0
    %vm6688 = vmand %vm6485, %vm6687
    %vm6689 = vcmp.lt.s32.totalorder %v6477, 4
    %vm6690 = vmand %vm6688, %vm6689
    %v6691 = vsel %vm6690, 1, 0
    %vm6692 = vcmp.eq.s32.totalorder %v6691, 1
    %v6693 = vsel %vm6692, %v6684, 0.0
    %v6694 = vsel %vm6692, %v6686, 0.0
    %v6695 = vpack.c.bf16 %v6694, %v6693
    %s6696 = scalar_lea.vmem %s7, 24
    %v6697 = vld [vmem:[%s6696] sm:$0xf]
    %v6698 = vld [vmem:[%s6696 + $0x4] sm:$0xf]
    %v6701 = vunpack.c.l.b16 %v6697
    %v6702 = vunpack.c.l.b16 %v6698
    %v6703 = vpack.c.b16 %v6702, %v6701
    %v6705 = vsel %vm6520, %v6703, 0
    %6707 = vmatprep.subr.bf16.mxu0 0
    %6708 = vmatpush1.bf16.msra.mxu0 %v6695
    %6709 = vmatprep.subr.bf16.mxu0 0
    %6710 = vmatpush1.bf16.msra.mxu0 0
    %6711 = vmatprep.subr.bf16.mxu0 0
    %6712 = vmatpush1.bf16.msra.mxu0 0
    %6713 = vmatprep.subr.bf16.mxu0 0
    %6714 = vmatpush1.bf16.msra.mxu0 0
    %6715 = vmatprep.subr.bf16.mxu0 0
    %6716 = vmatpush1.bf16.msra.mxu0 0
    %6717 = vmatprep.subr.bf16.mxu0 0
    %6718 = vmatpush1.bf16.msra.mxu0 0
    %6719 = vmatprep.subr.bf16.mxu0 0
    %6720 = vmatpush1.bf16.msra.mxu0 0
    %6721 = vmatprep.subr.bf16.mxu0 0
    %6722 = vmatpush1.bf16.msra.mxu0 0
    %6723 = vmatprep.subr.bf16.mxu0 0
    %6724 = vmatpush1.bf16.msra.mxu0 0
    %6725 = vmatprep.subr.bf16.mxu0 0
    %6726 = vmatpush1.bf16.msra.mxu0 0
    %6727 = vmatprep.subr.bf16.mxu0 0
    %6728 = vmatpush1.bf16.msra.mxu0 0
    %6729 = vmatprep.subr.bf16.mxu0 0
    %6730 = vmatpush1.bf16.msra.mxu0 0
    %6731 = vmatprep.subr.bf16.mxu0 0
    %6732 = vmatpush1.bf16.msra.mxu0 0
    %6733 = vmatprep.subr.bf16.mxu0 0
    %6734 = vmatpush1.bf16.msra.mxu0 0
    %6735 = vmatprep.subr.bf16.mxu0 0
    %6736 = vmatpush1.bf16.msra.mxu0 0
    %6737 = vmatprep.subr.bf16.mxu0 0
    %6738 = vmatpush1.bf16.msra.mxu0 0
    %6739 = vmatprep.mubr.bf16.mxu0 0
    %6740 = vmatmul.mubr.bf16.gmra.mrb[0].mxu0 %v6705
    %v6741 = vpop.f32.mrb[0].mxu0
    %v6742 = vadd.f32 0.0, %v6741
    %v6743 = vpop.f32.mrb[0].mxu0
    %v6744 = vpop.f32.mrb[0].mxu0
    %v6745 = vadd.f32 0.0, %v6744
    %v6746 = vpop.f32.mrb[0].mxu0
    %6747 = vdwg.mxu0
    %v6748 = vadd.f32 %v6681, %v6742
    %v6749 = vadd.f32 %v6682, %v6745
    %vm6750 = vmand %vm6504, %vm6687
    %vm6751 = vmand %vm6750, %vm6689
    %v6752 = vsel %vm6751, 1, 0
    %vm6753 = vcmp.eq.s32.totalorder %v6752, 1
    %v6754 = vsel %vm6753, %v6473, 0.0
    %v6755 = vsel %vm6753, %v6474, 0.0
    %v6756 = vpack.c.bf16 %v6755, %v6754
    %s6757 = scalar_lea.vmem %s7, 32
    %v6758 = vld [vmem:[%s6757] sm:$0xf]
    %v6759 = vld [vmem:[%s6757 + $0x4] sm:$0xf]
    %v6762 = vunpack.c.l.b16 %v6758
    %v6763 = vunpack.c.l.b16 %v6759
    %v6764 = vpack.c.b16 %v6763, %v6762
    %v6766 = vsel %vm6520, %v6764, 0
    %6768 = vmatprep.subr.bf16.mxu0 0
    %6769 = vmatpush1.bf16.msra.mxu0 %v6756
    %6770 = vmatprep.subr.bf16.mxu0 0
    %6771 = vmatpush1.bf16.msra.mxu0 0
    %6772 = vmatprep.subr.bf16.mxu0 0
    %6773 = vmatpush1.bf16.msra.mxu0 0
    %6774 = vmatprep.subr.bf16.mxu0 0
    %6775 = vmatpush1.bf16.msra.mxu0 0
    %6776 = vmatprep.subr.bf16.mxu0 0
    %6777 = vmatpush1.bf16.msra.mxu0 0
    %6778 = vmatprep.subr.bf16.mxu0 0
    %6779 = vmatpush1.bf16.msra.mxu0 0
    %6780 = vmatprep.subr.bf16.mxu0 0
    %6781 = vmatpush1.bf16.msra.mxu0 0
    %6782 = vmatprep.subr.bf16.mxu0 0
    %6783 = vmatpush1.bf16.msra.mxu0 0
    %6784 = vmatprep.subr.bf16.mxu0 0
    %6785 = vmatpush1.bf16.msra.mxu0 0
    %6786 = vmatprep.subr.bf16.mxu0 0
    %6787 = vmatpush1.bf16.msra.mxu0 0
    %6788 = vmatprep.subr.bf16.mxu0 0
    %6789 = vmatpush1.bf16.msra.mxu0 0
    %6790 = vmatprep.subr.bf16.mxu0 0
    %6791 = vmatpush1.bf16.msra.mxu0 0
    %6792 = vmatprep.subr.bf16.mxu0 0
    %6793 = vmatpush1.bf16.msra.mxu0 0
    %6794 = vmatprep.subr.bf16.mxu0 0
    %6795 = vmatpush1.bf16.msra.mxu0 0
    %6796 = vmatprep.subr.bf16.mxu0 0
    %6797 = vmatpush1.bf16.msra.mxu0 0
    %6798 = vmatprep.subr.bf16.mxu0 0
    %6799 = vmatpush1.bf16.msra.mxu0 0
    %6800 = vmatprep.mubr.bf16.mxu0 0
    %6801 = vmatmul.mubr.bf16.gmra.mrb[0].mxu0 %v6766
    %v6802 = vpop.f32.mrb[0].mxu0
    %v6803 = vadd.f32 0.0, %v6802
    %v6804 = vpop.f32.mrb[0].mxu0
    %v6805 = vpop.f32.mrb[0].mxu0
    %v6806 = vadd.f32 0.0, %v6805
    %v6807 = vpop.f32.mrb[0].mxu0
    %6808 = vdwg.mxu0
    %v6809 = vadd.f32 %v6748, %v6803
    %v6810 = vadd.f32 %v6749, %v6806
    %6811 = vrot.lane.b32.xlu0 %v6473, 127
    %v6812 = vpop.permute.xlu0 %6811
    %6813 = vrot.lane.b32.xlu0 %v6474, 127
    %v6814 = vpop.permute.xlu0 %6813
    %vm6815 = vmand %vm6621, %vm6687
    %vm6816 = vmand %vm6815, %vm6689
    %v6817 = vsel %vm6816, 1, 0
    %vm6818 = vcmp.eq.s32.totalorder %v6817, 1
    %v6819 = vsel %vm6818, %v6812, 0.0
    %v6820 = vsel %vm6818, %v6814, 0.0
    %v6821 = vpack.c.bf16 %v6820, %v6819
    %s6822 = scalar_lea.vmem %s7, 40
    %v6823 = vld [vmem:[%s6822] sm:$0xf]
    %v6824 = vld [vmem:[%s6822 + $0x4] sm:$0xf]
    %v6827 = vunpack.c.l.b16 %v6823
    %v6828 = vunpack.c.l.b16 %v6824
    %v6829 = vpack.c.b16 %v6828, %v6827
    %v6831 = vsel %vm6520, %v6829, 0
    %6833 = vmatprep.subr.bf16.mxu0 0
    %6834 = vmatpush1.bf16.msra.mxu0 %v6821
    %6835 = vmatprep.subr.bf16.mxu0 0
    %6836 = vmatpush1.bf16.msra.mxu0 0
    %6837 = vmatprep.subr.bf16.mxu0 0
    %6838 = vmatpush1.bf16.msra.mxu0 0
    %6839 = vmatprep.subr.bf16.mxu0 0
    %6840 = vmatpush1.bf16.msra.mxu0 0
    %6841 = vmatprep.subr.bf16.mxu0 0
    %6842 = vmatpush1.bf16.msra.mxu0 0
    %6843 = vmatprep.subr.bf16.mxu0 0
    %6844 = vmatpush1.bf16.msra.mxu0 0
    %6845 = vmatprep.subr.bf16.mxu0 0
    %6846 = vmatpush1.bf16.msra.mxu0 0
    %6847 = vmatprep.subr.bf16.mxu0 0
    %6848 = vmatpush1.bf16.msra.mxu0 0
    %6849 = vmatprep.subr.bf16.mxu0 0
    %6850 = vmatpush1.bf16.msra.mxu0 0
    %6851 = vmatprep.subr.bf16.mxu0 0
    %6852 = vmatpush1.bf16.msra.mxu0 0
    %6853 = vmatprep.subr.bf16.mxu0 0
    %6854 = vmatpush1.bf16.msra.mxu0 0
    %6855 = vmatprep.subr.bf16.mxu0 0
    %6856 = vmatpush1.bf16.msra.mxu0 0
    %6857 = vmatprep.subr.bf16.mxu0 0
    %6858 = vmatpush1.bf16.msra.mxu0 0
    %6859 = vmatprep.subr.bf16.mxu0 0
    %6860 = vmatpush1.bf16.msra.mxu0 0
    %6861 = vmatprep.subr.bf16.mxu0 0
    %6862 = vmatpush1.bf16.msra.mxu0 0
    %6863 = vmatprep.subr.bf16.mxu0 0
    %6864 = vmatpush1.bf16.msra.mxu0 0
    %6865 = vmatprep.mubr.bf16.mxu0 0
    %6866 = vmatmul.mubr.bf16.gmra.mrb[0].mxu0 %v6831
    %v6867 = vpop.f32.mrb[0].mxu0
    %v6868 = vadd.f32 0.0, %v6867
    %v6869 = vpop.f32.mrb[0].mxu0
    %v6870 = vpop.f32.mrb[0].mxu0
    %v6871 = vadd.f32 0.0, %v6870
    %v6872 = vpop.f32.mrb[0].mxu0
    %6873 = vdwg.mxu0
    %v6874 = vadd.f32 %v6809, %v6868
    %v6875 = vadd.f32 %v6810, %v6871
    %6876 = vrot.lane.b32.xlu0 %v6473, 125
    %v6877 = vpop.permute.xlu0 %6876
    %6878 = vrot.lane.b32.xlu0 %v6474, 125
    %v6879 = vpop.permute.xlu0 %6878
    %v6880 = vadd.s32 %v6477, 1
    %vm6881 = vcmp.ge.s32.totalorder %v6880, 0
    %vm6882 = vmand %vm6485, %vm6881
    %vm6883 = vcmp.lt.s32.totalorder %v6880, 4
    %vm6884 = vmand %vm6882, %vm6883
    %v6885 = vsel %vm6884, 1, 0
    %vm6886 = vcmp.eq.s32.totalorder %v6885, 1
    %v6887 = vsel %vm6886, %v6877, 0.0
    %v6888 = vsel %vm6886, %v6879, 0.0
    %v6889 = vpack.c.bf16 %v6888, %v6887
    %s6890 = scalar_lea.vmem %s7, 48
    %v6891 = vld [vmem:[%s6890] sm:$0xf]
    %v6892 = vld [vmem:[%s6890 + $0x4] sm:$0xf]
    %v6895 = vunpack.c.l.b16 %v6891
    %v6896 = vunpack.c.l.b16 %v6892
    %v6897 = vpack.c.b16 %v6896, %v6895
    %v6899 = vsel %vm6520, %v6897, 0
    %6901 = vmatprep.subr.bf16.mxu0 0
    %6902 = vmatpush1.bf16.msra.mxu0 %v6889
    %6903 = vmatprep.subr.bf16.mxu0 0
    %6904 = vmatpush1.bf16.msra.mxu0 0
    %6905 = vmatprep.subr.bf16.mxu0 0
    %6906 = vmatpush1.bf16.msra.mxu0 0
    %6907 = vmatprep.subr.bf16.mxu0 0
    %6908 = vmatpush1.bf16.msra.mxu0 0
    %6909 = vmatprep.subr.bf16.mxu0 0
    %6910 = vmatpush1.bf16.msra.mxu0 0
    %6911 = vmatprep.subr.bf16.mxu0 0
    %6912 = vmatpush1.bf16.msra.mxu0 0
    %6913 = vmatprep.subr.bf16.mxu0 0
    %6914 = vmatpush1.bf16.msra.mxu0 0
    %6915 = vmatprep.subr.bf16.mxu0 0
    %6916 = vmatpush1.bf16.msra.mxu0 0
    %6917 = vmatprep.subr.bf16.mxu0 0
    %6918 = vmatpush1.bf16.msra.mxu0 0
    %6919 = vmatprep.subr.bf16.mxu0 0
    %6920 = vmatpush1.bf16.msra.mxu0 0
    %6921 = vmatprep.subr.bf16.mxu0 0
    %6922 = vmatpush1.bf16.msra.mxu0 0
    %6923 = vmatprep.subr.bf16.mxu0 0
    %6924 = vmatpush1.bf16.msra.mxu0 0
    %6925 = vmatprep.subr.bf16.mxu0 0
    %6926 = vmatpush1.bf16.msra.mxu0 0
    %6927 = vmatprep.subr.bf16.mxu0 0
    %6928 = vmatpush1.bf16.msra.mxu0 0
    %6929 = vmatprep.subr.bf16.mxu0 0
    %6930 = vmatpush1.bf16.msra.mxu0 0
    %6931 = vmatprep.subr.bf16.mxu0 0
    %6932 = vmatpush1.bf16.msra.mxu0 0
    %6933 = vmatprep.mubr.bf16.mxu0 0
    %6934 = vmatmul.mubr.bf16.gmra.mrb[0].mxu0 %v6899
    %v6935 = vpop.f32.mrb[0].mxu0
    %v6936 = vadd.f32 0.0, %v6935
    %v6937 = vpop.f32.mrb[0].mxu0
    %v6938 = vpop.f32.mrb[0].mxu0
    %v6939 = vadd.f32 0.0, %v6938
    %v6940 = vpop.f32.mrb[0].mxu0
    %6941 = vdwg.mxu0
    %v6942 = vadd.f32 %v6874, %v6936
    %v6943 = vadd.f32 %v6875, %v6939
    %6944 = vrot.lane.b32.xlu0 %v6473, 124
    %v6945 = vpop.permute.xlu0 %6944
    %6946 = vrot.lane.b32.xlu0 %v6474, 124
    %v6947 = vpop.permute.xlu0 %6946
    %vm6948 = vmand %vm6504, %vm6881
    %vm6949 = vmand %vm6948, %vm6883
    %v6950 = vsel %vm6949, 1, 0
    %vm6951 = vcmp.eq.s32.totalorder %v6950, 1
    %v6952 = vsel %vm6951, %v6945, 0.0
    %v6953 = vsel %vm6951, %v6947, 0.0
    %v6954 = vpack.c.bf16 %v6953, %v6952
    %s6955 = scalar_lea.vmem %s7, 56
    %v6956 = vld [vmem:[%s6955] sm:$0xf]
    %v6957 = vld [vmem:[%s6955 + $0x4] sm:$0xf]
    %v6960 = vunpack.c.l.b16 %v6956
    %v6961 = vunpack.c.l.b16 %v6957
    %v6962 = vpack.c.b16 %v6961, %v6960
    %v6964 = vsel %vm6520, %v6962, 0
    %6966 = vmatprep.subr.bf16.mxu0 0
    %6967 = vmatpush1.bf16.msra.mxu0 %v6954
    %6968 = vmatprep.subr.bf16.mxu0 0
    %6969 = vmatpush1.bf16.msra.mxu0 0
    %6970 = vmatprep.subr.bf16.mxu0 0
    %6971 = vmatpush1.bf16.msra.mxu0 0
    %6972 = vmatprep.subr.bf16.mxu0 0
    %6973 = vmatpush1.bf16.msra.mxu0 0
    %6974 = vmatprep.subr.bf16.mxu0 0
    %6975 = vmatpush1.bf16.msra.mxu0 0
    %6976 = vmatprep.subr.bf16.mxu0 0
    %6977 = vmatpush1.bf16.msra.mxu0 0
    %6978 = vmatprep.subr.bf16.mxu0 0
    %6979 = vmatpush1.bf16.msra.mxu0 0
    %6980 = vmatprep.subr.bf16.mxu0 0
    %6981 = vmatpush1.bf16.msra.mxu0 0
    %6982 = vmatprep.subr.bf16.mxu0 0
    %6983 = vmatpush1.bf16.msra.mxu0 0
    %6984 = vmatprep.subr.bf16.mxu0 0
    %6985 = vmatpush1.bf16.msra.mxu0 0
    %6986 = vmatprep.subr.bf16.mxu0 0
    %6987 = vmatpush1.bf16.msra.mxu0 0
    %6988 = vmatprep.subr.bf16.mxu0 0
    %6989 = vmatpush1.bf16.msra.mxu0 0
    %6990 = vmatprep.subr.bf16.mxu0 0
    %6991 = vmatpush1.bf16.msra.mxu0 0
    %6992 = vmatprep.subr.bf16.mxu0 0
    %6993 = vmatpush1.bf16.msra.mxu0 0
    %6994 = vmatprep.subr.bf16.mxu0 0
    %6995 = vmatpush1.bf16.msra.mxu0 0
    %6996 = vmatprep.subr.bf16.mxu0 0
    %6997 = vmatpush1.bf16.msra.mxu0 0
    %6998 = vmatprep.mubr.bf16.mxu0 0
    %6999 = vmatmul.mubr.bf16.gmra.mrb[0].mxu0 %v6964
    %v7000 = vpop.f32.mrb[0].mxu0
    %v7001 = vadd.f32 0.0, %v7000
    %v7002 = vpop.f32.mrb[0].mxu0
    %v7003 = vpop.f32.mrb[0].mxu0
    %v7004 = vadd.f32 0.0, %v7003
    %v7005 = vpop.f32.mrb[0].mxu0
    %7006 = vdwg.mxu0
    %v7007 = vadd.f32 %v6942, %v7001
    %v7008 = vadd.f32 %v6943, %v7004
    %7009 = vrot.lane.b32.xlu0 %v6473, 123
    %v7010 = vpop.permute.xlu0 %7009
    %7011 = vrot.lane.b32.xlu0 %v6474, 123
    %v7012 = vpop.permute.xlu0 %7011
    %vm7013 = vmand %vm6621, %vm6881
    %vm7014 = vmand %vm7013, %vm6883
    %v7015 = vsel %vm7014, 1, 0
    %vm7016 = vcmp.eq.s32.totalorder %v7015, 1
    %v7017 = vsel %vm7016, %v7010, 0.0
    %v7018 = vsel %vm7016, %v7012, 0.0
    %v7019 = vpack.c.bf16 %v7018, %v7017
    %s7020 = scalar_lea.vmem %s7, 64
    %v7021 = vld [vmem:[%s7020] sm:$0xf]
    %v7022 = vld [vmem:[%s7020 + $0x4] sm:$0xf]
    %v7025 = vunpack.c.l.b16 %v7021
    %v7026 = vunpack.c.l.b16 %v7022
    %v7027 = vpack.c.b16 %v7026, %v7025
    %v7029 = vsel %vm6520, %v7027, 0
    %7031 = vmatprep.subr.bf16.mxu0 0
    %7032 = vmatpush1.bf16.msra.mxu0 %v7019
    %7033 = vmatprep.subr.bf16.mxu0 0
    %7034 = vmatpush1.bf16.msra.mxu0 0
    %7035 = vmatprep.subr.bf16.mxu0 0
    %7036 = vmatpush1.bf16.msra.mxu0 0
    %7037 = vmatprep.subr.bf16.mxu0 0
    %7038 = vmatpush1.bf16.msra.mxu0 0
    %7039 = vmatprep.subr.bf16.mxu0 0
    %7040 = vmatpush1.bf16.msra.mxu0 0
    %7041 = vmatprep.subr.bf16.mxu0 0
    %7042 = vmatpush1.bf16.msra.mxu0 0
    %7043 = vmatprep.subr.bf16.mxu0 0
    %7044 = vmatpush1.bf16.msra.mxu0 0
    %7045 = vmatprep.subr.bf16.mxu0 0
    %7046 = vmatpush1.bf16.msra.mxu0 0
    %7047 = vmatprep.subr.bf16.mxu0 0
    %7048 = vmatpush1.bf16.msra.mxu0 0
    %7049 = vmatprep.subr.bf16.mxu0 0
    %7050 = vmatpush1.bf16.msra.mxu0 0
    %7051 = vmatprep.subr.bf16.mxu0 0
    %7052 = vmatpush1.bf16.msra.mxu0 0
    %7053 = vmatprep.subr.bf16.mxu0 0
    %7054 = vmatpush1.bf16.msra.mxu0 0
    %7055 = vmatprep.subr.bf16.mxu0 0
    %7056 = vmatpush1.bf16.msra.mxu0 0
    %7057 = vmatprep.subr.bf16.mxu0 0
    %7058 = vmatpush1.bf16.msra.mxu0 0
    %7059 = vmatprep.subr.bf16.mxu0 0
    %7060 = vmatpush1.bf16.msra.mxu0 0
    %7061 = vmatprep.subr.bf16.mxu0 0
    %7062 = vmatpush1.bf16.msra.mxu0 0
    %7063 = vmatprep.mubr.bf16.mxu0 0
    %7064 = vmatmul.mubr.bf16.gmra.mrb[0].mxu0 %v7029
    %v7065 = vpop.f32.mrb[0].mxu0
    %v7066 = vadd.f32 0.0, %v7065
    %v7067 = vpop.f32.mrb[0].mxu0
    %v7068 = vpop.f32.mrb[0].mxu0
    %v7069 = vadd.f32 0.0, %v7068
    %v7070 = vpop.f32.mrb[0].mxu0
    %7071 = vdwg.mxu0
    %v7072 = vadd.f32 %v7007, %v7066
    %v7073 = vadd.f32 %v7008, %v7069
    %v7074 = vstv %s5833
    %v7075 = vmul.f32 %v7072, %v7074
    %v7076 = vmul.f32 %v7073, %v7074
    %v7077 = vstv %s5832
    %v7078 = vadd.f32 %v7075, %v7077
    %v7079 = vadd.f32 %v7076, %v7077
    %7080 = vmatprep.subr.mxu0 0.0
    %7081 = vmatpush1.msra.mxu0 %v6378
    %7082 = vmatprep.subr.mxu0 0.0
    %7083 = vmatpush1.msra.mxu0 %v6379
    %7084 = vmatprep.subr.mxu0 0.0
    %7085 = vmatpush1.msra.mxu0 %v6380
    %7086 = vmatprep.subr.mxu0 0.0
    %7087 = vmatpush1.msra.mxu0 %v6381
    %7088 = vmatprep.subr.mxu0 0.0
    %7089 = vmatpush1.msra.mxu0 %v6382
    %7090 = vmatprep.subr.mxu0 0.0
    %7091 = vmatpush1.msra.mxu0 %v6383
    %7092 = vmatprep.subr.mxu0 0.0
    %7093 = vmatpush1.msra.mxu0 %v6384
    %7094 = vmatprep.subr.mxu0 0.0
    %7095 = vmatpush1.msra.mxu0 %v6385
    %7096 = vmatprep.subr.mxu0 0.0
    %7097 = vmatpush1.msra.mxu0 %v6386
    %7098 = vmatprep.subr.mxu0 0.0
    %7099 = vmatpush1.msra.mxu0 %v6387
    %7100 = vmatprep.subr.mxu0 0.0
    %7101 = vmatpush1.msra.mxu0 %v6388
    %7102 = vmatprep.subr.mxu0 0.0
    %7103 = vmatpush1.msra.mxu0 %v6389
    %7104 = vmatprep.subr.mxu0 0.0
    %7105 = vmatpush1.msra.mxu0 %v6390
    %7106 = vmatprep.subr.mxu0 0.0
    %7107 = vmatpush1.msra.mxu0 %v6391
    %7108 = vmatprep.subr.mxu0 0.0
    %7109 = vmatpush1.msra.mxu0 %v6392
    %7110 = vmatprep.subr.mxu0 0.0
    %7111 = vmatpush1.msra.mxu0 %v6393
    %7112 = vmatprep.subr.mxu0 0.0
    %7113 = vmatpush1.msra.mxu0 0.0
    %7114 = vmatprep.subr.mxu0 0.0
    %7115 = vmatpush1.msra.mxu0 0.0
    %7116 = vmatprep.subr.mxu0 0.0
    %7117 = vmatpush1.msra.mxu0 0.0
    %7118 = vmatprep.subr.mxu0 0.0
    %7119 = vmatpush1.msra.mxu0 0.0
    %7120 = vmatprep.subr.mxu0 0.0
    %7121 = vmatpush1.msra.mxu0 0.0
    %7122 = vmatprep.subr.mxu0 0.0
    %7123 = vmatpush1.msra.mxu0 0.0
    %7124 = vmatprep.subr.mxu0 0.0
    %7125 = vmatpush1.msra.mxu0 0.0
    %7126 = vmatprep.subr.mxu0 0.0
    %7127 = vmatpush1.msra.mxu0 0.0
    %7128 = vmatprep.subr.mxu0 0.0
    %7129 = vmatpush1.msra.mxu0 0.0
    %7130 = vmatprep.subr.mxu0 0.0
    %7131 = vmatpush1.msra.mxu0 0.0
    %7132 = vmatprep.subr.mxu0 0.0
    %7133 = vmatpush1.msra.mxu0 0.0
    %7134 = vmatprep.subr.mxu0 0.0
    %7135 = vmatpush1.msra.mxu0 0.0
    %7136 = vmatprep.subr.mxu0 0.0
    %7137 = vmatpush1.msra.mxu0 0.0
    %7138 = vmatprep.subr.mxu0 0.0
    %7139 = vmatpush1.msra.mxu0 0.0
    %7140 = vmatprep.subr.mxu0 0.0
    %7141 = vmatpush1.msra.mxu0 0.0
    %7142 = vmatprep.subr.mxu0 0.0
    %7143 = vmatpush1.msra.mxu0 0.0
    %7144 = vmatprep.mubr.f32.mxu0 0.0
    %7145 = vmatmul.mubr.f32.gmra.mrb[0].mxu0 %v5835
    %v7146 = vpop.f32.mrb[0].mxu0
    %v7147 = vadd.f32 0.0, %v7146
    %v7148 = vpop.f32.mrb[0].mxu0
    %7149 = vdwg.mxu0
    %v7150 = vld [vmem:[#allocation16] sm:$0xff]
    %v7151 = vld [vmem:[#allocation16 + $0x8] sm:$0xff]
    %v7153 = vsel %vm5106, %v7150, 0
    %v7156 = vsel %vm5106, %v7151, 0
    %7158 = vmatprep.subr.mxu0 0.0
    %7159 = vmatpush1.msra.mxu0 %v7147
    %7160 = vmatprep.subr.mxu0 0.0
    %7161 = vmatpush1.msra.mxu0 0.0
    %7162 = vmatprep.subr.mxu0 0.0
    %7163 = vmatpush1.msra.mxu0 0.0
    %7164 = vmatprep.subr.mxu0 0.0
    %7165 = vmatpush1.msra.mxu0 0.0
    %7166 = vmatprep.subr.mxu0 0.0
    %7167 = vmatpush1.msra.mxu0 0.0
    %7168 = vmatprep.subr.mxu0 0.0
    %7169 = vmatpush1.msra.mxu0 0.0
    %7170 = vmatprep.subr.mxu0 0.0
    %7171 = vmatpush1.msra.mxu0 0.0
    %7172 = vmatprep.subr.mxu0 0.0
    %7173 = vmatpush1.msra.mxu0 0.0
    %7174 = vmatprep.subr.mxu0 0.0
    %7175 = vmatpush1.msra.mxu0 0.0
    %7176 = vmatprep.subr.mxu0 0.0
    %7177 = vmatpush1.msra.mxu0 0.0
    %7178 = vmatprep.subr.mxu0 0.0
    %7179 = vmatpush1.msra.mxu0 0.0
    %7180 = vmatprep.subr.mxu0 0.0
    %7181 = vmatpush1.msra.mxu0 0.0
    %7182 = vmatprep.subr.mxu0 0.0
    %7183 = vmatpush1.msra.mxu0 0.0
    %7184 = vmatprep.subr.mxu0 0.0
    %7185 = vmatpush1.msra.mxu0 0.0
    %7186 = vmatprep.subr.mxu0 0.0
    %7187 = vmatpush1.msra.mxu0 0.0
    %7188 = vmatprep.subr.mxu0 0.0
    %7189 = vmatpush1.msra.mxu0 0.0
    %7190 = vmatprep.subr.mxu0 0.0
    %7191 = vmatpush1.msra.mxu0 0.0
    %7192 = vmatprep.subr.mxu0 0.0
    %7193 = vmatpush1.msra.mxu0 0.0
    %7194 = vmatprep.subr.mxu0 0.0
    %7195 = vmatpush1.msra.mxu0 0.0
    %7196 = vmatprep.subr.mxu0 0.0
    %7197 = vmatpush1.msra.mxu0 0.0
    %7198 = vmatprep.subr.mxu0 0.0
    %7199 = vmatpush1.msra.mxu0 0.0
    %7200 = vmatprep.subr.mxu0 0.0
    %7201 = vmatpush1.msra.mxu0 0.0
    %7202 = vmatprep.subr.mxu0 0.0
    %7203 = vmatpush1.msra.mxu0 0.0
    %7204 = vmatprep.subr.mxu0 0.0
    %7205 = vmatpush1.msra.mxu0 0.0
    %7206 = vmatprep.subr.mxu0 0.0
    %7207 = vmatpush1.msra.mxu0 0.0
    %7208 = vmatprep.subr.mxu0 0.0
    %7209 = vmatpush1.msra.mxu0 0.0
    %7210 = vmatprep.subr.mxu0 0.0
    %7211 = vmatpush1.msra.mxu0 0.0
    %7212 = vmatprep.subr.mxu0 0.0
    %7213 = vmatpush1.msra.mxu0 0.0
    %7214 = vmatprep.subr.mxu0 0.0
    %7215 = vmatpush1.msra.mxu0 0.0
    %7216 = vmatprep.subr.mxu0 0.0
    %7217 = vmatpush1.msra.mxu0 0.0
    %7218 = vmatprep.subr.mxu0 0.0
    %7219 = vmatpush1.msra.mxu0 0.0
    %7220 = vmatprep.subr.mxu0 0.0
    %7221 = vmatpush1.msra.mxu0 0.0
    %7222 = vmatprep.mubr.f32.mxu0 0.0
    %7223 = vmatmul.mubr.f32.gmra.mrb[0].mxu0 %v7153
    %v7224 = vpop.f32.mrb[0].mxu0
    %v7225 = vadd.f32 0.0, %v7224
    %v7226 = vpop.f32.mrb[0].mxu0
    %7227 = vmatprep.mubr.f32.mxu0 0.0
    %7228 = vmatmul.mubr.f32.gmra.mrb[0].mxu0 %v7156
    %v7229 = vpop.f32.mrb[0].mxu0
    %v7230 = vadd.f32 0.0, %v7229
    %v7231 = vpop.f32.mrb[0].mxu0
    %7232 = vdwg.mxu0
    %v7233 = vadd.f32 %v7078, %v7225
    %v7234 = vadd.f32 %v7079, %v7230
    %v7235 = vmax.f32 %v7233, 0.0
    %v7236 = vmax.f32 %v7234, 0.0
    %v7237 = vld [vmem:[%s12] sm:$0xff]
    %v7238 = vld [vmem:[%s12 + $0x8] sm:$0xff]
    %v7239 = vld [vmem:[%s12 + $0x10] sm:$0xff]
    %v7240 = vld [vmem:[%s12 + $0x18] sm:$0xff]
    %v7241 = vld [vmem:[%s12 + $0x20] sm:$0xff]
    %v7242 = vld [vmem:[%s12 + $0x28] sm:$0xff]
    %v7243 = vld [vmem:[%s12 + $0x30] sm:$0xff]
    %v7244 = vld [vmem:[%s12 + $0x38] sm:$0xff]
    %v7245 = vld [vmem:[%s12 + $0x40] sm:$0xff]
    %v7246 = vld [vmem:[%s12 + $0x48] sm:$0xff]
    %v7247 = vld [vmem:[%s12 + $0x50] sm:$0xff]
    %v7248 = vld [vmem:[%s12 + $0x58] sm:$0xff]
    %v7249 = vld [vmem:[%s12 + $0x60] sm:$0xff]
    %v7250 = vld [vmem:[%s12 + $0x68] sm:$0xff]
    %v7251 = vld [vmem:[%s12 + $0x70] sm:$0xff]
    %v7252 = vld [vmem:[%s12 + $0x78] sm:$0xff]
    %s7253 = sld [smem:[#allocation19 + $0x10]]
    %v7254 = vstv %s7253
    %7255 = vmatprep.subr.mxu0 0.0
    %7256 = vmatpush1.msra.mxu0 %v7237
    %7257 = vmatprep.subr.mxu0 0.0
    %7258 = vmatpush1.msra.mxu0 %v7238
    %7259 = vmatprep.subr.mxu0 0.0
    %7260 = vmatpush1.msra.mxu0 %v7239
    %7261 = vmatprep.subr.mxu0 0.0
    %7262 = vmatpush1.msra.mxu0 %v7240
    %7263 = vmatprep.subr.mxu0 0.0
    %7264 = vmatpush1.msra.mxu0 %v7241
    %7265 = vmatprep.subr.mxu0 0.0
    %7266 = vmatpush1.msra.mxu0 %v7242
    %7267 = vmatprep.subr.mxu0 0.0
    %7268 = vmatpush1.msra.mxu0 %v7243
    %7269 = vmatprep.subr.mxu0 0.0
    %7270 = vmatpush1.msra.mxu0 %v7244
    %7271 = vmatprep.subr.mxu0 0.0
    %7272 = vmatpush1.msra.mxu0 %v7245
    %7273 = vmatprep.subr.mxu0 0.0
    %7274 = vmatpush1.msra.mxu0 %v7246
    %7275 = vmatprep.subr.mxu0 0.0
    %7276 = vmatpush1.msra.mxu0 %v7247
    %7277 = vmatprep.subr.mxu0 0.0
    %7278 = vmatpush1.msra.mxu0 %v7248
    %7279 = vmatprep.subr.mxu0 0.0
    %7280 = vmatpush1.msra.mxu0 %v7249
    %7281 = vmatprep.subr.mxu0 0.0
    %7282 = vmatpush1.msra.mxu0 %v7250
    %7283 = vmatprep.subr.mxu0 0.0
    %7284 = vmatpush1.msra.mxu0 %v7251
    %7285 = vmatprep.subr.mxu0 0.0
    %7286 = vmatpush1.msra.mxu0 %v7252
    %7287 = vmatprep.subr.mxu0 0.0
    %7288 = vmatpush1.msra.mxu0 0.0
    %7289 = vmatprep.subr.mxu0 0.0
    %7290 = vmatpush1.msra.mxu0 0.0
    %7291 = vmatprep.subr.mxu0 0.0
    %7292 = vmatpush1.msra.mxu0 0.0
    %7293 = vmatprep.subr.mxu0 0.0
    %7294 = vmatpush1.msra.mxu0 0.0
    %7295 = vmatprep.subr.mxu0 0.0
    %7296 = vmatpush1.msra.mxu0 0.0
    %7297 = vmatprep.subr.mxu0 0.0
    %7298 = vmatpush1.msra.mxu0 0.0
    %7299 = vmatprep.subr.mxu0 0.0
    %7300 = vmatpush1.msra.mxu0 0.0
    %7301 = vmatprep.subr.mxu0 0.0
    %7302 = vmatpush1.msra.mxu0 0.0
    %7303 = vmatprep.subr.mxu0 0.0
    %7304 = vmatpush1.msra.mxu0 0.0
    %7305 = vmatprep.subr.mxu0 0.0
    %7306 = vmatpush1.msra.mxu0 0.0
    %7307 = vmatprep.subr.mxu0 0.0
    %7308 = vmatpush1.msra.mxu0 0.0
    %7309 = vmatprep.subr.mxu0 0.0
    %7310 = vmatpush1.msra.mxu0 0.0
    %7311 = vmatprep.subr.mxu0 0.0
    %7312 = vmatpush1.msra.mxu0 0.0
    %7313 = vmatprep.subr.mxu0 0.0
    %7314 = vmatpush1.msra.mxu0 0.0
    %7315 = vmatprep.subr.mxu0 0.0
    %7316 = vmatpush1.msra.mxu0 0.0
    %7317 = vmatprep.subr.mxu0 0.0
    %7318 = vmatpush1.msra.mxu0 0.0
    %7319 = vmatprep.mubr.f32.mxu0 0.0
    %7320 = vmatmul.mubr.f32.gmra.mrb[0].mxu0 %v7235
    %v7321 = vpop.f32.mrb[0].mxu0
    %v7322 = vadd.f32 %v7254, %v7321
    %v7323 = vpop.f32.mrb[0].mxu0
    %7324 = vmatprep.mubr.f32.mxu0 0.0
    %7325 = vmatmul.mubr.f32.gmra.mrb[0].mxu0 %v7236
    %v7326 = vpop.f32.mrb[0].mxu0
    %v7327 = vadd.f32 %v7254, %v7326
    %v7328 = vpop.f32.mrb[0].mxu0
    %7329 = vdwg.mxu0
    %v7330 = vld [vmem:[#allocation17] sm:$0xff]
    %v7331 = vld [vmem:[#allocation17 + $0x8] sm:$0x3]
    %v7332 = vld [vmem:[%s14] sm:$0xff]
    %v7333 = vld [vmem:[%s14 + $0x8] sm:$0x3]
    %7335 = vset.pattern.permute.xlu0 0
    %7336 = vperm.xlu0 %7335, %v7332
    %v7337 = vpop.permute.xlu0 %7336
    %7340 = vset.pattern.permute.xlu0 0
    %7341 = vperm.xlu0 %7340, %v7333
    %v7342 = vpop.permute.xlu0 %7341
    %v7345 = vsel %vm6520, %v7330, 0
    %v7348 = vsel %vm6520, %v7331, 0
    %7350 = vmatprep.subr.mxu0 0.0
    %7351 = vmatpush1.msra.mxu0 %v7322
    %7352 = vmatprep.subr.mxu0 0.0
    %7353 = vmatpush1.msra.mxu0 %v7327
    %7354 = vmatprep.subr.mxu0 0.0
    %7355 = vmatpush1.msra.mxu0 0.0
    %7356 = vmatprep.subr.mxu0 0.0
    %7357 = vmatpush1.msra.mxu0 0.0
    %7358 = vmatprep.subr.mxu0 0.0
    %7359 = vmatpush1.msra.mxu0 0.0
    %7360 = vmatprep.subr.mxu0 0.0
    %7361 = vmatpush1.msra.mxu0 0.0
    %7362 = vmatprep.subr.mxu0 0.0
    %7363 = vmatpush1.msra.mxu0 0.0
    %7364 = vmatprep.subr.mxu0 0.0
    %7365 = vmatpush1.msra.mxu0 0.0
    %7366 = vmatprep.subr.mxu0 0.0
    %7367 = vmatpush1.msra.mxu0 0.0
    %7368 = vmatprep.subr.mxu0 0.0
    %7369 = vmatpush1.msra.mxu0 0.0
    %7370 = vmatprep.subr.mxu0 0.0
    %7371 = vmatpush1.msra.mxu0 0.0
    %7372 = vmatprep.subr.mxu0 0.0
    %7373 = vmatpush1.msra.mxu0 0.0
    %7374 = vmatprep.subr.mxu0 0.0
    %7375 = vmatpush1.msra.mxu0 0.0
    %7376 = vmatprep.subr.mxu0 0.0
    %7377 = vmatpush1.msra.mxu0 0.0
    %7378 = vmatprep.subr.mxu0 0.0
    %7379 = vmatpush1.msra.mxu0 0.0
    %7380 = vmatprep.subr.mxu0 0.0
    %7381 = vmatpush1.msra.mxu0 0.0
    %7382 = vmatprep.subr.mxu0 0.0
    %7383 = vmatpush1.msra.mxu0 0.0
    %7384 = vmatprep.subr.mxu0 0.0
    %7385 = vmatpush1.msra.mxu0 0.0
    %7386 = vmatprep.subr.mxu0 0.0
    %7387 = vmatpush1.msra.mxu0 0.0
    %7388 = vmatprep.subr.mxu0 0.0
    %7389 = vmatpush1.msra.mxu0 0.0
    %7390 = vmatprep.subr.mxu0 0.0
    %7391 = vmatpush1.msra.mxu0 0.0
    %7392 = vmatprep.subr.mxu0 0.0
    %7393 = vmatpush1.msra.mxu0 0.0
    %7394 = vmatprep.subr.mxu0 0.0
    %7395 = vmatpush1.msra.mxu0 0.0
    %7396 = vmatprep.subr.mxu0 0.0
    %7397 = vmatpush1.msra.mxu0 0.0
    %7398 = vmatprep.subr.mxu0 0.0
    %7399 = vmatpush1.msra.mxu0 0.0
    %7400 = vmatprep.subr.mxu0 0.0
    %7401 = vmatpush1.msra.mxu0 0.0
    %7402 = vmatprep.subr.mxu0 0.0
    %7403 = vmatpush1.msra.mxu0 0.0
    %7404 = vmatprep.subr.mxu0 0.0
    %7405 = vmatpush1.msra.mxu0 0.0
    %7406 = vmatprep.subr.mxu0 0.0
    %7407 = vmatpush1.msra.mxu0 0.0
    %7408 = vmatprep.subr.mxu0 0.0
    %7409 = vmatpush1.msra.mxu0 0.0
    %7410 = vmatprep.subr.mxu0 0.0
    %7411 = vmatpush1.msra.mxu0 0.0
    %7412 = vmatprep.subr.mxu0 0.0
    %7413 = vmatpush1.msra.mxu0 0.0
    %7414 = vmatprep.mubr.f32.mxu0 0.0
    %7415 = vmatmul.mubr.f32.gmra.mrb[0].mxu0 %v7345
    %v7416 = vpop.f32.mrb[0].mxu0
    %v7417 = vadd.f32 %v7337, %v7416
    %v7418 = vpop.f32.mrb[0].mxu0
    %7419 = vmatprep.mubr.f32.mxu0 0.0
    %7420 = vmatmul.mubr.f32.gmra.mrb[0].mxu0 %v7348
    %v7421 = vpop.f32.mrb[0].mxu0
    %v7422 = vadd.f32 %v7342, %v7421
    %v7423 = vpop.f32.mrb[0].mxu0
    %7424 = vdwg.mxu0
    %vm7425 = vcmask 15360
    %7426 = vst.msk [vmem:[%s16] sm:$0xff] %vm7425, %v7417
    %vm7427 = vcmask 9216
    %7428 = vst.msk [vmem:[%s16 + $0x8] sm:$0x3] %vm7427, %v7422
    // Predicated region
    $region110: #{forward.1} parent=1 // pred_check
      _
    $region111: #{forward.1} parent=1 // pred_check_branch
      %7430 = sbr.rel (0) target = $region113
    $region112: #{forward.1} parent=1 // pred_region
      _
    $region113: #{forward.1} parent=1 // pred_fallthru
      _
    // Predicated region
    $region114: #{forward.1} parent=1 // pred_check
      _
    $region115: #{forward.1} parent=1 // pred_check_branch
      %7432 = sbr.rel (0) target = $region117
    $region116: #{forward.1} parent=1 // pred_region
      _
    $region117: #{forward.1} parent=1 // pred_fallthru
      _
    %7433 = vsyncpa [#allocation3], 1
    %7434 = vsyncpa [#allocation6], 1
    %7435 = vsyncpa [#allocation9], 1
    %7436 = vsyncpa [#allocation12], 1
    %7437 = vsyncpa [#allocation15], 1
    %7438 = vsyncpa [#allocation18], 1
    %7439 = vsyncpa [#allocation4], 1

</llo_original>
